<compile_context>
chip_gen: v7x
topology: tpu7x:2x2x1
jax: 0.10.0
libtpu: 0.0.40
codegen_flags: <defaults>
</compile_context>

<pallas_src>
import jax
import jax.numpy as jnp
import numpy as np
from jax.experimental import pallas as pl
from jax.experimental.pallas import tpu as pltpu

CPAD = 8                  # input xyz channels padded 3 -> 8 (zero pad, zero weight rows)
HPAD = 8                  # each head's output padded (3 and 2) -> 8; merged output = 2*HPAD
NFEAT = 512               # global feature width
_POINTS_PER_STEP = 2048   # conv-stack M target per grid step (VMEM governor)


# --------------------------------------------------------------------------- #
# Kernels
# --------------------------------------------------------------------------- #

def _dense(a, w_ref, b_ref, relu=True):
    o = jnp.dot(a, w_ref[...], preferred_element_type=jnp.float32) + b_ref[...]
    return jnp.maximum(o, 0.0) if relu else o


def _conv_pool_kernel(x_ref, w1, b1, w2, b2, w3, b3, w4, b4, g_ref):
    """Conv1..Conv4 (+folded BN, ReLU) on one (b_tile, p_chunk) block, then a
    running max over point chunks accumulated into the resident output block."""
    bf16 = jnp.bfloat16
    bt, pch, cpad = x_ref.shape
    nfeat = w4.shape[-1]

    x = x_ref[...].reshape(bt * pch, cpad)            # f32 (bt*pch, CPAD) — pure view
    h = _dense(x, w1, b1)                             # conv1+bn1 (f32, K=8)
    h = _dense(h.astype(bf16), w2, b2)                # conv2+bn2
    h = _dense(h.astype(bf16), w3, b3)                # conv3+bn3
    h = _dense(h.astype(bf16), w4, b4)                # conv4+bn4 -> (bt*pch, 512) f32

    # Per-item max over this point chunk (bf16 round commutes with max).
    chunk_max = jnp.max(h.reshape(bt, pch, nfeat), axis=1).astype(bf16)

    j = pl.program_id(1)

    @pl.when(j == 0)
    def _():
        g_ref[0] = chunk_max

    @pl.when(j > 0)
    def _():
        g_ref[0] = jnp.maximum(g_ref[0], chunk_max)


def _head_kernel(g_ref, wh1, bh1, wc2, bc2, wy2, by2, w3f, b3f, out_ref):
    """Fused centre/yaw FC heads, run once with M = bs_pad."""
    bf16 = jnp.bfloat16
    g = g_ref[...]                                    # (bs_pad, 512) bf16
    t = _dense(g, wh1, bh1)                           # fused fc1 -> (bs_pad, 1024) f32
    half = wh1.shape[-1] // 2                         # 512
    c = _dense(t[:, :half].astype(bf16), wc2, bc2)    # centre fc2 + bn
    y = _dense(t[:, half:].astype(bf16), wy2, by2)    # yaw    fc2 + bn
    z = jnp.concatenate([c, y], axis=-1).astype(bf16)
    out_ref[...] = _dense(z, w3f, b3f, relu=False)    # block-diag fc3: [:3]=xyz, [8:10]=yaw


# --------------------------------------------------------------------------- #
# Parameters
# --------------------------------------------------------------------------- #

def init_params(key):
    """Deterministic synthetic f32 weights; eval-mode BN folded into conv/fc."""
    eps = 1e-5
    keys = list(jax.random.split(key, 64))
    ki = iter(keys)

    def fold_bn(w, b, cout):
        g_k, be_k, m_k, v_k = jax.random.split(next(ki), 4)
        gamma = 1.0 + 0.1 * jax.random.normal(g_k, (cout,), jnp.float32)
        beta = 0.1 * jax.random.normal(be_k, (cout,), jnp.float32)
        rmean = 0.1 * jax.random.normal(m_k, (cout,), jnp.float32)
        rvar = 1.0 + 0.1 * jnp.abs(jax.random.normal(v_k, (cout,), jnp.float32))
        scale = gamma / jnp.sqrt(rvar + eps)
        return w * scale[None, :], (b - rmean) * scale + beta

    def layer(cin, cout, bn):
        w = 0.05 * jax.random.normal(next(ki), (cin, cout), jnp.float32)
        b = 0.05 * jax.random.normal(next(ki), (cout,), jnp.float32)
        if bn:
            w, b = fold_bn(w, b, cout)
        return w, b

    p = {}
    p['w1'], p['b1'] = layer(3, 128, True)       # conv1 + bn1
    p['w2'], p['b2'] = layer(128, 128, True)     # conv2 + bn2
    p['w3'], p['b3'] = layer(128, 256, True)     # conv3 + bn3
    p['w4'], p['b4'] = layer(256, 512, True)     # conv4 + bn4
    p['wc1'], p['bc1'] = layer(512, 512, True)   # centre_fc1 + fcbn1
    p['wc2'], p['bc2'] = layer(512, 256, True)   # centre_fc2 + fcbn2
    p['wc3'], p['bc3'] = layer(256, 3, False)    # centre_fc3
    p['wy1'], p['by1'] = layer(512, 512, True)   # yaw_fc1 + fcbn1
    p['wy2'], p['by2'] = layer(512, 256, True)   # yaw_fc2 + fcbn2
    p['wy3'], p['by3'] = layer(256, 2, False)    # yaw_fc3
    return p


def pack_params(p):
    """Pad / fuse / cast logical params into (conv_packed, head_packed) tuples."""
    bf16, f32 = jnp.bfloat16, jnp.float32

    def wcast(a):
        return a.astype(bf16)

    def bcast(a):
        return a.reshape(1, -1).astype(f32)

    # conv1 stays f32 (4 KB weight, K=8) to preserve raw-coordinate precision.
    w1 = jnp.pad(p['w1'], ((0, CPAD - 3), (0, 0))).astype(f32)     # (CPAD, 128)

    # Fuse centre_fc1 / yaw_fc1 (same input g) along the output dim.
    wh1 = jnp.concatenate([p['wc1'], p['wy1']], axis=1)            # (512, 1024)
    bh1 = jnp.concatenate([p['bc1'], p['by1']], axis=0)            # (1024,)

    # Fuse centre_fc3 / yaw_fc3 into one block-diagonal (512, 16) weight.
    nf2 = p['wc2'].shape[1]                                        # 256
    w3f = jnp.zeros((2 * nf2, 2 * HPAD), f32)
    w3f = w3f.at[:nf2, :3].set(p['wc3'])
    w3f = w3f.at[nf2:, HPAD:HPAD + 2].set(p['wy3'])
    b3f = jnp.zeros((2 * HPAD,), f32)
    b3f = b3f.at[:3].set(p['bc3'])
    b3f = b3f.at[HPAD:HPAD + 2].set(p['by3'])

    conv = (w1, bcast(p['b1']),
            wcast(p['w2']), bcast(p['b2']),
            wcast(p['w3']), bcast(p['b3']),
            wcast(p['w4']), bcast(p['b4']))
    head = (wcast(wh1), bcast(bh1),
            wcast(p['wc2']), bcast(p['bc2']),
            wcast(p['wy2']), bcast(p['by2']),
            wcast(w3f), bcast(b3f))
    return conv, head


# --------------------------------------------------------------------------- #
# Tiling / VMEM heuristics
# --------------------------------------------------------------------------- #

def _cores_per_device():
    """TensorCores a single JAX device can shard a 'parallel' grid axis over."""
    try:
        kind = jax.devices()[0].device_kind.lower()
    except Exception:
        return 1
    if "lite" in kind or "v5e" in kind or "v6" in kind:
        return 1            # single-TC parts: one big grid step is best
    if "v4" in kind or "v5" in kind or "v7" in kind:
        return 2            # megacore parts: keep n_bsteps even
    return 1


def _choose_p_chunk(n_pts, p_chunk):
    if p_chunk is not None:
        assert n_pts % p_chunk == 0 and p_chunk % 8 == 0
        return p_chunk
    if n_pts <= _POINTS_PER_STEP:
        return n_pts
    for c in range(_POINTS_PER_STEP, 7, -8):       # largest divisor <= target, mult of 8
        if n_pts % c == 0:
            return c
    return n_pts


def _choose_tiles(bs, n_pts, cores, b_tile, p_chunk):
    p_chunk = _choose_p_chunk(n_pts, p_chunk)
    n_pchunks = n_pts // p_chunk
    if b_tile is None:
        bt_cap = max(1, _POINTS_PER_STEP // p_chunk)   # VMEM- / M-aware batch-tile cap
        n_bsteps = -(-bs // bt_cap)
    else:
        n_bsteps = -(-bs // b_tile)
    n_bsteps = -(-n_bsteps // cores) * cores           # equal work per TensorCore
    b_tile = -(-bs // n_bsteps)
    return b_tile, n_bsteps, p_chunk, n_pchunks


def _nbytes(arrs):
    return sum(int(a.size) * a.dtype.itemsize for a in arrs)


def _conv_vmem_limit(b_tile, p_chunk, conv_bytes, single_buffer):
    pts = b_tile * p_chunk
    act = pts * 8 * 1024                 # conv intermediates (conservative)
    x_in = 2 * pts * 128 * 4             # lane-padded (CPAD->128) input, 2 buffers
    g_out = 2 * b_tile * NFEAT * 2
    w = conv_bytes * (1 if single_buffer else 2)
    return int(min(max(act + x_in + g_out + w + (4 << 20), 20 << 20), 48 << 20))


def _head_vmem_limit(bs_pad, head_bytes, single_buffer):
    act = bs_pad * 16 * 1024
    w = head_bytes * (1 if single_buffer else 2)
    return int(min(max(act + w + (4 << 20), 12 << 20), 48 << 20))


def _shared_spec(arr, single_buffer):
    nd = arr.ndim
    idx = lambda *_, _nd=nd: (0,) * _nd          # constant index_map: DMA'd once
    if single_buffer:
        return pl.BlockSpec(arr.shape, idx, pipeline_mode=pl.Buffered(buffer_count=1))
    return pl.BlockSpec(arr.shape, idx)


# --------------------------------------------------------------------------- #
# Forward
# --------------------------------------------------------------------------- #

def _forward_impl(pts, conv_packed, head_packed, *, b_tile, p_chunk, single_buffer):
    bs, cin, n_pts = pts.shape
    assert cin >= 3
    assert n_pts % 8 == 0, "n_pts must be a multiple of 8 for in-kernel reshapes"

    cores = _cores_per_device()
    b_tile, n_bsteps, p_chunk, n_pchunks = _choose_tiles(bs, n_pts, cores, b_tile, p_chunk)
    bs_pad = n_bsteps * b_tile

    # NCL -> NLC, channel pad 3 -> CPAD, batch pad to bs_pad (padded rows discarded).
    x = jnp.transpose(pts[:, :3, :], (0, 2, 1))
    x = jnp.pad(x, ((0, bs_pad - bs), (0, 0), (0, CPAD - 3)))

    # ---- kernel 1: conv stack + per-item running max over point chunks ----
    conv_specs = [pl.BlockSpec((b_tile, p_chunk, CPAD), lambda i, j: (i, j, 0))]
    conv_specs += [_shared_spec(a, single_buffer) for a in conv_packed]
    g_spec = pl.BlockSpec((1, b_tile, NFEAT), lambda i, j: (i, 0, 0))
    g = pl.pallas_call(
        _conv_pool_kernel,
        grid=(n_bsteps, n_pchunks),
        in_specs=conv_specs,
        out_specs=g_spec,
        out_shape=jax.ShapeDtypeStruct((n_bsteps, b_tile, NFEAT), jnp.bfloat16),
        compiler_params=pltpu.CompilerParams(
            dimension_semantics=("parallel", "arbitrary"),
            vmem_limit_bytes=_conv_vmem_limit(
                b_tile, p_chunk, _nbytes(conv_packed), single_buffer)),
    )(x, *conv_packed)

    g = g.reshape(bs_pad, NFEAT)

    # ---- kernel 2: fused FC heads, run once with M = bs_pad ----
    head_specs = [pl.BlockSpec((bs_pad, NFEAT), lambda i: (0, 0))]
    head_specs += [_shared_spec(a, single_buffer) for a in head_packed]
    out = pl.pallas_call(
        _head_kernel,
        grid=(1,),
        in_specs=head_specs,
        out_specs=pl.BlockSpec((bs_pad, 2 * HPAD), lambda i: (0, 0)),
        out_shape=jax.ShapeDtypeStruct((bs_pad, 2 * HPAD), jnp.float32),
        compiler_params=pltpu.CompilerParams(
            dimension_semantics=("arbitrary",),
            vmem_limit_bytes=_head_vmem_limit(
                bs_pad, _nbytes(head_packed), single_buffer)),
    )(g, *head_packed)

    xyz = out[:bs, :3]
    yaw = out[:bs, HPAD:HPAD + 2]
    return xyz, yaw


def pointnet_estimation_forward(pts, conv_packed, head_packed, *, b_tile=None, p_chunk=None):
    """pts: (bs, 3, n_pts) -> (xyz (bs,3), yaw (bs,2))."""
    try:
        return _forward_impl(pts, conv_packed, head_packed,
                             b_tile=b_tile, p_chunk=p_chunk, single_buffer=True)
    except Exception:
        # pipeline_mode=pl.Buffered(1) unsupported on this jax -> default buffering.
        return _forward_impl(pts, conv_packed, head_packed,
                             b_tile=b_tile, p_chunk=p_chunk, single_buffer=False)


# --------------------------------------------------------------------------- #
# Reference & test
# --------------------------------------------------------------------------- #

def reference_forward(pts, p):
    """Plain-JAX reference mirroring the kernel's mixed f32/bf16 arithmetic."""
    bf16, f32 = jnp.bfloat16, jnp.float32
    x = jnp.transpose(pts[:, :3, :], (0, 2, 1))

    def dense(a, w, b, relu=True, dtype=bf16):
        o = jnp.dot(a.astype(dtype), w.astype(dtype),
                    preferred_element_type=f32) + b
        return jnp.maximum(o, 0.0) if relu else o

    h = dense(x, p['w1'], p['b1'], dtype=f32)        # conv1 in f32 (matches kernel)
    h = dense(h, p['w2'], p['b2'])
    h = dense(h, p['w3'], p['b3'])
    h = dense(h, p['w4'], p['b4'])
    g = jnp.max(h, axis=1)
    c = dense(g, p['wc1'], p['bc1'])
    c = dense(c, p['wc2'], p['bc2'])
    xyz = dense(c, p['wc3'], p['bc3'], relu=False)
    y = dense(g, p['wy1'], p['by1'])
    y = dense(y, p['wy2'], p['by2'])
    yaw = dense(y, p['wy3'], p['by3'], relu=False)
    return xyz, yaw


if __name__ == "__main__":
    bs, n_pts = 4, 128
    key = jax.random.PRNGKey(0)
    k_pc, k_par = jax.random.split(key)
    pts = jax.random.normal(k_pc, (bs, 3, n_pts), jnp.float32)

    logical = init_params(k_par)
    conv_packed, head_packed = pack_params(logical)

    ref_xyz, ref_yaw = reference_forward(pts, logical)

    # 1) Auto tiling (single conv step on single-TC parts, even split on megacore).
    xyz, yaw = pointnet_estimation_forward(pts, conv_packed, head_packed)
    jax.block_until_ready((xyz, yaw))
    np.testing.assert_allclose(np.asarray(xyz), np.asarray(ref_xyz), rtol=5e-3, atol=5e-3)
    np.testing.assert_allclose(np.asarray(yaw), np.asarray(ref_yaw), rtol=5e-3, atol=5e-3)

    # 2) Forced point-chunk streaming + multi-step batch tiling (exercises the
    #    running-max accumulator path across the "arbitrary" grid axis).
    xyz2, yaw2 = pointnet_estimation_forward(pts, conv_packed, head_packed,
                                             b_tile=2, p_chunk=64)
    jax.block_until_ready((xyz2, yaw2))
    np.testing.assert_allclose(np.asarray(xyz2), np.asarray(ref_xyz), rtol=5e-3, atol=5e-3)
    np.testing.assert_allclose(np.asarray(yaw2), np.asarray(ref_yaw), rtol=5e-3, atol=5e-3)

    print("KERNEL_OK")
</pallas_src>

<mosaic_0001>
module attributes {stable_mosaic.version = 11 : i64} {
  func.func @_conv_pool_kernel(%arg0: i32, %arg1: i32, %arg2: memref<4x128x8xf32, #tpu.memory_space<vmem>>, %arg3: memref<8x128xf32, #tpu.memory_space<vmem>>, %arg4: memref<1x128xf32, #tpu.memory_space<vmem>>, %arg5: memref<128x128xbf16, #tpu.memory_space<vmem>>, %arg6: memref<1x128xf32, #tpu.memory_space<vmem>>, %arg7: memref<128x256xbf16, #tpu.memory_space<vmem>>, %arg8: memref<1x256xf32, #tpu.memory_space<vmem>>, %arg9: memref<256x512xbf16, #tpu.memory_space<vmem>>, %arg10: memref<1x512xf32, #tpu.memory_space<vmem>>, %arg11: memref<1x4x512xbf16, #tpu.memory_space<vmem>>) attributes {dimension_semantics = [#tpu.dimension_semantics<parallel>, #tpu.dimension_semantics<arbitrary>], iteration_bounds = array<i64: 1, 1>, scalar_prefetch = 0 : i64, scratch_operands = 0 : i64, tpu.core_type = #tpu.core_type<tc>, window_params = [{transform_indices = @transform_0, window_bounds = array<i64: 4, 128, 8>}, {pipeline_mode = #tpu.pipeline_mode<synchronous>, transform_indices = @transform_1, window_bounds = array<i64: 8, 128>}, {pipeline_mode = #tpu.pipeline_mode<synchronous>, transform_indices = @transform_2, window_bounds = array<i64: 1, 128>}, {pipeline_mode = #tpu.pipeline_mode<synchronous>, transform_indices = @transform_3, window_bounds = array<i64: 128, 128>}, {pipeline_mode = #tpu.pipeline_mode<synchronous>, transform_indices = @transform_4, window_bounds = array<i64: 1, 128>}, {pipeline_mode = #tpu.pipeline_mode<synchronous>, transform_indices = @transform_5, window_bounds = array<i64: 128, 256>}, {pipeline_mode = #tpu.pipeline_mode<synchronous>, transform_indices = @transform_6, window_bounds = array<i64: 1, 256>}, {pipeline_mode = #tpu.pipeline_mode<synchronous>, transform_indices = @transform_7, window_bounds = array<i64: 256, 512>}, {pipeline_mode = #tpu.pipeline_mode<synchronous>, transform_indices = @transform_8, window_bounds = array<i64: 1, 512>}, {transform_indices = @transform_9, window_bounds = array<i64: 1, 4, 512>}]} {
    %c0 = arith.constant 0 : index
    %c0_0 = arith.constant 0 : index
    %c0_1 = arith.constant 0 : index
    %0 = vector.load %arg2[%c0, %c0_0, %c0_1] : memref<4x128x8xf32, #tpu.memory_space<vmem>>, vector<4x128x8xf32>
    %1 = vector.shape_cast %0 : vector<4x128x8xf32> to vector<512x8xf32>
    %c0_2 = arith.constant 0 : index
    %c0_3 = arith.constant 0 : index
    %2 = vector.load %arg3[%c0_2, %c0_3] : memref<8x128xf32, #tpu.memory_space<vmem>>, vector<8x128xf32>
    %cst = arith.constant dense<0.000000e+00> : vector<512x128xf32>
    %3 = tpu.matmul %1, %2, %cst {dimension_numbers = #tpu.dot_dimension_numbers<[1], [0], [0], [1], [0, 0, 1, 1], [], []>} : vector<512x8xf32>, vector<8x128xf32>, vector<512x128xf32> -> vector<512x128xf32>
    %c0_4 = arith.constant 0 : index
    %c0_5 = arith.constant 0 : index
    %4 = vector.load %arg4[%c0_4, %c0_5] : memref<1x128xf32, #tpu.memory_space<vmem>>, vector<1x128xf32>
    %5 = vector.broadcast %4 : vector<1x128xf32> to vector<512x128xf32>
    %6 = arith.addf %3, %5 : vector<512x128xf32>
    %cst_6 = arith.constant 0.000000e+00 : f32
    %7 = vector.broadcast %cst_6 : f32 to vector<512x128xf32>
    %8 = arith.maximumf %6, %7 : vector<512x128xf32>
    %9 = arith.truncf %8 : vector<512x128xf32> to vector<512x128xbf16>
    %c0_7 = arith.constant 0 : index
    %c0_8 = arith.constant 0 : index
    %10 = vector.load %arg5[%c0_7, %c0_8] : memref<128x128xbf16, #tpu.memory_space<vmem>>, vector<128x128xbf16>
    %cst_9 = arith.constant dense<0.000000e+00> : vector<512x128xf32>
    %11 = tpu.matmul %9, %10, %cst_9 {dimension_numbers = #tpu.dot_dimension_numbers<[1], [0], [0], [1], [0, 0, 1, 1], [], []>} : vector<512x128xbf16>, vector<128x128xbf16>, vector<512x128xf32> -> vector<512x128xf32>
    %c0_10 = arith.constant 0 : index
    %c0_11 = arith.constant 0 : index
    %12 = vector.load %arg6[%c0_10, %c0_11] : memref<1x128xf32, #tpu.memory_space<vmem>>, vector<1x128xf32>
    %13 = vector.broadcast %12 : vector<1x128xf32> to vector<512x128xf32>
    %14 = arith.addf %11, %13 : vector<512x128xf32>
    %cst_12 = arith.constant 0.000000e+00 : f32
    %15 = vector.broadcast %cst_12 : f32 to vector<512x128xf32>
    %16 = arith.maximumf %14, %15 : vector<512x128xf32>
    %17 = arith.truncf %16 : vector<512x128xf32> to vector<512x128xbf16>
    %c0_13 = arith.constant 0 : index
    %c0_14 = arith.constant 0 : index
    %18 = vector.load %arg7[%c0_13, %c0_14] : memref<128x256xbf16, #tpu.memory_space<vmem>>, vector<128x256xbf16>
    %cst_15 = arith.constant dense<0.000000e+00> : vector<512x256xf32>
    %19 = tpu.matmul %17, %18, %cst_15 {dimension_numbers = #tpu.dot_dimension_numbers<[1], [0], [0], [1], [0, 0, 1, 1], [], []>} : vector<512x128xbf16>, vector<128x256xbf16>, vector<512x256xf32> -> vector<512x256xf32>
    %c0_16 = arith.constant 0 : index
    %c0_17 = arith.constant 0 : index
    %20 = vector.load %arg8[%c0_16, %c0_17] : memref<1x256xf32, #tpu.memory_space<vmem>>, vector<1x256xf32>
    %21 = vector.broadcast %20 : vector<1x256xf32> to vector<512x256xf32>
    %22 = arith.addf %19, %21 : vector<512x256xf32>
    %cst_18 = arith.constant 0.000000e+00 : f32
    %23 = vector.broadcast %cst_18 : f32 to vector<512x256xf32>
    %24 = arith.maximumf %22, %23 : vector<512x256xf32>
    %25 = arith.truncf %24 : vector<512x256xf32> to vector<512x256xbf16>
    %c0_19 = arith.constant 0 : index
    %c0_20 = arith.constant 0 : index
    %26 = vector.load %arg9[%c0_19, %c0_20] : memref<256x512xbf16, #tpu.memory_space<vmem>>, vector<256x512xbf16>
    %cst_21 = arith.constant dense<0.000000e+00> : vector<512x512xf32>
    %27 = tpu.matmul %25, %26, %cst_21 {dimension_numbers = #tpu.dot_dimension_numbers<[1], [0], [0], [1], [0, 0, 1, 1], [], []>} : vector<512x256xbf16>, vector<256x512xbf16>, vector<512x512xf32> -> vector<512x512xf32>
    %c0_22 = arith.constant 0 : index
    %c0_23 = arith.constant 0 : index
    %28 = vector.load %arg10[%c0_22, %c0_23] : memref<1x512xf32, #tpu.memory_space<vmem>>, vector<1x512xf32>
    %29 = vector.broadcast %28 : vector<1x512xf32> to vector<512x512xf32>
    %30 = arith.addf %27, %29 : vector<512x512xf32>
    %cst_24 = arith.constant 0.000000e+00 : f32
    %31 = vector.broadcast %cst_24 : f32 to vector<512x512xf32>
    %32 = arith.maximumf %30, %31 : vector<512x512xf32>
    %33 = vector.shape_cast %32 : vector<512x512xf32> to vector<4x128x512xf32>
    %cst_25 = arith.constant dense<0xFF800000> : vector<4x512xf32>
    %34 = vector.multi_reduction <maximumf>, %33, %cst_25 [1] : vector<4x128x512xf32> to vector<4x512xf32>
    %35 = arith.truncf %34 : vector<4x512xf32> to vector<4x512xbf16>
    %c0_i32 = arith.constant 0 : i32
    %36 = arith.cmpi eq, %arg1, %c0_i32 : i32
    %37 = arith.extui %36 : i1 to i32
    %c0_i32_26 = arith.constant 0 : i32
    %38 = arith.cmpi ne, %37, %c0_i32_26 : i32
    scf.if %38 {
      %c0_29 = arith.constant 0 : index
      %c0_30 = arith.constant 0 : index
      %c0_31 = arith.constant 0 : index
      %42 = vector.load %arg11[%c0_29, %c0_30, %c0_31] : memref<1x4x512xbf16, #tpu.memory_space<vmem>>, vector<1x4x512xbf16>
      %43 = vector.shape_cast %42 : vector<1x4x512xbf16> to vector<4x512xbf16>
      %44 = vector.shape_cast %35 : vector<4x512xbf16> to vector<1x4x512xbf16>
      tpu.vector_store %arg11[%c0_29, %c0_30, %c0_31], %44 {strides = array<i32>} : memref<1x4x512xbf16, #tpu.memory_space<vmem>>, vector<1x4x512xbf16>,
    } else {
    }
    %c0_i32_27 = arith.constant 0 : i32
    %39 = arith.cmpi sgt, %arg1, %c0_i32_27 : i32
    %40 = arith.extui %39 : i1 to i32
    %c0_i32_28 = arith.constant 0 : i32
    %41 = arith.cmpi ne, %40, %c0_i32_28 : i32
    scf.if %41 {
      %c0_29 = arith.constant 0 : index
      %c0_30 = arith.constant 0 : index
      %c0_31 = arith.constant 0 : index
      %42 = vector.load %arg11[%c0_29, %c0_30, %c0_31] : memref<1x4x512xbf16, #tpu.memory_space<vmem>>, vector<1x4x512xbf16>
      %43 = vector.shape_cast %42 : vector<1x4x512xbf16> to vector<4x512xbf16>
      %44 = arith.maximumf %43, %35 : vector<4x512xbf16>
      %c0_32 = arith.constant 0 : index
      %c0_33 = arith.constant 0 : index
      %c0_34 = arith.constant 0 : index
      %45 = vector.load %arg11[%c0_32, %c0_33, %c0_34] : memref<1x4x512xbf16, #tpu.memory_space<vmem>>, vector<1x4x512xbf16>
      %46 = vector.shape_cast %45 : vector<1x4x512xbf16> to vector<4x512xbf16>
      %47 = vector.shape_cast %44 : vector<4x512xbf16> to vector<1x4x512xbf16>
      tpu.vector_store %arg11[%c0_32, %c0_33, %c0_34], %47 {strides = array<i32>} : memref<1x4x512xbf16, #tpu.memory_space<vmem>>, vector<1x4x512xbf16>,
    } else {
    }
    return
  }
  func.func @transform_0(%arg0: i32, %arg1: i32) -> (i32, i32, i32) {
    %c0_i32 = arith.constant 0 : i32
    %c0_i32_0 = arith.constant 0 : i32
    return %arg0, %arg1, %c0_i32 : i32, i32, i32
  }
  func.func @transform_1(%arg0: i32, %arg1: i32) -> (i32, i32) {
    %c0_i32 = arith.constant 0 : i32
    %c0_i32_0 = arith.constant 0 : i32
    %c0_i32_1 = arith.constant 0 : i32
    return %c0_i32, %c0_i32_0 : i32, i32
  }
  func.func @transform_2(%arg0: i32, %arg1: i32) -> (i32, i32) {
    %c0_i32 = arith.constant 0 : i32
    %c0_i32_0 = arith.constant 0 : i32
    %c0_i32_1 = arith.constant 0 : i32
    return %c0_i32, %c0_i32_0 : i32, i32
  }
  func.func @transform_3(%arg0: i32, %arg1: i32) -> (i32, i32) {
    %c0_i32 = arith.constant 0 : i32
    %c0_i32_0 = arith.constant 0 : i32
    %c0_i32_1 = arith.constant 0 : i32
    return %c0_i32, %c0_i32_0 : i32, i32
  }
  func.func @transform_4(%arg0: i32, %arg1: i32) -> (i32, i32) {
    %c0_i32 = arith.constant 0 : i32
    %c0_i32_0 = arith.constant 0 : i32
    %c0_i32_1 = arith.constant 0 : i32
    return %c0_i32, %c0_i32_0 : i32, i32
  }
  func.func @transform_5(%arg0: i32, %arg1: i32) -> (i32, i32) {
    %c0_i32 = arith.constant 0 : i32
    %c0_i32_0 = arith.constant 0 : i32
    %c0_i32_1 = arith.constant 0 : i32
    return %c0_i32, %c0_i32_0 : i32, i32
  }
  func.func @transform_6(%arg0: i32, %arg1: i32) -> (i32, i32) {
    %c0_i32 = arith.constant 0 : i32
    %c0_i32_0 = arith.constant 0 : i32
    %c0_i32_1 = arith.constant 0 : i32
    return %c0_i32, %c0_i32_0 : i32, i32
  }
  func.func @transform_7(%arg0: i32, %arg1: i32) -> (i32, i32) {
    %c0_i32 = arith.constant 0 : i32
    %c0_i32_0 = arith.constant 0 : i32
    %c0_i32_1 = arith.constant 0 : i32
    return %c0_i32, %c0_i32_0 : i32, i32
  }
  func.func @transform_8(%arg0: i32, %arg1: i32) -> (i32, i32) {
    %c0_i32 = arith.constant 0 : i32
    %c0_i32_0 = arith.constant 0 : i32
    %c0_i32_1 = arith.constant 0 : i32
    return %c0_i32, %c0_i32_0 : i32, i32
  }
  func.func @transform_9(%arg0: i32, %arg1: i32) -> (i32, i32, i32) {
    %c0_i32 = arith.constant 0 : i32
    %c0_i32_0 = arith.constant 0 : i32
    %c0_i32_1 = arith.constant 0 : i32
    return %arg0, %c0_i32, %c0_i32_0 : i32, i32, i32
  }
}

module attributes {stable_mosaic.version = 11 : i64} {
  func.func @_conv_pool_kernel(%arg0: i32, %arg1: i32, %arg2: memref<4x128x8xf32, #tpu.memory_space<vmem>>, %arg3: memref<8x128xf32, #tpu.memory_space<vmem>>, %arg4: memref<1x128xf32, #tpu.memory_space<vmem>>, %arg5: memref<128x128xbf16, #tpu.memory_space<vmem>>, %arg6: memref<1x128xf32, #tpu.memory_space<vmem>>, %arg7: memref<128x256xbf16, #tpu.memory_space<vmem>>, %arg8: memref<1x256xf32, #tpu.memory_space<vmem>>, %arg9: memref<256x512xbf16, #tpu.memory_space<vmem>>, %arg10: memref<1x512xf32, #tpu.memory_space<vmem>>, %arg11: memref<1x4x512xbf16, #tpu.memory_space<vmem>>) attributes {dimension_semantics = [#tpu.dimension_semantics<parallel>, #tpu.dimension_semantics<arbitrary>], iteration_bounds = array<i64: 1, 1>, scalar_prefetch = 0 : i64, scratch_operands = 0 : i64, tpu.core_type = #tpu.core_type<tc>, window_params = [{transform_indices = @transform_0, window_bounds = array<i64: 4, 128, 8>}, {pipeline_mode = #tpu.pipeline_mode<synchronous>, transform_indices = @transform_1, window_bounds = array<i64: 8, 128>}, {pipeline_mode = #tpu.pipeline_mode<synchronous>, transform_indices = @transform_2, window_bounds = array<i64: 1, 128>}, {pipeline_mode = #tpu.pipeline_mode<synchronous>, transform_indices = @transform_3, window_bounds = array<i64: 128, 128>}, {pipeline_mode = #tpu.pipeline_mode<synchronous>, transform_indices = @transform_4, window_bounds = array<i64: 1, 128>}, {pipeline_mode = #tpu.pipeline_mode<synchronous>, transform_indices = @transform_5, window_bounds = array<i64: 128, 256>}, {pipeline_mode = #tpu.pipeline_mode<synchronous>, transform_indices = @transform_6, window_bounds = array<i64: 1, 256>}, {pipeline_mode = #tpu.pipeline_mode<synchronous>, transform_indices = @transform_7, window_bounds = array<i64: 256, 512>}, {pipeline_mode = #tpu.pipeline_mode<synchronous>, transform_indices = @transform_8, window_bounds = array<i64: 1, 512>}, {transform_indices = @transform_9, window_bounds = array<i64: 1, 4, 512>}]} {
    %c0 = arith.constant 0 : index
    %c0_0 = arith.constant 0 : index
    %c0_1 = arith.constant 0 : index
    %0 = vector.load %arg2[%c0, %c0_0, %c0_1] : memref<4x128x8xf32, #tpu.memory_space<vmem>>, vector<4x128x8xf32>
    %1 = vector.shape_cast %0 : vector<4x128x8xf32> to vector<512x8xf32>
    %c0_2 = arith.constant 0 : index
    %c0_3 = arith.constant 0 : index
    %2 = vector.load %arg3[%c0_2, %c0_3] : memref<8x128xf32, #tpu.memory_space<vmem>>, vector<8x128xf32>
    %cst = arith.constant dense<0.000000e+00> : vector<512x128xf32>
    %3 = tpu.matmul %1, %2, %cst {dimension_numbers = #tpu.dot_dimension_numbers<[1], [0], [0], [1], [0, 0, 1, 1], [], []>} : vector<512x8xf32>, vector<8x128xf32>, vector<512x128xf32> -> vector<512x128xf32>
    %c0_4 = arith.constant 0 : index
    %c0_5 = arith.constant 0 : index
    %4 = vector.load %arg4[%c0_4, %c0_5] : memref<1x128xf32, #tpu.memory_space<vmem>>, vector<1x128xf32>
    %5 = vector.broadcast %4 : vector<1x128xf32> to vector<512x128xf32>
    %6 = arith.addf %3, %5 : vector<512x128xf32>
    %cst_6 = arith.constant 0.000000e+00 : f32
    %7 = vector.broadcast %cst_6 : f32 to vector<512x128xf32>
    %8 = arith.maximumf %6, %7 : vector<512x128xf32>
    %9 = arith.truncf %8 : vector<512x128xf32> to vector<512x128xbf16>
    %c0_7 = arith.constant 0 : index
    %c0_8 = arith.constant 0 : index
    %10 = vector.load %arg5[%c0_7, %c0_8] : memref<128x128xbf16, #tpu.memory_space<vmem>>, vector<128x128xbf16>
    %cst_9 = arith.constant dense<0.000000e+00> : vector<512x128xf32>
    %11 = tpu.matmul %9, %10, %cst_9 {dimension_numbers = #tpu.dot_dimension_numbers<[1], [0], [0], [1], [0, 0, 1, 1], [], []>} : vector<512x128xbf16>, vector<128x128xbf16>, vector<512x128xf32> -> vector<512x128xf32>
    %c0_10 = arith.constant 0 : index
    %c0_11 = arith.constant 0 : index
    %12 = vector.load %arg6[%c0_10, %c0_11] : memref<1x128xf32, #tpu.memory_space<vmem>>, vector<1x128xf32>
    %13 = vector.broadcast %12 : vector<1x128xf32> to vector<512x128xf32>
    %14 = arith.addf %11, %13 : vector<512x128xf32>
    %cst_12 = arith.constant 0.000000e+00 : f32
    %15 = vector.broadcast %cst_12 : f32 to vector<512x128xf32>
    %16 = arith.maximumf %14, %15 : vector<512x128xf32>
    %17 = arith.truncf %16 : vector<512x128xf32> to vector<512x128xbf16>
    %c0_13 = arith.constant 0 : index
    %c0_14 = arith.constant 0 : index
    %18 = vector.load %arg7[%c0_13, %c0_14] : memref<128x256xbf16, #tpu.memory_space<vmem>>, vector<128x256xbf16>
    %cst_15 = arith.constant dense<0.000000e+00> : vector<512x256xf32>
    %19 = tpu.matmul %17, %18, %cst_15 {dimension_numbers = #tpu.dot_dimension_numbers<[1], [0], [0], [1], [0, 0, 1, 1], [], []>} : vector<512x128xbf16>, vector<128x256xbf16>, vector<512x256xf32> -> vector<512x256xf32>
    %c0_16 = arith.constant 0 : index
    %c0_17 = arith.constant 0 : index
    %20 = vector.load %arg8[%c0_16, %c0_17] : memref<1x256xf32, #tpu.memory_space<vmem>>, vector<1x256xf32>
    %21 = vector.broadcast %20 : vector<1x256xf32> to vector<512x256xf32>
    %22 = arith.addf %19, %21 : vector<512x256xf32>
    %cst_18 = arith.constant 0.000000e+00 : f32
    %23 = vector.broadcast %cst_18 : f32 to vector<512x256xf32>
    %24 = arith.maximumf %22, %23 : vector<512x256xf32>
    %25 = arith.truncf %24 : vector<512x256xf32> to vector<512x256xbf16>
    %c0_19 = arith.constant 0 : index
    %c0_20 = arith.constant 0 : index
    %26 = vector.load %arg9[%c0_19, %c0_20] : memref<256x512xbf16, #tpu.memory_space<vmem>>, vector<256x512xbf16>
    %cst_21 = arith.constant dense<0.000000e+00> : vector<512x512xf32>
    %27 = tpu.matmul %25, %26, %cst_21 {dimension_numbers = #tpu.dot_dimension_numbers<[1], [0], [0], [1], [0, 0, 1, 1], [], []>} : vector<512x256xbf16>, vector<256x512xbf16>, vector<512x512xf32> -> vector<512x512xf32>
    %c0_22 = arith.constant 0 : index
    %c0_23 = arith.constant 0 : index
    %28 = vector.load %arg10[%c0_22, %c0_23] : memref<1x512xf32, #tpu.memory_space<vmem>>, vector<1x512xf32>
    %29 = vector.broadcast %28 : vector<1x512xf32> to vector<512x512xf32>
    %30 = arith.addf %27, %29 : vector<512x512xf32>
    %cst_24 = arith.constant 0.000000e+00 : f32
    %31 = vector.broadcast %cst_24 : f32 to vector<512x512xf32>
    %32 = arith.maximumf %30, %31 : vector<512x512xf32>
    %33 = vector.shape_cast %32 : vector<512x512xf32> to vector<4x128x512xf32>
    %cst_25 = arith.constant dense<0xFF800000> : vector<4x512xf32>
    %34 = vector.multi_reduction <maximumf>, %33, %cst_25 [1] : vector<4x128x512xf32> to vector<4x512xf32>
    %35 = arith.truncf %34 : vector<4x512xf32> to vector<4x512xbf16>
    %c0_i32 = arith.constant 0 : i32
    %36 = arith.cmpi eq, %arg1, %c0_i32 : i32
    %37 = arith.extui %36 : i1 to i32
    %c0_i32_26 = arith.constant 0 : i32
    %38 = arith.cmpi ne, %37, %c0_i32_26 : i32
    scf.if %38 {
      %c0_29 = arith.constant 0 : index
      %c0_30 = arith.constant 0 : index
      %c0_31 = arith.constant 0 : index
      %42 = vector.load %arg11[%c0_29, %c0_30, %c0_31] : memref<1x4x512xbf16, #tpu.memory_space<vmem>>, vector<1x4x512xbf16>
      %43 = vector.shape_cast %42 : vector<1x4x512xbf16> to vector<4x512xbf16>
      %44 = vector.shape_cast %35 : vector<4x512xbf16> to vector<1x4x512xbf16>
      tpu.vector_store %arg11[%c0_29, %c0_30, %c0_31], %44 {strides = array<i32>} : memref<1x4x512xbf16, #tpu.memory_space<vmem>>, vector<1x4x512xbf16>,
    } else {
    }
    %c0_i32_27 = arith.constant 0 : i32
    %39 = arith.cmpi sgt, %arg1, %c0_i32_27 : i32
    %40 = arith.extui %39 : i1 to i32
    %c0_i32_28 = arith.constant 0 : i32
    %41 = arith.cmpi ne, %40, %c0_i32_28 : i32
    scf.if %41 {
      %c0_29 = arith.constant 0 : index
      %c0_30 = arith.constant 0 : index
      %c0_31 = arith.constant 0 : index
      %42 = vector.load %arg11[%c0_29, %c0_30, %c0_31] : memref<1x4x512xbf16, #tpu.memory_space<vmem>>, vector<1x4x512xbf16>
      %43 = vector.shape_cast %42 : vector<1x4x512xbf16> to vector<4x512xbf16>
      %44 = arith.maximumf %43, %35 : vector<4x512xbf16>
      %c0_32 = arith.constant 0 : index
      %c0_33 = arith.constant 0 : index
      %c0_34 = arith.constant 0 : index
      %45 = vector.load %arg11[%c0_32, %c0_33, %c0_34] : memref<1x4x512xbf16, #tpu.memory_space<vmem>>, vector<1x4x512xbf16>
      %46 = vector.shape_cast %45 : vector<1x4x512xbf16> to vector<4x512xbf16>
      %47 = vector.shape_cast %44 : vector<4x512xbf16> to vector<1x4x512xbf16>
      tpu.vector_store %arg11[%c0_32, %c0_33, %c0_34], %47 {strides = array<i32>} : memref<1x4x512xbf16, #tpu.memory_space<vmem>>, vector<1x4x512xbf16>,
    } else {
    }
    return
  }
  func.func @transform_0(%arg0: i32, %arg1: i32) -> (i32, i32, i32) {
    %c0_i32 = arith.constant 0 : i32
    %c0_i32_0 = arith.constant 0 : i32
    return %arg0, %arg1, %c0_i32 : i32, i32, i32
  }
  func.func @transform_1(%arg0: i32, %arg1: i32) -> (i32, i32) {
    %c0_i32 = arith.constant 0 : i32
    %c0_i32_0 = arith.constant 0 : i32
    %c0_i32_1 = arith.constant 0 : i32
    return %c0_i32, %c0_i32_0 : i32, i32
  }
  func.func @transform_2(%arg0: i32, %arg1: i32) -> (i32, i32) {
    %c0_i32 = arith.constant 0 : i32
    %c0_i32_0 = arith.constant 0 : i32
    %c0_i32_1 = arith.constant 0 : i32
    return %c0_i32, %c0_i32_0 : i32, i32
  }
  func.func @transform_3(%arg0: i32, %arg1: i32) -> (i32, i32) {
    %c0_i32 = arith.constant 0 : i32
    %c0_i32_0 = arith.constant 0 : i32
    %c0_i32_1 = arith.constant 0 : i32
    return %c0_i32, %c0_i32_0 : i32, i32
  }
  func.func @transform_4(%arg0: i32, %arg1: i32) -> (i32, i32) {
    %c0_i32 = arith.constant 0 : i32
    %c0_i32_0 = arith.constant 0 : i32
    %c0_i32_1 = arith.constant 0 : i32
    return %c0_i32, %c0_i32_0 : i32, i32
  }
  func.func @transform_5(%arg0: i32, %arg1: i32) -> (i32, i32) {
    %c0_i32 = arith.constant 0 : i32
    %c0_i32_0 = arith.constant 0 : i32
    %c0_i32_1 = arith.constant 0 : i32
    return %c0_i32, %c0_i32_0 : i32, i32
  }
  func.func @transform_6(%arg0: i32, %arg1: i32) -> (i32, i32) {
    %c0_i32 = arith.constant 0 : i32
    %c0_i32_0 = arith.constant 0 : i32
    %c0_i32_1 = arith.constant 0 : i32
    return %c0_i32, %c0_i32_0 : i32, i32
  }
  func.func @transform_7(%arg0: i32, %arg1: i32) -> (i32, i32) {
    %c0_i32 = arith.constant 0 : i32
    %c0_i32_0 = arith.constant 0 : i32
    %c0_i32_1 = arith.constant 0 : i32
    return %c0_i32, %c0_i32_0 : i32, i32
  }
  func.func @transform_8(%arg0: i32, %arg1: i32) -> (i32, i32) {
    %c0_i32 = arith.constant 0 : i32
    %c0_i32_0 = arith.constant 0 : i32
    %c0_i32_1 = arith.constant 0 : i32
    return %c0_i32, %c0_i32_0 : i32, i32
  }
  func.func @transform_9(%arg0: i32, %arg1: i32) -> (i32, i32, i32) {
    %c0_i32 = arith.constant 0 : i32
    %c0_i32_0 = arith.constant 0 : i32
    %c0_i32_1 = arith.constant 0 : i32
    return %arg0, %c0_i32, %c0_i32_0 : i32, i32, i32
  }
}

</mosaic_0001>

<llo_original>
// kernel: tpu_custom_call.1
$region0: #{tpu_custom_call.1}
  #allocation0 [shape = 'u32[]', space=smem, size = 0x4, offset = 0x4, fixed_abs, tag = 'smem constant byte address 0x4 - core index']
  #allocation1 [shape = 'u32[144,128]{1,0:T(1,128)}', space=vmem, size = 0x12000, scoped, tag = 'internal scratch']
  %s0 = inlined_call_operand.vmem [shape: f32[4,128,8], index: 0, kind: input, shape index: {}]
  %s1 = inlined_call_operand.vmem [shape: f32[8,128], index: 1, kind: input, shape index: {}]
  %s2 = inlined_call_operand.vmem [shape: f32[1,128], index: 2, kind: input, shape index: {}]
  %s3 = inlined_call_operand.hbm [shape: bf16[128,128], index: 3, kind: input, shape index: {}]
  %s4 = inlined_call_operand.vmem [shape: f32[1,128], index: 4, kind: input, shape index: {}]
  %s5 = inlined_call_operand.hbm [shape: bf16[128,256], index: 5, kind: input, shape index: {}]
  %s6 = inlined_call_operand.vmem [shape: f32[1,256], index: 6, kind: input, shape index: {}]
  %s7 = inlined_call_operand.vmem [shape: bf16[256,512], index: 7, kind: input, shape index: {}]
  %s8 = inlined_call_operand.vmem [shape: f32[1,512], index: 8, kind: input, shape index: {}]
  %s9 = inlined_call_operand.hbm [shape: bf16[1,4,512], index: 9, kind: output, shape index: {}]
  %s10 = sld [smem:[#allocation0]]
  $region62: #{tpu_custom_call.1} parent=0
    _
  %s12 = ssub.s32 1, %s10
  %s13 = scalar_select 0, %s12, %s10
  $region1: #{tpu_custom_call.1} parent=0
    #allocation2 [shape = 'u8[32768]{0}', space=vmem, size = 0x8000, scoped, tag = 'input window, operand 3, single buffered']
    #allocation3 [shape = 's32[1]{0}', space=sflag, size = 0x4, scoped, tag = 'scoped memory for tpu_custom_call.1']
    #allocation4 [shape = 's32[1]{0}', space=sflag, size = 0x4, scoped, tag = 'scoped memory for tpu_custom_call.1']
    #allocation5 [shape = 'u8[65536]{0}', space=vmem, size = 0x10000, scoped, tag = 'input window, operand 5, single buffered']
    #allocation6 [shape = 's32[1]{0}', space=sflag, size = 0x4, scoped, tag = 'scoped memory for tpu_custom_call.1']
    #allocation7 [shape = 'u8[4096]{0}', space=vmem, size = 0x1000, scoped, tag = 'output window, operand 0, single buffered']
    %14 = vsyncpa [#allocation3], 0
    %15 = vsyncpa [#allocation6], 0
    %16 = vsyncpa [#allocation4], 0
    // Predicated region
    $region2: #{tpu_custom_call.1} parent=1 // pred_check
      _
    $region3: #{tpu_custom_call.1} parent=1 // pred_check_branch
      %18 = sbr.rel (0) target = $region5
    $region4: #{tpu_custom_call.1} parent=1 // pred_region
      _
    $region5: #{tpu_custom_call.1} parent=1 // pred_fallthru
      _
    // Predicated region
    $region6: #{tpu_custom_call.1} parent=1 // pred_check
      _
    $region7: #{tpu_custom_call.1} parent=1 // pred_check_branch
      %20 = sbr.rel (0) target = $region9
    $region8: #{tpu_custom_call.1} parent=1 // pred_region
      _
    $region9: #{tpu_custom_call.1} parent=1 // pred_fallthru
      _
    // Predicated region
    $region10: #{tpu_custom_call.1} parent=1 // pred_check
      _
    $region11: #{tpu_custom_call.1} parent=1 // pred_check_branch
      %22 = sbr.rel (0) target = $region13
    $region12: #{tpu_custom_call.1} parent=1 // pred_region
      _
    $region13: #{tpu_custom_call.1} parent=1 // pred_fallthru
      _
    // Predicated region
    $region14: #{tpu_custom_call.1} parent=1 // pred_check
      _
    $region15: #{tpu_custom_call.1} parent=1 // pred_check_branch
      %24 = sbr.rel (0) target = $region17
    $region16: #{tpu_custom_call.1} parent=1 // pred_region
      %s26 = ssub.s32 1024, 1024
      %27 = vsyncadd [#allocation3], %s26
      %s28 = sshll.u32 [#allocation2], 4
      %s29 = int_to_ptr.vmem [resolvable:$true] %s28
      %34 = dma.hbm_to_vmem [thread:$0]  %s3, 1024, %s29, [#allocation3], 64, 64, 4
    $region17: #{tpu_custom_call.1} parent=1 // pred_fallthru
      _
    // Predicated region
    $region18: #{tpu_custom_call.1} parent=1 // pred_check
      _
    $region19: #{tpu_custom_call.1} parent=1 // pred_check_branch
      %36 = sbr.rel (0) target = $region21
    $region20: #{tpu_custom_call.1} parent=1 // pred_region
      _
    $region21: #{tpu_custom_call.1} parent=1 // pred_fallthru
      _
    // Predicated region
    $region22: #{tpu_custom_call.1} parent=1 // pred_check
      _
    $region23: #{tpu_custom_call.1} parent=1 // pred_check_branch
      %38 = sbr.rel (0) target = $region25
    $region24: #{tpu_custom_call.1} parent=1 // pred_region
      %s40 = ssub.s32 2048, 2048
      %41 = vsyncadd [#allocation6], %s40
      %s42 = sshll.u32 [#allocation5], 4
      %s43 = int_to_ptr.vmem [resolvable:$true] %s42
      %48 = dma.hbm_to_vmem [thread:$0]  %s5, 2048, %s43, [#allocation6], 128, 128, 8
    $region25: #{tpu_custom_call.1} parent=1 // pred_fallthru
      _
    // Predicated region
    $region26: #{tpu_custom_call.1} parent=1 // pred_check
      _
    $region27: #{tpu_custom_call.1} parent=1 // pred_check_branch
      %50 = sbr.rel (0) target = $region29
    $region28: #{tpu_custom_call.1} parent=1 // pred_region
      _
    $region29: #{tpu_custom_call.1} parent=1 // pred_fallthru
      _
    // Predicated region
    $region30: #{tpu_custom_call.1} parent=1 // pred_check
      _
    $region31: #{tpu_custom_call.1} parent=1 // pred_check_branch
      %52 = sbr.rel (0) target = $region33
    $region32: #{tpu_custom_call.1} parent=1 // pred_region
      _
    $region33: #{tpu_custom_call.1} parent=1 // pred_fallthru
      _
    // Predicated region
    $region34: #{tpu_custom_call.1} parent=1 // pred_check
      _
    $region35: #{tpu_custom_call.1} parent=1 // pred_check_branch
      %54 = sbr.rel (0) target = $region37
    $region36: #{tpu_custom_call.1} parent=1 // pred_region
      _
    $region37: #{tpu_custom_call.1} parent=1 // pred_fallthru
      _
    // Predicated region
    $region38: #{tpu_custom_call.1} parent=1 // pred_check
      _
    $region39: #{tpu_custom_call.1} parent=1 // pred_check_branch
      %56 = sbr.rel (0) target = $region41
    $region40: #{tpu_custom_call.1} parent=1 // pred_region
      %57 = dma.done [#allocation3], 1024
    $region41: #{tpu_custom_call.1} parent=1 // pred_fallthru
      _
    // Predicated region
    $region42: #{tpu_custom_call.1} parent=1 // pred_check
      _
    $region43: #{tpu_custom_call.1} parent=1 // pred_check_branch
      %59 = sbr.rel (0) target = $region45
    $region44: #{tpu_custom_call.1} parent=1 // pred_region
      %60 = dma.done [#allocation6], 2048
    $region45: #{tpu_custom_call.1} parent=1 // pred_fallthru
      _
    %v62 = vld [vmem:[%s0] sm:$0xff]
    %v63 = vld [vmem:[%s0 + $0x8] sm:$0xff]
    %v64 = vld [vmem:[%s0 + $0x10] sm:$0xff]
    %v65 = vld [vmem:[%s0 + $0x18] sm:$0xff]
    %v66 = vld [vmem:[%s0 + $0x20] sm:$0xff]
    %v67 = vld [vmem:[%s0 + $0x28] sm:$0xff]
    %v68 = vld [vmem:[%s0 + $0x30] sm:$0xff]
    %v69 = vld [vmem:[%s0 + $0x38] sm:$0xff]
    %v70 = vld [vmem:[%s0 + $0x40] sm:$0xff]
    %v71 = vld [vmem:[%s0 + $0x48] sm:$0xff]
    %v72 = vld [vmem:[%s0 + $0x50] sm:$0xff]
    %v73 = vld [vmem:[%s0 + $0x58] sm:$0xff]
    %v74 = vld [vmem:[%s0 + $0x60] sm:$0xff]
    %v75 = vld [vmem:[%s0 + $0x68] sm:$0xff]
    %v76 = vld [vmem:[%s0 + $0x70] sm:$0xff]
    %v77 = vld [vmem:[%s0 + $0x78] sm:$0xff]
    %v78 = vld [vmem:[%s0 + $0x80] sm:$0xff]
    %v79 = vld [vmem:[%s0 + $0x88] sm:$0xff]
    %v80 = vld [vmem:[%s0 + $0x90] sm:$0xff]
    %v81 = vld [vmem:[%s0 + $0x98] sm:$0xff]
    %v82 = vld [vmem:[%s0 + $0xa0] sm:$0xff]
    %v83 = vld [vmem:[%s0 + $0xa8] sm:$0xff]
    %v84 = vld [vmem:[%s0 + $0xb0] sm:$0xff]
    %v85 = vld [vmem:[%s0 + $0xb8] sm:$0xff]
    %v86 = vld [vmem:[%s0 + $0xc0] sm:$0xff]
    %v87 = vld [vmem:[%s0 + $0xc8] sm:$0xff]
    %v88 = vld [vmem:[%s0 + $0xd0] sm:$0xff]
    %v89 = vld [vmem:[%s0 + $0xd8] sm:$0xff]
    %v90 = vld [vmem:[%s0 + $0xe0] sm:$0xff]
    %v91 = vld [vmem:[%s0 + $0xe8] sm:$0xff]
    %v92 = vld [vmem:[%s0 + $0xf0] sm:$0xff]
    %v93 = vld [vmem:[%s0 + $0xf8] sm:$0xff]
    %v94 = vld [vmem:[%s0 + $0x100] sm:$0xff]
    %v95 = vld [vmem:[%s0 + $0x108] sm:$0xff]
    %v96 = vld [vmem:[%s0 + $0x110] sm:$0xff]
    %v97 = vld [vmem:[%s0 + $0x118] sm:$0xff]
    %v98 = vld [vmem:[%s0 + $0x120] sm:$0xff]
    %v99 = vld [vmem:[%s0 + $0x128] sm:$0xff]
    %v100 = vld [vmem:[%s0 + $0x130] sm:$0xff]
    %v101 = vld [vmem:[%s0 + $0x138] sm:$0xff]
    %v102 = vld [vmem:[%s0 + $0x140] sm:$0xff]
    %v103 = vld [vmem:[%s0 + $0x148] sm:$0xff]
    %v104 = vld [vmem:[%s0 + $0x150] sm:$0xff]
    %v105 = vld [vmem:[%s0 + $0x158] sm:$0xff]
    %v106 = vld [vmem:[%s0 + $0x160] sm:$0xff]
    %v107 = vld [vmem:[%s0 + $0x168] sm:$0xff]
    %v108 = vld [vmem:[%s0 + $0x170] sm:$0xff]
    %v109 = vld [vmem:[%s0 + $0x178] sm:$0xff]
    %v110 = vld [vmem:[%s0 + $0x180] sm:$0xff]
    %v111 = vld [vmem:[%s0 + $0x188] sm:$0xff]
    %v112 = vld [vmem:[%s0 + $0x190] sm:$0xff]
    %v113 = vld [vmem:[%s0 + $0x198] sm:$0xff]
    %v114 = vld [vmem:[%s0 + $0x1a0] sm:$0xff]
    %v115 = vld [vmem:[%s0 + $0x1a8] sm:$0xff]
    %v116 = vld [vmem:[%s0 + $0x1b0] sm:$0xff]
    %v117 = vld [vmem:[%s0 + $0x1b8] sm:$0xff]
    %v118 = vld [vmem:[%s0 + $0x1c0] sm:$0xff]
    %v119 = vld [vmem:[%s0 + $0x1c8] sm:$0xff]
    %v120 = vld [vmem:[%s0 + $0x1d0] sm:$0xff]
    %v121 = vld [vmem:[%s0 + $0x1d8] sm:$0xff]
    %v122 = vld [vmem:[%s0 + $0x1e0] sm:$0xff]
    %v123 = vld [vmem:[%s0 + $0x1e8] sm:$0xff]
    %v124 = vld [vmem:[%s0 + $0x1f0] sm:$0xff]
    %v125 = vld [vmem:[%s0 + $0x1f8] sm:$0xff]
    %v126 = vld [vmem:[%s1] sm:$0xff]
    %v127 = vld [vmem:[%s2] sm:$0x1]
    %v129 = vlaneseq
    %v130 = vshrl.u32 %v129, 7
    %v131 = vsub.s32 0, %v130
    %v132 = vrot.slane %v127, %v131
    %vm134 = vcmask 64512
    %v136 = vsel %vm134, %v62, 0
    %v139 = vsel %vm134, %v63, 0
    %v142 = vsel %vm134, %v64, 0
    %v145 = vsel %vm134, %v65, 0
    %v148 = vsel %vm134, %v66, 0
    %v151 = vsel %vm134, %v67, 0
    %v154 = vsel %vm134, %v68, 0
    %v157 = vsel %vm134, %v69, 0
    %v160 = vsel %vm134, %v70, 0
    %v163 = vsel %vm134, %v71, 0
    %v166 = vsel %vm134, %v72, 0
    %v169 = vsel %vm134, %v73, 0
    %v172 = vsel %vm134, %v74, 0
    %v175 = vsel %vm134, %v75, 0
    %v178 = vsel %vm134, %v76, 0
    %v181 = vsel %vm134, %v77, 0
    %v184 = vsel %vm134, %v78, 0
    %v187 = vsel %vm134, %v79, 0
    %v190 = vsel %vm134, %v80, 0
    %v193 = vsel %vm134, %v81, 0
    %v196 = vsel %vm134, %v82, 0
    %v199 = vsel %vm134, %v83, 0
    %v202 = vsel %vm134, %v84, 0
    %v205 = vsel %vm134, %v85, 0
    %v208 = vsel %vm134, %v86, 0
    %v211 = vsel %vm134, %v87, 0
    %v214 = vsel %vm134, %v88, 0
    %v217 = vsel %vm134, %v89, 0
    %v220 = vsel %vm134, %v90, 0
    %v223 = vsel %vm134, %v91, 0
    %v226 = vsel %vm134, %v92, 0
    %v229 = vsel %vm134, %v93, 0
    %v232 = vsel %vm134, %v94, 0
    %v235 = vsel %vm134, %v95, 0
    %v238 = vsel %vm134, %v96, 0
    %v241 = vsel %vm134, %v97, 0
    %v244 = vsel %vm134, %v98, 0
    %v247 = vsel %vm134, %v99, 0
    %v250 = vsel %vm134, %v100, 0
    %v253 = vsel %vm134, %v101, 0
    %v256 = vsel %vm134, %v102, 0
    %v259 = vsel %vm134, %v103, 0
    %v262 = vsel %vm134, %v104, 0
    %v265 = vsel %vm134, %v105, 0
    %v268 = vsel %vm134, %v106, 0
    %v271 = vsel %vm134, %v107, 0
    %v274 = vsel %vm134, %v108, 0
    %v277 = vsel %vm134, %v109, 0
    %v280 = vsel %vm134, %v110, 0
    %v283 = vsel %vm134, %v111, 0
    %v286 = vsel %vm134, %v112, 0
    %v289 = vsel %vm134, %v113, 0
    %v292 = vsel %vm134, %v114, 0
    %v295 = vsel %vm134, %v115, 0
    %v298 = vsel %vm134, %v116, 0
    %v301 = vsel %vm134, %v117, 0
    %v304 = vsel %vm134, %v118, 0
    %v307 = vsel %vm134, %v119, 0
    %v310 = vsel %vm134, %v120, 0
    %v313 = vsel %vm134, %v121, 0
    %v316 = vsel %vm134, %v122, 0
    %v319 = vsel %vm134, %v123, 0
    %v322 = vsel %vm134, %v124, 0
    %v325 = vsel %vm134, %v125, 0
    %327 = vmatprep.subr.mxu0 0.0
    %328 = vmatpush1.msra.mxu0 %v126
    %329 = vmatprep.subr.mxu0 0.0
    %330 = vmatpush1.msra.mxu0 0.0
    %331 = vmatprep.subr.mxu0 0.0
    %332 = vmatpush1.msra.mxu0 0.0
    %333 = vmatprep.subr.mxu0 0.0
    %334 = vmatpush1.msra.mxu0 0.0
    %335 = vmatprep.subr.mxu0 0.0
    %336 = vmatpush1.msra.mxu0 0.0
    %337 = vmatprep.subr.mxu0 0.0
    %338 = vmatpush1.msra.mxu0 0.0
    %339 = vmatprep.subr.mxu0 0.0
    %340 = vmatpush1.msra.mxu0 0.0
    %341 = vmatprep.subr.mxu0 0.0
    %342 = vmatpush1.msra.mxu0 0.0
    %343 = vmatprep.subr.mxu0 0.0
    %344 = vmatpush1.msra.mxu0 0.0
    %345 = vmatprep.subr.mxu0 0.0
    %346 = vmatpush1.msra.mxu0 0.0
    %347 = vmatprep.subr.mxu0 0.0
    %348 = vmatpush1.msra.mxu0 0.0
    %349 = vmatprep.subr.mxu0 0.0
    %350 = vmatpush1.msra.mxu0 0.0
    %351 = vmatprep.subr.mxu0 0.0
    %352 = vmatpush1.msra.mxu0 0.0
    %353 = vmatprep.subr.mxu0 0.0
    %354 = vmatpush1.msra.mxu0 0.0
    %355 = vmatprep.subr.mxu0 0.0
    %356 = vmatpush1.msra.mxu0 0.0
    %357 = vmatprep.subr.mxu0 0.0
    %358 = vmatpush1.msra.mxu0 0.0
    %359 = vmatprep.subr.mxu0 0.0
    %360 = vmatpush1.msra.mxu0 0.0
    %361 = vmatprep.subr.mxu0 0.0
    %362 = vmatpush1.msra.mxu0 0.0
    %363 = vmatprep.subr.mxu0 0.0
    %364 = vmatpush1.msra.mxu0 0.0
    %365 = vmatprep.subr.mxu0 0.0
    %366 = vmatpush1.msra.mxu0 0.0
    %367 = vmatprep.subr.mxu0 0.0
    %368 = vmatpush1.msra.mxu0 0.0
    %369 = vmatprep.subr.mxu0 0.0
    %370 = vmatpush1.msra.mxu0 0.0
    %371 = vmatprep.subr.mxu0 0.0
    %372 = vmatpush1.msra.mxu0 0.0
    %373 = vmatprep.subr.mxu0 0.0
    %374 = vmatpush1.msra.mxu0 0.0
    %375 = vmatprep.subr.mxu0 0.0
    %376 = vmatpush1.msra.mxu0 0.0
    %377 = vmatprep.subr.mxu0 0.0
    %378 = vmatpush1.msra.mxu0 0.0
    %379 = vmatprep.subr.mxu0 0.0
    %380 = vmatpush1.msra.mxu0 0.0
    %381 = vmatprep.subr.mxu0 0.0
    %382 = vmatpush1.msra.mxu0 0.0
    %383 = vmatprep.subr.mxu0 0.0
    %384 = vmatpush1.msra.mxu0 0.0
    %385 = vmatprep.subr.mxu0 0.0
    %386 = vmatpush1.msra.mxu0 0.0
    %387 = vmatprep.subr.mxu0 0.0
    %388 = vmatpush1.msra.mxu0 0.0
    %389 = vmatprep.subr.mxu0 0.0
    %390 = vmatpush1.msra.mxu0 0.0
    %391 = vmatprep.mubr.f32.mxu0 0.0
    %392 = vmatmul.mubr.f32.gmra.mrb[0].mxu0 %v136
    %v393 = vpop.f32.mrb[0].mxu0
    %v394 = vadd.f32 %v132, %v393
    %v395 = vpop.f32.mrb[0].mxu0
    %396 = vmatprep.mubr.f32.mxu0 0.0
    %397 = vmatmul.mubr.f32.gmra.mrb[0].mxu0 %v139
    %v398 = vpop.f32.mrb[0].mxu0
    %v399 = vadd.f32 %v132, %v398
    %v400 = vpop.f32.mrb[0].mxu0
    %401 = vmatprep.mubr.f32.mxu0 0.0
    %402 = vmatmul.mubr.f32.gmra.mrb[0].mxu0 %v142
    %v403 = vpop.f32.mrb[0].mxu0
    %v404 = vadd.f32 %v132, %v403
    %v405 = vpop.f32.mrb[0].mxu0
    %406 = vmatprep.mubr.f32.mxu0 0.0
    %407 = vmatmul.mubr.f32.gmra.mrb[0].mxu0 %v145
    %v408 = vpop.f32.mrb[0].mxu0
    %v409 = vadd.f32 %v132, %v408
    %v410 = vpop.f32.mrb[0].mxu0
    %411 = vmatprep.mubr.f32.mxu0 0.0
    %412 = vmatmul.mubr.f32.gmra.mrb[0].mxu0 %v148
    %v413 = vpop.f32.mrb[0].mxu0
    %v414 = vadd.f32 %v132, %v413
    %v415 = vpop.f32.mrb[0].mxu0
    %416 = vmatprep.mubr.f32.mxu0 0.0
    %417 = vmatmul.mubr.f32.gmra.mrb[0].mxu0 %v151
    %v418 = vpop.f32.mrb[0].mxu0
    %v419 = vadd.f32 %v132, %v418
    %v420 = vpop.f32.mrb[0].mxu0
    %421 = vmatprep.mubr.f32.mxu0 0.0
    %422 = vmatmul.mubr.f32.gmra.mrb[0].mxu0 %v154
    %v423 = vpop.f32.mrb[0].mxu0
    %v424 = vadd.f32 %v132, %v423
    %v425 = vpop.f32.mrb[0].mxu0
    %426 = vmatprep.mubr.f32.mxu0 0.0
    %427 = vmatmul.mubr.f32.gmra.mrb[0].mxu0 %v157
    %v428 = vpop.f32.mrb[0].mxu0
    %v429 = vadd.f32 %v132, %v428
    %v430 = vpop.f32.mrb[0].mxu0
    %431 = vmatprep.mubr.f32.mxu0 0.0
    %432 = vmatmul.mubr.f32.gmra.mrb[0].mxu0 %v160
    %v433 = vpop.f32.mrb[0].mxu0
    %v434 = vadd.f32 %v132, %v433
    %v435 = vpop.f32.mrb[0].mxu0
    %436 = vmatprep.mubr.f32.mxu0 0.0
    %437 = vmatmul.mubr.f32.gmra.mrb[0].mxu0 %v163
    %v438 = vpop.f32.mrb[0].mxu0
    %v439 = vadd.f32 %v132, %v438
    %v440 = vpop.f32.mrb[0].mxu0
    %441 = vmatprep.mubr.f32.mxu0 0.0
    %442 = vmatmul.mubr.f32.gmra.mrb[0].mxu0 %v166
    %v443 = vpop.f32.mrb[0].mxu0
    %v444 = vadd.f32 %v132, %v443
    %v445 = vpop.f32.mrb[0].mxu0
    %446 = vmatprep.mubr.f32.mxu0 0.0
    %447 = vmatmul.mubr.f32.gmra.mrb[0].mxu0 %v169
    %v448 = vpop.f32.mrb[0].mxu0
    %v449 = vadd.f32 %v132, %v448
    %v450 = vpop.f32.mrb[0].mxu0
    %451 = vmatprep.mubr.f32.mxu0 0.0
    %452 = vmatmul.mubr.f32.gmra.mrb[0].mxu0 %v172
    %v453 = vpop.f32.mrb[0].mxu0
    %v454 = vadd.f32 %v132, %v453
    %v455 = vpop.f32.mrb[0].mxu0
    %456 = vmatprep.mubr.f32.mxu0 0.0
    %457 = vmatmul.mubr.f32.gmra.mrb[0].mxu0 %v175
    %v458 = vpop.f32.mrb[0].mxu0
    %v459 = vadd.f32 %v132, %v458
    %v460 = vpop.f32.mrb[0].mxu0
    %461 = vmatprep.mubr.f32.mxu0 0.0
    %462 = vmatmul.mubr.f32.gmra.mrb[0].mxu0 %v178
    %v463 = vpop.f32.mrb[0].mxu0
    %v464 = vadd.f32 %v132, %v463
    %v465 = vpop.f32.mrb[0].mxu0
    %466 = vmatprep.mubr.f32.mxu0 0.0
    %467 = vmatmul.mubr.f32.gmra.mrb[0].mxu0 %v181
    %v468 = vpop.f32.mrb[0].mxu0
    %v469 = vadd.f32 %v132, %v468
    %v470 = vpop.f32.mrb[0].mxu0
    %471 = vmatprep.mubr.f32.mxu0 0.0
    %472 = vmatmul.mubr.f32.gmra.mrb[0].mxu0 %v184
    %v473 = vpop.f32.mrb[0].mxu0
    %v474 = vadd.f32 %v132, %v473
    %v475 = vpop.f32.mrb[0].mxu0
    %476 = vmatprep.mubr.f32.mxu0 0.0
    %477 = vmatmul.mubr.f32.gmra.mrb[0].mxu0 %v187
    %v478 = vpop.f32.mrb[0].mxu0
    %v479 = vadd.f32 %v132, %v478
    %v480 = vpop.f32.mrb[0].mxu0
    %481 = vmatprep.mubr.f32.mxu0 0.0
    %482 = vmatmul.mubr.f32.gmra.mrb[0].mxu0 %v190
    %v483 = vpop.f32.mrb[0].mxu0
    %v484 = vadd.f32 %v132, %v483
    %v485 = vpop.f32.mrb[0].mxu0
    %486 = vmatprep.mubr.f32.mxu0 0.0
    %487 = vmatmul.mubr.f32.gmra.mrb[0].mxu0 %v193
    %v488 = vpop.f32.mrb[0].mxu0
    %v489 = vadd.f32 %v132, %v488
    %v490 = vpop.f32.mrb[0].mxu0
    %491 = vmatprep.mubr.f32.mxu0 0.0
    %492 = vmatmul.mubr.f32.gmra.mrb[0].mxu0 %v196
    %v493 = vpop.f32.mrb[0].mxu0
    %v494 = vadd.f32 %v132, %v493
    %v495 = vpop.f32.mrb[0].mxu0
    %496 = vmatprep.mubr.f32.mxu0 0.0
    %497 = vmatmul.mubr.f32.gmra.mrb[0].mxu0 %v199
    %v498 = vpop.f32.mrb[0].mxu0
    %v499 = vadd.f32 %v132, %v498
    %v500 = vpop.f32.mrb[0].mxu0
    %501 = vmatprep.mubr.f32.mxu0 0.0
    %502 = vmatmul.mubr.f32.gmra.mrb[0].mxu0 %v202
    %v503 = vpop.f32.mrb[0].mxu0
    %v504 = vadd.f32 %v132, %v503
    %v505 = vpop.f32.mrb[0].mxu0
    %506 = vmatprep.mubr.f32.mxu0 0.0
    %507 = vmatmul.mubr.f32.gmra.mrb[0].mxu0 %v205
    %v508 = vpop.f32.mrb[0].mxu0
    %v509 = vadd.f32 %v132, %v508
    %v510 = vpop.f32.mrb[0].mxu0
    %511 = vmatprep.mubr.f32.mxu0 0.0
    %512 = vmatmul.mubr.f32.gmra.mrb[0].mxu0 %v208
    %v513 = vpop.f32.mrb[0].mxu0
    %v514 = vadd.f32 %v132, %v513
    %v515 = vpop.f32.mrb[0].mxu0
    %516 = vmatprep.mubr.f32.mxu0 0.0
    %517 = vmatmul.mubr.f32.gmra.mrb[0].mxu0 %v211
    %v518 = vpop.f32.mrb[0].mxu0
    %v519 = vadd.f32 %v132, %v518
    %v520 = vpop.f32.mrb[0].mxu0
    %521 = vmatprep.mubr.f32.mxu0 0.0
    %522 = vmatmul.mubr.f32.gmra.mrb[0].mxu0 %v214
    %v523 = vpop.f32.mrb[0].mxu0
    %v524 = vadd.f32 %v132, %v523
    %v525 = vpop.f32.mrb[0].mxu0
    %526 = vmatprep.mubr.f32.mxu0 0.0
    %527 = vmatmul.mubr.f32.gmra.mrb[0].mxu0 %v217
    %v528 = vpop.f32.mrb[0].mxu0
    %v529 = vadd.f32 %v132, %v528
    %v530 = vpop.f32.mrb[0].mxu0
    %531 = vmatprep.mubr.f32.mxu0 0.0
    %532 = vmatmul.mubr.f32.gmra.mrb[0].mxu0 %v220
    %v533 = vpop.f32.mrb[0].mxu0
    %v534 = vadd.f32 %v132, %v533
    %v535 = vpop.f32.mrb[0].mxu0
    %536 = vmatprep.mubr.f32.mxu0 0.0
    %537 = vmatmul.mubr.f32.gmra.mrb[0].mxu0 %v223
    %v538 = vpop.f32.mrb[0].mxu0
    %v539 = vadd.f32 %v132, %v538
    %v540 = vpop.f32.mrb[0].mxu0
    %541 = vmatprep.mubr.f32.mxu0 0.0
    %542 = vmatmul.mubr.f32.gmra.mrb[0].mxu0 %v226
    %v543 = vpop.f32.mrb[0].mxu0
    %v544 = vadd.f32 %v132, %v543
    %v545 = vpop.f32.mrb[0].mxu0
    %546 = vmatprep.mubr.f32.mxu0 0.0
    %547 = vmatmul.mubr.f32.gmra.mrb[0].mxu0 %v229
    %v548 = vpop.f32.mrb[0].mxu0
    %v549 = vadd.f32 %v132, %v548
    %v550 = vpop.f32.mrb[0].mxu0
    %551 = vmatprep.mubr.f32.mxu0 0.0
    %552 = vmatmul.mubr.f32.gmra.mrb[0].mxu0 %v232
    %v553 = vpop.f32.mrb[0].mxu0
    %v554 = vadd.f32 %v132, %v553
    %v555 = vpop.f32.mrb[0].mxu0
    %556 = vmatprep.mubr.f32.mxu0 0.0
    %557 = vmatmul.mubr.f32.gmra.mrb[0].mxu0 %v235
    %v558 = vpop.f32.mrb[0].mxu0
    %v559 = vadd.f32 %v132, %v558
    %v560 = vpop.f32.mrb[0].mxu0
    %561 = vmatprep.mubr.f32.mxu0 0.0
    %562 = vmatmul.mubr.f32.gmra.mrb[0].mxu0 %v238
    %v563 = vpop.f32.mrb[0].mxu0
    %v564 = vadd.f32 %v132, %v563
    %v565 = vpop.f32.mrb[0].mxu0
    %566 = vmatprep.mubr.f32.mxu0 0.0
    %567 = vmatmul.mubr.f32.gmra.mrb[0].mxu0 %v241
    %v568 = vpop.f32.mrb[0].mxu0
    %v569 = vadd.f32 %v132, %v568
    %v570 = vpop.f32.mrb[0].mxu0
    %571 = vmatprep.mubr.f32.mxu0 0.0
    %572 = vmatmul.mubr.f32.gmra.mrb[0].mxu0 %v244
    %v573 = vpop.f32.mrb[0].mxu0
    %v574 = vadd.f32 %v132, %v573
    %v575 = vpop.f32.mrb[0].mxu0
    %576 = vmatprep.mubr.f32.mxu0 0.0
    %577 = vmatmul.mubr.f32.gmra.mrb[0].mxu0 %v247
    %v578 = vpop.f32.mrb[0].mxu0
    %v579 = vadd.f32 %v132, %v578
    %v580 = vpop.f32.mrb[0].mxu0
    %581 = vmatprep.mubr.f32.mxu0 0.0
    %582 = vmatmul.mubr.f32.gmra.mrb[0].mxu0 %v250
    %v583 = vpop.f32.mrb[0].mxu0
    %v584 = vadd.f32 %v132, %v583
    %v585 = vpop.f32.mrb[0].mxu0
    %586 = vmatprep.mubr.f32.mxu0 0.0
    %587 = vmatmul.mubr.f32.gmra.mrb[0].mxu0 %v253
    %v588 = vpop.f32.mrb[0].mxu0
    %v589 = vadd.f32 %v132, %v588
    %v590 = vpop.f32.mrb[0].mxu0
    %591 = vmatprep.mubr.f32.mxu0 0.0
    %592 = vmatmul.mubr.f32.gmra.mrb[0].mxu0 %v256
    %v593 = vpop.f32.mrb[0].mxu0
    %v594 = vadd.f32 %v132, %v593
    %v595 = vpop.f32.mrb[0].mxu0
    %596 = vmatprep.mubr.f32.mxu0 0.0
    %597 = vmatmul.mubr.f32.gmra.mrb[0].mxu0 %v259
    %v598 = vpop.f32.mrb[0].mxu0
    %v599 = vadd.f32 %v132, %v598
    %v600 = vpop.f32.mrb[0].mxu0
    %601 = vmatprep.mubr.f32.mxu0 0.0
    %602 = vmatmul.mubr.f32.gmra.mrb[0].mxu0 %v262
    %v603 = vpop.f32.mrb[0].mxu0
    %v604 = vadd.f32 %v132, %v603
    %v605 = vpop.f32.mrb[0].mxu0
    %606 = vmatprep.mubr.f32.mxu0 0.0
    %607 = vmatmul.mubr.f32.gmra.mrb[0].mxu0 %v265
    %v608 = vpop.f32.mrb[0].mxu0
    %v609 = vadd.f32 %v132, %v608
    %v610 = vpop.f32.mrb[0].mxu0
    %611 = vmatprep.mubr.f32.mxu0 0.0
    %612 = vmatmul.mubr.f32.gmra.mrb[0].mxu0 %v268
    %v613 = vpop.f32.mrb[0].mxu0
    %v614 = vadd.f32 %v132, %v613
    %v615 = vpop.f32.mrb[0].mxu0
    %616 = vmatprep.mubr.f32.mxu0 0.0
    %617 = vmatmul.mubr.f32.gmra.mrb[0].mxu0 %v271
    %v618 = vpop.f32.mrb[0].mxu0
    %v619 = vadd.f32 %v132, %v618
    %v620 = vpop.f32.mrb[0].mxu0
    %621 = vmatprep.mubr.f32.mxu0 0.0
    %622 = vmatmul.mubr.f32.gmra.mrb[0].mxu0 %v274
    %v623 = vpop.f32.mrb[0].mxu0
    %v624 = vadd.f32 %v132, %v623
    %v625 = vpop.f32.mrb[0].mxu0
    %626 = vmatprep.mubr.f32.mxu0 0.0
    %627 = vmatmul.mubr.f32.gmra.mrb[0].mxu0 %v277
    %v628 = vpop.f32.mrb[0].mxu0
    %v629 = vadd.f32 %v132, %v628
    %v630 = vpop.f32.mrb[0].mxu0
    %631 = vmatprep.mubr.f32.mxu0 0.0
    %632 = vmatmul.mubr.f32.gmra.mrb[0].mxu0 %v280
    %v633 = vpop.f32.mrb[0].mxu0
    %v634 = vadd.f32 %v132, %v633
    %v635 = vpop.f32.mrb[0].mxu0
    %636 = vmatprep.mubr.f32.mxu0 0.0
    %637 = vmatmul.mubr.f32.gmra.mrb[0].mxu0 %v283
    %v638 = vpop.f32.mrb[0].mxu0
    %v639 = vadd.f32 %v132, %v638
    %v640 = vpop.f32.mrb[0].mxu0
    %641 = vmatprep.mubr.f32.mxu0 0.0
    %642 = vmatmul.mubr.f32.gmra.mrb[0].mxu0 %v286
    %v643 = vpop.f32.mrb[0].mxu0
    %v644 = vadd.f32 %v132, %v643
    %v645 = vpop.f32.mrb[0].mxu0
    %646 = vmatprep.mubr.f32.mxu0 0.0
    %647 = vmatmul.mubr.f32.gmra.mrb[0].mxu0 %v289
    %v648 = vpop.f32.mrb[0].mxu0
    %v649 = vadd.f32 %v132, %v648
    %v650 = vpop.f32.mrb[0].mxu0
    %651 = vmatprep.mubr.f32.mxu0 0.0
    %652 = vmatmul.mubr.f32.gmra.mrb[0].mxu0 %v292
    %v653 = vpop.f32.mrb[0].mxu0
    %v654 = vadd.f32 %v132, %v653
    %v655 = vpop.f32.mrb[0].mxu0
    %656 = vmatprep.mubr.f32.mxu0 0.0
    %657 = vmatmul.mubr.f32.gmra.mrb[0].mxu0 %v295
    %v658 = vpop.f32.mrb[0].mxu0
    %v659 = vadd.f32 %v132, %v658
    %v660 = vpop.f32.mrb[0].mxu0
    %661 = vmatprep.mubr.f32.mxu0 0.0
    %662 = vmatmul.mubr.f32.gmra.mrb[0].mxu0 %v298
    %v663 = vpop.f32.mrb[0].mxu0
    %v664 = vadd.f32 %v132, %v663
    %v665 = vpop.f32.mrb[0].mxu0
    %666 = vmatprep.mubr.f32.mxu0 0.0
    %667 = vmatmul.mubr.f32.gmra.mrb[0].mxu0 %v301
    %v668 = vpop.f32.mrb[0].mxu0
    %v669 = vadd.f32 %v132, %v668
    %v670 = vpop.f32.mrb[0].mxu0
    %671 = vmatprep.mubr.f32.mxu0 0.0
    %672 = vmatmul.mubr.f32.gmra.mrb[0].mxu0 %v304
    %v673 = vpop.f32.mrb[0].mxu0
    %v674 = vadd.f32 %v132, %v673
    %v675 = vpop.f32.mrb[0].mxu0
    %676 = vmatprep.mubr.f32.mxu0 0.0
    %677 = vmatmul.mubr.f32.gmra.mrb[0].mxu0 %v307
    %v678 = vpop.f32.mrb[0].mxu0
    %v679 = vadd.f32 %v132, %v678
    %v680 = vpop.f32.mrb[0].mxu0
    %681 = vmatprep.mubr.f32.mxu0 0.0
    %682 = vmatmul.mubr.f32.gmra.mrb[0].mxu0 %v310
    %v683 = vpop.f32.mrb[0].mxu0
    %v684 = vadd.f32 %v132, %v683
    %v685 = vpop.f32.mrb[0].mxu0
    %686 = vmatprep.mubr.f32.mxu0 0.0
    %687 = vmatmul.mubr.f32.gmra.mrb[0].mxu0 %v313
    %v688 = vpop.f32.mrb[0].mxu0
    %v689 = vadd.f32 %v132, %v688
    %v690 = vpop.f32.mrb[0].mxu0
    %691 = vmatprep.mubr.f32.mxu0 0.0
    %692 = vmatmul.mubr.f32.gmra.mrb[0].mxu0 %v316
    %v693 = vpop.f32.mrb[0].mxu0
    %v694 = vadd.f32 %v132, %v693
    %v695 = vpop.f32.mrb[0].mxu0
    %696 = vmatprep.mubr.f32.mxu0 0.0
    %697 = vmatmul.mubr.f32.gmra.mrb[0].mxu0 %v319
    %v698 = vpop.f32.mrb[0].mxu0
    %v699 = vadd.f32 %v132, %v698
    %v700 = vpop.f32.mrb[0].mxu0
    %701 = vmatprep.mubr.f32.mxu0 0.0
    %702 = vmatmul.mubr.f32.gmra.mrb[0].mxu0 %v322
    %v703 = vpop.f32.mrb[0].mxu0
    %v704 = vadd.f32 %v132, %v703
    %v705 = vpop.f32.mrb[0].mxu0
    %706 = vmatprep.mubr.f32.mxu0 0.0
    %707 = vmatmul.mubr.f32.gmra.mrb[0].mxu0 %v325
    %v708 = vpop.f32.mrb[0].mxu0
    %v709 = vadd.f32 %v132, %v708
    %v710 = vpop.f32.mrb[0].mxu0
    %711 = vdwg.mxu0
    %v712 = vmax.f32 %v394, 0.0
    %v713 = vmax.f32 %v399, 0.0
    %v714 = vmax.f32 %v404, 0.0
    %v715 = vmax.f32 %v409, 0.0
    %v716 = vmax.f32 %v414, 0.0
    %v717 = vmax.f32 %v419, 0.0
    %v718 = vmax.f32 %v424, 0.0
    %v719 = vmax.f32 %v429, 0.0
    %v720 = vmax.f32 %v434, 0.0
    %v721 = vmax.f32 %v439, 0.0
    %v722 = vmax.f32 %v444, 0.0
    %v723 = vmax.f32 %v449, 0.0
    %v724 = vmax.f32 %v454, 0.0
    %v725 = vmax.f32 %v459, 0.0
    %v726 = vmax.f32 %v464, 0.0
    %v727 = vmax.f32 %v469, 0.0
    %v728 = vmax.f32 %v474, 0.0
    %v729 = vmax.f32 %v479, 0.0
    %v730 = vmax.f32 %v484, 0.0
    %v731 = vmax.f32 %v489, 0.0
    %v732 = vmax.f32 %v494, 0.0
    %v733 = vmax.f32 %v499, 0.0
    %v734 = vmax.f32 %v504, 0.0
    %v735 = vmax.f32 %v509, 0.0
    %v736 = vmax.f32 %v514, 0.0
    %v737 = vmax.f32 %v519, 0.0
    %v738 = vmax.f32 %v524, 0.0
    %v739 = vmax.f32 %v529, 0.0
    %v740 = vmax.f32 %v534, 0.0
    %v741 = vmax.f32 %v539, 0.0
    %v742 = vmax.f32 %v544, 0.0
    %v743 = vmax.f32 %v549, 0.0
    %v744 = vmax.f32 %v554, 0.0
    %v745 = vmax.f32 %v559, 0.0
    %v746 = vmax.f32 %v564, 0.0
    %v747 = vmax.f32 %v569, 0.0
    %v748 = vmax.f32 %v574, 0.0
    %v749 = vmax.f32 %v579, 0.0
    %v750 = vmax.f32 %v584, 0.0
    %v751 = vmax.f32 %v589, 0.0
    %v752 = vmax.f32 %v594, 0.0
    %v753 = vmax.f32 %v599, 0.0
    %v754 = vmax.f32 %v604, 0.0
    %v755 = vmax.f32 %v609, 0.0
    %v756 = vmax.f32 %v614, 0.0
    %v757 = vmax.f32 %v619, 0.0
    %v758 = vmax.f32 %v624, 0.0
    %v759 = vmax.f32 %v629, 0.0
    %v760 = vmax.f32 %v634, 0.0
    %v761 = vmax.f32 %v639, 0.0
    %v762 = vmax.f32 %v644, 0.0
    %v763 = vmax.f32 %v649, 0.0
    %v764 = vmax.f32 %v654, 0.0
    %v765 = vmax.f32 %v659, 0.0
    %v766 = vmax.f32 %v664, 0.0
    %v767 = vmax.f32 %v669, 0.0
    %v768 = vmax.f32 %v674, 0.0
    %v769 = vmax.f32 %v679, 0.0
    %v770 = vmax.f32 %v684, 0.0
    %v771 = vmax.f32 %v689, 0.0
    %v772 = vmax.f32 %v694, 0.0
    %v773 = vmax.f32 %v699, 0.0
    %v774 = vmax.f32 %v704, 0.0
    %v775 = vmax.f32 %v709, 0.0
    %v776 = vpack.c.bf16 %v713, %v712
    %v777 = vpack.c.bf16 %v715, %v714
    %v778 = vpack.c.bf16 %v717, %v716
    %v779 = vpack.c.bf16 %v719, %v718
    %v780 = vpack.c.bf16 %v721, %v720
    %v781 = vpack.c.bf16 %v723, %v722
    %v782 = vpack.c.bf16 %v725, %v724
    %v783 = vpack.c.bf16 %v727, %v726
    %v784 = vpack.c.bf16 %v729, %v728
    %v785 = vpack.c.bf16 %v731, %v730
    %v786 = vpack.c.bf16 %v733, %v732
    %v787 = vpack.c.bf16 %v735, %v734
    %v788 = vpack.c.bf16 %v737, %v736
    %v789 = vpack.c.bf16 %v739, %v738
    %v790 = vpack.c.bf16 %v741, %v740
    %v791 = vpack.c.bf16 %v743, %v742
    %v792 = vpack.c.bf16 %v745, %v744
    %v793 = vpack.c.bf16 %v747, %v746
    %v794 = vpack.c.bf16 %v749, %v748
    %v795 = vpack.c.bf16 %v751, %v750
    %v796 = vpack.c.bf16 %v753, %v752
    %v797 = vpack.c.bf16 %v755, %v754
    %v798 = vpack.c.bf16 %v757, %v756
    %v799 = vpack.c.bf16 %v759, %v758
    %v800 = vpack.c.bf16 %v761, %v760
    %v801 = vpack.c.bf16 %v763, %v762
    %v802 = vpack.c.bf16 %v765, %v764
    %v803 = vpack.c.bf16 %v767, %v766
    %v804 = vpack.c.bf16 %v769, %v768
    %v805 = vpack.c.bf16 %v771, %v770
    %v806 = vpack.c.bf16 %v773, %v772
    %v807 = vpack.c.bf16 %v775, %v774
    %v808 = vld [vmem:[#allocation2] sm:$0xf]
    %v809 = vld [vmem:[#allocation2 + $0x4] sm:$0xf]
    %v810 = vld [vmem:[#allocation2 + $0x8] sm:$0xf]
    %v811 = vld [vmem:[#allocation2 + $0xc] sm:$0xf]
    %v812 = vld [vmem:[#allocation2 + $0x10] sm:$0xf]
    %v813 = vld [vmem:[#allocation2 + $0x14] sm:$0xf]
    %v814 = vld [vmem:[#allocation2 + $0x18] sm:$0xf]
    %v815 = vld [vmem:[#allocation2 + $0x1c] sm:$0xf]
    %v816 = vld [vmem:[#allocation2 + $0x20] sm:$0xf]
    %v817 = vld [vmem:[#allocation2 + $0x24] sm:$0xf]
    %v818 = vld [vmem:[#allocation2 + $0x28] sm:$0xf]
    %v819 = vld [vmem:[#allocation2 + $0x2c] sm:$0xf]
    %v820 = vld [vmem:[#allocation2 + $0x30] sm:$0xf]
    %v821 = vld [vmem:[#allocation2 + $0x34] sm:$0xf]
    %v822 = vld [vmem:[#allocation2 + $0x38] sm:$0xf]
    %v823 = vld [vmem:[#allocation2 + $0x3c] sm:$0xf]
    %v824 = vld [vmem:[%s4] sm:$0x1]
    %v826 = vlaneseq
    %v827 = vshrl.u32 %v826, 7
    %v828 = vsub.s32 0, %v827
    %v829 = vrot.slane %v824, %v828
    %v847 = vunpack.c.l.b16 %v808
    %v848 = vunpack.c.l.b16 %v809
    %v849 = vunpack.c.l.b16 %v810
    %v850 = vunpack.c.l.b16 %v811
    %v851 = vunpack.c.l.b16 %v812
    %v852 = vunpack.c.l.b16 %v813
    %v853 = vunpack.c.l.b16 %v814
    %v854 = vunpack.c.l.b16 %v815
    %v855 = vunpack.c.l.b16 %v816
    %v856 = vunpack.c.l.b16 %v817
    %v857 = vunpack.c.l.b16 %v818
    %v858 = vunpack.c.l.b16 %v819
    %v859 = vunpack.c.l.b16 %v820
    %v860 = vunpack.c.l.b16 %v821
    %v861 = vunpack.c.l.b16 %v822
    %v862 = vunpack.c.l.b16 %v823
    %v863 = vpack.c.b16 %v848, %v847
    %v864 = vpack.c.b16 %v850, %v849
    %v865 = vpack.c.b16 %v852, %v851
    %v866 = vpack.c.b16 %v854, %v853
    %v867 = vpack.c.b16 %v856, %v855
    %v868 = vpack.c.b16 %v858, %v857
    %v869 = vpack.c.b16 %v860, %v859
    %v870 = vpack.c.b16 %v862, %v861
    %879 = vmatprep.subr.bf16.mxu0 0
    %880 = vmatpush1.bf16.msra.mxu0 %v863
    %881 = vmatprep.subr.bf16.mxu0 0
    %882 = vmatpush1.bf16.msra.mxu0 %v864
    %883 = vmatprep.subr.bf16.mxu0 0
    %884 = vmatpush1.bf16.msra.mxu0 %v865
    %885 = vmatprep.subr.bf16.mxu0 0
    %886 = vmatpush1.bf16.msra.mxu0 %v866
    %887 = vmatprep.subr.bf16.mxu0 0
    %888 = vmatpush1.bf16.msra.mxu0 %v867
    %889 = vmatprep.subr.bf16.mxu0 0
    %890 = vmatpush1.bf16.msra.mxu0 %v868
    %891 = vmatprep.subr.bf16.mxu0 0
    %892 = vmatpush1.bf16.msra.mxu0 %v869
    %893 = vmatprep.subr.bf16.mxu0 0
    %894 = vmatpush1.bf16.msra.mxu0 %v870
    %895 = vmatprep.subr.bf16.mxu0 0
    %896 = vmatpush1.bf16.msra.mxu0 0
    %897 = vmatprep.subr.bf16.mxu0 0
    %898 = vmatpush1.bf16.msra.mxu0 0
    %899 = vmatprep.subr.bf16.mxu0 0
    %900 = vmatpush1.bf16.msra.mxu0 0
    %901 = vmatprep.subr.bf16.mxu0 0
    %902 = vmatpush1.bf16.msra.mxu0 0
    %903 = vmatprep.subr.bf16.mxu0 0
    %904 = vmatpush1.bf16.msra.mxu0 0
    %905 = vmatprep.subr.bf16.mxu0 0
    %906 = vmatpush1.bf16.msra.mxu0 0
    %907 = vmatprep.subr.bf16.mxu0 0
    %908 = vmatpush1.bf16.msra.mxu0 0
    %909 = vmatprep.subr.bf16.mxu0 0
    %910 = vmatpush1.bf16.msra.mxu0 0
    %911 = vmatprep.mubr.bf16.mxu0 0
    %912 = vmatmul.mubr.bf16.gmra.mrb[0].mxu0 %v776
    %v913 = vpop.f32.mrb[0].mxu0
    %v914 = vadd.f32 %v829, %v913
    %v915 = vpop.f32.mrb[0].mxu0
    %v916 = vpop.f32.mrb[0].mxu0
    %v917 = vadd.f32 %v829, %v916
    %v918 = vpop.f32.mrb[0].mxu0
    %919 = vmatprep.mubr.bf16.mxu0 0
    %920 = vmatmul.mubr.bf16.gmra.mrb[0].mxu0 %v777
    %v921 = vpop.f32.mrb[0].mxu0
    %v922 = vadd.f32 %v829, %v921
    %v923 = vpop.f32.mrb[0].mxu0
    %v924 = vpop.f32.mrb[0].mxu0
    %v925 = vadd.f32 %v829, %v924
    %v926 = vpop.f32.mrb[0].mxu0
    %927 = vmatprep.mubr.bf16.mxu0 0
    %928 = vmatmul.mubr.bf16.gmra.mrb[0].mxu0 %v778
    %v929 = vpop.f32.mrb[0].mxu0
    %v930 = vadd.f32 %v829, %v929
    %v931 = vpop.f32.mrb[0].mxu0
    %v932 = vpop.f32.mrb[0].mxu0
    %v933 = vadd.f32 %v829, %v932
    %v934 = vpop.f32.mrb[0].mxu0
    %935 = vmatprep.mubr.bf16.mxu0 0
    %936 = vmatmul.mubr.bf16.gmra.mrb[0].mxu0 %v779
    %v937 = vpop.f32.mrb[0].mxu0
    %v938 = vadd.f32 %v829, %v937
    %v939 = vpop.f32.mrb[0].mxu0
    %v940 = vpop.f32.mrb[0].mxu0
    %v941 = vadd.f32 %v829, %v940
    %v942 = vpop.f32.mrb[0].mxu0
    %943 = vmatprep.mubr.bf16.mxu0 0
    %944 = vmatmul.mubr.bf16.gmra.mrb[0].mxu0 %v780
    %v945 = vpop.f32.mrb[0].mxu0
    %v946 = vadd.f32 %v829, %v945
    %v947 = vpop.f32.mrb[0].mxu0
    %v948 = vpop.f32.mrb[0].mxu0
    %v949 = vadd.f32 %v829, %v948
    %v950 = vpop.f32.mrb[0].mxu0
    %951 = vmatprep.mubr.bf16.mxu0 0
    %952 = vmatmul.mubr.bf16.gmra.mrb[0].mxu0 %v781
    %v953 = vpop.f32.mrb[0].mxu0
    %v954 = vadd.f32 %v829, %v953
    %v955 = vpop.f32.mrb[0].mxu0
    %v956 = vpop.f32.mrb[0].mxu0
    %v957 = vadd.f32 %v829, %v956
    %v958 = vpop.f32.mrb[0].mxu0
    %959 = vmatprep.mubr.bf16.mxu0 0
    %960 = vmatmul.mubr.bf16.gmra.mrb[0].mxu0 %v782
    %v961 = vpop.f32.mrb[0].mxu0
    %v962 = vadd.f32 %v829, %v961
    %v963 = vpop.f32.mrb[0].mxu0
    %v964 = vpop.f32.mrb[0].mxu0
    %v965 = vadd.f32 %v829, %v964
    %v966 = vpop.f32.mrb[0].mxu0
    %967 = vmatprep.mubr.bf16.mxu0 0
    %968 = vmatmul.mubr.bf16.gmra.mrb[0].mxu0 %v783
    %v969 = vpop.f32.mrb[0].mxu0
    %v970 = vadd.f32 %v829, %v969
    %v971 = vpop.f32.mrb[0].mxu0
    %v972 = vpop.f32.mrb[0].mxu0
    %v973 = vadd.f32 %v829, %v972
    %v974 = vpop.f32.mrb[0].mxu0
    %975 = vmatprep.mubr.bf16.mxu0 0
    %976 = vmatmul.mubr.bf16.gmra.mrb[0].mxu0 %v784
    %v977 = vpop.f32.mrb[0].mxu0
    %v978 = vadd.f32 %v829, %v977
    %v979 = vpop.f32.mrb[0].mxu0
    %v980 = vpop.f32.mrb[0].mxu0
    %v981 = vadd.f32 %v829, %v980
    %v982 = vpop.f32.mrb[0].mxu0
    %983 = vmatprep.mubr.bf16.mxu0 0
    %984 = vmatmul.mubr.bf16.gmra.mrb[0].mxu0 %v785
    %v985 = vpop.f32.mrb[0].mxu0
    %v986 = vadd.f32 %v829, %v985
    %v987 = vpop.f32.mrb[0].mxu0
    %v988 = vpop.f32.mrb[0].mxu0
    %v989 = vadd.f32 %v829, %v988
    %v990 = vpop.f32.mrb[0].mxu0
    %991 = vmatprep.mubr.bf16.mxu0 0
    %992 = vmatmul.mubr.bf16.gmra.mrb[0].mxu0 %v786
    %v993 = vpop.f32.mrb[0].mxu0
    %v994 = vadd.f32 %v829, %v993
    %v995 = vpop.f32.mrb[0].mxu0
    %v996 = vpop.f32.mrb[0].mxu0
    %v997 = vadd.f32 %v829, %v996
    %v998 = vpop.f32.mrb[0].mxu0
    %999 = vmatprep.mubr.bf16.mxu0 0
    %1000 = vmatmul.mubr.bf16.gmra.mrb[0].mxu0 %v787
    %v1001 = vpop.f32.mrb[0].mxu0
    %v1002 = vadd.f32 %v829, %v1001
    %v1003 = vpop.f32.mrb[0].mxu0
    %v1004 = vpop.f32.mrb[0].mxu0
    %v1005 = vadd.f32 %v829, %v1004
    %v1006 = vpop.f32.mrb[0].mxu0
    %1007 = vmatprep.mubr.bf16.mxu0 0
    %1008 = vmatmul.mubr.bf16.gmra.mrb[0].mxu0 %v788
    %v1009 = vpop.f32.mrb[0].mxu0
    %v1010 = vadd.f32 %v829, %v1009
    %v1011 = vpop.f32.mrb[0].mxu0
    %v1012 = vpop.f32.mrb[0].mxu0
    %v1013 = vadd.f32 %v829, %v1012
    %v1014 = vpop.f32.mrb[0].mxu0
    %1015 = vmatprep.mubr.bf16.mxu0 0
    %1016 = vmatmul.mubr.bf16.gmra.mrb[0].mxu0 %v789
    %v1017 = vpop.f32.mrb[0].mxu0
    %v1018 = vadd.f32 %v829, %v1017
    %v1019 = vpop.f32.mrb[0].mxu0
    %v1020 = vpop.f32.mrb[0].mxu0
    %v1021 = vadd.f32 %v829, %v1020
    %v1022 = vpop.f32.mrb[0].mxu0
    %1023 = vmatprep.mubr.bf16.mxu0 0
    %1024 = vmatmul.mubr.bf16.gmra.mrb[0].mxu0 %v790
    %v1025 = vpop.f32.mrb[0].mxu0
    %v1026 = vadd.f32 %v829, %v1025
    %v1027 = vpop.f32.mrb[0].mxu0
    %v1028 = vpop.f32.mrb[0].mxu0
    %v1029 = vadd.f32 %v829, %v1028
    %v1030 = vpop.f32.mrb[0].mxu0
    %1031 = vmatprep.mubr.bf16.mxu0 0
    %1032 = vmatmul.mubr.bf16.gmra.mrb[0].mxu0 %v791
    %v1033 = vpop.f32.mrb[0].mxu0
    %v1034 = vadd.f32 %v829, %v1033
    %v1035 = vpop.f32.mrb[0].mxu0
    %v1036 = vpop.f32.mrb[0].mxu0
    %v1037 = vadd.f32 %v829, %v1036
    %v1038 = vpop.f32.mrb[0].mxu0
    %1039 = vmatprep.mubr.bf16.mxu0 0
    %1040 = vmatmul.mubr.bf16.gmra.mrb[0].mxu0 %v792
    %v1041 = vpop.f32.mrb[0].mxu0
    %v1042 = vadd.f32 %v829, %v1041
    %v1043 = vpop.f32.mrb[0].mxu0
    %v1044 = vpop.f32.mrb[0].mxu0
    %v1045 = vadd.f32 %v829, %v1044
    %v1046 = vpop.f32.mrb[0].mxu0
    %1047 = vmatprep.mubr.bf16.mxu0 0
    %1048 = vmatmul.mubr.bf16.gmra.mrb[0].mxu0 %v793
    %v1049 = vpop.f32.mrb[0].mxu0
    %v1050 = vadd.f32 %v829, %v1049
    %v1051 = vpop.f32.mrb[0].mxu0
    %v1052 = vpop.f32.mrb[0].mxu0
    %v1053 = vadd.f32 %v829, %v1052
    %v1054 = vpop.f32.mrb[0].mxu0
    %1055 = vmatprep.mubr.bf16.mxu0 0
    %1056 = vmatmul.mubr.bf16.gmra.mrb[0].mxu0 %v794
    %v1057 = vpop.f32.mrb[0].mxu0
    %v1058 = vadd.f32 %v829, %v1057
    %v1059 = vpop.f32.mrb[0].mxu0
    %v1060 = vpop.f32.mrb[0].mxu0
    %v1061 = vadd.f32 %v829, %v1060
    %v1062 = vpop.f32.mrb[0].mxu0
    %1063 = vmatprep.mubr.bf16.mxu0 0
    %1064 = vmatmul.mubr.bf16.gmra.mrb[0].mxu0 %v795
    %v1065 = vpop.f32.mrb[0].mxu0
    %v1066 = vadd.f32 %v829, %v1065
    %v1067 = vpop.f32.mrb[0].mxu0
    %v1068 = vpop.f32.mrb[0].mxu0
    %v1069 = vadd.f32 %v829, %v1068
    %v1070 = vpop.f32.mrb[0].mxu0
    %1071 = vmatprep.mubr.bf16.mxu0 0
    %1072 = vmatmul.mubr.bf16.gmra.mrb[0].mxu0 %v796
    %v1073 = vpop.f32.mrb[0].mxu0
    %v1074 = vadd.f32 %v829, %v1073
    %v1075 = vpop.f32.mrb[0].mxu0
    %v1076 = vpop.f32.mrb[0].mxu0
    %v1077 = vadd.f32 %v829, %v1076
    %v1078 = vpop.f32.mrb[0].mxu0
    %1079 = vmatprep.mubr.bf16.mxu0 0
    %1080 = vmatmul.mubr.bf16.gmra.mrb[0].mxu0 %v797
    %v1081 = vpop.f32.mrb[0].mxu0
    %v1082 = vadd.f32 %v829, %v1081
    %v1083 = vpop.f32.mrb[0].mxu0
    %v1084 = vpop.f32.mrb[0].mxu0
    %v1085 = vadd.f32 %v829, %v1084
    %v1086 = vpop.f32.mrb[0].mxu0
    %1087 = vmatprep.mubr.bf16.mxu0 0
    %1088 = vmatmul.mubr.bf16.gmra.mrb[0].mxu0 %v798
    %v1089 = vpop.f32.mrb[0].mxu0
    %v1090 = vadd.f32 %v829, %v1089
    %v1091 = vpop.f32.mrb[0].mxu0
    %v1092 = vpop.f32.mrb[0].mxu0
    %v1093 = vadd.f32 %v829, %v1092
    %v1094 = vpop.f32.mrb[0].mxu0
    %1095 = vmatprep.mubr.bf16.mxu0 0
    %1096 = vmatmul.mubr.bf16.gmra.mrb[0].mxu0 %v799
    %v1097 = vpop.f32.mrb[0].mxu0
    %v1098 = vadd.f32 %v829, %v1097
    %v1099 = vpop.f32.mrb[0].mxu0
    %v1100 = vpop.f32.mrb[0].mxu0
    %v1101 = vadd.f32 %v829, %v1100
    %v1102 = vpop.f32.mrb[0].mxu0
    %1103 = vmatprep.mubr.bf16.mxu0 0
    %1104 = vmatmul.mubr.bf16.gmra.mrb[0].mxu0 %v800
    %v1105 = vpop.f32.mrb[0].mxu0
    %v1106 = vadd.f32 %v829, %v1105
    %v1107 = vpop.f32.mrb[0].mxu0
    %v1108 = vpop.f32.mrb[0].mxu0
    %v1109 = vadd.f32 %v829, %v1108
    %v1110 = vpop.f32.mrb[0].mxu0
    %1111 = vmatprep.mubr.bf16.mxu0 0
    %1112 = vmatmul.mubr.bf16.gmra.mrb[0].mxu0 %v801
    %v1113 = vpop.f32.mrb[0].mxu0
    %v1114 = vadd.f32 %v829, %v1113
    %v1115 = vpop.f32.mrb[0].mxu0
    %v1116 = vpop.f32.mrb[0].mxu0
    %v1117 = vadd.f32 %v829, %v1116
    %v1118 = vpop.f32.mrb[0].mxu0
    %1119 = vmatprep.mubr.bf16.mxu0 0
    %1120 = vmatmul.mubr.bf16.gmra.mrb[0].mxu0 %v802
    %v1121 = vpop.f32.mrb[0].mxu0
    %v1122 = vadd.f32 %v829, %v1121
    %v1123 = vpop.f32.mrb[0].mxu0
    %v1124 = vpop.f32.mrb[0].mxu0
    %v1125 = vadd.f32 %v829, %v1124
    %v1126 = vpop.f32.mrb[0].mxu0
    %1127 = vmatprep.mubr.bf16.mxu0 0
    %1128 = vmatmul.mubr.bf16.gmra.mrb[0].mxu0 %v803
    %v1129 = vpop.f32.mrb[0].mxu0
    %v1130 = vadd.f32 %v829, %v1129
    %v1131 = vpop.f32.mrb[0].mxu0
    %v1132 = vpop.f32.mrb[0].mxu0
    %v1133 = vadd.f32 %v829, %v1132
    %v1134 = vpop.f32.mrb[0].mxu0
    %1135 = vmatprep.mubr.bf16.mxu0 0
    %1136 = vmatmul.mubr.bf16.gmra.mrb[0].mxu0 %v804
    %v1137 = vpop.f32.mrb[0].mxu0
    %v1138 = vadd.f32 %v829, %v1137
    %v1139 = vpop.f32.mrb[0].mxu0
    %v1140 = vpop.f32.mrb[0].mxu0
    %v1141 = vadd.f32 %v829, %v1140
    %v1142 = vpop.f32.mrb[0].mxu0
    %1143 = vmatprep.mubr.bf16.mxu0 0
    %1144 = vmatmul.mubr.bf16.gmra.mrb[0].mxu0 %v805
    %v1145 = vpop.f32.mrb[0].mxu0
    %v1146 = vadd.f32 %v829, %v1145
    %v1147 = vpop.f32.mrb[0].mxu0
    %v1148 = vpop.f32.mrb[0].mxu0
    %v1149 = vadd.f32 %v829, %v1148
    %v1150 = vpop.f32.mrb[0].mxu0
    %1151 = vmatprep.mubr.bf16.mxu0 0
    %1152 = vmatmul.mubr.bf16.gmra.mrb[0].mxu0 %v806
    %v1153 = vpop.f32.mrb[0].mxu0
    %v1154 = vadd.f32 %v829, %v1153
    %v1155 = vpop.f32.mrb[0].mxu0
    %v1156 = vpop.f32.mrb[0].mxu0
    %v1157 = vadd.f32 %v829, %v1156
    %v1158 = vpop.f32.mrb[0].mxu0
    %1159 = vmatprep.mubr.bf16.mxu0 0
    %1160 = vmatmul.mubr.bf16.gmra.mrb[0].mxu0 %v807
    %v1161 = vpop.f32.mrb[0].mxu0
    %v1162 = vadd.f32 %v829, %v1161
    %v1163 = vpop.f32.mrb[0].mxu0
    %v1164 = vpop.f32.mrb[0].mxu0
    %v1165 = vadd.f32 %v829, %v1164
    %v1166 = vpop.f32.mrb[0].mxu0
    %1167 = vdwg.mxu0
    %v1168 = vmax.f32 %v914, 0.0
    %v1169 = vmax.f32 %v917, 0.0
    %v1170 = vmax.f32 %v922, 0.0
    %v1171 = vmax.f32 %v925, 0.0
    %v1172 = vmax.f32 %v930, 0.0
    %v1173 = vmax.f32 %v933, 0.0
    %v1174 = vmax.f32 %v938, 0.0
    %v1175 = vmax.f32 %v941, 0.0
    %v1176 = vmax.f32 %v946, 0.0
    %v1177 = vmax.f32 %v949, 0.0
    %v1178 = vmax.f32 %v954, 0.0
    %v1179 = vmax.f32 %v957, 0.0
    %v1180 = vmax.f32 %v962, 0.0
    %v1181 = vmax.f32 %v965, 0.0
    %v1182 = vmax.f32 %v970, 0.0
    %v1183 = vmax.f32 %v973, 0.0
    %v1184 = vmax.f32 %v978, 0.0
    %v1185 = vmax.f32 %v981, 0.0
    %v1186 = vmax.f32 %v986, 0.0
    %v1187 = vmax.f32 %v989, 0.0
    %v1188 = vmax.f32 %v994, 0.0
    %v1189 = vmax.f32 %v997, 0.0
    %v1190 = vmax.f32 %v1002, 0.0
    %v1191 = vmax.f32 %v1005, 0.0
    %v1192 = vmax.f32 %v1010, 0.0
    %v1193 = vmax.f32 %v1013, 0.0
    %v1194 = vmax.f32 %v1018, 0.0
    %v1195 = vmax.f32 %v1021, 0.0
    %v1196 = vmax.f32 %v1026, 0.0
    %v1197 = vmax.f32 %v1029, 0.0
    %v1198 = vmax.f32 %v1034, 0.0
    %v1199 = vmax.f32 %v1037, 0.0
    %v1200 = vmax.f32 %v1042, 0.0
    %v1201 = vmax.f32 %v1045, 0.0
    %v1202 = vmax.f32 %v1050, 0.0
    %v1203 = vmax.f32 %v1053, 0.0
    %v1204 = vmax.f32 %v1058, 0.0
    %v1205 = vmax.f32 %v1061, 0.0
    %v1206 = vmax.f32 %v1066, 0.0
    %v1207 = vmax.f32 %v1069, 0.0
    %v1208 = vmax.f32 %v1074, 0.0
    %v1209 = vmax.f32 %v1077, 0.0
    %v1210 = vmax.f32 %v1082, 0.0
    %v1211 = vmax.f32 %v1085, 0.0
    %v1212 = vmax.f32 %v1090, 0.0
    %v1213 = vmax.f32 %v1093, 0.0
    %v1214 = vmax.f32 %v1098, 0.0
    %v1215 = vmax.f32 %v1101, 0.0
    %v1216 = vmax.f32 %v1106, 0.0
    %v1217 = vmax.f32 %v1109, 0.0
    %v1218 = vmax.f32 %v1114, 0.0
    %v1219 = vmax.f32 %v1117, 0.0
    %v1220 = vmax.f32 %v1122, 0.0
    %v1221 = vmax.f32 %v1125, 0.0
    %v1222 = vmax.f32 %v1130, 0.0
    %v1223 = vmax.f32 %v1133, 0.0
    %v1224 = vmax.f32 %v1138, 0.0
    %v1225 = vmax.f32 %v1141, 0.0
    %v1226 = vmax.f32 %v1146, 0.0
    %v1227 = vmax.f32 %v1149, 0.0
    %v1228 = vmax.f32 %v1154, 0.0
    %v1229 = vmax.f32 %v1157, 0.0
    %v1230 = vmax.f32 %v1162, 0.0
    %v1231 = vmax.f32 %v1165, 0.0
    %v1232 = vpack.c.bf16 %v1169, %v1168
    %v1233 = vpack.c.bf16 %v1171, %v1170
    %v1234 = vpack.c.bf16 %v1173, %v1172
    %v1235 = vpack.c.bf16 %v1175, %v1174
    %v1236 = vpack.c.bf16 %v1177, %v1176
    %v1237 = vpack.c.bf16 %v1179, %v1178
    %v1238 = vpack.c.bf16 %v1181, %v1180
    %v1239 = vpack.c.bf16 %v1183, %v1182
    %v1240 = vpack.c.bf16 %v1185, %v1184
    %v1241 = vpack.c.bf16 %v1187, %v1186
    %v1242 = vpack.c.bf16 %v1189, %v1188
    %v1243 = vpack.c.bf16 %v1191, %v1190
    %v1244 = vpack.c.bf16 %v1193, %v1192
    %v1245 = vpack.c.bf16 %v1195, %v1194
    %v1246 = vpack.c.bf16 %v1197, %v1196
    %v1247 = vpack.c.bf16 %v1199, %v1198
    %v1248 = vpack.c.bf16 %v1201, %v1200
    %v1249 = vpack.c.bf16 %v1203, %v1202
    %v1250 = vpack.c.bf16 %v1205, %v1204
    %v1251 = vpack.c.bf16 %v1207, %v1206
    %v1252 = vpack.c.bf16 %v1209, %v1208
    %v1253 = vpack.c.bf16 %v1211, %v1210
    %v1254 = vpack.c.bf16 %v1213, %v1212
    %v1255 = vpack.c.bf16 %v1215, %v1214
    %v1256 = vpack.c.bf16 %v1217, %v1216
    %v1257 = vpack.c.bf16 %v1219, %v1218
    %v1258 = vpack.c.bf16 %v1221, %v1220
    %v1259 = vpack.c.bf16 %v1223, %v1222
    %v1260 = vpack.c.bf16 %v1225, %v1224
    %v1261 = vpack.c.bf16 %v1227, %v1226
    %v1262 = vpack.c.bf16 %v1229, %v1228
    %v1263 = vpack.c.bf16 %v1231, %v1230
    %v1264 = vld [vmem:[#allocation5] sm:$0xff]
    %v1265 = vld [vmem:[#allocation5 + $0x8] sm:$0xff]
    %v1266 = vld [vmem:[#allocation5 + $0x10] sm:$0xff]
    %v1267 = vld [vmem:[#allocation5 + $0x18] sm:$0xff]
    %v1268 = vld [vmem:[#allocation5 + $0x20] sm:$0xff]
    %v1269 = vld [vmem:[#allocation5 + $0x28] sm:$0xff]
    %v1270 = vld [vmem:[#allocation5 + $0x30] sm:$0xff]
    %v1271 = vld [vmem:[#allocation5 + $0x38] sm:$0xff]
    %v1272 = vld [vmem:[#allocation5 + $0x40] sm:$0xff]
    %v1273 = vld [vmem:[#allocation5 + $0x48] sm:$0xff]
    %v1274 = vld [vmem:[#allocation5 + $0x50] sm:$0xff]
    %v1275 = vld [vmem:[#allocation5 + $0x58] sm:$0xff]
    %v1276 = vld [vmem:[#allocation5 + $0x60] sm:$0xff]
    %v1277 = vld [vmem:[#allocation5 + $0x68] sm:$0xff]
    %v1278 = vld [vmem:[#allocation5 + $0x70] sm:$0xff]
    %v1279 = vld [vmem:[#allocation5 + $0x78] sm:$0xff]
    %v1280 = vld [vmem:[%s6] sm:$0x3]
    %v1282 = vlaneseq
    %v1283 = vshrl.u32 %v1282, 7
    %v1284 = vsub.s32 0, %v1283
    %v1285 = vrot.slane %v1280, %v1284
    %v1286 = vlaneseq
    %v1287 = vshrl.u32 %v1286, 7
    %v1288 = vsub.s32 1, %v1287
    %v1289 = vrot.slane %v1280, %v1288
    %v1308 = vunpack.c.l.b16 %v1264
    %v1309 = vunpack.c.h.b16 %v1264
    %v1310 = vunpack.c.l.b16 %v1265
    %v1311 = vunpack.c.h.b16 %v1265
    %v1312 = vunpack.c.l.b16 %v1266
    %v1313 = vunpack.c.h.b16 %v1266
    %v1314 = vunpack.c.l.b16 %v1267
    %v1315 = vunpack.c.h.b16 %v1267
    %v1316 = vunpack.c.l.b16 %v1268
    %v1317 = vunpack.c.h.b16 %v1268
    %v1318 = vunpack.c.l.b16 %v1269
    %v1319 = vunpack.c.h.b16 %v1269
    %v1320 = vunpack.c.l.b16 %v1270
    %v1321 = vunpack.c.h.b16 %v1270
    %v1322 = vunpack.c.l.b16 %v1271
    %v1323 = vunpack.c.h.b16 %v1271
    %v1324 = vunpack.c.l.b16 %v1272
    %v1325 = vunpack.c.h.b16 %v1272
    %v1326 = vunpack.c.l.b16 %v1273
    %v1327 = vunpack.c.h.b16 %v1273
    %v1328 = vunpack.c.l.b16 %v1274
    %v1329 = vunpack.c.h.b16 %v1274
    %v1330 = vunpack.c.l.b16 %v1275
    %v1331 = vunpack.c.h.b16 %v1275
    %v1332 = vunpack.c.l.b16 %v1276
    %v1333 = vunpack.c.h.b16 %v1276
    %v1334 = vunpack.c.l.b16 %v1277
    %v1335 = vunpack.c.h.b16 %v1277
    %v1336 = vunpack.c.l.b16 %v1278
    %v1337 = vunpack.c.h.b16 %v1278
    %v1338 = vunpack.c.l.b16 %v1279
    %v1339 = vunpack.c.h.b16 %v1279
    %v1340 = vpack.c.b16 %v1310, %v1308
    %v1341 = vpack.c.b16 %v1311, %v1309
    %v1342 = vpack.c.b16 %v1314, %v1312
    %v1343 = vpack.c.b16 %v1315, %v1313
    %v1344 = vpack.c.b16 %v1318, %v1316
    %v1345 = vpack.c.b16 %v1319, %v1317
    %v1346 = vpack.c.b16 %v1322, %v1320
    %v1347 = vpack.c.b16 %v1323, %v1321
    %v1348 = vpack.c.b16 %v1326, %v1324
    %v1349 = vpack.c.b16 %v1327, %v1325
    %v1350 = vpack.c.b16 %v1330, %v1328
    %v1351 = vpack.c.b16 %v1331, %v1329
    %v1352 = vpack.c.b16 %v1334, %v1332
    %v1353 = vpack.c.b16 %v1335, %v1333
    %v1354 = vpack.c.b16 %v1338, %v1336
    %v1355 = vpack.c.b16 %v1339, %v1337
    %1372 = vmatprep.subr.bf16.mxu0 %v1341
    %1373 = vmatpush1.bf16.msra.mxu0 %v1340
    %1374 = vmatprep.subr.bf16.mxu0 %v1343
    %1375 = vmatpush1.bf16.msra.mxu0 %v1342
    %1376 = vmatprep.subr.bf16.mxu0 %v1345
    %1377 = vmatpush1.bf16.msra.mxu0 %v1344
    %1378 = vmatprep.subr.bf16.mxu0 %v1347
    %1379 = vmatpush1.bf16.msra.mxu0 %v1346
    %1380 = vmatprep.subr.bf16.mxu0 %v1349
    %1381 = vmatpush1.bf16.msra.mxu0 %v1348
    %1382 = vmatprep.subr.bf16.mxu0 %v1351
    %1383 = vmatpush1.bf16.msra.mxu0 %v1350
    %1384 = vmatprep.subr.bf16.mxu0 %v1353
    %1385 = vmatpush1.bf16.msra.mxu0 %v1352
    %1386 = vmatprep.subr.bf16.mxu0 %v1355
    %1387 = vmatpush1.bf16.msra.mxu0 %v1354
    %1388 = vmatprep.subr.bf16.mxu0 0
    %1389 = vmatpush1.bf16.msra.mxu0 0
    %1390 = vmatprep.subr.bf16.mxu0 0
    %1391 = vmatpush1.bf16.msra.mxu0 0
    %1392 = vmatprep.subr.bf16.mxu0 0
    %1393 = vmatpush1.bf16.msra.mxu0 0
    %1394 = vmatprep.subr.bf16.mxu0 0
    %1395 = vmatpush1.bf16.msra.mxu0 0
    %1396 = vmatprep.subr.bf16.mxu0 0
    %1397 = vmatpush1.bf16.msra.mxu0 0
    %1398 = vmatprep.subr.bf16.mxu0 0
    %1399 = vmatpush1.bf16.msra.mxu0 0
    %1400 = vmatprep.subr.bf16.mxu0 0
    %1401 = vmatpush1.bf16.msra.mxu0 0
    %1402 = vmatprep.subr.bf16.mxu0 0
    %1403 = vmatpush1.bf16.msra.mxu0 0
    %1404 = vmatprep.mubr.bf16.mxu0 0
    %1405 = vmatmul.mubr.bf16.gmra.mrb[0].mxu0 %v1232
    %v1406 = vpop.f32.mrb[0].mxu0
    %v1407 = vadd.f32 %v1285, %v1406
    %v1408 = vpop.f32.mrb[0].mxu0
    %v1409 = vadd.f32 %v1289, %v1408
    %v1410 = vpop.f32.mrb[0].mxu0
    %v1411 = vadd.f32 %v1285, %v1410
    %v1412 = vpop.f32.mrb[0].mxu0
    %v1413 = vadd.f32 %v1289, %v1412
    %1414 = vmatprep.mubr.bf16.mxu0 0
    %1415 = vmatmul.mubr.bf16.gmra.mrb[0].mxu0 %v1233
    %v1416 = vpop.f32.mrb[0].mxu0
    %v1417 = vadd.f32 %v1285, %v1416
    %v1418 = vpop.f32.mrb[0].mxu0
    %v1419 = vadd.f32 %v1289, %v1418
    %v1420 = vpop.f32.mrb[0].mxu0
    %v1421 = vadd.f32 %v1285, %v1420
    %v1422 = vpop.f32.mrb[0].mxu0
    %v1423 = vadd.f32 %v1289, %v1422
    %1424 = vmatprep.mubr.bf16.mxu0 0
    %1425 = vmatmul.mubr.bf16.gmra.mrb[0].mxu0 %v1234
    %v1426 = vpop.f32.mrb[0].mxu0
    %v1427 = vadd.f32 %v1285, %v1426
    %v1428 = vpop.f32.mrb[0].mxu0
    %v1429 = vadd.f32 %v1289, %v1428
    %v1430 = vpop.f32.mrb[0].mxu0
    %v1431 = vadd.f32 %v1285, %v1430
    %v1432 = vpop.f32.mrb[0].mxu0
    %v1433 = vadd.f32 %v1289, %v1432
    %1434 = vmatprep.mubr.bf16.mxu0 0
    %1435 = vmatmul.mubr.bf16.gmra.mrb[0].mxu0 %v1235
    %v1436 = vpop.f32.mrb[0].mxu0
    %v1437 = vadd.f32 %v1285, %v1436
    %v1438 = vpop.f32.mrb[0].mxu0
    %v1439 = vadd.f32 %v1289, %v1438
    %v1440 = vpop.f32.mrb[0].mxu0
    %v1441 = vadd.f32 %v1285, %v1440
    %v1442 = vpop.f32.mrb[0].mxu0
    %v1443 = vadd.f32 %v1289, %v1442
    %1444 = vmatprep.mubr.bf16.mxu0 0
    %1445 = vmatmul.mubr.bf16.gmra.mrb[0].mxu0 %v1236
    %v1446 = vpop.f32.mrb[0].mxu0
    %v1447 = vadd.f32 %v1285, %v1446
    %v1448 = vpop.f32.mrb[0].mxu0
    %v1449 = vadd.f32 %v1289, %v1448
    %v1450 = vpop.f32.mrb[0].mxu0
    %v1451 = vadd.f32 %v1285, %v1450
    %v1452 = vpop.f32.mrb[0].mxu0
    %v1453 = vadd.f32 %v1289, %v1452
    %1454 = vmatprep.mubr.bf16.mxu0 0
    %1455 = vmatmul.mubr.bf16.gmra.mrb[0].mxu0 %v1237
    %v1456 = vpop.f32.mrb[0].mxu0
    %v1457 = vadd.f32 %v1285, %v1456
    %v1458 = vpop.f32.mrb[0].mxu0
    %v1459 = vadd.f32 %v1289, %v1458
    %v1460 = vpop.f32.mrb[0].mxu0
    %v1461 = vadd.f32 %v1285, %v1460
    %v1462 = vpop.f32.mrb[0].mxu0
    %v1463 = vadd.f32 %v1289, %v1462
    %1464 = vmatprep.mubr.bf16.mxu0 0
    %1465 = vmatmul.mubr.bf16.gmra.mrb[0].mxu0 %v1238
    %v1466 = vpop.f32.mrb[0].mxu0
    %v1467 = vadd.f32 %v1285, %v1466
    %v1468 = vpop.f32.mrb[0].mxu0
    %v1469 = vadd.f32 %v1289, %v1468
    %v1470 = vpop.f32.mrb[0].mxu0
    %v1471 = vadd.f32 %v1285, %v1470
    %v1472 = vpop.f32.mrb[0].mxu0
    %v1473 = vadd.f32 %v1289, %v1472
    %1474 = vmatprep.mubr.bf16.mxu0 0
    %1475 = vmatmul.mubr.bf16.gmra.mrb[0].mxu0 %v1239
    %v1476 = vpop.f32.mrb[0].mxu0
    %v1477 = vadd.f32 %v1285, %v1476
    %v1478 = vpop.f32.mrb[0].mxu0
    %v1479 = vadd.f32 %v1289, %v1478
    %v1480 = vpop.f32.mrb[0].mxu0
    %v1481 = vadd.f32 %v1285, %v1480
    %v1482 = vpop.f32.mrb[0].mxu0
    %v1483 = vadd.f32 %v1289, %v1482
    %1484 = vmatprep.mubr.bf16.mxu0 0
    %1485 = vmatmul.mubr.bf16.gmra.mrb[0].mxu0 %v1240
    %v1486 = vpop.f32.mrb[0].mxu0
    %v1487 = vadd.f32 %v1285, %v1486
    %v1488 = vpop.f32.mrb[0].mxu0
    %v1489 = vadd.f32 %v1289, %v1488
    %v1490 = vpop.f32.mrb[0].mxu0
    %v1491 = vadd.f32 %v1285, %v1490
    %v1492 = vpop.f32.mrb[0].mxu0
    %v1493 = vadd.f32 %v1289, %v1492
    %1494 = vmatprep.mubr.bf16.mxu0 0
    %1495 = vmatmul.mubr.bf16.gmra.mrb[0].mxu0 %v1241
    %v1496 = vpop.f32.mrb[0].mxu0
    %v1497 = vadd.f32 %v1285, %v1496
    %v1498 = vpop.f32.mrb[0].mxu0
    %v1499 = vadd.f32 %v1289, %v1498
    %v1500 = vpop.f32.mrb[0].mxu0
    %v1501 = vadd.f32 %v1285, %v1500
    %v1502 = vpop.f32.mrb[0].mxu0
    %v1503 = vadd.f32 %v1289, %v1502
    %1504 = vmatprep.mubr.bf16.mxu0 0
    %1505 = vmatmul.mubr.bf16.gmra.mrb[0].mxu0 %v1242
    %v1506 = vpop.f32.mrb[0].mxu0
    %v1507 = vadd.f32 %v1285, %v1506
    %v1508 = vpop.f32.mrb[0].mxu0
    %v1509 = vadd.f32 %v1289, %v1508
    %v1510 = vpop.f32.mrb[0].mxu0
    %v1511 = vadd.f32 %v1285, %v1510
    %v1512 = vpop.f32.mrb[0].mxu0
    %v1513 = vadd.f32 %v1289, %v1512
    %1514 = vmatprep.mubr.bf16.mxu0 0
    %1515 = vmatmul.mubr.bf16.gmra.mrb[0].mxu0 %v1243
    %v1516 = vpop.f32.mrb[0].mxu0
    %v1517 = vadd.f32 %v1285, %v1516
    %v1518 = vpop.f32.mrb[0].mxu0
    %v1519 = vadd.f32 %v1289, %v1518
    %v1520 = vpop.f32.mrb[0].mxu0
    %v1521 = vadd.f32 %v1285, %v1520
    %v1522 = vpop.f32.mrb[0].mxu0
    %v1523 = vadd.f32 %v1289, %v1522
    %1524 = vmatprep.mubr.bf16.mxu0 0
    %1525 = vmatmul.mubr.bf16.gmra.mrb[0].mxu0 %v1244
    %v1526 = vpop.f32.mrb[0].mxu0
    %v1527 = vadd.f32 %v1285, %v1526
    %v1528 = vpop.f32.mrb[0].mxu0
    %v1529 = vadd.f32 %v1289, %v1528
    %v1530 = vpop.f32.mrb[0].mxu0
    %v1531 = vadd.f32 %v1285, %v1530
    %v1532 = vpop.f32.mrb[0].mxu0
    %v1533 = vadd.f32 %v1289, %v1532
    %1534 = vmatprep.mubr.bf16.mxu0 0
    %1535 = vmatmul.mubr.bf16.gmra.mrb[0].mxu0 %v1245
    %v1536 = vpop.f32.mrb[0].mxu0
    %v1537 = vadd.f32 %v1285, %v1536
    %v1538 = vpop.f32.mrb[0].mxu0
    %v1539 = vadd.f32 %v1289, %v1538
    %v1540 = vpop.f32.mrb[0].mxu0
    %v1541 = vadd.f32 %v1285, %v1540
    %v1542 = vpop.f32.mrb[0].mxu0
    %v1543 = vadd.f32 %v1289, %v1542
    %1544 = vmatprep.mubr.bf16.mxu0 0
    %1545 = vmatmul.mubr.bf16.gmra.mrb[0].mxu0 %v1246
    %v1546 = vpop.f32.mrb[0].mxu0
    %v1547 = vadd.f32 %v1285, %v1546
    %v1548 = vpop.f32.mrb[0].mxu0
    %v1549 = vadd.f32 %v1289, %v1548
    %v1550 = vpop.f32.mrb[0].mxu0
    %v1551 = vadd.f32 %v1285, %v1550
    %v1552 = vpop.f32.mrb[0].mxu0
    %v1553 = vadd.f32 %v1289, %v1552
    %1554 = vmatprep.mubr.bf16.mxu0 0
    %1555 = vmatmul.mubr.bf16.gmra.mrb[0].mxu0 %v1247
    %v1556 = vpop.f32.mrb[0].mxu0
    %v1557 = vadd.f32 %v1285, %v1556
    %v1558 = vpop.f32.mrb[0].mxu0
    %v1559 = vadd.f32 %v1289, %v1558
    %v1560 = vpop.f32.mrb[0].mxu0
    %v1561 = vadd.f32 %v1285, %v1560
    %v1562 = vpop.f32.mrb[0].mxu0
    %v1563 = vadd.f32 %v1289, %v1562
    %1564 = vmatprep.mubr.bf16.mxu0 0
    %1565 = vmatmul.mubr.bf16.gmra.mrb[0].mxu0 %v1248
    %v1566 = vpop.f32.mrb[0].mxu0
    %v1567 = vadd.f32 %v1285, %v1566
    %v1568 = vpop.f32.mrb[0].mxu0
    %v1569 = vadd.f32 %v1289, %v1568
    %v1570 = vpop.f32.mrb[0].mxu0
    %v1571 = vadd.f32 %v1285, %v1570
    %v1572 = vpop.f32.mrb[0].mxu0
    %v1573 = vadd.f32 %v1289, %v1572
    %1574 = vmatprep.mubr.bf16.mxu0 0
    %1575 = vmatmul.mubr.bf16.gmra.mrb[0].mxu0 %v1249
    %v1576 = vpop.f32.mrb[0].mxu0
    %v1577 = vadd.f32 %v1285, %v1576
    %v1578 = vpop.f32.mrb[0].mxu0
    %v1579 = vadd.f32 %v1289, %v1578
    %v1580 = vpop.f32.mrb[0].mxu0
    %v1581 = vadd.f32 %v1285, %v1580
    %v1582 = vpop.f32.mrb[0].mxu0
    %v1583 = vadd.f32 %v1289, %v1582
    %1584 = vmatprep.mubr.bf16.mxu0 0
    %1585 = vmatmul.mubr.bf16.gmra.mrb[0].mxu0 %v1250
    %v1586 = vpop.f32.mrb[0].mxu0
    %v1587 = vadd.f32 %v1285, %v1586
    %v1588 = vpop.f32.mrb[0].mxu0
    %v1589 = vadd.f32 %v1289, %v1588
    %v1590 = vpop.f32.mrb[0].mxu0
    %v1591 = vadd.f32 %v1285, %v1590
    %v1592 = vpop.f32.mrb[0].mxu0
    %v1593 = vadd.f32 %v1289, %v1592
    %1594 = vmatprep.mubr.bf16.mxu0 0
    %1595 = vmatmul.mubr.bf16.gmra.mrb[0].mxu0 %v1251
    %v1596 = vpop.f32.mrb[0].mxu0
    %v1597 = vadd.f32 %v1285, %v1596
    %v1598 = vpop.f32.mrb[0].mxu0
    %v1599 = vadd.f32 %v1289, %v1598
    %v1600 = vpop.f32.mrb[0].mxu0
    %v1601 = vadd.f32 %v1285, %v1600
    %v1602 = vpop.f32.mrb[0].mxu0
    %v1603 = vadd.f32 %v1289, %v1602
    %1604 = vmatprep.mubr.bf16.mxu0 0
    %1605 = vmatmul.mubr.bf16.gmra.mrb[0].mxu0 %v1252
    %v1606 = vpop.f32.mrb[0].mxu0
    %v1607 = vadd.f32 %v1285, %v1606
    %v1608 = vpop.f32.mrb[0].mxu0
    %v1609 = vadd.f32 %v1289, %v1608
    %v1610 = vpop.f32.mrb[0].mxu0
    %v1611 = vadd.f32 %v1285, %v1610
    %v1612 = vpop.f32.mrb[0].mxu0
    %v1613 = vadd.f32 %v1289, %v1612
    %1614 = vmatprep.mubr.bf16.mxu0 0
    %1615 = vmatmul.mubr.bf16.gmra.mrb[0].mxu0 %v1253
    %v1616 = vpop.f32.mrb[0].mxu0
    %v1617 = vadd.f32 %v1285, %v1616
    %v1618 = vpop.f32.mrb[0].mxu0
    %v1619 = vadd.f32 %v1289, %v1618
    %v1620 = vpop.f32.mrb[0].mxu0
    %v1621 = vadd.f32 %v1285, %v1620
    %v1622 = vpop.f32.mrb[0].mxu0
    %v1623 = vadd.f32 %v1289, %v1622
    %1624 = vmatprep.mubr.bf16.mxu0 0
    %1625 = vmatmul.mubr.bf16.gmra.mrb[0].mxu0 %v1254
    %v1626 = vpop.f32.mrb[0].mxu0
    %v1627 = vadd.f32 %v1285, %v1626
    %v1628 = vpop.f32.mrb[0].mxu0
    %v1629 = vadd.f32 %v1289, %v1628
    %v1630 = vpop.f32.mrb[0].mxu0
    %v1631 = vadd.f32 %v1285, %v1630
    %v1632 = vpop.f32.mrb[0].mxu0
    %v1633 = vadd.f32 %v1289, %v1632
    %1634 = vmatprep.mubr.bf16.mxu0 0
    %1635 = vmatmul.mubr.bf16.gmra.mrb[0].mxu0 %v1255
    %v1636 = vpop.f32.mrb[0].mxu0
    %v1637 = vadd.f32 %v1285, %v1636
    %v1638 = vpop.f32.mrb[0].mxu0
    %v1639 = vadd.f32 %v1289, %v1638
    %v1640 = vpop.f32.mrb[0].mxu0
    %v1641 = vadd.f32 %v1285, %v1640
    %v1642 = vpop.f32.mrb[0].mxu0
    %v1643 = vadd.f32 %v1289, %v1642
    %1644 = vmatprep.mubr.bf16.mxu0 0
    %1645 = vmatmul.mubr.bf16.gmra.mrb[0].mxu0 %v1256
    %v1646 = vpop.f32.mrb[0].mxu0
    %v1647 = vadd.f32 %v1285, %v1646
    %v1648 = vpop.f32.mrb[0].mxu0
    %v1649 = vadd.f32 %v1289, %v1648
    %v1650 = vpop.f32.mrb[0].mxu0
    %v1651 = vadd.f32 %v1285, %v1650
    %v1652 = vpop.f32.mrb[0].mxu0
    %v1653 = vadd.f32 %v1289, %v1652
    %1654 = vmatprep.mubr.bf16.mxu0 0
    %1655 = vmatmul.mubr.bf16.gmra.mrb[0].mxu0 %v1257
    %v1656 = vpop.f32.mrb[0].mxu0
    %v1657 = vadd.f32 %v1285, %v1656
    %v1658 = vpop.f32.mrb[0].mxu0
    %v1659 = vadd.f32 %v1289, %v1658
    %v1660 = vpop.f32.mrb[0].mxu0
    %v1661 = vadd.f32 %v1285, %v1660
    %v1662 = vpop.f32.mrb[0].mxu0
    %v1663 = vadd.f32 %v1289, %v1662
    %1664 = vmatprep.mubr.bf16.mxu0 0
    %1665 = vmatmul.mubr.bf16.gmra.mrb[0].mxu0 %v1258
    %v1666 = vpop.f32.mrb[0].mxu0
    %v1667 = vadd.f32 %v1285, %v1666
    %v1668 = vpop.f32.mrb[0].mxu0
    %v1669 = vadd.f32 %v1289, %v1668
    %v1670 = vpop.f32.mrb[0].mxu0
    %v1671 = vadd.f32 %v1285, %v1670
    %v1672 = vpop.f32.mrb[0].mxu0
    %v1673 = vadd.f32 %v1289, %v1672
    %1674 = vmatprep.mubr.bf16.mxu0 0
    %1675 = vmatmul.mubr.bf16.gmra.mrb[0].mxu0 %v1259
    %v1676 = vpop.f32.mrb[0].mxu0
    %v1677 = vadd.f32 %v1285, %v1676
    %v1678 = vpop.f32.mrb[0].mxu0
    %v1679 = vadd.f32 %v1289, %v1678
    %v1680 = vpop.f32.mrb[0].mxu0
    %v1681 = vadd.f32 %v1285, %v1680
    %v1682 = vpop.f32.mrb[0].mxu0
    %v1683 = vadd.f32 %v1289, %v1682
    %1684 = vmatprep.mubr.bf16.mxu0 0
    %1685 = vmatmul.mubr.bf16.gmra.mrb[0].mxu0 %v1260
    %v1686 = vpop.f32.mrb[0].mxu0
    %v1687 = vadd.f32 %v1285, %v1686
    %v1688 = vpop.f32.mrb[0].mxu0
    %v1689 = vadd.f32 %v1289, %v1688
    %v1690 = vpop.f32.mrb[0].mxu0
    %v1691 = vadd.f32 %v1285, %v1690
    %v1692 = vpop.f32.mrb[0].mxu0
    %v1693 = vadd.f32 %v1289, %v1692
    %1694 = vmatprep.mubr.bf16.mxu0 0
    %1695 = vmatmul.mubr.bf16.gmra.mrb[0].mxu0 %v1261
    %v1696 = vpop.f32.mrb[0].mxu0
    %v1697 = vadd.f32 %v1285, %v1696
    %v1698 = vpop.f32.mrb[0].mxu0
    %v1699 = vadd.f32 %v1289, %v1698
    %v1700 = vpop.f32.mrb[0].mxu0
    %v1701 = vadd.f32 %v1285, %v1700
    %v1702 = vpop.f32.mrb[0].mxu0
    %v1703 = vadd.f32 %v1289, %v1702
    %1704 = vmatprep.mubr.bf16.mxu0 0
    %1705 = vmatmul.mubr.bf16.gmra.mrb[0].mxu0 %v1262
    %v1706 = vpop.f32.mrb[0].mxu0
    %v1707 = vadd.f32 %v1285, %v1706
    %v1708 = vpop.f32.mrb[0].mxu0
    %v1709 = vadd.f32 %v1289, %v1708
    %v1710 = vpop.f32.mrb[0].mxu0
    %v1711 = vadd.f32 %v1285, %v1710
    %v1712 = vpop.f32.mrb[0].mxu0
    %v1713 = vadd.f32 %v1289, %v1712
    %1714 = vmatprep.mubr.bf16.mxu0 0
    %1715 = vmatmul.mubr.bf16.gmra.mrb[0].mxu0 %v1263
    %v1716 = vpop.f32.mrb[0].mxu0
    %v1717 = vadd.f32 %v1285, %v1716
    %v1718 = vpop.f32.mrb[0].mxu0
    %v1719 = vadd.f32 %v1289, %v1718
    %v1720 = vpop.f32.mrb[0].mxu0
    %v1721 = vadd.f32 %v1285, %v1720
    %v1722 = vpop.f32.mrb[0].mxu0
    %v1723 = vadd.f32 %v1289, %v1722
    %1724 = vdwg.mxu0
    %v1725 = vmax.f32 %v1407, 0.0
    %v1726 = vmax.f32 %v1409, 0.0
    %v1727 = vmax.f32 %v1411, 0.0
    %v1728 = vmax.f32 %v1413, 0.0
    %v1729 = vmax.f32 %v1417, 0.0
    %v1730 = vmax.f32 %v1419, 0.0
    %v1731 = vmax.f32 %v1421, 0.0
    %v1732 = vmax.f32 %v1423, 0.0
    %v1733 = vmax.f32 %v1427, 0.0
    %v1734 = vmax.f32 %v1429, 0.0
    %v1735 = vmax.f32 %v1431, 0.0
    %v1736 = vmax.f32 %v1433, 0.0
    %v1737 = vmax.f32 %v1437, 0.0
    %v1738 = vmax.f32 %v1439, 0.0
    %v1739 = vmax.f32 %v1441, 0.0
    %v1740 = vmax.f32 %v1443, 0.0
    %v1741 = vmax.f32 %v1447, 0.0
    %v1742 = vmax.f32 %v1449, 0.0
    %v1743 = vmax.f32 %v1451, 0.0
    %v1744 = vmax.f32 %v1453, 0.0
    %v1745 = vmax.f32 %v1457, 0.0
    %v1746 = vmax.f32 %v1459, 0.0
    %v1747 = vmax.f32 %v1461, 0.0
    %v1748 = vmax.f32 %v1463, 0.0
    %v1749 = vmax.f32 %v1467, 0.0
    %v1750 = vmax.f32 %v1469, 0.0
    %v1751 = vmax.f32 %v1471, 0.0
    %v1752 = vmax.f32 %v1473, 0.0
    %v1753 = vmax.f32 %v1477, 0.0
    %v1754 = vmax.f32 %v1479, 0.0
    %v1755 = vmax.f32 %v1481, 0.0
    %v1756 = vmax.f32 %v1483, 0.0
    %v1757 = vmax.f32 %v1487, 0.0
    %v1758 = vmax.f32 %v1489, 0.0
    %v1759 = vmax.f32 %v1491, 0.0
    %v1760 = vmax.f32 %v1493, 0.0
    %v1761 = vmax.f32 %v1497, 0.0
    %v1762 = vmax.f32 %v1499, 0.0
    %v1763 = vmax.f32 %v1501, 0.0
    %v1764 = vmax.f32 %v1503, 0.0
    %v1765 = vmax.f32 %v1507, 0.0
    %v1766 = vmax.f32 %v1509, 0.0
    %v1767 = vmax.f32 %v1511, 0.0
    %v1768 = vmax.f32 %v1513, 0.0
    %v1769 = vmax.f32 %v1517, 0.0
    %v1770 = vmax.f32 %v1519, 0.0
    %v1771 = vmax.f32 %v1521, 0.0
    %v1772 = vmax.f32 %v1523, 0.0
    %v1773 = vmax.f32 %v1527, 0.0
    %v1774 = vmax.f32 %v1529, 0.0
    %v1775 = vmax.f32 %v1531, 0.0
    %v1776 = vmax.f32 %v1533, 0.0
    %v1777 = vmax.f32 %v1537, 0.0
    %v1778 = vmax.f32 %v1539, 0.0
    %v1779 = vmax.f32 %v1541, 0.0
    %v1780 = vmax.f32 %v1543, 0.0
    %v1781 = vmax.f32 %v1547, 0.0
    %v1782 = vmax.f32 %v1549, 0.0
    %v1783 = vmax.f32 %v1551, 0.0
    %v1784 = vmax.f32 %v1553, 0.0
    %v1785 = vmax.f32 %v1557, 0.0
    %v1786 = vmax.f32 %v1559, 0.0
    %v1787 = vmax.f32 %v1561, 0.0
    %v1788 = vmax.f32 %v1563, 0.0
    %v1789 = vmax.f32 %v1567, 0.0
    %v1790 = vmax.f32 %v1569, 0.0
    %v1791 = vmax.f32 %v1571, 0.0
    %v1792 = vmax.f32 %v1573, 0.0
    %v1793 = vmax.f32 %v1577, 0.0
    %v1794 = vmax.f32 %v1579, 0.0
    %v1795 = vmax.f32 %v1581, 0.0
    %v1796 = vmax.f32 %v1583, 0.0
    %v1797 = vmax.f32 %v1587, 0.0
    %v1798 = vmax.f32 %v1589, 0.0
    %v1799 = vmax.f32 %v1591, 0.0
    %v1800 = vmax.f32 %v1593, 0.0
    %v1801 = vmax.f32 %v1597, 0.0
    %v1802 = vmax.f32 %v1599, 0.0
    %v1803 = vmax.f32 %v1601, 0.0
    %v1804 = vmax.f32 %v1603, 0.0
    %v1805 = vmax.f32 %v1607, 0.0
    %v1806 = vmax.f32 %v1609, 0.0
    %v1807 = vmax.f32 %v1611, 0.0
    %v1808 = vmax.f32 %v1613, 0.0
    %v1809 = vmax.f32 %v1617, 0.0
    %v1810 = vmax.f32 %v1619, 0.0
    %v1811 = vmax.f32 %v1621, 0.0
    %v1812 = vmax.f32 %v1623, 0.0
    %v1813 = vmax.f32 %v1627, 0.0
    %v1814 = vmax.f32 %v1629, 0.0
    %v1815 = vmax.f32 %v1631, 0.0
    %v1816 = vmax.f32 %v1633, 0.0
    %v1817 = vmax.f32 %v1637, 0.0
    %v1818 = vmax.f32 %v1639, 0.0
    %v1819 = vmax.f32 %v1641, 0.0
    %v1820 = vmax.f32 %v1643, 0.0
    %v1821 = vmax.f32 %v1647, 0.0
    %v1822 = vmax.f32 %v1649, 0.0
    %v1823 = vmax.f32 %v1651, 0.0
    %v1824 = vmax.f32 %v1653, 0.0
    %v1825 = vmax.f32 %v1657, 0.0
    %v1826 = vmax.f32 %v1659, 0.0
    %v1827 = vmax.f32 %v1661, 0.0
    %v1828 = vmax.f32 %v1663, 0.0
    %v1829 = vmax.f32 %v1667, 0.0
    %v1830 = vmax.f32 %v1669, 0.0
    %v1831 = vmax.f32 %v1671, 0.0
    %v1832 = vmax.f32 %v1673, 0.0
    %v1833 = vmax.f32 %v1677, 0.0
    %v1834 = vmax.f32 %v1679, 0.0
    %v1835 = vmax.f32 %v1681, 0.0
    %v1836 = vmax.f32 %v1683, 0.0
    %v1837 = vmax.f32 %v1687, 0.0
    %v1838 = vmax.f32 %v1689, 0.0
    %v1839 = vmax.f32 %v1691, 0.0
    %v1840 = vmax.f32 %v1693, 0.0
    %v1841 = vmax.f32 %v1697, 0.0
    %v1842 = vmax.f32 %v1699, 0.0
    %v1843 = vmax.f32 %v1701, 0.0
    %v1844 = vmax.f32 %v1703, 0.0
    %v1845 = vmax.f32 %v1707, 0.0
    %v1846 = vmax.f32 %v1709, 0.0
    %v1847 = vmax.f32 %v1711, 0.0
    %v1848 = vmax.f32 %v1713, 0.0
    %v1849 = vmax.f32 %v1717, 0.0
    %v1850 = vmax.f32 %v1719, 0.0
    %v1851 = vmax.f32 %v1721, 0.0
    %v1852 = vmax.f32 %v1723, 0.0
    %v1853 = vpack.c.bf16 %v1727, %v1725
    %v1854 = vpack.c.bf16 %v1728, %v1726
    %v1855 = vpack.c.bf16 %v1731, %v1729
    %v1856 = vpack.c.bf16 %v1732, %v1730
    %v1857 = vpack.c.bf16 %v1735, %v1733
    %v1858 = vpack.c.bf16 %v1736, %v1734
    %v1859 = vpack.c.bf16 %v1739, %v1737
    %v1860 = vpack.c.bf16 %v1740, %v1738
    %v1861 = vpack.c.bf16 %v1743, %v1741
    %v1862 = vpack.c.bf16 %v1744, %v1742
    %v1863 = vpack.c.bf16 %v1747, %v1745
    %v1864 = vpack.c.bf16 %v1748, %v1746
    %v1865 = vpack.c.bf16 %v1751, %v1749
    %v1866 = vpack.c.bf16 %v1752, %v1750
    %v1867 = vpack.c.bf16 %v1755, %v1753
    %v1868 = vpack.c.bf16 %v1756, %v1754
    %v1869 = vpack.c.bf16 %v1759, %v1757
    %v1870 = vpack.c.bf16 %v1760, %v1758
    %v1871 = vpack.c.bf16 %v1763, %v1761
    %v1872 = vpack.c.bf16 %v1764, %v1762
    %v1873 = vpack.c.bf16 %v1767, %v1765
    %v1874 = vpack.c.bf16 %v1768, %v1766
    %v1875 = vpack.c.bf16 %v1771, %v1769
    %v1876 = vpack.c.bf16 %v1772, %v1770
    %v1877 = vpack.c.bf16 %v1775, %v1773
    %v1878 = vpack.c.bf16 %v1776, %v1774
    %v1879 = vpack.c.bf16 %v1779, %v1777
    %v1880 = vpack.c.bf16 %v1780, %v1778
    %v1881 = vpack.c.bf16 %v1783, %v1781
    %v1882 = vpack.c.bf16 %v1784, %v1782
    %v1883 = vpack.c.bf16 %v1787, %v1785
    %v1884 = vpack.c.bf16 %v1788, %v1786
    %v1885 = vpack.c.bf16 %v1791, %v1789
    %v1886 = vpack.c.bf16 %v1792, %v1790
    %v1887 = vpack.c.bf16 %v1795, %v1793
    %v1888 = vpack.c.bf16 %v1796, %v1794
    %v1889 = vpack.c.bf16 %v1799, %v1797
    %v1890 = vpack.c.bf16 %v1800, %v1798
    %v1891 = vpack.c.bf16 %v1803, %v1801
    %v1892 = vpack.c.bf16 %v1804, %v1802
    %v1893 = vpack.c.bf16 %v1807, %v1805
    %v1894 = vpack.c.bf16 %v1808, %v1806
    %v1895 = vpack.c.bf16 %v1811, %v1809
    %v1896 = vpack.c.bf16 %v1812, %v1810
    %v1897 = vpack.c.bf16 %v1815, %v1813
    %v1898 = vpack.c.bf16 %v1816, %v1814
    %v1899 = vpack.c.bf16 %v1819, %v1817
    %v1900 = vpack.c.bf16 %v1820, %v1818
    %v1901 = vpack.c.bf16 %v1823, %v1821
    %v1902 = vpack.c.bf16 %v1824, %v1822
    %v1903 = vpack.c.bf16 %v1827, %v1825
    %v1904 = vpack.c.bf16 %v1828, %v1826
    %v1905 = vpack.c.bf16 %v1831, %v1829
    %v1906 = vpack.c.bf16 %v1832, %v1830
    %v1907 = vpack.c.bf16 %v1835, %v1833
    %v1908 = vpack.c.bf16 %v1836, %v1834
    %v1909 = vpack.c.bf16 %v1839, %v1837
    %v1910 = vpack.c.bf16 %v1840, %v1838
    %v1911 = vpack.c.bf16 %v1843, %v1841
    %v1912 = vpack.c.bf16 %v1844, %v1842
    %v1913 = vpack.c.bf16 %v1847, %v1845
    %v1914 = vpack.c.bf16 %v1848, %v1846
    %v1915 = vpack.c.bf16 %v1851, %v1849
    %v1916 = vpack.c.bf16 %v1852, %v1850
    %v1917 = vld [vmem:[%s7] sm:$0xff]
    %v1918 = vld [vmem:[%s7 + $0x8] sm:$0xff]
    %v1919 = vld [vmem:[%s7 + $0x10] sm:$0xff]
    %v1920 = vld [vmem:[%s7 + $0x18] sm:$0xff]
    %v1921 = vld [vmem:[%s7 + $0x20] sm:$0xff]
    %v1922 = vld [vmem:[%s7 + $0x28] sm:$0xff]
    %v1923 = vld [vmem:[%s7 + $0x30] sm:$0xff]
    %v1924 = vld [vmem:[%s7 + $0x38] sm:$0xff]
    %v1925 = vld [vmem:[%s7 + $0x40] sm:$0xff]
    %v1926 = vld [vmem:[%s7 + $0x48] sm:$0xff]
    %v1927 = vld [vmem:[%s7 + $0x50] sm:$0xff]
    %v1928 = vld [vmem:[%s7 + $0x58] sm:$0xff]
    %v1929 = vld [vmem:[%s7 + $0x60] sm:$0xff]
    %v1930 = vld [vmem:[%s7 + $0x68] sm:$0xff]
    %v1931 = vld [vmem:[%s7 + $0x70] sm:$0xff]
    %v1932 = vld [vmem:[%s7 + $0x78] sm:$0xff]
    %v1933 = vld [vmem:[%s7 + $0x80] sm:$0xff]
    %v1934 = vld [vmem:[%s7 + $0x88] sm:$0xff]
    %v1935 = vld [vmem:[%s7 + $0x90] sm:$0xff]
    %v1936 = vld [vmem:[%s7 + $0x98] sm:$0xff]
    %v1937 = vld [vmem:[%s7 + $0xa0] sm:$0xff]
    %v1938 = vld [vmem:[%s7 + $0xa8] sm:$0xff]
    %v1939 = vld [vmem:[%s7 + $0xb0] sm:$0xff]
    %v1940 = vld [vmem:[%s7 + $0xb8] sm:$0xff]
    %v1941 = vld [vmem:[%s7 + $0xc0] sm:$0xff]
    %v1942 = vld [vmem:[%s7 + $0xc8] sm:$0xff]
    %v1943 = vld [vmem:[%s7 + $0xd0] sm:$0xff]
    %v1944 = vld [vmem:[%s7 + $0xd8] sm:$0xff]
    %v1945 = vld [vmem:[%s7 + $0xe0] sm:$0xff]
    %v1946 = vld [vmem:[%s7 + $0xe8] sm:$0xff]
    %v1947 = vld [vmem:[%s7 + $0xf0] sm:$0xff]
    %v1948 = vld [vmem:[%s7 + $0xf8] sm:$0xff]
    %v1949 = vld [vmem:[%s7 + $0x100] sm:$0xff]
    %v1950 = vld [vmem:[%s7 + $0x108] sm:$0xff]
    %v1951 = vld [vmem:[%s7 + $0x110] sm:$0xff]
    %v1952 = vld [vmem:[%s7 + $0x118] sm:$0xff]
    %v1953 = vld [vmem:[%s7 + $0x120] sm:$0xff]
    %v1954 = vld [vmem:[%s7 + $0x128] sm:$0xff]
    %v1955 = vld [vmem:[%s7 + $0x130] sm:$0xff]
    %v1956 = vld [vmem:[%s7 + $0x138] sm:$0xff]
    %v1957 = vld [vmem:[%s7 + $0x140] sm:$0xff]
    %v1958 = vld [vmem:[%s7 + $0x148] sm:$0xff]
    %v1959 = vld [vmem:[%s7 + $0x150] sm:$0xff]
    %v1960 = vld [vmem:[%s7 + $0x158] sm:$0xff]
    %v1961 = vld [vmem:[%s7 + $0x160] sm:$0xff]
    %v1962 = vld [vmem:[%s7 + $0x168] sm:$0xff]
    %v1963 = vld [vmem:[%s7 + $0x170] sm:$0xff]
    %v1964 = vld [vmem:[%s7 + $0x178] sm:$0xff]
    %v1965 = vld [vmem:[%s7 + $0x180] sm:$0xff]
    %v1966 = vld [vmem:[%s7 + $0x188] sm:$0xff]
    %v1967 = vld [vmem:[%s7 + $0x190] sm:$0xff]
    %v1968 = vld [vmem:[%s7 + $0x198] sm:$0xff]
    %v1969 = vld [vmem:[%s7 + $0x1a0] sm:$0xff]
    %v1970 = vld [vmem:[%s7 + $0x1a8] sm:$0xff]
    %v1971 = vld [vmem:[%s7 + $0x1b0] sm:$0xff]
    %v1972 = vld [vmem:[%s7 + $0x1b8] sm:$0xff]
    %v1973 = vld [vmem:[%s7 + $0x1c0] sm:$0xff]
    %v1974 = vld [vmem:[%s7 + $0x1c8] sm:$0xff]
    %v1975 = vld [vmem:[%s7 + $0x1d0] sm:$0xff]
    %v1976 = vld [vmem:[%s7 + $0x1d8] sm:$0xff]
    %v1977 = vld [vmem:[%s7 + $0x1e0] sm:$0xff]
    %v1978 = vld [vmem:[%s7 + $0x1e8] sm:$0xff]
    %v1979 = vld [vmem:[%s7 + $0x1f0] sm:$0xff]
    %v1980 = vld [vmem:[%s7 + $0x1f8] sm:$0xff]
    %v1981 = vld [vmem:[%s8] sm:$0xf]
    %v1983 = vlaneseq
    %v1984 = vshrl.u32 %v1983, 7
    %v1985 = vsub.s32 0, %v1984
    %v1986 = vrot.slane %v1981, %v1985
    %v1987 = vlaneseq
    %v1988 = vshrl.u32 %v1987, 7
    %v1989 = vsub.s32 1, %v1988
    %v1990 = vrot.slane %v1981, %v1989
    %v1991 = vlaneseq
    %v1992 = vshrl.u32 %v1991, 7
    %v1993 = vsub.s32 2, %v1992
    %v1994 = vrot.slane %v1981, %v1993
    %v1995 = vlaneseq
    %v1996 = vshrl.u32 %v1995, 7
    %v1997 = vsub.s32 3, %v1996
    %v1998 = vrot.slane %v1981, %v1997
    %v2067 = vunpack.c.l.b16 %v1917
    %v2068 = vunpack.c.h.b16 %v1917
    %v2069 = vunpack.c.l.b16 %v1918
    %v2070 = vunpack.c.h.b16 %v1918
    %v2071 = vunpack.c.l.b16 %v1919
    %v2072 = vunpack.c.h.b16 %v1919
    %v2073 = vunpack.c.l.b16 %v1920
    %v2074 = vunpack.c.h.b16 %v1920
    %v2075 = vunpack.c.l.b16 %v1921
    %v2076 = vunpack.c.h.b16 %v1921
    %v2077 = vunpack.c.l.b16 %v1922
    %v2078 = vunpack.c.h.b16 %v1922
    %v2079 = vunpack.c.l.b16 %v1923
    %v2080 = vunpack.c.h.b16 %v1923
    %v2081 = vunpack.c.l.b16 %v1924
    %v2082 = vunpack.c.h.b16 %v1924
    %v2083 = vunpack.c.l.b16 %v1925
    %v2084 = vunpack.c.h.b16 %v1925
    %v2085 = vunpack.c.l.b16 %v1926
    %v2086 = vunpack.c.h.b16 %v1926
    %v2087 = vunpack.c.l.b16 %v1927
    %v2088 = vunpack.c.h.b16 %v1927
    %v2089 = vunpack.c.l.b16 %v1928
    %v2090 = vunpack.c.h.b16 %v1928
    %v2091 = vunpack.c.l.b16 %v1929
    %v2092 = vunpack.c.h.b16 %v1929
    %v2093 = vunpack.c.l.b16 %v1930
    %v2094 = vunpack.c.h.b16 %v1930
    %v2095 = vunpack.c.l.b16 %v1931
    %v2096 = vunpack.c.h.b16 %v1931
    %v2097 = vunpack.c.l.b16 %v1932
    %v2098 = vunpack.c.h.b16 %v1932
    %v2099 = vunpack.c.l.b16 %v1933
    %v2100 = vunpack.c.h.b16 %v1933
    %v2101 = vunpack.c.l.b16 %v1934
    %v2102 = vunpack.c.h.b16 %v1934
    %v2103 = vunpack.c.l.b16 %v1935
    %v2104 = vunpack.c.h.b16 %v1935
    %v2105 = vunpack.c.l.b16 %v1936
    %v2106 = vunpack.c.h.b16 %v1936
    %v2107 = vunpack.c.l.b16 %v1937
    %v2108 = vunpack.c.h.b16 %v1937
    %v2109 = vunpack.c.l.b16 %v1938
    %v2110 = vunpack.c.h.b16 %v1938
    %v2111 = vunpack.c.l.b16 %v1939
    %v2112 = vunpack.c.h.b16 %v1939
    %v2113 = vunpack.c.l.b16 %v1940
    %v2114 = vunpack.c.h.b16 %v1940
    %v2115 = vunpack.c.l.b16 %v1941
    %v2116 = vunpack.c.h.b16 %v1941
    %v2117 = vunpack.c.l.b16 %v1942
    %v2118 = vunpack.c.h.b16 %v1942
    %v2119 = vunpack.c.l.b16 %v1943
    %v2120 = vunpack.c.h.b16 %v1943
    %v2121 = vunpack.c.l.b16 %v1944
    %v2122 = vunpack.c.h.b16 %v1944
    %v2123 = vunpack.c.l.b16 %v1945
    %v2124 = vunpack.c.h.b16 %v1945
    %v2125 = vunpack.c.l.b16 %v1946
    %v2126 = vunpack.c.h.b16 %v1946
    %v2127 = vunpack.c.l.b16 %v1947
    %v2128 = vunpack.c.h.b16 %v1947
    %v2129 = vunpack.c.l.b16 %v1948
    %v2130 = vunpack.c.h.b16 %v1948
    %v2131 = vunpack.c.l.b16 %v1949
    %v2132 = vunpack.c.h.b16 %v1949
    %v2133 = vunpack.c.l.b16 %v1950
    %v2134 = vunpack.c.h.b16 %v1950
    %v2135 = vunpack.c.l.b16 %v1951
    %v2136 = vunpack.c.h.b16 %v1951
    %v2137 = vunpack.c.l.b16 %v1952
    %v2138 = vunpack.c.h.b16 %v1952
    %v2139 = vunpack.c.l.b16 %v1953
    %v2140 = vunpack.c.h.b16 %v1953
    %v2141 = vunpack.c.l.b16 %v1954
    %v2142 = vunpack.c.h.b16 %v1954
    %v2143 = vunpack.c.l.b16 %v1955
    %v2144 = vunpack.c.h.b16 %v1955
    %v2145 = vunpack.c.l.b16 %v1956
    %v2146 = vunpack.c.h.b16 %v1956
    %v2147 = vunpack.c.l.b16 %v1957
    %v2148 = vunpack.c.h.b16 %v1957
    %v2149 = vunpack.c.l.b16 %v1958
    %v2150 = vunpack.c.h.b16 %v1958
    %v2151 = vunpack.c.l.b16 %v1959
    %v2152 = vunpack.c.h.b16 %v1959
    %v2153 = vunpack.c.l.b16 %v1960
    %v2154 = vunpack.c.h.b16 %v1960
    %v2155 = vunpack.c.l.b16 %v1961
    %v2156 = vunpack.c.h.b16 %v1961
    %v2157 = vunpack.c.l.b16 %v1962
    %v2158 = vunpack.c.h.b16 %v1962
    %v2159 = vunpack.c.l.b16 %v1963
    %v2160 = vunpack.c.h.b16 %v1963
    %v2161 = vunpack.c.l.b16 %v1964
    %v2162 = vunpack.c.h.b16 %v1964
    %v2163 = vunpack.c.l.b16 %v1965
    %v2164 = vunpack.c.h.b16 %v1965
    %v2165 = vunpack.c.l.b16 %v1966
    %v2166 = vunpack.c.h.b16 %v1966
    %v2167 = vunpack.c.l.b16 %v1967
    %v2168 = vunpack.c.h.b16 %v1967
    %v2169 = vunpack.c.l.b16 %v1968
    %v2170 = vunpack.c.h.b16 %v1968
    %v2171 = vunpack.c.l.b16 %v1969
    %v2172 = vunpack.c.h.b16 %v1969
    %v2173 = vunpack.c.l.b16 %v1970
    %v2174 = vunpack.c.h.b16 %v1970
    %v2175 = vunpack.c.l.b16 %v1971
    %v2176 = vunpack.c.h.b16 %v1971
    %v2177 = vunpack.c.l.b16 %v1972
    %v2178 = vunpack.c.h.b16 %v1972
    %v2179 = vunpack.c.l.b16 %v1973
    %v2180 = vunpack.c.h.b16 %v1973
    %v2181 = vunpack.c.l.b16 %v1974
    %v2182 = vunpack.c.h.b16 %v1974
    %v2183 = vunpack.c.l.b16 %v1975
    %v2184 = vunpack.c.h.b16 %v1975
    %v2185 = vunpack.c.l.b16 %v1976
    %v2186 = vunpack.c.h.b16 %v1976
    %v2187 = vunpack.c.l.b16 %v1977
    %v2188 = vunpack.c.h.b16 %v1977
    %v2189 = vunpack.c.l.b16 %v1978
    %v2190 = vunpack.c.h.b16 %v1978
    %v2191 = vunpack.c.l.b16 %v1979
    %v2192 = vunpack.c.h.b16 %v1979
    %v2193 = vunpack.c.l.b16 %v1980
    %v2194 = vunpack.c.h.b16 %v1980
    %v2195 = vpack.c.b16 %v2071, %v2067
    %v2196 = vpack.c.b16 %v2072, %v2068
    %v2197 = vpack.c.b16 %v2073, %v2069
    %v2198 = vpack.c.b16 %v2074, %v2070
    %v2199 = vpack.c.b16 %v2079, %v2075
    %v2200 = vpack.c.b16 %v2080, %v2076
    %v2201 = vpack.c.b16 %v2081, %v2077
    %v2202 = vpack.c.b16 %v2082, %v2078
    %v2203 = vpack.c.b16 %v2087, %v2083
    %v2204 = vpack.c.b16 %v2088, %v2084
    %v2205 = vpack.c.b16 %v2089, %v2085
    %v2206 = vpack.c.b16 %v2090, %v2086
    %v2207 = vpack.c.b16 %v2095, %v2091
    %v2208 = vpack.c.b16 %v2096, %v2092
    %v2209 = vpack.c.b16 %v2097, %v2093
    %v2210 = vpack.c.b16 %v2098, %v2094
    %v2211 = vpack.c.b16 %v2103, %v2099
    %v2212 = vpack.c.b16 %v2104, %v2100
    %v2213 = vpack.c.b16 %v2105, %v2101
    %v2214 = vpack.c.b16 %v2106, %v2102
    %v2215 = vpack.c.b16 %v2111, %v2107
    %v2216 = vpack.c.b16 %v2112, %v2108
    %v2217 = vpack.c.b16 %v2113, %v2109
    %v2218 = vpack.c.b16 %v2114, %v2110
    %v2219 = vpack.c.b16 %v2119, %v2115
    %v2220 = vpack.c.b16 %v2120, %v2116
    %v2221 = vpack.c.b16 %v2121, %v2117
    %v2222 = vpack.c.b16 %v2122, %v2118
    %v2223 = vpack.c.b16 %v2127, %v2123
    %v2224 = vpack.c.b16 %v2128, %v2124
    %v2225 = vpack.c.b16 %v2129, %v2125
    %v2226 = vpack.c.b16 %v2130, %v2126
    %v2227 = vpack.c.b16 %v2135, %v2131
    %v2228 = vpack.c.b16 %v2136, %v2132
    %v2229 = vpack.c.b16 %v2137, %v2133
    %v2230 = vpack.c.b16 %v2138, %v2134
    %v2231 = vpack.c.b16 %v2143, %v2139
    %v2232 = vpack.c.b16 %v2144, %v2140
    %v2233 = vpack.c.b16 %v2145, %v2141
    %v2234 = vpack.c.b16 %v2146, %v2142
    %v2235 = vpack.c.b16 %v2151, %v2147
    %v2236 = vpack.c.b16 %v2152, %v2148
    %v2237 = vpack.c.b16 %v2153, %v2149
    %v2238 = vpack.c.b16 %v2154, %v2150
    %v2239 = vpack.c.b16 %v2159, %v2155
    %v2240 = vpack.c.b16 %v2160, %v2156
    %v2241 = vpack.c.b16 %v2161, %v2157
    %v2242 = vpack.c.b16 %v2162, %v2158
    %v2243 = vpack.c.b16 %v2167, %v2163
    %v2244 = vpack.c.b16 %v2168, %v2164
    %v2245 = vpack.c.b16 %v2169, %v2165
    %v2246 = vpack.c.b16 %v2170, %v2166
    %v2247 = vpack.c.b16 %v2175, %v2171
    %v2248 = vpack.c.b16 %v2176, %v2172
    %v2249 = vpack.c.b16 %v2177, %v2173
    %v2250 = vpack.c.b16 %v2178, %v2174
    %v2251 = vpack.c.b16 %v2183, %v2179
    %v2252 = vpack.c.b16 %v2184, %v2180
    %v2253 = vpack.c.b16 %v2185, %v2181
    %v2254 = vpack.c.b16 %v2186, %v2182
    %v2255 = vpack.c.b16 %v2191, %v2187
    %v2256 = vpack.c.b16 %v2192, %v2188
    %v2257 = vpack.c.b16 %v2193, %v2189
    %v2258 = vpack.c.b16 %v2194, %v2190
    %2323 = vmatprep.subr.bf16.mxu0 %v2196
    %2324 = vmatpush1.bf16.msra.mxu0 %v2195
    %2325 = vmatprep.subr.bf16.mxu0 %v2200
    %2326 = vmatpush1.bf16.msra.mxu0 %v2199
    %2327 = vmatprep.subr.bf16.mxu0 %v2204
    %2328 = vmatpush1.bf16.msra.mxu0 %v2203
    %2329 = vmatprep.subr.bf16.mxu0 %v2208
    %2330 = vmatpush1.bf16.msra.mxu0 %v2207
    %2331 = vmatprep.subr.bf16.mxu0 %v2212
    %2332 = vmatpush1.bf16.msra.mxu0 %v2211
    %2333 = vmatprep.subr.bf16.mxu0 %v2216
    %2334 = vmatpush1.bf16.msra.mxu0 %v2215
    %2335 = vmatprep.subr.bf16.mxu0 %v2220
    %2336 = vmatpush1.bf16.msra.mxu0 %v2219
    %2337 = vmatprep.subr.bf16.mxu0 %v2224
    %2338 = vmatpush1.bf16.msra.mxu0 %v2223
    %2339 = vmatprep.subr.bf16.mxu0 %v2228
    %2340 = vmatpush1.bf16.msra.mxu0 %v2227
    %2341 = vmatprep.subr.bf16.mxu0 %v2232
    %2342 = vmatpush1.bf16.msra.mxu0 %v2231
    %2343 = vmatprep.subr.bf16.mxu0 %v2236
    %2344 = vmatpush1.bf16.msra.mxu0 %v2235
    %2345 = vmatprep.subr.bf16.mxu0 %v2240
    %2346 = vmatpush1.bf16.msra.mxu0 %v2239
    %2347 = vmatprep.subr.bf16.mxu0 %v2244
    %2348 = vmatpush1.bf16.msra.mxu0 %v2243
    %2349 = vmatprep.subr.bf16.mxu0 %v2248
    %2350 = vmatpush1.bf16.msra.mxu0 %v2247
    %2351 = vmatprep.subr.bf16.mxu0 %v2252
    %2352 = vmatpush1.bf16.msra.mxu0 %v2251
    %2353 = vmatprep.subr.bf16.mxu0 %v2256
    %2354 = vmatpush1.bf16.msra.mxu0 %v2255
    %2355 = vmatprep.mubr.bf16.mxu0 %v1854
    %2356 = vmatmul.mubr.bf16.gmra.mrb[0].mxu0 %v1853
    %v2357 = vpop.f32.mrb[0].mxu0
    %v2358 = vadd.f32 %v1986, %v2357
    %v2359 = vpop.f32.mrb[0].mxu0
    %v2360 = vadd.f32 %v1990, %v2359
    %v2361 = vpop.f32.mrb[0].mxu0
    %v2362 = vadd.f32 %v1986, %v2361
    %v2363 = vpop.f32.mrb[0].mxu0
    %v2364 = vadd.f32 %v1990, %v2363
    %2365 = vmatprep.mubr.bf16.mxu0 %v1856
    %2366 = vmatmul.mubr.bf16.gmra.mrb[0].mxu0 %v1855
    %v2367 = vpop.f32.mrb[0].mxu0
    %v2368 = vadd.f32 %v1986, %v2367
    %v2369 = vpop.f32.mrb[0].mxu0
    %v2370 = vadd.f32 %v1990, %v2369
    %v2371 = vpop.f32.mrb[0].mxu0
    %v2372 = vadd.f32 %v1986, %v2371
    %v2373 = vpop.f32.mrb[0].mxu0
    %v2374 = vadd.f32 %v1990, %v2373
    %2375 = vmatprep.mubr.bf16.mxu0 %v1858
    %2376 = vmatmul.mubr.bf16.gmra.mrb[0].mxu0 %v1857
    %v2377 = vpop.f32.mrb[0].mxu0
    %v2378 = vadd.f32 %v1986, %v2377
    %v2379 = vpop.f32.mrb[0].mxu0
    %v2380 = vadd.f32 %v1990, %v2379
    %v2381 = vpop.f32.mrb[0].mxu0
    %v2382 = vadd.f32 %v1986, %v2381
    %v2383 = vpop.f32.mrb[0].mxu0
    %v2384 = vadd.f32 %v1990, %v2383
    %2385 = vmatprep.mubr.bf16.mxu0 %v1860
    %2386 = vmatmul.mubr.bf16.gmra.mrb[0].mxu0 %v1859
    %v2387 = vpop.f32.mrb[0].mxu0
    %v2388 = vadd.f32 %v1986, %v2387
    %v2389 = vpop.f32.mrb[0].mxu0
    %v2390 = vadd.f32 %v1990, %v2389
    %v2391 = vpop.f32.mrb[0].mxu0
    %v2392 = vadd.f32 %v1986, %v2391
    %v2393 = vpop.f32.mrb[0].mxu0
    %v2394 = vadd.f32 %v1990, %v2393
    %2395 = vmatprep.mubr.bf16.mxu0 %v1862
    %2396 = vmatmul.mubr.bf16.gmra.mrb[0].mxu0 %v1861
    %v2397 = vpop.f32.mrb[0].mxu0
    %v2398 = vadd.f32 %v1986, %v2397
    %v2399 = vpop.f32.mrb[0].mxu0
    %v2400 = vadd.f32 %v1990, %v2399
    %v2401 = vpop.f32.mrb[0].mxu0
    %v2402 = vadd.f32 %v1986, %v2401
    %v2403 = vpop.f32.mrb[0].mxu0
    %v2404 = vadd.f32 %v1990, %v2403
    %2405 = vmatprep.mubr.bf16.mxu0 %v1864
    %2406 = vmatmul.mubr.bf16.gmra.mrb[0].mxu0 %v1863
    %v2407 = vpop.f32.mrb[0].mxu0
    %v2408 = vadd.f32 %v1986, %v2407
    %v2409 = vpop.f32.mrb[0].mxu0
    %v2410 = vadd.f32 %v1990, %v2409
    %v2411 = vpop.f32.mrb[0].mxu0
    %v2412 = vadd.f32 %v1986, %v2411
    %v2413 = vpop.f32.mrb[0].mxu0
    %v2414 = vadd.f32 %v1990, %v2413
    %2415 = vmatprep.mubr.bf16.mxu0 %v1866
    %2416 = vmatmul.mubr.bf16.gmra.mrb[0].mxu0 %v1865
    %v2417 = vpop.f32.mrb[0].mxu0
    %v2418 = vadd.f32 %v1986, %v2417
    %v2419 = vpop.f32.mrb[0].mxu0
    %v2420 = vadd.f32 %v1990, %v2419
    %v2421 = vpop.f32.mrb[0].mxu0
    %v2422 = vadd.f32 %v1986, %v2421
    %v2423 = vpop.f32.mrb[0].mxu0
    %v2424 = vadd.f32 %v1990, %v2423
    %2425 = vmatprep.mubr.bf16.mxu0 %v1868
    %2426 = vmatmul.mubr.bf16.gmra.mrb[0].mxu0 %v1867
    %v2427 = vpop.f32.mrb[0].mxu0
    %v2428 = vadd.f32 %v1986, %v2427
    %v2429 = vpop.f32.mrb[0].mxu0
    %v2430 = vadd.f32 %v1990, %v2429
    %v2431 = vpop.f32.mrb[0].mxu0
    %v2432 = vadd.f32 %v1986, %v2431
    %v2433 = vpop.f32.mrb[0].mxu0
    %v2434 = vadd.f32 %v1990, %v2433
    %2435 = vmatprep.mubr.bf16.mxu0 %v1870
    %2436 = vmatmul.mubr.bf16.gmra.mrb[0].mxu0 %v1869
    %v2437 = vpop.f32.mrb[0].mxu0
    %v2438 = vadd.f32 %v1986, %v2437
    %v2439 = vpop.f32.mrb[0].mxu0
    %v2440 = vadd.f32 %v1990, %v2439
    %v2441 = vpop.f32.mrb[0].mxu0
    %v2442 = vadd.f32 %v1986, %v2441
    %v2443 = vpop.f32.mrb[0].mxu0
    %v2444 = vadd.f32 %v1990, %v2443
    %2445 = vmatprep.mubr.bf16.mxu0 %v1872
    %2446 = vmatmul.mubr.bf16.gmra.mrb[0].mxu0 %v1871
    %v2447 = vpop.f32.mrb[0].mxu0
    %v2448 = vadd.f32 %v1986, %v2447
    %v2449 = vpop.f32.mrb[0].mxu0
    %v2450 = vadd.f32 %v1990, %v2449
    %v2451 = vpop.f32.mrb[0].mxu0
    %v2452 = vadd.f32 %v1986, %v2451
    %v2453 = vpop.f32.mrb[0].mxu0
    %v2454 = vadd.f32 %v1990, %v2453
    %2455 = vmatprep.mubr.bf16.mxu0 %v1874
    %2456 = vmatmul.mubr.bf16.gmra.mrb[0].mxu0 %v1873
    %v2457 = vpop.f32.mrb[0].mxu0
    %v2458 = vadd.f32 %v1986, %v2457
    %v2459 = vpop.f32.mrb[0].mxu0
    %v2460 = vadd.f32 %v1990, %v2459
    %v2461 = vpop.f32.mrb[0].mxu0
    %v2462 = vadd.f32 %v1986, %v2461
    %v2463 = vpop.f32.mrb[0].mxu0
    %v2464 = vadd.f32 %v1990, %v2463
    %2465 = vmatprep.mubr.bf16.mxu0 %v1876
    %2466 = vmatmul.mubr.bf16.gmra.mrb[0].mxu0 %v1875
    %v2467 = vpop.f32.mrb[0].mxu0
    %v2468 = vadd.f32 %v1986, %v2467
    %v2469 = vpop.f32.mrb[0].mxu0
    %v2470 = vadd.f32 %v1990, %v2469
    %v2471 = vpop.f32.mrb[0].mxu0
    %v2472 = vadd.f32 %v1986, %v2471
    %v2473 = vpop.f32.mrb[0].mxu0
    %v2474 = vadd.f32 %v1990, %v2473
    %2475 = vmatprep.mubr.bf16.mxu0 %v1878
    %2476 = vmatmul.mubr.bf16.gmra.mrb[0].mxu0 %v1877
    %v2477 = vpop.f32.mrb[0].mxu0
    %v2478 = vadd.f32 %v1986, %v2477
    %v2479 = vpop.f32.mrb[0].mxu0
    %v2480 = vadd.f32 %v1990, %v2479
    %v2481 = vpop.f32.mrb[0].mxu0
    %v2482 = vadd.f32 %v1986, %v2481
    %v2483 = vpop.f32.mrb[0].mxu0
    %v2484 = vadd.f32 %v1990, %v2483
    %2485 = vmatprep.mubr.bf16.mxu0 %v1880
    %2486 = vmatmul.mubr.bf16.gmra.mrb[0].mxu0 %v1879
    %v2487 = vpop.f32.mrb[0].mxu0
    %v2488 = vadd.f32 %v1986, %v2487
    %v2489 = vpop.f32.mrb[0].mxu0
    %v2490 = vadd.f32 %v1990, %v2489
    %v2491 = vpop.f32.mrb[0].mxu0
    %v2492 = vadd.f32 %v1986, %v2491
    %v2493 = vpop.f32.mrb[0].mxu0
    %v2494 = vadd.f32 %v1990, %v2493
    %2495 = vmatprep.mubr.bf16.mxu0 %v1882
    %2496 = vmatmul.mubr.bf16.gmra.mrb[0].mxu0 %v1881
    %v2497 = vpop.f32.mrb[0].mxu0
    %v2498 = vadd.f32 %v1986, %v2497
    %v2499 = vpop.f32.mrb[0].mxu0
    %v2500 = vadd.f32 %v1990, %v2499
    %v2501 = vpop.f32.mrb[0].mxu0
    %v2502 = vadd.f32 %v1986, %v2501
    %v2503 = vpop.f32.mrb[0].mxu0
    %v2504 = vadd.f32 %v1990, %v2503
    %2505 = vmatprep.mubr.bf16.mxu0 %v1884
    %2506 = vmatmul.mubr.bf16.gmra.mrb[0].mxu0 %v1883
    %v2507 = vpop.f32.mrb[0].mxu0
    %v2508 = vadd.f32 %v1986, %v2507
    %v2509 = vpop.f32.mrb[0].mxu0
    %v2510 = vadd.f32 %v1990, %v2509
    %v2511 = vpop.f32.mrb[0].mxu0
    %v2512 = vadd.f32 %v1986, %v2511
    %v2513 = vpop.f32.mrb[0].mxu0
    %v2514 = vadd.f32 %v1990, %v2513
    %2515 = vmatprep.mubr.bf16.mxu0 %v1886
    %2516 = vmatmul.mubr.bf16.gmra.mrb[0].mxu0 %v1885
    %v2517 = vpop.f32.mrb[0].mxu0
    %v2518 = vadd.f32 %v1986, %v2517
    %v2519 = vpop.f32.mrb[0].mxu0
    %v2520 = vadd.f32 %v1990, %v2519
    %v2521 = vpop.f32.mrb[0].mxu0
    %v2522 = vadd.f32 %v1986, %v2521
    %v2523 = vpop.f32.mrb[0].mxu0
    %v2524 = vadd.f32 %v1990, %v2523
    %2525 = vmatprep.mubr.bf16.mxu0 %v1888
    %2526 = vmatmul.mubr.bf16.gmra.mrb[0].mxu0 %v1887
    %v2527 = vpop.f32.mrb[0].mxu0
    %v2528 = vadd.f32 %v1986, %v2527
    %v2529 = vpop.f32.mrb[0].mxu0
    %v2530 = vadd.f32 %v1990, %v2529
    %v2531 = vpop.f32.mrb[0].mxu0
    %v2532 = vadd.f32 %v1986, %v2531
    %v2533 = vpop.f32.mrb[0].mxu0
    %v2534 = vadd.f32 %v1990, %v2533
    %2535 = vmatprep.mubr.bf16.mxu0 %v1890
    %2536 = vmatmul.mubr.bf16.gmra.mrb[0].mxu0 %v1889
    %v2537 = vpop.f32.mrb[0].mxu0
    %v2538 = vadd.f32 %v1986, %v2537
    %v2539 = vpop.f32.mrb[0].mxu0
    %v2540 = vadd.f32 %v1990, %v2539
    %v2541 = vpop.f32.mrb[0].mxu0
    %v2542 = vadd.f32 %v1986, %v2541
    %v2543 = vpop.f32.mrb[0].mxu0
    %v2544 = vadd.f32 %v1990, %v2543
    %2545 = vmatprep.mubr.bf16.mxu0 %v1892
    %2546 = vmatmul.mubr.bf16.gmra.mrb[0].mxu0 %v1891
    %v2547 = vpop.f32.mrb[0].mxu0
    %v2548 = vadd.f32 %v1986, %v2547
    %v2549 = vpop.f32.mrb[0].mxu0
    %v2550 = vadd.f32 %v1990, %v2549
    %v2551 = vpop.f32.mrb[0].mxu0
    %v2552 = vadd.f32 %v1986, %v2551
    %v2553 = vpop.f32.mrb[0].mxu0
    %v2554 = vadd.f32 %v1990, %v2553
    %2555 = vmatprep.mubr.bf16.mxu0 %v1894
    %2556 = vmatmul.mubr.bf16.gmra.mrb[0].mxu0 %v1893
    %v2557 = vpop.f32.mrb[0].mxu0
    %v2558 = vadd.f32 %v1986, %v2557
    %v2559 = vpop.f32.mrb[0].mxu0
    %v2560 = vadd.f32 %v1990, %v2559
    %v2561 = vpop.f32.mrb[0].mxu0
    %v2562 = vadd.f32 %v1986, %v2561
    %v2563 = vpop.f32.mrb[0].mxu0
    %v2564 = vadd.f32 %v1990, %v2563
    %2565 = vmatprep.mubr.bf16.mxu0 %v1896
    %2566 = vmatmul.mubr.bf16.gmra.mrb[0].mxu0 %v1895
    %v2567 = vpop.f32.mrb[0].mxu0
    %v2568 = vadd.f32 %v1986, %v2567
    %v2569 = vpop.f32.mrb[0].mxu0
    %v2570 = vadd.f32 %v1990, %v2569
    %v2571 = vpop.f32.mrb[0].mxu0
    %v2572 = vadd.f32 %v1986, %v2571
    %v2573 = vpop.f32.mrb[0].mxu0
    %v2574 = vadd.f32 %v1990, %v2573
    %2575 = vmatprep.mubr.bf16.mxu0 %v1898
    %2576 = vmatmul.mubr.bf16.gmra.mrb[0].mxu0 %v1897
    %v2577 = vpop.f32.mrb[0].mxu0
    %v2578 = vadd.f32 %v1986, %v2577
    %v2579 = vpop.f32.mrb[0].mxu0
    %v2580 = vadd.f32 %v1990, %v2579
    %v2581 = vpop.f32.mrb[0].mxu0
    %v2582 = vadd.f32 %v1986, %v2581
    %v2583 = vpop.f32.mrb[0].mxu0
    %v2584 = vadd.f32 %v1990, %v2583
    %2585 = vmatprep.mubr.bf16.mxu0 %v1900
    %2586 = vmatmul.mubr.bf16.gmra.mrb[0].mxu0 %v1899
    %v2587 = vpop.f32.mrb[0].mxu0
    %v2588 = vadd.f32 %v1986, %v2587
    %v2589 = vpop.f32.mrb[0].mxu0
    %v2590 = vadd.f32 %v1990, %v2589
    %v2591 = vpop.f32.mrb[0].mxu0
    %v2592 = vadd.f32 %v1986, %v2591
    %v2593 = vpop.f32.mrb[0].mxu0
    %v2594 = vadd.f32 %v1990, %v2593
    %2595 = vmatprep.mubr.bf16.mxu0 %v1902
    %2596 = vmatmul.mubr.bf16.gmra.mrb[0].mxu0 %v1901
    %v2597 = vpop.f32.mrb[0].mxu0
    %v2598 = vadd.f32 %v1986, %v2597
    %v2599 = vpop.f32.mrb[0].mxu0
    %v2600 = vadd.f32 %v1990, %v2599
    %v2601 = vpop.f32.mrb[0].mxu0
    %v2602 = vadd.f32 %v1986, %v2601
    %v2603 = vpop.f32.mrb[0].mxu0
    %v2604 = vadd.f32 %v1990, %v2603
    %2605 = vmatprep.mubr.bf16.mxu0 %v1904
    %2606 = vmatmul.mubr.bf16.gmra.mrb[0].mxu0 %v1903
    %v2607 = vpop.f32.mrb[0].mxu0
    %v2608 = vadd.f32 %v1986, %v2607
    %v2609 = vpop.f32.mrb[0].mxu0
    %v2610 = vadd.f32 %v1990, %v2609
    %v2611 = vpop.f32.mrb[0].mxu0
    %v2612 = vadd.f32 %v1986, %v2611
    %v2613 = vpop.f32.mrb[0].mxu0
    %v2614 = vadd.f32 %v1990, %v2613
    %2615 = vmatprep.mubr.bf16.mxu0 %v1906
    %2616 = vmatmul.mubr.bf16.gmra.mrb[0].mxu0 %v1905
    %v2617 = vpop.f32.mrb[0].mxu0
    %v2618 = vadd.f32 %v1986, %v2617
    %v2619 = vpop.f32.mrb[0].mxu0
    %v2620 = vadd.f32 %v1990, %v2619
    %v2621 = vpop.f32.mrb[0].mxu0
    %v2622 = vadd.f32 %v1986, %v2621
    %v2623 = vpop.f32.mrb[0].mxu0
    %v2624 = vadd.f32 %v1990, %v2623
    %2625 = vmatprep.mubr.bf16.mxu0 %v1908
    %2626 = vmatmul.mubr.bf16.gmra.mrb[0].mxu0 %v1907
    %v2627 = vpop.f32.mrb[0].mxu0
    %v2628 = vadd.f32 %v1986, %v2627
    %v2629 = vpop.f32.mrb[0].mxu0
    %v2630 = vadd.f32 %v1990, %v2629
    %v2631 = vpop.f32.mrb[0].mxu0
    %v2632 = vadd.f32 %v1986, %v2631
    %v2633 = vpop.f32.mrb[0].mxu0
    %v2634 = vadd.f32 %v1990, %v2633
    %2635 = vmatprep.mubr.bf16.mxu0 %v1910
    %2636 = vmatmul.mubr.bf16.gmra.mrb[0].mxu0 %v1909
    %v2637 = vpop.f32.mrb[0].mxu0
    %v2638 = vadd.f32 %v1986, %v2637
    %v2639 = vpop.f32.mrb[0].mxu0
    %v2640 = vadd.f32 %v1990, %v2639
    %v2641 = vpop.f32.mrb[0].mxu0
    %v2642 = vadd.f32 %v1986, %v2641
    %v2643 = vpop.f32.mrb[0].mxu0
    %v2644 = vadd.f32 %v1990, %v2643
    %2645 = vmatprep.mubr.bf16.mxu0 %v1912
    %2646 = vmatmul.mubr.bf16.gmra.mrb[0].mxu0 %v1911
    %v2647 = vpop.f32.mrb[0].mxu0
    %v2648 = vadd.f32 %v1986, %v2647
    %v2649 = vpop.f32.mrb[0].mxu0
    %v2650 = vadd.f32 %v1990, %v2649
    %v2651 = vpop.f32.mrb[0].mxu0
    %v2652 = vadd.f32 %v1986, %v2651
    %v2653 = vpop.f32.mrb[0].mxu0
    %v2654 = vadd.f32 %v1990, %v2653
    %2655 = vmatprep.mubr.bf16.mxu0 %v1914
    %2656 = vmatmul.mubr.bf16.gmra.mrb[0].mxu0 %v1913
    %v2657 = vpop.f32.mrb[0].mxu0
    %v2658 = vadd.f32 %v1986, %v2657
    %v2659 = vpop.f32.mrb[0].mxu0
    %v2660 = vadd.f32 %v1990, %v2659
    %v2661 = vpop.f32.mrb[0].mxu0
    %v2662 = vadd.f32 %v1986, %v2661
    %v2663 = vpop.f32.mrb[0].mxu0
    %v2664 = vadd.f32 %v1990, %v2663
    %2665 = vmatprep.mubr.bf16.mxu0 %v1916
    %2666 = vmatmul.mubr.bf16.gmra.mrb[0].mxu0 %v1915
    %v2667 = vpop.f32.mrb[0].mxu0
    %v2668 = vadd.f32 %v1986, %v2667
    %v2669 = vpop.f32.mrb[0].mxu0
    %v2670 = vadd.f32 %v1990, %v2669
    %v2671 = vpop.f32.mrb[0].mxu0
    %v2672 = vadd.f32 %v1986, %v2671
    %v2673 = vpop.f32.mrb[0].mxu0
    %v2674 = vadd.f32 %v1990, %v2673
    %2675 = vdwg.mxu0
    %2676 = vmatprep.subr.bf16.mxu0 %v2198
    %2677 = vmatpush1.bf16.msra.mxu0 %v2197
    %2678 = vmatprep.subr.bf16.mxu0 %v2202
    %2679 = vmatpush1.bf16.msra.mxu0 %v2201
    %2680 = vmatprep.subr.bf16.mxu0 %v2206
    %2681 = vmatpush1.bf16.msra.mxu0 %v2205
    %2682 = vmatprep.subr.bf16.mxu0 %v2210
    %2683 = vmatpush1.bf16.msra.mxu0 %v2209
    %2684 = vmatprep.subr.bf16.mxu0 %v2214
    %2685 = vmatpush1.bf16.msra.mxu0 %v2213
    %2686 = vmatprep.subr.bf16.mxu0 %v2218
    %2687 = vmatpush1.bf16.msra.mxu0 %v2217
    %2688 = vmatprep.subr.bf16.mxu0 %v2222
    %2689 = vmatpush1.bf16.msra.mxu0 %v2221
    %2690 = vmatprep.subr.bf16.mxu0 %v2226
    %2691 = vmatpush1.bf16.msra.mxu0 %v2225
    %2692 = vmatprep.subr.bf16.mxu0 %v2230
    %2693 = vmatpush1.bf16.msra.mxu0 %v2229
    %2694 = vmatprep.subr.bf16.mxu0 %v2234
    %2695 = vmatpush1.bf16.msra.mxu0 %v2233
    %2696 = vmatprep.subr.bf16.mxu0 %v2238
    %2697 = vmatpush1.bf16.msra.mxu0 %v2237
    %2698 = vmatprep.subr.bf16.mxu0 %v2242
    %2699 = vmatpush1.bf16.msra.mxu0 %v2241
    %2700 = vmatprep.subr.bf16.mxu0 %v2246
    %2701 = vmatpush1.bf16.msra.mxu0 %v2245
    %2702 = vmatprep.subr.bf16.mxu0 %v2250
    %2703 = vmatpush1.bf16.msra.mxu0 %v2249
    %2704 = vmatprep.subr.bf16.mxu0 %v2254
    %2705 = vmatpush1.bf16.msra.mxu0 %v2253
    %2706 = vmatprep.subr.bf16.mxu0 %v2258
    %2707 = vmatpush1.bf16.msra.mxu0 %v2257
    %2708 = vmatprep.mubr.bf16.mxu0 %v1854
    %2709 = vmatmul.mubr.bf16.gmra.mrb[0].mxu0 %v1853
    %v2710 = vpop.f32.mrb[0].mxu0
    %v2711 = vadd.f32 %v1994, %v2710
    %v2712 = vpop.f32.mrb[0].mxu0
    %v2713 = vadd.f32 %v1998, %v2712
    %v2714 = vpop.f32.mrb[0].mxu0
    %v2715 = vadd.f32 %v1994, %v2714
    %v2716 = vpop.f32.mrb[0].mxu0
    %v2717 = vadd.f32 %v1998, %v2716
    %2718 = vmatprep.mubr.bf16.mxu0 %v1856
    %2719 = vmatmul.mubr.bf16.gmra.mrb[0].mxu0 %v1855
    %v2720 = vpop.f32.mrb[0].mxu0
    %v2721 = vadd.f32 %v1994, %v2720
    %v2722 = vpop.f32.mrb[0].mxu0
    %v2723 = vadd.f32 %v1998, %v2722
    %v2724 = vpop.f32.mrb[0].mxu0
    %v2725 = vadd.f32 %v1994, %v2724
    %v2726 = vpop.f32.mrb[0].mxu0
    %v2727 = vadd.f32 %v1998, %v2726
    %2728 = vmatprep.mubr.bf16.mxu0 %v1858
    %2729 = vmatmul.mubr.bf16.gmra.mrb[0].mxu0 %v1857
    %v2730 = vpop.f32.mrb[0].mxu0
    %v2731 = vadd.f32 %v1994, %v2730
    %v2732 = vpop.f32.mrb[0].mxu0
    %v2733 = vadd.f32 %v1998, %v2732
    %v2734 = vpop.f32.mrb[0].mxu0
    %v2735 = vadd.f32 %v1994, %v2734
    %v2736 = vpop.f32.mrb[0].mxu0
    %v2737 = vadd.f32 %v1998, %v2736
    %2738 = vmatprep.mubr.bf16.mxu0 %v1860
    %2739 = vmatmul.mubr.bf16.gmra.mrb[0].mxu0 %v1859
    %v2740 = vpop.f32.mrb[0].mxu0
    %v2741 = vadd.f32 %v1994, %v2740
    %v2742 = vpop.f32.mrb[0].mxu0
    %v2743 = vadd.f32 %v1998, %v2742
    %v2744 = vpop.f32.mrb[0].mxu0
    %v2745 = vadd.f32 %v1994, %v2744
    %v2746 = vpop.f32.mrb[0].mxu0
    %v2747 = vadd.f32 %v1998, %v2746
    %2748 = vmatprep.mubr.bf16.mxu0 %v1862
    %2749 = vmatmul.mubr.bf16.gmra.mrb[0].mxu0 %v1861
    %v2750 = vpop.f32.mrb[0].mxu0
    %v2751 = vadd.f32 %v1994, %v2750
    %v2752 = vpop.f32.mrb[0].mxu0
    %v2753 = vadd.f32 %v1998, %v2752
    %v2754 = vpop.f32.mrb[0].mxu0
    %v2755 = vadd.f32 %v1994, %v2754
    %v2756 = vpop.f32.mrb[0].mxu0
    %v2757 = vadd.f32 %v1998, %v2756
    %2758 = vmatprep.mubr.bf16.mxu0 %v1864
    %2759 = vmatmul.mubr.bf16.gmra.mrb[0].mxu0 %v1863
    %v2760 = vpop.f32.mrb[0].mxu0
    %v2761 = vadd.f32 %v1994, %v2760
    %v2762 = vpop.f32.mrb[0].mxu0
    %v2763 = vadd.f32 %v1998, %v2762
    %v2764 = vpop.f32.mrb[0].mxu0
    %v2765 = vadd.f32 %v1994, %v2764
    %v2766 = vpop.f32.mrb[0].mxu0
    %v2767 = vadd.f32 %v1998, %v2766
    %2768 = vmatprep.mubr.bf16.mxu0 %v1866
    %2769 = vmatmul.mubr.bf16.gmra.mrb[0].mxu0 %v1865
    %v2770 = vpop.f32.mrb[0].mxu0
    %v2771 = vadd.f32 %v1994, %v2770
    %v2772 = vpop.f32.mrb[0].mxu0
    %v2773 = vadd.f32 %v1998, %v2772
    %v2774 = vpop.f32.mrb[0].mxu0
    %v2775 = vadd.f32 %v1994, %v2774
    %v2776 = vpop.f32.mrb[0].mxu0
    %v2777 = vadd.f32 %v1998, %v2776
    %2778 = vmatprep.mubr.bf16.mxu0 %v1868
    %2779 = vmatmul.mubr.bf16.gmra.mrb[0].mxu0 %v1867
    %v2780 = vpop.f32.mrb[0].mxu0
    %v2781 = vadd.f32 %v1994, %v2780
    %v2782 = vpop.f32.mrb[0].mxu0
    %v2783 = vadd.f32 %v1998, %v2782
    %v2784 = vpop.f32.mrb[0].mxu0
    %v2785 = vadd.f32 %v1994, %v2784
    %v2786 = vpop.f32.mrb[0].mxu0
    %v2787 = vadd.f32 %v1998, %v2786
    %2788 = vmatprep.mubr.bf16.mxu0 %v1870
    %2789 = vmatmul.mubr.bf16.gmra.mrb[0].mxu0 %v1869
    %v2790 = vpop.f32.mrb[0].mxu0
    %v2791 = vadd.f32 %v1994, %v2790
    %v2792 = vpop.f32.mrb[0].mxu0
    %v2793 = vadd.f32 %v1998, %v2792
    %v2794 = vpop.f32.mrb[0].mxu0
    %v2795 = vadd.f32 %v1994, %v2794
    %v2796 = vpop.f32.mrb[0].mxu0
    %v2797 = vadd.f32 %v1998, %v2796
    %2798 = vmatprep.mubr.bf16.mxu0 %v1872
    %2799 = vmatmul.mubr.bf16.gmra.mrb[0].mxu0 %v1871
    %v2800 = vpop.f32.mrb[0].mxu0
    %v2801 = vadd.f32 %v1994, %v2800
    %v2802 = vpop.f32.mrb[0].mxu0
    %v2803 = vadd.f32 %v1998, %v2802
    %v2804 = vpop.f32.mrb[0].mxu0
    %v2805 = vadd.f32 %v1994, %v2804
    %v2806 = vpop.f32.mrb[0].mxu0
    %v2807 = vadd.f32 %v1998, %v2806
    %2808 = vmatprep.mubr.bf16.mxu0 %v1874
    %2809 = vmatmul.mubr.bf16.gmra.mrb[0].mxu0 %v1873
    %v2810 = vpop.f32.mrb[0].mxu0
    %v2811 = vadd.f32 %v1994, %v2810
    %v2812 = vpop.f32.mrb[0].mxu0
    %v2813 = vadd.f32 %v1998, %v2812
    %v2814 = vpop.f32.mrb[0].mxu0
    %v2815 = vadd.f32 %v1994, %v2814
    %v2816 = vpop.f32.mrb[0].mxu0
    %v2817 = vadd.f32 %v1998, %v2816
    %2818 = vmatprep.mubr.bf16.mxu0 %v1876
    %2819 = vmatmul.mubr.bf16.gmra.mrb[0].mxu0 %v1875
    %v2820 = vpop.f32.mrb[0].mxu0
    %v2821 = vadd.f32 %v1994, %v2820
    %v2822 = vpop.f32.mrb[0].mxu0
    %v2823 = vadd.f32 %v1998, %v2822
    %v2824 = vpop.f32.mrb[0].mxu0
    %v2825 = vadd.f32 %v1994, %v2824
    %v2826 = vpop.f32.mrb[0].mxu0
    %v2827 = vadd.f32 %v1998, %v2826
    %2828 = vmatprep.mubr.bf16.mxu0 %v1878
    %2829 = vmatmul.mubr.bf16.gmra.mrb[0].mxu0 %v1877
    %v2830 = vpop.f32.mrb[0].mxu0
    %v2831 = vadd.f32 %v1994, %v2830
    %v2832 = vpop.f32.mrb[0].mxu0
    %v2833 = vadd.f32 %v1998, %v2832
    %v2834 = vpop.f32.mrb[0].mxu0
    %v2835 = vadd.f32 %v1994, %v2834
    %v2836 = vpop.f32.mrb[0].mxu0
    %v2837 = vadd.f32 %v1998, %v2836
    %2838 = vmatprep.mubr.bf16.mxu0 %v1880
    %2839 = vmatmul.mubr.bf16.gmra.mrb[0].mxu0 %v1879
    %v2840 = vpop.f32.mrb[0].mxu0
    %v2841 = vadd.f32 %v1994, %v2840
    %v2842 = vpop.f32.mrb[0].mxu0
    %v2843 = vadd.f32 %v1998, %v2842
    %v2844 = vpop.f32.mrb[0].mxu0
    %v2845 = vadd.f32 %v1994, %v2844
    %v2846 = vpop.f32.mrb[0].mxu0
    %v2847 = vadd.f32 %v1998, %v2846
    %2848 = vmatprep.mubr.bf16.mxu0 %v1882
    %2849 = vmatmul.mubr.bf16.gmra.mrb[0].mxu0 %v1881
    %v2850 = vpop.f32.mrb[0].mxu0
    %v2851 = vadd.f32 %v1994, %v2850
    %v2852 = vpop.f32.mrb[0].mxu0
    %v2853 = vadd.f32 %v1998, %v2852
    %v2854 = vpop.f32.mrb[0].mxu0
    %v2855 = vadd.f32 %v1994, %v2854
    %v2856 = vpop.f32.mrb[0].mxu0
    %v2857 = vadd.f32 %v1998, %v2856
    %2858 = vmatprep.mubr.bf16.mxu0 %v1884
    %2859 = vmatmul.mubr.bf16.gmra.mrb[0].mxu0 %v1883
    %v2860 = vpop.f32.mrb[0].mxu0
    %v2861 = vadd.f32 %v1994, %v2860
    %v2862 = vpop.f32.mrb[0].mxu0
    %v2863 = vadd.f32 %v1998, %v2862
    %v2864 = vpop.f32.mrb[0].mxu0
    %v2865 = vadd.f32 %v1994, %v2864
    %v2866 = vpop.f32.mrb[0].mxu0
    %v2867 = vadd.f32 %v1998, %v2866
    %2868 = vmatprep.mubr.bf16.mxu0 %v1886
    %2869 = vmatmul.mubr.bf16.gmra.mrb[0].mxu0 %v1885
    %v2870 = vpop.f32.mrb[0].mxu0
    %v2871 = vadd.f32 %v1994, %v2870
    %v2872 = vpop.f32.mrb[0].mxu0
    %v2873 = vadd.f32 %v1998, %v2872
    %v2874 = vpop.f32.mrb[0].mxu0
    %v2875 = vadd.f32 %v1994, %v2874
    %v2876 = vpop.f32.mrb[0].mxu0
    %v2877 = vadd.f32 %v1998, %v2876
    %2878 = vmatprep.mubr.bf16.mxu0 %v1888
    %2879 = vmatmul.mubr.bf16.gmra.mrb[0].mxu0 %v1887
    %v2880 = vpop.f32.mrb[0].mxu0
    %v2881 = vadd.f32 %v1994, %v2880
    %v2882 = vpop.f32.mrb[0].mxu0
    %v2883 = vadd.f32 %v1998, %v2882
    %v2884 = vpop.f32.mrb[0].mxu0
    %v2885 = vadd.f32 %v1994, %v2884
    %v2886 = vpop.f32.mrb[0].mxu0
    %v2887 = vadd.f32 %v1998, %v2886
    %2888 = vmatprep.mubr.bf16.mxu0 %v1890
    %2889 = vmatmul.mubr.bf16.gmra.mrb[0].mxu0 %v1889
    %v2890 = vpop.f32.mrb[0].mxu0
    %v2891 = vadd.f32 %v1994, %v2890
    %v2892 = vpop.f32.mrb[0].mxu0
    %v2893 = vadd.f32 %v1998, %v2892
    %v2894 = vpop.f32.mrb[0].mxu0
    %v2895 = vadd.f32 %v1994, %v2894
    %v2896 = vpop.f32.mrb[0].mxu0
    %v2897 = vadd.f32 %v1998, %v2896
    %2898 = vmatprep.mubr.bf16.mxu0 %v1892
    %2899 = vmatmul.mubr.bf16.gmra.mrb[0].mxu0 %v1891
    %v2900 = vpop.f32.mrb[0].mxu0
    %v2901 = vadd.f32 %v1994, %v2900
    %v2902 = vpop.f32.mrb[0].mxu0
    %v2903 = vadd.f32 %v1998, %v2902
    %v2904 = vpop.f32.mrb[0].mxu0
    %v2905 = vadd.f32 %v1994, %v2904
    %v2906 = vpop.f32.mrb[0].mxu0
    %v2907 = vadd.f32 %v1998, %v2906
    %2908 = vmatprep.mubr.bf16.mxu0 %v1894
    %2909 = vmatmul.mubr.bf16.gmra.mrb[0].mxu0 %v1893
    %v2910 = vpop.f32.mrb[0].mxu0
    %v2911 = vadd.f32 %v1994, %v2910
    %v2912 = vpop.f32.mrb[0].mxu0
    %v2913 = vadd.f32 %v1998, %v2912
    %v2914 = vpop.f32.mrb[0].mxu0
    %v2915 = vadd.f32 %v1994, %v2914
    %v2916 = vpop.f32.mrb[0].mxu0
    %v2917 = vadd.f32 %v1998, %v2916
    %2918 = vmatprep.mubr.bf16.mxu0 %v1896
    %2919 = vmatmul.mubr.bf16.gmra.mrb[0].mxu0 %v1895
    %v2920 = vpop.f32.mrb[0].mxu0
    %v2921 = vadd.f32 %v1994, %v2920
    %v2922 = vpop.f32.mrb[0].mxu0
    %v2923 = vadd.f32 %v1998, %v2922
    %v2924 = vpop.f32.mrb[0].mxu0
    %v2925 = vadd.f32 %v1994, %v2924
    %v2926 = vpop.f32.mrb[0].mxu0
    %v2927 = vadd.f32 %v1998, %v2926
    %2928 = vmatprep.mubr.bf16.mxu0 %v1898
    %2929 = vmatmul.mubr.bf16.gmra.mrb[0].mxu0 %v1897
    %v2930 = vpop.f32.mrb[0].mxu0
    %v2931 = vadd.f32 %v1994, %v2930
    %v2932 = vpop.f32.mrb[0].mxu0
    %v2933 = vadd.f32 %v1998, %v2932
    %v2934 = vpop.f32.mrb[0].mxu0
    %v2935 = vadd.f32 %v1994, %v2934
    %v2936 = vpop.f32.mrb[0].mxu0
    %v2937 = vadd.f32 %v1998, %v2936
    %2938 = vmatprep.mubr.bf16.mxu0 %v1900
    %2939 = vmatmul.mubr.bf16.gmra.mrb[0].mxu0 %v1899
    %v2940 = vpop.f32.mrb[0].mxu0
    %v2941 = vadd.f32 %v1994, %v2940
    %v2942 = vpop.f32.mrb[0].mxu0
    %v2943 = vadd.f32 %v1998, %v2942
    %v2944 = vpop.f32.mrb[0].mxu0
    %v2945 = vadd.f32 %v1994, %v2944
    %v2946 = vpop.f32.mrb[0].mxu0
    %v2947 = vadd.f32 %v1998, %v2946
    %2948 = vmatprep.mubr.bf16.mxu0 %v1902
    %2949 = vmatmul.mubr.bf16.gmra.mrb[0].mxu0 %v1901
    %v2950 = vpop.f32.mrb[0].mxu0
    %v2951 = vadd.f32 %v1994, %v2950
    %v2952 = vpop.f32.mrb[0].mxu0
    %v2953 = vadd.f32 %v1998, %v2952
    %v2954 = vpop.f32.mrb[0].mxu0
    %v2955 = vadd.f32 %v1994, %v2954
    %v2956 = vpop.f32.mrb[0].mxu0
    %v2957 = vadd.f32 %v1998, %v2956
    %2958 = vmatprep.mubr.bf16.mxu0 %v1904
    %2959 = vmatmul.mubr.bf16.gmra.mrb[0].mxu0 %v1903
    %v2960 = vpop.f32.mrb[0].mxu0
    %v2961 = vadd.f32 %v1994, %v2960
    %v2962 = vpop.f32.mrb[0].mxu0
    %v2963 = vadd.f32 %v1998, %v2962
    %v2964 = vpop.f32.mrb[0].mxu0
    %v2965 = vadd.f32 %v1994, %v2964
    %v2966 = vpop.f32.mrb[0].mxu0
    %v2967 = vadd.f32 %v1998, %v2966
    %2968 = vmatprep.mubr.bf16.mxu0 %v1906
    %2969 = vmatmul.mubr.bf16.gmra.mrb[0].mxu0 %v1905
    %v2970 = vpop.f32.mrb[0].mxu0
    %v2971 = vadd.f32 %v1994, %v2970
    %v2972 = vpop.f32.mrb[0].mxu0
    %v2973 = vadd.f32 %v1998, %v2972
    %v2974 = vpop.f32.mrb[0].mxu0
    %v2975 = vadd.f32 %v1994, %v2974
    %v2976 = vpop.f32.mrb[0].mxu0
    %v2977 = vadd.f32 %v1998, %v2976
    %2978 = vmatprep.mubr.bf16.mxu0 %v1908
    %2979 = vmatmul.mubr.bf16.gmra.mrb[0].mxu0 %v1907
    %v2980 = vpop.f32.mrb[0].mxu0
    %v2981 = vadd.f32 %v1994, %v2980
    %v2982 = vpop.f32.mrb[0].mxu0
    %v2983 = vadd.f32 %v1998, %v2982
    %v2984 = vpop.f32.mrb[0].mxu0
    %v2985 = vadd.f32 %v1994, %v2984
    %v2986 = vpop.f32.mrb[0].mxu0
    %v2987 = vadd.f32 %v1998, %v2986
    %2988 = vmatprep.mubr.bf16.mxu0 %v1910
    %2989 = vmatmul.mubr.bf16.gmra.mrb[0].mxu0 %v1909
    %v2990 = vpop.f32.mrb[0].mxu0
    %v2991 = vadd.f32 %v1994, %v2990
    %v2992 = vpop.f32.mrb[0].mxu0
    %v2993 = vadd.f32 %v1998, %v2992
    %v2994 = vpop.f32.mrb[0].mxu0
    %v2995 = vadd.f32 %v1994, %v2994
    %v2996 = vpop.f32.mrb[0].mxu0
    %v2997 = vadd.f32 %v1998, %v2996
    %2998 = vmatprep.mubr.bf16.mxu0 %v1912
    %2999 = vmatmul.mubr.bf16.gmra.mrb[0].mxu0 %v1911
    %v3000 = vpop.f32.mrb[0].mxu0
    %v3001 = vadd.f32 %v1994, %v3000
    %v3002 = vpop.f32.mrb[0].mxu0
    %v3003 = vadd.f32 %v1998, %v3002
    %v3004 = vpop.f32.mrb[0].mxu0
    %v3005 = vadd.f32 %v1994, %v3004
    %v3006 = vpop.f32.mrb[0].mxu0
    %v3007 = vadd.f32 %v1998, %v3006
    %3008 = vmatprep.mubr.bf16.mxu0 %v1914
    %3009 = vmatmul.mubr.bf16.gmra.mrb[0].mxu0 %v1913
    %v3010 = vpop.f32.mrb[0].mxu0
    %v3011 = vadd.f32 %v1994, %v3010
    %v3012 = vpop.f32.mrb[0].mxu0
    %v3013 = vadd.f32 %v1998, %v3012
    %v3014 = vpop.f32.mrb[0].mxu0
    %v3015 = vadd.f32 %v1994, %v3014
    %v3016 = vpop.f32.mrb[0].mxu0
    %v3017 = vadd.f32 %v1998, %v3016
    %3018 = vmatprep.mubr.bf16.mxu0 %v1916
    %3019 = vmatmul.mubr.bf16.gmra.mrb[0].mxu0 %v1915
    %v3020 = vpop.f32.mrb[0].mxu0
    %v3021 = vadd.f32 %v1994, %v3020
    %v3022 = vpop.f32.mrb[0].mxu0
    %v3023 = vadd.f32 %v1998, %v3022
    %v3024 = vpop.f32.mrb[0].mxu0
    %v3025 = vadd.f32 %v1994, %v3024
    %v3026 = vpop.f32.mrb[0].mxu0
    %v3027 = vadd.f32 %v1998, %v3026
    %3028 = vdwg.mxu0
    %v3029 = vmax.f32 %v2358, 0.0
    %v3030 = vmax.f32 %v2360, 0.0
    %v3031 = vmax.f32 %v2711, 0.0
    %v3032 = vmax.f32 %v2713, 0.0
    %v3033 = vmax.f32 %v2362, 0.0
    %v3034 = vmax.f32 %v2364, 0.0
    %v3035 = vmax.f32 %v2715, 0.0
    %v3036 = vmax.f32 %v2717, 0.0
    %v3037 = vmax.f32 %v2368, 0.0
    %v3038 = vmax.f32 %v2370, 0.0
    %v3039 = vmax.f32 %v2721, 0.0
    %v3040 = vmax.f32 %v2723, 0.0
    %v3041 = vmax.f32 %v2372, 0.0
    %v3042 = vmax.f32 %v2374, 0.0
    %v3043 = vmax.f32 %v2725, 0.0
    %v3044 = vmax.f32 %v2727, 0.0
    %v3045 = vmax.f32 %v2378, 0.0
    %v3046 = vmax.f32 %v2380, 0.0
    %v3047 = vmax.f32 %v2731, 0.0
    %v3048 = vmax.f32 %v2733, 0.0
    %v3049 = vmax.f32 %v2382, 0.0
    %v3050 = vmax.f32 %v2384, 0.0
    %v3051 = vmax.f32 %v2735, 0.0
    %v3052 = vmax.f32 %v2737, 0.0
    %v3053 = vmax.f32 %v2388, 0.0
    %v3054 = vmax.f32 %v2390, 0.0
    %v3055 = vmax.f32 %v2741, 0.0
    %v3056 = vmax.f32 %v2743, 0.0
    %v3057 = vmax.f32 %v2392, 0.0
    %v3058 = vmax.f32 %v2394, 0.0
    %v3059 = vmax.f32 %v2745, 0.0
    %v3060 = vmax.f32 %v2747, 0.0
    %v3061 = vmax.f32 %v2398, 0.0
    %v3062 = vmax.f32 %v2400, 0.0
    %v3063 = vmax.f32 %v2751, 0.0
    %v3064 = vmax.f32 %v2753, 0.0
    %v3065 = vmax.f32 %v2402, 0.0
    %v3066 = vmax.f32 %v2404, 0.0
    %v3067 = vmax.f32 %v2755, 0.0
    %v3068 = vmax.f32 %v2757, 0.0
    %v3069 = vmax.f32 %v2408, 0.0
    %v3070 = vmax.f32 %v2410, 0.0
    %v3071 = vmax.f32 %v2761, 0.0
    %v3072 = vmax.f32 %v2763, 0.0
    %v3073 = vmax.f32 %v2412, 0.0
    %v3074 = vmax.f32 %v2414, 0.0
    %v3075 = vmax.f32 %v2765, 0.0
    %v3076 = vmax.f32 %v2767, 0.0
    %v3077 = vmax.f32 %v2418, 0.0
    %v3078 = vmax.f32 %v2420, 0.0
    %v3079 = vmax.f32 %v2771, 0.0
    %v3080 = vmax.f32 %v2773, 0.0
    %v3081 = vmax.f32 %v2422, 0.0
    %v3082 = vmax.f32 %v2424, 0.0
    %v3083 = vmax.f32 %v2775, 0.0
    %v3084 = vmax.f32 %v2777, 0.0
    %v3085 = vmax.f32 %v2428, 0.0
    %v3086 = vmax.f32 %v2430, 0.0
    %v3087 = vmax.f32 %v2781, 0.0
    %v3088 = vmax.f32 %v2783, 0.0
    %v3089 = vmax.f32 %v2432, 0.0
    %v3090 = vmax.f32 %v2434, 0.0
    %v3091 = vmax.f32 %v2785, 0.0
    %v3092 = vmax.f32 %v2787, 0.0
    %v3093 = vmax.f32 %v2438, 0.0
    %v3094 = vmax.f32 %v2440, 0.0
    %v3095 = vmax.f32 %v2791, 0.0
    %v3096 = vmax.f32 %v2793, 0.0
    %v3097 = vmax.f32 %v2442, 0.0
    %v3098 = vmax.f32 %v2444, 0.0
    %v3099 = vmax.f32 %v2795, 0.0
    %v3100 = vmax.f32 %v2797, 0.0
    %v3101 = vmax.f32 %v2448, 0.0
    %v3102 = vmax.f32 %v2450, 0.0
    %v3103 = vmax.f32 %v2801, 0.0
    %v3104 = vmax.f32 %v2803, 0.0
    %v3105 = vmax.f32 %v2452, 0.0
    %v3106 = vmax.f32 %v2454, 0.0
    %v3107 = vmax.f32 %v2805, 0.0
    %v3108 = vmax.f32 %v2807, 0.0
    %v3109 = vmax.f32 %v2458, 0.0
    %v3110 = vmax.f32 %v2460, 0.0
    %v3111 = vmax.f32 %v2811, 0.0
    %v3112 = vmax.f32 %v2813, 0.0
    %v3113 = vmax.f32 %v2462, 0.0
    %v3114 = vmax.f32 %v2464, 0.0
    %v3115 = vmax.f32 %v2815, 0.0
    %v3116 = vmax.f32 %v2817, 0.0
    %v3117 = vmax.f32 %v2468, 0.0
    %v3118 = vmax.f32 %v2470, 0.0
    %v3119 = vmax.f32 %v2821, 0.0
    %v3120 = vmax.f32 %v2823, 0.0
    %v3121 = vmax.f32 %v2472, 0.0
    %v3122 = vmax.f32 %v2474, 0.0
    %v3123 = vmax.f32 %v2825, 0.0
    %v3124 = vmax.f32 %v2827, 0.0
    %v3125 = vmax.f32 %v2478, 0.0
    %v3126 = vmax.f32 %v2480, 0.0
    %v3127 = vmax.f32 %v2831, 0.0
    %v3128 = vmax.f32 %v2833, 0.0
    %v3129 = vmax.f32 %v2482, 0.0
    %v3130 = vmax.f32 %v2484, 0.0
    %v3131 = vmax.f32 %v2835, 0.0
    %v3132 = vmax.f32 %v2837, 0.0
    %v3133 = vmax.f32 %v2488, 0.0
    %v3134 = vmax.f32 %v2490, 0.0
    %v3135 = vmax.f32 %v2841, 0.0
    %v3136 = vmax.f32 %v2843, 0.0
    %v3137 = vmax.f32 %v2492, 0.0
    %v3138 = vmax.f32 %v2494, 0.0
    %v3139 = vmax.f32 %v2845, 0.0
    %v3140 = vmax.f32 %v2847, 0.0
    %v3141 = vmax.f32 %v2498, 0.0
    %v3142 = vmax.f32 %v2500, 0.0
    %v3143 = vmax.f32 %v2851, 0.0
    %v3144 = vmax.f32 %v2853, 0.0
    %v3145 = vmax.f32 %v2502, 0.0
    %v3146 = vmax.f32 %v2504, 0.0
    %v3147 = vmax.f32 %v2855, 0.0
    %v3148 = vmax.f32 %v2857, 0.0
    %v3149 = vmax.f32 %v2508, 0.0
    %v3150 = vmax.f32 %v2510, 0.0
    %v3151 = vmax.f32 %v2861, 0.0
    %v3152 = vmax.f32 %v2863, 0.0
    %v3153 = vmax.f32 %v2512, 0.0
    %v3154 = vmax.f32 %v2514, 0.0
    %v3155 = vmax.f32 %v2865, 0.0
    %v3156 = vmax.f32 %v2867, 0.0
    %v3157 = vmax.f32 %v2518, 0.0
    %v3158 = vmax.f32 %v2520, 0.0
    %v3159 = vmax.f32 %v2871, 0.0
    %v3160 = vmax.f32 %v2873, 0.0
    %v3161 = vmax.f32 %v2522, 0.0
    %v3162 = vmax.f32 %v2524, 0.0
    %v3163 = vmax.f32 %v2875, 0.0
    %v3164 = vmax.f32 %v2877, 0.0
    %v3165 = vmax.f32 %v2528, 0.0
    %v3166 = vmax.f32 %v2530, 0.0
    %v3167 = vmax.f32 %v2881, 0.0
    %v3168 = vmax.f32 %v2883, 0.0
    %v3169 = vmax.f32 %v2532, 0.0
    %v3170 = vmax.f32 %v2534, 0.0
    %v3171 = vmax.f32 %v2885, 0.0
    %v3172 = vmax.f32 %v2887, 0.0
    %v3173 = vmax.f32 %v2538, 0.0
    %v3174 = vmax.f32 %v2540, 0.0
    %v3175 = vmax.f32 %v2891, 0.0
    %v3176 = vmax.f32 %v2893, 0.0
    %v3177 = vmax.f32 %v2542, 0.0
    %v3178 = vmax.f32 %v2544, 0.0
    %v3179 = vmax.f32 %v2895, 0.0
    %v3180 = vmax.f32 %v2897, 0.0
    %v3181 = vmax.f32 %v2548, 0.0
    %v3182 = vmax.f32 %v2550, 0.0
    %v3183 = vmax.f32 %v2901, 0.0
    %v3184 = vmax.f32 %v2903, 0.0
    %v3185 = vmax.f32 %v2552, 0.0
    %v3186 = vmax.f32 %v2554, 0.0
    %v3187 = vmax.f32 %v2905, 0.0
    %v3188 = vmax.f32 %v2907, 0.0
    %v3189 = vmax.f32 %v2558, 0.0
    %v3190 = vmax.f32 %v2560, 0.0
    %v3191 = vmax.f32 %v2911, 0.0
    %v3192 = vmax.f32 %v2913, 0.0
    %v3193 = vmax.f32 %v2562, 0.0
    %v3194 = vmax.f32 %v2564, 0.0
    %v3195 = vmax.f32 %v2915, 0.0
    %v3196 = vmax.f32 %v2917, 0.0
    %v3197 = vmax.f32 %v2568, 0.0
    %v3198 = vmax.f32 %v2570, 0.0
    %v3199 = vmax.f32 %v2921, 0.0
    %v3200 = vmax.f32 %v2923, 0.0
    %v3201 = vmax.f32 %v2572, 0.0
    %v3202 = vmax.f32 %v2574, 0.0
    %v3203 = vmax.f32 %v2925, 0.0
    %v3204 = vmax.f32 %v2927, 0.0
    %v3205 = vmax.f32 %v2578, 0.0
    %v3206 = vmax.f32 %v2580, 0.0
    %v3207 = vmax.f32 %v2931, 0.0
    %v3208 = vmax.f32 %v2933, 0.0
    %v3209 = vmax.f32 %v2582, 0.0
    %v3210 = vmax.f32 %v2584, 0.0
    %v3211 = vmax.f32 %v2935, 0.0
    %v3212 = vmax.f32 %v2937, 0.0
    %v3213 = vmax.f32 %v2588, 0.0
    %v3214 = vmax.f32 %v2590, 0.0
    %v3215 = vmax.f32 %v2941, 0.0
    %v3216 = vmax.f32 %v2943, 0.0
    %v3217 = vmax.f32 %v2592, 0.0
    %v3218 = vmax.f32 %v2594, 0.0
    %v3219 = vmax.f32 %v2945, 0.0
    %v3220 = vmax.f32 %v2947, 0.0
    %v3221 = vmax.f32 %v2598, 0.0
    %v3222 = vmax.f32 %v2600, 0.0
    %v3223 = vmax.f32 %v2951, 0.0
    %v3224 = vmax.f32 %v2953, 0.0
    %v3225 = vmax.f32 %v2602, 0.0
    %v3226 = vmax.f32 %v2604, 0.0
    %v3227 = vmax.f32 %v2955, 0.0
    %v3228 = vmax.f32 %v2957, 0.0
    %v3229 = vmax.f32 %v2608, 0.0
    %v3230 = vmax.f32 %v2610, 0.0
    %v3231 = vmax.f32 %v2961, 0.0
    %v3232 = vmax.f32 %v2963, 0.0
    %v3233 = vmax.f32 %v2612, 0.0
    %v3234 = vmax.f32 %v2614, 0.0
    %v3235 = vmax.f32 %v2965, 0.0
    %v3236 = vmax.f32 %v2967, 0.0
    %v3237 = vmax.f32 %v2618, 0.0
    %v3238 = vmax.f32 %v2620, 0.0
    %v3239 = vmax.f32 %v2971, 0.0
    %v3240 = vmax.f32 %v2973, 0.0
    %v3241 = vmax.f32 %v2622, 0.0
    %v3242 = vmax.f32 %v2624, 0.0
    %v3243 = vmax.f32 %v2975, 0.0
    %v3244 = vmax.f32 %v2977, 0.0
    %v3245 = vmax.f32 %v2628, 0.0
    %v3246 = vmax.f32 %v2630, 0.0
    %v3247 = vmax.f32 %v2981, 0.0
    %v3248 = vmax.f32 %v2983, 0.0
    %v3249 = vmax.f32 %v2632, 0.0
    %v3250 = vmax.f32 %v2634, 0.0
    %v3251 = vmax.f32 %v2985, 0.0
    %v3252 = vmax.f32 %v2987, 0.0
    %v3253 = vmax.f32 %v2638, 0.0
    %v3254 = vmax.f32 %v2640, 0.0
    %v3255 = vmax.f32 %v2991, 0.0
    %v3256 = vmax.f32 %v2993, 0.0
    %v3257 = vmax.f32 %v2642, 0.0
    %v3258 = vmax.f32 %v2644, 0.0
    %v3259 = vmax.f32 %v2995, 0.0
    %v3260 = vmax.f32 %v2997, 0.0
    %v3261 = vmax.f32 %v2648, 0.0
    %v3262 = vmax.f32 %v2650, 0.0
    %v3263 = vmax.f32 %v3001, 0.0
    %v3264 = vmax.f32 %v3003, 0.0
    %v3265 = vmax.f32 %v2652, 0.0
    %v3266 = vmax.f32 %v2654, 0.0
    %v3267 = vmax.f32 %v3005, 0.0
    %v3268 = vmax.f32 %v3007, 0.0
    %v3269 = vmax.f32 %v2658, 0.0
    %v3270 = vmax.f32 %v2660, 0.0
    %v3271 = vmax.f32 %v3011, 0.0
    %v3272 = vmax.f32 %v3013, 0.0
    %v3273 = vmax.f32 %v2662, 0.0
    %v3274 = vmax.f32 %v2664, 0.0
    %v3275 = vmax.f32 %v3015, 0.0
    %v3276 = vmax.f32 %v3017, 0.0
    %v3277 = vmax.f32 %v2668, 0.0
    %v3278 = vmax.f32 %v2670, 0.0
    %v3279 = vmax.f32 %v3021, 0.0
    %v3280 = vmax.f32 %v3023, 0.0
    %v3281 = vmax.f32 %v2672, 0.0
    %v3282 = vmax.f32 %v2674, 0.0
    %v3283 = vmax.f32 %v3025, 0.0
    %v3284 = vmax.f32 %v3027, 0.0
    %v3285 = vmax.f32 %v3029, %v3033
    %v3286 = vmax.f32 %v3285, %v3037
    %v3287 = vmax.f32 %v3286, %v3041
    %v3288 = vmax.f32 %v3287, %v3045
    %v3289 = vmax.f32 %v3288, %v3049
    %v3290 = vmax.f32 %v3289, %v3053
    %v3291 = vmax.f32 %v3290, %v3057
    %v3292 = vmax.f32 %v3291, %v3061
    %v3293 = vmax.f32 %v3292, %v3065
    %v3294 = vmax.f32 %v3293, %v3069
    %v3295 = vmax.f32 %v3294, %v3073
    %v3296 = vmax.f32 %v3295, %v3077
    %v3297 = vmax.f32 %v3296, %v3081
    %v3298 = vmax.f32 %v3297, %v3085
    %v3299 = vmax.f32 %v3298, %v3089
    %v3300 = vrot.slane %v3299, 4
    %v3301 = vmax.f32 %v3299, %v3300
    %v3302 = vrot.slane %v3301, 2
    %v3303 = vmax.f32 %v3301, %v3302
    %v3304 = vrot.slane %v3303, 1
    %v3305 = vmax.f32 %v3303, %v3304
    %v3306 = vmax.f32 %v3030, %v3034
    %v3307 = vmax.f32 %v3306, %v3038
    %v3308 = vmax.f32 %v3307, %v3042
    %v3309 = vmax.f32 %v3308, %v3046
    %v3310 = vmax.f32 %v3309, %v3050
    %v3311 = vmax.f32 %v3310, %v3054
    %v3312 = vmax.f32 %v3311, %v3058
    %v3313 = vmax.f32 %v3312, %v3062
    %v3314 = vmax.f32 %v3313, %v3066
    %v3315 = vmax.f32 %v3314, %v3070
    %v3316 = vmax.f32 %v3315, %v3074
    %v3317 = vmax.f32 %v3316, %v3078
    %v3318 = vmax.f32 %v3317, %v3082
    %v3319 = vmax.f32 %v3318, %v3086
    %v3320 = vmax.f32 %v3319, %v3090
    %v3321 = vrot.slane %v3320, 4
    %v3322 = vmax.f32 %v3320, %v3321
    %v3323 = vrot.slane %v3322, 2
    %v3324 = vmax.f32 %v3322, %v3323
    %v3325 = vrot.slane %v3324, 1
    %v3326 = vmax.f32 %v3324, %v3325
    %v3327 = vmax.f32 %v3031, %v3035
    %v3328 = vmax.f32 %v3327, %v3039
    %v3329 = vmax.f32 %v3328, %v3043
    %v3330 = vmax.f32 %v3329, %v3047
    %v3331 = vmax.f32 %v3330, %v3051
    %v3332 = vmax.f32 %v3331, %v3055
    %v3333 = vmax.f32 %v3332, %v3059
    %v3334 = vmax.f32 %v3333, %v3063
    %v3335 = vmax.f32 %v3334, %v3067
    %v3336 = vmax.f32 %v3335, %v3071
    %v3337 = vmax.f32 %v3336, %v3075
    %v3338 = vmax.f32 %v3337, %v3079
    %v3339 = vmax.f32 %v3338, %v3083
    %v3340 = vmax.f32 %v3339, %v3087
    %v3341 = vmax.f32 %v3340, %v3091
    %v3342 = vrot.slane %v3341, 4
    %v3343 = vmax.f32 %v3341, %v3342
    %v3344 = vrot.slane %v3343, 2
    %v3345 = vmax.f32 %v3343, %v3344
    %v3346 = vrot.slane %v3345, 1
    %v3347 = vmax.f32 %v3345, %v3346
    %v3348 = vmax.f32 %v3032, %v3036
    %v3349 = vmax.f32 %v3348, %v3040
    %v3350 = vmax.f32 %v3349, %v3044
    %v3351 = vmax.f32 %v3350, %v3048
    %v3352 = vmax.f32 %v3351, %v3052
    %v3353 = vmax.f32 %v3352, %v3056
    %v3354 = vmax.f32 %v3353, %v3060
    %v3355 = vmax.f32 %v3354, %v3064
    %v3356 = vmax.f32 %v3355, %v3068
    %v3357 = vmax.f32 %v3356, %v3072
    %v3358 = vmax.f32 %v3357, %v3076
    %v3359 = vmax.f32 %v3358, %v3080
    %v3360 = vmax.f32 %v3359, %v3084
    %v3361 = vmax.f32 %v3360, %v3088
    %v3362 = vmax.f32 %v3361, %v3092
    %v3363 = vrot.slane %v3362, 4
    %v3364 = vmax.f32 %v3362, %v3363
    %v3365 = vrot.slane %v3364, 2
    %v3366 = vmax.f32 %v3364, %v3365
    %v3367 = vrot.slane %v3366, 1
    %v3368 = vmax.f32 %v3366, %v3367
    %v3369 = vmax.f32 %v3093, %v3097
    %v3370 = vmax.f32 %v3369, %v3101
    %v3371 = vmax.f32 %v3370, %v3105
    %v3372 = vmax.f32 %v3371, %v3109
    %v3373 = vmax.f32 %v3372, %v3113
    %v3374 = vmax.f32 %v3373, %v3117
    %v3375 = vmax.f32 %v3374, %v3121
    %v3376 = vmax.f32 %v3375, %v3125
    %v3377 = vmax.f32 %v3376, %v3129
    %v3378 = vmax.f32 %v3377, %v3133
    %v3379 = vmax.f32 %v3378, %v3137
    %v3380 = vmax.f32 %v3379, %v3141
    %v3381 = vmax.f32 %v3380, %v3145
    %v3382 = vmax.f32 %v3381, %v3149
    %v3383 = vmax.f32 %v3382, %v3153
    %v3384 = vrot.slane %v3383, 4
    %v3385 = vmax.f32 %v3383, %v3384
    %v3386 = vrot.slane %v3385, 2
    %v3387 = vmax.f32 %v3385, %v3386
    %v3388 = vrot.slane %v3387, 1
    %v3389 = vmax.f32 %v3387, %v3388
    %v3390 = vmax.f32 %v3094, %v3098
    %v3391 = vmax.f32 %v3390, %v3102
    %v3392 = vmax.f32 %v3391, %v3106
    %v3393 = vmax.f32 %v3392, %v3110
    %v3394 = vmax.f32 %v3393, %v3114
    %v3395 = vmax.f32 %v3394, %v3118
    %v3396 = vmax.f32 %v3395, %v3122
    %v3397 = vmax.f32 %v3396, %v3126
    %v3398 = vmax.f32 %v3397, %v3130
    %v3399 = vmax.f32 %v3398, %v3134
    %v3400 = vmax.f32 %v3399, %v3138
    %v3401 = vmax.f32 %v3400, %v3142
    %v3402 = vmax.f32 %v3401, %v3146
    %v3403 = vmax.f32 %v3402, %v3150
    %v3404 = vmax.f32 %v3403, %v3154
    %v3405 = vrot.slane %v3404, 4
    %v3406 = vmax.f32 %v3404, %v3405
    %v3407 = vrot.slane %v3406, 2
    %v3408 = vmax.f32 %v3406, %v3407
    %v3409 = vrot.slane %v3408, 1
    %v3410 = vmax.f32 %v3408, %v3409
    %v3411 = vmax.f32 %v3095, %v3099
    %v3412 = vmax.f32 %v3411, %v3103
    %v3413 = vmax.f32 %v3412, %v3107
    %v3414 = vmax.f32 %v3413, %v3111
    %v3415 = vmax.f32 %v3414, %v3115
    %v3416 = vmax.f32 %v3415, %v3119
    %v3417 = vmax.f32 %v3416, %v3123
    %v3418 = vmax.f32 %v3417, %v3127
    %v3419 = vmax.f32 %v3418, %v3131
    %v3420 = vmax.f32 %v3419, %v3135
    %v3421 = vmax.f32 %v3420, %v3139
    %v3422 = vmax.f32 %v3421, %v3143
    %v3423 = vmax.f32 %v3422, %v3147
    %v3424 = vmax.f32 %v3423, %v3151
    %v3425 = vmax.f32 %v3424, %v3155
    %v3426 = vrot.slane %v3425, 4
    %v3427 = vmax.f32 %v3425, %v3426
    %v3428 = vrot.slane %v3427, 2
    %v3429 = vmax.f32 %v3427, %v3428
    %v3430 = vrot.slane %v3429, 1
    %v3431 = vmax.f32 %v3429, %v3430
    %v3432 = vmax.f32 %v3096, %v3100
    %v3433 = vmax.f32 %v3432, %v3104
    %v3434 = vmax.f32 %v3433, %v3108
    %v3435 = vmax.f32 %v3434, %v3112
    %v3436 = vmax.f32 %v3435, %v3116
    %v3437 = vmax.f32 %v3436, %v3120
    %v3438 = vmax.f32 %v3437, %v3124
    %v3439 = vmax.f32 %v3438, %v3128
    %v3440 = vmax.f32 %v3439, %v3132
    %v3441 = vmax.f32 %v3440, %v3136
    %v3442 = vmax.f32 %v3441, %v3140
    %v3443 = vmax.f32 %v3442, %v3144
    %v3444 = vmax.f32 %v3443, %v3148
    %v3445 = vmax.f32 %v3444, %v3152
    %v3446 = vmax.f32 %v3445, %v3156
    %v3447 = vrot.slane %v3446, 4
    %v3448 = vmax.f32 %v3446, %v3447
    %v3449 = vrot.slane %v3448, 2
    %v3450 = vmax.f32 %v3448, %v3449
    %v3451 = vrot.slane %v3450, 1
    %v3452 = vmax.f32 %v3450, %v3451
    %v3453 = vmax.f32 %v3157, %v3161
    %v3454 = vmax.f32 %v3453, %v3165
    %v3455 = vmax.f32 %v3454, %v3169
    %v3456 = vmax.f32 %v3455, %v3173
    %v3457 = vmax.f32 %v3456, %v3177
    %v3458 = vmax.f32 %v3457, %v3181
    %v3459 = vmax.f32 %v3458, %v3185
    %v3460 = vmax.f32 %v3459, %v3189
    %v3461 = vmax.f32 %v3460, %v3193
    %v3462 = vmax.f32 %v3461, %v3197
    %v3463 = vmax.f32 %v3462, %v3201
    %v3464 = vmax.f32 %v3463, %v3205
    %v3465 = vmax.f32 %v3464, %v3209
    %v3466 = vmax.f32 %v3465, %v3213
    %v3467 = vmax.f32 %v3466, %v3217
    %v3468 = vrot.slane %v3467, 4
    %v3469 = vmax.f32 %v3467, %v3468
    %v3470 = vrot.slane %v3469, 2
    %v3471 = vmax.f32 %v3469, %v3470
    %v3472 = vrot.slane %v3471, 1
    %v3473 = vmax.f32 %v3471, %v3472
    %v3474 = vmax.f32 %v3158, %v3162
    %v3475 = vmax.f32 %v3474, %v3166
    %v3476 = vmax.f32 %v3475, %v3170
    %v3477 = vmax.f32 %v3476, %v3174
    %v3478 = vmax.f32 %v3477, %v3178
    %v3479 = vmax.f32 %v3478, %v3182
    %v3480 = vmax.f32 %v3479, %v3186
    %v3481 = vmax.f32 %v3480, %v3190
    %v3482 = vmax.f32 %v3481, %v3194
    %v3483 = vmax.f32 %v3482, %v3198
    %v3484 = vmax.f32 %v3483, %v3202
    %v3485 = vmax.f32 %v3484, %v3206
    %v3486 = vmax.f32 %v3485, %v3210
    %v3487 = vmax.f32 %v3486, %v3214
    %v3488 = vmax.f32 %v3487, %v3218
    %v3489 = vrot.slane %v3488, 4
    %v3490 = vmax.f32 %v3488, %v3489
    %v3491 = vrot.slane %v3490, 2
    %v3492 = vmax.f32 %v3490, %v3491
    %v3493 = vrot.slane %v3492, 1
    %v3494 = vmax.f32 %v3492, %v3493
    %v3495 = vmax.f32 %v3159, %v3163
    %v3496 = vmax.f32 %v3495, %v3167
    %v3497 = vmax.f32 %v3496, %v3171
    %v3498 = vmax.f32 %v3497, %v3175
    %v3499 = vmax.f32 %v3498, %v3179
    %v3500 = vmax.f32 %v3499, %v3183
    %v3501 = vmax.f32 %v3500, %v3187
    %v3502 = vmax.f32 %v3501, %v3191
    %v3503 = vmax.f32 %v3502, %v3195
    %v3504 = vmax.f32 %v3503, %v3199
    %v3505 = vmax.f32 %v3504, %v3203
    %v3506 = vmax.f32 %v3505, %v3207
    %v3507 = vmax.f32 %v3506, %v3211
    %v3508 = vmax.f32 %v3507, %v3215
    %v3509 = vmax.f32 %v3508, %v3219
    %v3510 = vrot.slane %v3509, 4
    %v3511 = vmax.f32 %v3509, %v3510
    %v3512 = vrot.slane %v3511, 2
    %v3513 = vmax.f32 %v3511, %v3512
    %v3514 = vrot.slane %v3513, 1
    %v3515 = vmax.f32 %v3513, %v3514
    %v3516 = vmax.f32 %v3160, %v3164
    %v3517 = vmax.f32 %v3516, %v3168
    %v3518 = vmax.f32 %v3517, %v3172
    %v3519 = vmax.f32 %v3518, %v3176
    %v3520 = vmax.f32 %v3519, %v3180
    %v3521 = vmax.f32 %v3520, %v3184
    %v3522 = vmax.f32 %v3521, %v3188
    %v3523 = vmax.f32 %v3522, %v3192
    %v3524 = vmax.f32 %v3523, %v3196
    %v3525 = vmax.f32 %v3524, %v3200
    %v3526 = vmax.f32 %v3525, %v3204
    %v3527 = vmax.f32 %v3526, %v3208
    %v3528 = vmax.f32 %v3527, %v3212
    %v3529 = vmax.f32 %v3528, %v3216
    %v3530 = vmax.f32 %v3529, %v3220
    %v3531 = vrot.slane %v3530, 4
    %v3532 = vmax.f32 %v3530, %v3531
    %v3533 = vrot.slane %v3532, 2
    %v3534 = vmax.f32 %v3532, %v3533
    %v3535 = vrot.slane %v3534, 1
    %v3536 = vmax.f32 %v3534, %v3535
    %v3537 = vmax.f32 %v3221, %v3225
    %v3538 = vmax.f32 %v3537, %v3229
    %v3539 = vmax.f32 %v3538, %v3233
    %v3540 = vmax.f32 %v3539, %v3237
    %v3541 = vmax.f32 %v3540, %v3241
    %v3542 = vmax.f32 %v3541, %v3245
    %v3543 = vmax.f32 %v3542, %v3249
    %v3544 = vmax.f32 %v3543, %v3253
    %v3545 = vmax.f32 %v3544, %v3257
    %v3546 = vmax.f32 %v3545, %v3261
    %v3547 = vmax.f32 %v3546, %v3265
    %v3548 = vmax.f32 %v3547, %v3269
    %v3549 = vmax.f32 %v3548, %v3273
    %v3550 = vmax.f32 %v3549, %v3277
    %v3551 = vmax.f32 %v3550, %v3281
    %v3552 = vrot.slane %v3551, 4
    %v3553 = vmax.f32 %v3551, %v3552
    %v3554 = vrot.slane %v3553, 2
    %v3555 = vmax.f32 %v3553, %v3554
    %v3556 = vrot.slane %v3555, 1
    %v3557 = vmax.f32 %v3555, %v3556
    %v3558 = vmax.f32 %v3222, %v3226
    %v3559 = vmax.f32 %v3558, %v3230
    %v3560 = vmax.f32 %v3559, %v3234
    %v3561 = vmax.f32 %v3560, %v3238
    %v3562 = vmax.f32 %v3561, %v3242
    %v3563 = vmax.f32 %v3562, %v3246
    %v3564 = vmax.f32 %v3563, %v3250
    %v3565 = vmax.f32 %v3564, %v3254
    %v3566 = vmax.f32 %v3565, %v3258
    %v3567 = vmax.f32 %v3566, %v3262
    %v3568 = vmax.f32 %v3567, %v3266
    %v3569 = vmax.f32 %v3568, %v3270
    %v3570 = vmax.f32 %v3569, %v3274
    %v3571 = vmax.f32 %v3570, %v3278
    %v3572 = vmax.f32 %v3571, %v3282
    %v3573 = vrot.slane %v3572, 4
    %v3574 = vmax.f32 %v3572, %v3573
    %v3575 = vrot.slane %v3574, 2
    %v3576 = vmax.f32 %v3574, %v3575
    %v3577 = vrot.slane %v3576, 1
    %v3578 = vmax.f32 %v3576, %v3577
    %v3579 = vmax.f32 %v3223, %v3227
    %v3580 = vmax.f32 %v3579, %v3231
    %v3581 = vmax.f32 %v3580, %v3235
    %v3582 = vmax.f32 %v3581, %v3239
    %v3583 = vmax.f32 %v3582, %v3243
    %v3584 = vmax.f32 %v3583, %v3247
    %v3585 = vmax.f32 %v3584, %v3251
    %v3586 = vmax.f32 %v3585, %v3255
    %v3587 = vmax.f32 %v3586, %v3259
    %v3588 = vmax.f32 %v3587, %v3263
    %v3589 = vmax.f32 %v3588, %v3267
    %v3590 = vmax.f32 %v3589, %v3271
    %v3591 = vmax.f32 %v3590, %v3275
    %v3592 = vmax.f32 %v3591, %v3279
    %v3593 = vmax.f32 %v3592, %v3283
    %v3594 = vrot.slane %v3593, 4
    %v3595 = vmax.f32 %v3593, %v3594
    %v3596 = vrot.slane %v3595, 2
    %v3597 = vmax.f32 %v3595, %v3596
    %v3598 = vrot.slane %v3597, 1
    %v3599 = vmax.f32 %v3597, %v3598
    %v3600 = vmax.f32 %v3224, %v3228
    %v3601 = vmax.f32 %v3600, %v3232
    %v3602 = vmax.f32 %v3601, %v3236
    %v3603 = vmax.f32 %v3602, %v3240
    %v3604 = vmax.f32 %v3603, %v3244
    %v3605 = vmax.f32 %v3604, %v3248
    %v3606 = vmax.f32 %v3605, %v3252
    %v3607 = vmax.f32 %v3606, %v3256
    %v3608 = vmax.f32 %v3607, %v3260
    %v3609 = vmax.f32 %v3608, %v3264
    %v3610 = vmax.f32 %v3609, %v3268
    %v3611 = vmax.f32 %v3610, %v3272
    %v3612 = vmax.f32 %v3611, %v3276
    %v3613 = vmax.f32 %v3612, %v3280
    %v3614 = vmax.f32 %v3613, %v3284
    %v3615 = vrot.slane %v3614, 4
    %v3616 = vmax.f32 %v3614, %v3615
    %v3617 = vrot.slane %v3616, 2
    %v3618 = vmax.f32 %v3616, %v3617
    %v3619 = vrot.slane %v3618, 1
    %v3620 = vmax.f32 %v3618, %v3619
    %v3621 = vpack.c.bf16 %v3305, %v3305
    %v3622 = vpack.c.bf16 %v3326, %v3326
    %v3623 = vpack.c.bf16 %v3347, %v3347
    %v3624 = vpack.c.bf16 %v3368, %v3368
    %v3625 = vpack.c.bf16 %v3389, %v3389
    %v3626 = vpack.c.bf16 %v3410, %v3410
    %v3627 = vpack.c.bf16 %v3431, %v3431
    %v3628 = vpack.c.bf16 %v3452, %v3452
    %v3629 = vpack.c.bf16 %v3473, %v3473
    %v3630 = vpack.c.bf16 %v3494, %v3494
    %v3631 = vpack.c.bf16 %v3515, %v3515
    %v3632 = vpack.c.bf16 %v3536, %v3536
    %v3633 = vpack.c.bf16 %v3557, %v3557
    %v3634 = vpack.c.bf16 %v3578, %v3578
    %v3635 = vpack.c.bf16 %v3599, %v3599
    %v3636 = vpack.c.bf16 %v3620, %v3620
    %p3637 = scmp.eq.s32.totalorder 0, 0
    // Predicated region
    $region46: #{tpu_custom_call.1} parent=1 // pred_check
      %p3638 = pneg %p3637
    $region47: #{tpu_custom_call.1} parent=1 // pred_check_branch
      %3640 = sbr.rel (%p3638) target = $region49
    $region48: #{tpu_custom_call.1} parent=1 // pred_region
      %v3657 = vcombine.low %v3621, %v3622
      %v3658 = vcombine.low %v3623, %v3624
      %v3660 = vunpack.c.l.s4 1983009808
      %v3661 = vunpack.c.0.s8 %v3660
      %v3662 = vlaneseq
      %v3663 = vshrl.u32 %v3662, 7
      %v3664 = vsub.s32 %v3661, %v3663
      %v3665 = vrot.slane %v3657, %v3664
      %v3667 = vunpack.c.l.s4 1983009808
      %v3668 = vunpack.c.0.s8 %v3667
      %v3669 = vlaneseq
      %v3670 = vshrl.u32 %v3669, 7
      %v3671 = vsub.s32 %v3668, %v3670
      %v3672 = vrot.slane %v3658, %v3671
      %v3673 = vcombine.low %v3665, %v3672
      %v3674 = vcombine.low %v3625, %v3626
      %v3675 = vcombine.low %v3627, %v3628
      %v3677 = vunpack.c.l.s4 1983009808
      %v3678 = vunpack.c.0.s8 %v3677
      %v3679 = vlaneseq
      %v3680 = vshrl.u32 %v3679, 7
      %v3681 = vsub.s32 %v3678, %v3680
      %v3682 = vrot.slane %v3674, %v3681
      %v3684 = vunpack.c.l.s4 1983009808
      %v3685 = vunpack.c.0.s8 %v3684
      %v3686 = vlaneseq
      %v3687 = vshrl.u32 %v3686, 7
      %v3688 = vsub.s32 %v3685, %v3687
      %v3689 = vrot.slane %v3675, %v3688
      %v3690 = vcombine.low %v3682, %v3689
      %v3691 = vcombine.low %v3629, %v3630
      %v3692 = vcombine.low %v3631, %v3632
      %v3694 = vunpack.c.l.s4 1983009808
      %v3695 = vunpack.c.0.s8 %v3694
      %v3696 = vlaneseq
      %v3697 = vshrl.u32 %v3696, 7
      %v3698 = vsub.s32 %v3695, %v3697
      %v3699 = vrot.slane %v3691, %v3698
      %v3701 = vunpack.c.l.s4 1983009808
      %v3702 = vunpack.c.0.s8 %v3701
      %v3703 = vlaneseq
      %v3704 = vshrl.u32 %v3703, 7
      %v3705 = vsub.s32 %v3702, %v3704
      %v3706 = vrot.slane %v3692, %v3705
      %v3707 = vcombine.low %v3699, %v3706
      %v3708 = vcombine.low %v3633, %v3634
      %v3709 = vcombine.low %v3635, %v3636
      %v3711 = vunpack.c.l.s4 1983009808
      %v3712 = vunpack.c.0.s8 %v3711
      %v3713 = vlaneseq
      %v3714 = vshrl.u32 %v3713, 7
      %v3715 = vsub.s32 %v3712, %v3714
      %v3716 = vrot.slane %v3708, %v3715
      %v3718 = vunpack.c.l.s4 1983009808
      %v3719 = vunpack.c.0.s8 %v3718
      %v3720 = vlaneseq
      %v3721 = vshrl.u32 %v3720, 7
      %v3722 = vsub.s32 %v3719, %v3721
      %v3723 = vrot.slane %v3709, %v3722
      %v3724 = vcombine.low %v3716, %v3723
      %v3725 = vcombine.high %v3673, %v3673
      %v3727 = vunpack.c.l.s4 1983009808
      %v3728 = vunpack.c.0.s8 %v3727
      %v3729 = vlaneseq
      %v3730 = vshrl.u32 %v3729, 7
      %v3731 = vsub.s32 %v3728, %v3730
      %v3732 = vrot.slane %v3673, %v3731
      %v3734 = vunpack.c.l.s4 1983009808
      %v3735 = vunpack.c.0.s8 %v3734
      %v3736 = vlaneseq
      %v3737 = vshrl.u32 %v3736, 7
      %v3738 = vsub.s32 %v3735, %v3737
      %v3739 = vrot.slane %v3725, %v3738
      %v3740 = vcombine.high %v3690, %v3690
      %v3742 = vunpack.c.l.s4 1983009808
      %v3743 = vunpack.c.0.s8 %v3742
      %v3744 = vlaneseq
      %v3745 = vshrl.u32 %v3744, 7
      %v3746 = vsub.s32 %v3743, %v3745
      %v3747 = vrot.slane %v3690, %v3746
      %v3749 = vunpack.c.l.s4 1983009808
      %v3750 = vunpack.c.0.s8 %v3749
      %v3751 = vlaneseq
      %v3752 = vshrl.u32 %v3751, 7
      %v3753 = vsub.s32 %v3750, %v3752
      %v3754 = vrot.slane %v3740, %v3753
      %v3755 = vcombine.high %v3707, %v3707
      %v3757 = vunpack.c.l.s4 1983009808
      %v3758 = vunpack.c.0.s8 %v3757
      %v3759 = vlaneseq
      %v3760 = vshrl.u32 %v3759, 7
      %v3761 = vsub.s32 %v3758, %v3760
      %v3762 = vrot.slane %v3707, %v3761
      %v3764 = vunpack.c.l.s4 1983009808
      %v3765 = vunpack.c.0.s8 %v3764
      %v3766 = vlaneseq
      %v3767 = vshrl.u32 %v3766, 7
      %v3768 = vsub.s32 %v3765, %v3767
      %v3769 = vrot.slane %v3755, %v3768
      %v3770 = vcombine.high %v3724, %v3724
      %v3772 = vunpack.c.l.s4 1983009808
      %v3773 = vunpack.c.0.s8 %v3772
      %v3774 = vlaneseq
      %v3775 = vshrl.u32 %v3774, 7
      %v3776 = vsub.s32 %v3773, %v3775
      %v3777 = vrot.slane %v3724, %v3776
      %v3779 = vunpack.c.l.s4 1983009808
      %v3780 = vunpack.c.0.s8 %v3779
      %v3781 = vlaneseq
      %v3782 = vshrl.u32 %v3781, 7
      %v3783 = vsub.s32 %v3780, %v3782
      %v3784 = vrot.slane %v3770, %v3783
      %v3785 = vunpack.c.l.b16 %v3732
      %v3786 = vunpack.c.h.b16 %v3732
      %v3787 = vunpack.c.l.b16 %v3739
      %v3788 = vunpack.c.h.b16 %v3739
      %v3789 = vunpack.c.l.b16 %v3747
      %v3790 = vunpack.c.h.b16 %v3747
      %v3791 = vunpack.c.l.b16 %v3754
      %v3792 = vunpack.c.h.b16 %v3754
      %v3793 = vunpack.c.l.b16 %v3762
      %v3794 = vunpack.c.h.b16 %v3762
      %v3795 = vunpack.c.l.b16 %v3769
      %v3796 = vunpack.c.h.b16 %v3769
      %v3797 = vunpack.c.l.b16 %v3777
      %v3798 = vunpack.c.h.b16 %v3777
      %v3799 = vunpack.c.l.b16 %v3784
      %v3800 = vunpack.c.h.b16 %v3784
      %v3801 = vrot.slane %v3789, 7
      %vm3802 = vcmask 1041409
      %v3803 = vsel %vm3802, %v3801, %v3785
      %v3804 = vrot.slane %v3793, 6
      %vm3805 = vcmask 1042434
      %v3806 = vsel %vm3805, %v3804, %v3803
      %v3807 = vrot.slane %v3797, 5
      %vm3808 = vcmask 1043459
      %v3809 = vsel %vm3808, %v3807, %v3806
      %v3810 = vrot.slane %v3790, 7
      %v3811 = vsel %vm3802, %v3810, %v3786
      %v3812 = vrot.slane %v3794, 6
      %v3813 = vsel %vm3805, %v3812, %v3811
      %v3814 = vrot.slane %v3798, 5
      %v3815 = vsel %vm3808, %v3814, %v3813
      %v3816 = vrot.slane %v3791, 7
      %v3817 = vsel %vm3802, %v3816, %v3787
      %v3818 = vrot.slane %v3795, 6
      %v3819 = vsel %vm3805, %v3818, %v3817
      %v3820 = vrot.slane %v3799, 5
      %v3821 = vsel %vm3808, %v3820, %v3819
      %v3822 = vrot.slane %v3792, 7
      %v3823 = vsel %vm3802, %v3822, %v3788
      %v3824 = vrot.slane %v3796, 6
      %v3825 = vsel %vm3805, %v3824, %v3823
      %v3826 = vrot.slane %v3800, 5
      %v3827 = vsel %vm3808, %v3826, %v3825
      %v3828 = vpack.c.b16 %v3815, %v3809
      %v3829 = vpack.c.b16 %v3827, %v3821
      %v3831 = vunpack.c.l.s4 1983009808
      %v3832 = vunpack.c.0.s8 %v3831
      %v3833 = vlaneseq
      %v3834 = vshrl.u32 %v3833, 7
      %v3835 = vsub.s32 %v3832, %v3834
      %v3836 = vrot.slane %v3828, %v3835
      %v3838 = vunpack.c.l.s4 1983009808
      %v3839 = vunpack.c.0.s8 %v3838
      %v3840 = vlaneseq
      %v3841 = vshrl.u32 %v3840, 7
      %v3842 = vsub.s32 %v3839, %v3841
      %v3843 = vrot.slane %v3829, %v3842
      %v3844 = vcombine.low %v3836, %v3843
      %3846 = vst [vmem:[#allocation7] sm:$0xff] %v3844
    $region49: #{tpu_custom_call.1} parent=1 // pred_fallthru
      _
    %p3847 = scmp.gt.s32.totalorder 0, 0
    // Predicated region
    $region50: #{tpu_custom_call.1} parent=1 // pred_check
      %p3848 = pneg %p3847
    $region51: #{tpu_custom_call.1} parent=1 // pred_check_branch
      %3850 = sbr.rel (%p3848) target = $region53
    $region52: #{tpu_custom_call.1} parent=1 // pred_region
      %v3851 = vld [vmem:[#allocation7] sm:$0xff]
      %v3868 = vcombine.low %v3621, %v3622
      %v3869 = vcombine.low %v3623, %v3624
      %v3871 = vunpack.c.l.s4 1983009808
      %v3872 = vunpack.c.0.s8 %v3871
      %v3873 = vlaneseq
      %v3874 = vshrl.u32 %v3873, 7
      %v3875 = vsub.s32 %v3872, %v3874
      %v3876 = vrot.slane %v3868, %v3875
      %v3878 = vunpack.c.l.s4 1983009808
      %v3879 = vunpack.c.0.s8 %v3878
      %v3880 = vlaneseq
      %v3881 = vshrl.u32 %v3880, 7
      %v3882 = vsub.s32 %v3879, %v3881
      %v3883 = vrot.slane %v3869, %v3882
      %v3884 = vcombine.low %v3876, %v3883
      %v3885 = vcombine.low %v3625, %v3626
      %v3886 = vcombine.low %v3627, %v3628
      %v3888 = vunpack.c.l.s4 1983009808
      %v3889 = vunpack.c.0.s8 %v3888
      %v3890 = vlaneseq
      %v3891 = vshrl.u32 %v3890, 7
      %v3892 = vsub.s32 %v3889, %v3891
      %v3893 = vrot.slane %v3885, %v3892
      %v3895 = vunpack.c.l.s4 1983009808
      %v3896 = vunpack.c.0.s8 %v3895
      %v3897 = vlaneseq
      %v3898 = vshrl.u32 %v3897, 7
      %v3899 = vsub.s32 %v3896, %v3898
      %v3900 = vrot.slane %v3886, %v3899
      %v3901 = vcombine.low %v3893, %v3900
      %v3902 = vcombine.low %v3629, %v3630
      %v3903 = vcombine.low %v3631, %v3632
      %v3905 = vunpack.c.l.s4 1983009808
      %v3906 = vunpack.c.0.s8 %v3905
      %v3907 = vlaneseq
      %v3908 = vshrl.u32 %v3907, 7
      %v3909 = vsub.s32 %v3906, %v3908
      %v3910 = vrot.slane %v3902, %v3909
      %v3912 = vunpack.c.l.s4 1983009808
      %v3913 = vunpack.c.0.s8 %v3912
      %v3914 = vlaneseq
      %v3915 = vshrl.u32 %v3914, 7
      %v3916 = vsub.s32 %v3913, %v3915
      %v3917 = vrot.slane %v3903, %v3916
      %v3918 = vcombine.low %v3910, %v3917
      %v3919 = vcombine.low %v3633, %v3634
      %v3920 = vcombine.low %v3635, %v3636
      %v3922 = vunpack.c.l.s4 1983009808
      %v3923 = vunpack.c.0.s8 %v3922
      %v3924 = vlaneseq
      %v3925 = vshrl.u32 %v3924, 7
      %v3926 = vsub.s32 %v3923, %v3925
      %v3927 = vrot.slane %v3919, %v3926
      %v3929 = vunpack.c.l.s4 1983009808
      %v3930 = vunpack.c.0.s8 %v3929
      %v3931 = vlaneseq
      %v3932 = vshrl.u32 %v3931, 7
      %v3933 = vsub.s32 %v3930, %v3932
      %v3934 = vrot.slane %v3920, %v3933
      %v3935 = vcombine.low %v3927, %v3934
      %v3936 = vcombine.high %v3884, %v3884
      %v3938 = vunpack.c.l.s4 1983009808
      %v3939 = vunpack.c.0.s8 %v3938
      %v3940 = vlaneseq
      %v3941 = vshrl.u32 %v3940, 7
      %v3942 = vsub.s32 %v3939, %v3941
      %v3943 = vrot.slane %v3884, %v3942
      %v3945 = vunpack.c.l.s4 1983009808
      %v3946 = vunpack.c.0.s8 %v3945
      %v3947 = vlaneseq
      %v3948 = vshrl.u32 %v3947, 7
      %v3949 = vsub.s32 %v3946, %v3948
      %v3950 = vrot.slane %v3936, %v3949
      %v3951 = vcombine.high %v3901, %v3901
      %v3953 = vunpack.c.l.s4 1983009808
      %v3954 = vunpack.c.0.s8 %v3953
      %v3955 = vlaneseq
      %v3956 = vshrl.u32 %v3955, 7
      %v3957 = vsub.s32 %v3954, %v3956
      %v3958 = vrot.slane %v3901, %v3957
      %v3960 = vunpack.c.l.s4 1983009808
      %v3961 = vunpack.c.0.s8 %v3960
      %v3962 = vlaneseq
      %v3963 = vshrl.u32 %v3962, 7
      %v3964 = vsub.s32 %v3961, %v3963
      %v3965 = vrot.slane %v3951, %v3964
      %v3966 = vcombine.high %v3918, %v3918
      %v3968 = vunpack.c.l.s4 1983009808
      %v3969 = vunpack.c.0.s8 %v3968
      %v3970 = vlaneseq
      %v3971 = vshrl.u32 %v3970, 7
      %v3972 = vsub.s32 %v3969, %v3971
      %v3973 = vrot.slane %v3918, %v3972
      %v3975 = vunpack.c.l.s4 1983009808
      %v3976 = vunpack.c.0.s8 %v3975
      %v3977 = vlaneseq
      %v3978 = vshrl.u32 %v3977, 7
      %v3979 = vsub.s32 %v3976, %v3978
      %v3980 = vrot.slane %v3966, %v3979
      %v3981 = vcombine.high %v3935, %v3935
      %v3983 = vunpack.c.l.s4 1983009808
      %v3984 = vunpack.c.0.s8 %v3983
      %v3985 = vlaneseq
      %v3986 = vshrl.u32 %v3985, 7
      %v3987 = vsub.s32 %v3984, %v3986
      %v3988 = vrot.slane %v3935, %v3987
      %v3990 = vunpack.c.l.s4 1983009808
      %v3991 = vunpack.c.0.s8 %v3990
      %v3992 = vlaneseq
      %v3993 = vshrl.u32 %v3992, 7
      %v3994 = vsub.s32 %v3991, %v3993
      %v3995 = vrot.slane %v3981, %v3994
      %v3996 = vunpack.c.l.b16 %v3943
      %v3997 = vunpack.c.h.b16 %v3943
      %v3998 = vunpack.c.l.b16 %v3950
      %v3999 = vunpack.c.h.b16 %v3950
      %v4000 = vunpack.c.l.b16 %v3958
      %v4001 = vunpack.c.h.b16 %v3958
      %v4002 = vunpack.c.l.b16 %v3965
      %v4003 = vunpack.c.h.b16 %v3965
      %v4004 = vunpack.c.l.b16 %v3973
      %v4005 = vunpack.c.h.b16 %v3973
      %v4006 = vunpack.c.l.b16 %v3980
      %v4007 = vunpack.c.h.b16 %v3980
      %v4008 = vunpack.c.l.b16 %v3988
      %v4009 = vunpack.c.h.b16 %v3988
      %v4010 = vunpack.c.l.b16 %v3995
      %v4011 = vunpack.c.h.b16 %v3995
      %v4012 = vrot.slane %v4000, 7
      %vm4013 = vcmask 1041409
      %v4014 = vsel %vm4013, %v4012, %v3996
      %v4015 = vrot.slane %v4004, 6
      %vm4016 = vcmask 1042434
      %v4017 = vsel %vm4016, %v4015, %v4014
      %v4018 = vrot.slane %v4008, 5
      %vm4019 = vcmask 1043459
      %v4020 = vsel %vm4019, %v4018, %v4017
      %v4021 = vrot.slane %v4001, 7
      %v4022 = vsel %vm4013, %v4021, %v3997
      %v4023 = vrot.slane %v4005, 6
      %v4024 = vsel %vm4016, %v4023, %v4022
      %v4025 = vrot.slane %v4009, 5
      %v4026 = vsel %vm4019, %v4025, %v4024
      %v4027 = vrot.slane %v4002, 7
      %v4028 = vsel %vm4013, %v4027, %v3998
      %v4029 = vrot.slane %v4006, 6
      %v4030 = vsel %vm4016, %v4029, %v4028
      %v4031 = vrot.slane %v4010, 5
      %v4032 = vsel %vm4019, %v4031, %v4030
      %v4033 = vrot.slane %v4003, 7
      %v4034 = vsel %vm4013, %v4033, %v3999
      %v4035 = vrot.slane %v4007, 6
      %v4036 = vsel %vm4016, %v4035, %v4034
      %v4037 = vrot.slane %v4011, 5
      %v4038 = vsel %vm4019, %v4037, %v4036
      %v4039 = vpack.c.b16 %v4026, %v4020
      %v4040 = vpack.c.b16 %v4038, %v4032
      %v4042 = vunpack.c.l.s4 1983009808
      %v4043 = vunpack.c.0.s8 %v4042
      %v4044 = vlaneseq
      %v4045 = vshrl.u32 %v4044, 7
      %v4046 = vsub.s32 %v4043, %v4045
      %v4047 = vrot.slane %v4039, %v4046
      %v4049 = vunpack.c.l.s4 1983009808
      %v4050 = vunpack.c.0.s8 %v4049
      %v4051 = vlaneseq
      %v4052 = vshrl.u32 %v4051, 7
      %v4053 = vsub.s32 %v4050, %v4052
      %v4054 = vrot.slane %v4040, %v4053
      %v4055 = vcombine.low %v4047, %v4054
      %v4057 = vmax.bf16 %v3851, %v4055
      %4058 = vst [vmem:[#allocation7] sm:$0xff] %v4057
    $region53: #{tpu_custom_call.1} parent=1 // pred_fallthru
      _
    // Predicated region
    $region54: #{tpu_custom_call.1} parent=1 // pred_check
      _
    $region55: #{tpu_custom_call.1} parent=1 // pred_check_branch
      %4060 = sbr.rel (0) target = $region57
    $region56: #{tpu_custom_call.1} parent=1 // pred_region
      %s4062 = ssub.s32 128, 128
      %4063 = vsyncadd [#allocation4], %s4062
      %s4065 = sshll.u32 [#allocation7], 4
      %s4066 = int_to_ptr.vmem [resolvable:$true] %s4065
      %4068 = dma.vmem_to_hbm [thread:$0]  %s4066, 128, %s9, [#allocation4]
    $region57: #{tpu_custom_call.1} parent=1 // pred_fallthru
      _
    // Predicated region
    $region58: #{tpu_custom_call.1} parent=1 // pred_check
      _
    $region59: #{tpu_custom_call.1} parent=1 // pred_check_branch
      %4070 = sbr.rel (0) target = $region61
    $region60: #{tpu_custom_call.1} parent=1 // pred_region
      %4071 = dma.done [#allocation4], 128
    $region61: #{tpu_custom_call.1} parent=1 // pred_fallthru
      _
    %4072 = vsyncpa [#allocation3], 1
    %4073 = vsyncpa [#allocation6], 1
    %4074 = vsyncpa [#allocation4], 1

// kernel: tpu_custom_call.1
$region0: #{tpu_custom_call.1}
  #allocation0 [shape = 'u32[]', space=smem, size = 0x4, offset = 0x4, fixed_abs, tag = 'smem constant byte address 0x4 - core index']
  #allocation1 [shape = 'u32[144,128]{1,0:T(1,128)}', space=vmem, size = 0x12000, scoped, tag = 'internal scratch']
  %s0 = inlined_call_operand.vmem [shape: f32[4,128,8], index: 0, kind: input, shape index: {}]
  %s1 = inlined_call_operand.vmem [shape: f32[8,128], index: 1, kind: input, shape index: {}]
  %s2 = inlined_call_operand.vmem [shape: f32[1,128], index: 2, kind: input, shape index: {}]
  %s3 = inlined_call_operand.hbm [shape: bf16[128,128], index: 3, kind: input, shape index: {}]
  %s4 = inlined_call_operand.vmem [shape: f32[1,128], index: 4, kind: input, shape index: {}]
  %s5 = inlined_call_operand.hbm [shape: bf16[128,256], index: 5, kind: input, shape index: {}]
  %s6 = inlined_call_operand.vmem [shape: f32[1,256], index: 6, kind: input, shape index: {}]
  %s7 = inlined_call_operand.vmem [shape: bf16[256,512], index: 7, kind: input, shape index: {}]
  %s8 = inlined_call_operand.vmem [shape: f32[1,512], index: 8, kind: input, shape index: {}]
  %s9 = inlined_call_operand.hbm [shape: bf16[1,4,512], index: 9, kind: output, shape index: {}]
  %s10 = sld [smem:[#allocation0]]
  $region62: #{tpu_custom_call.1} parent=0
    _
  %s12 = ssub.s32 1, %s10
  %s13 = scalar_select 0, %s12, %s10
  $region1: #{tpu_custom_call.1} parent=0
    #allocation2 [shape = 'u8[32768]{0}', space=vmem, size = 0x8000, scoped, tag = 'input window, operand 3, single buffered']
    #allocation3 [shape = 's32[1]{0}', space=sflag, size = 0x4, scoped, tag = 'scoped memory for tpu_custom_call.1']
    #allocation4 [shape = 's32[1]{0}', space=sflag, size = 0x4, scoped, tag = 'scoped memory for tpu_custom_call.1']
    #allocation5 [shape = 'u8[65536]{0}', space=vmem, size = 0x10000, scoped, tag = 'input window, operand 5, single buffered']
    #allocation6 [shape = 's32[1]{0}', space=sflag, size = 0x4, scoped, tag = 'scoped memory for tpu_custom_call.1']
    #allocation7 [shape = 'u8[4096]{0}', space=vmem, size = 0x1000, scoped, tag = 'output window, operand 0, single buffered']
    %14 = vsyncpa [#allocation3], 0
    %15 = vsyncpa [#allocation6], 0
    %16 = vsyncpa [#allocation4], 0
    // Predicated region
    $region2: #{tpu_custom_call.1} parent=1 // pred_check
      _
    $region3: #{tpu_custom_call.1} parent=1 // pred_check_branch
      %18 = sbr.rel (0) target = $region5
    $region4: #{tpu_custom_call.1} parent=1 // pred_region
      _
    $region5: #{tpu_custom_call.1} parent=1 // pred_fallthru
      _
    // Predicated region
    $region6: #{tpu_custom_call.1} parent=1 // pred_check
      _
    $region7: #{tpu_custom_call.1} parent=1 // pred_check_branch
      %20 = sbr.rel (0) target = $region9
    $region8: #{tpu_custom_call.1} parent=1 // pred_region
      _
    $region9: #{tpu_custom_call.1} parent=1 // pred_fallthru
      _
    // Predicated region
    $region10: #{tpu_custom_call.1} parent=1 // pred_check
      _
    $region11: #{tpu_custom_call.1} parent=1 // pred_check_branch
      %22 = sbr.rel (0) target = $region13
    $region12: #{tpu_custom_call.1} parent=1 // pred_region
      _
    $region13: #{tpu_custom_call.1} parent=1 // pred_fallthru
      _
    // Predicated region
    $region14: #{tpu_custom_call.1} parent=1 // pred_check
      _
    $region15: #{tpu_custom_call.1} parent=1 // pred_check_branch
      %24 = sbr.rel (0) target = $region17
    $region16: #{tpu_custom_call.1} parent=1 // pred_region
      %s26 = ssub.s32 1024, 1024
      %27 = vsyncadd [#allocation3], %s26
      %s28 = sshll.u32 [#allocation2], 4
      %s29 = int_to_ptr.vmem [resolvable:$true] %s28
      %34 = dma.hbm_to_vmem [thread:$0]  %s3, 1024, %s29, [#allocation3], 64, 64, 4
    $region17: #{tpu_custom_call.1} parent=1 // pred_fallthru
      _
    // Predicated region
    $region18: #{tpu_custom_call.1} parent=1 // pred_check
      _
    $region19: #{tpu_custom_call.1} parent=1 // pred_check_branch
      %36 = sbr.rel (0) target = $region21
    $region20: #{tpu_custom_call.1} parent=1 // pred_region
      _
    $region21: #{tpu_custom_call.1} parent=1 // pred_fallthru
      _
    // Predicated region
    $region22: #{tpu_custom_call.1} parent=1 // pred_check
      _
    $region23: #{tpu_custom_call.1} parent=1 // pred_check_branch
      %38 = sbr.rel (0) target = $region25
    $region24: #{tpu_custom_call.1} parent=1 // pred_region
      %s40 = ssub.s32 2048, 2048
      %41 = vsyncadd [#allocation6], %s40
      %s42 = sshll.u32 [#allocation5], 4
      %s43 = int_to_ptr.vmem [resolvable:$true] %s42
      %48 = dma.hbm_to_vmem [thread:$0]  %s5, 2048, %s43, [#allocation6], 128, 128, 8
    $region25: #{tpu_custom_call.1} parent=1 // pred_fallthru
      _
    // Predicated region
    $region26: #{tpu_custom_call.1} parent=1 // pred_check
      _
    $region27: #{tpu_custom_call.1} parent=1 // pred_check_branch
      %50 = sbr.rel (0) target = $region29
    $region28: #{tpu_custom_call.1} parent=1 // pred_region
      _
    $region29: #{tpu_custom_call.1} parent=1 // pred_fallthru
      _
    // Predicated region
    $region30: #{tpu_custom_call.1} parent=1 // pred_check
      _
    $region31: #{tpu_custom_call.1} parent=1 // pred_check_branch
      %52 = sbr.rel (0) target = $region33
    $region32: #{tpu_custom_call.1} parent=1 // pred_region
      _
    $region33: #{tpu_custom_call.1} parent=1 // pred_fallthru
      _
    // Predicated region
    $region34: #{tpu_custom_call.1} parent=1 // pred_check
      _
    $region35: #{tpu_custom_call.1} parent=1 // pred_check_branch
      %54 = sbr.rel (0) target = $region37
    $region36: #{tpu_custom_call.1} parent=1 // pred_region
      _
    $region37: #{tpu_custom_call.1} parent=1 // pred_fallthru
      _
    // Predicated region
    $region38: #{tpu_custom_call.1} parent=1 // pred_check
      _
    $region39: #{tpu_custom_call.1} parent=1 // pred_check_branch
      %56 = sbr.rel (0) target = $region41
    $region40: #{tpu_custom_call.1} parent=1 // pred_region
      %57 = dma.done [#allocation3], 1024
    $region41: #{tpu_custom_call.1} parent=1 // pred_fallthru
      _
    // Predicated region
    $region42: #{tpu_custom_call.1} parent=1 // pred_check
      _
    $region43: #{tpu_custom_call.1} parent=1 // pred_check_branch
      %59 = sbr.rel (0) target = $region45
    $region44: #{tpu_custom_call.1} parent=1 // pred_region
      %60 = dma.done [#allocation6], 2048
    $region45: #{tpu_custom_call.1} parent=1 // pred_fallthru
      _
    %v62 = vld [vmem:[%s0] sm:$0xff]
    %v63 = vld [vmem:[%s0 + $0x8] sm:$0xff]
    %v64 = vld [vmem:[%s0 + $0x10] sm:$0xff]
    %v65 = vld [vmem:[%s0 + $0x18] sm:$0xff]
    %v66 = vld [vmem:[%s0 + $0x20] sm:$0xff]
    %v67 = vld [vmem:[%s0 + $0x28] sm:$0xff]
    %v68 = vld [vmem:[%s0 + $0x30] sm:$0xff]
    %v69 = vld [vmem:[%s0 + $0x38] sm:$0xff]
    %v70 = vld [vmem:[%s0 + $0x40] sm:$0xff]
    %v71 = vld [vmem:[%s0 + $0x48] sm:$0xff]
    %v72 = vld [vmem:[%s0 + $0x50] sm:$0xff]
    %v73 = vld [vmem:[%s0 + $0x58] sm:$0xff]
    %v74 = vld [vmem:[%s0 + $0x60] sm:$0xff]
    %v75 = vld [vmem:[%s0 + $0x68] sm:$0xff]
    %v76 = vld [vmem:[%s0 + $0x70] sm:$0xff]
    %v77 = vld [vmem:[%s0 + $0x78] sm:$0xff]
    %v78 = vld [vmem:[%s0 + $0x80] sm:$0xff]
    %v79 = vld [vmem:[%s0 + $0x88] sm:$0xff]
    %v80 = vld [vmem:[%s0 + $0x90] sm:$0xff]
    %v81 = vld [vmem:[%s0 + $0x98] sm:$0xff]
    %v82 = vld [vmem:[%s0 + $0xa0] sm:$0xff]
    %v83 = vld [vmem:[%s0 + $0xa8] sm:$0xff]
    %v84 = vld [vmem:[%s0 + $0xb0] sm:$0xff]
    %v85 = vld [vmem:[%s0 + $0xb8] sm:$0xff]
    %v86 = vld [vmem:[%s0 + $0xc0] sm:$0xff]
    %v87 = vld [vmem:[%s0 + $0xc8] sm:$0xff]
    %v88 = vld [vmem:[%s0 + $0xd0] sm:$0xff]
    %v89 = vld [vmem:[%s0 + $0xd8] sm:$0xff]
    %v90 = vld [vmem:[%s0 + $0xe0] sm:$0xff]
    %v91 = vld [vmem:[%s0 + $0xe8] sm:$0xff]
    %v92 = vld [vmem:[%s0 + $0xf0] sm:$0xff]
    %v93 = vld [vmem:[%s0 + $0xf8] sm:$0xff]
    %v94 = vld [vmem:[%s0 + $0x100] sm:$0xff]
    %v95 = vld [vmem:[%s0 + $0x108] sm:$0xff]
    %v96 = vld [vmem:[%s0 + $0x110] sm:$0xff]
    %v97 = vld [vmem:[%s0 + $0x118] sm:$0xff]
    %v98 = vld [vmem:[%s0 + $0x120] sm:$0xff]
    %v99 = vld [vmem:[%s0 + $0x128] sm:$0xff]
    %v100 = vld [vmem:[%s0 + $0x130] sm:$0xff]
    %v101 = vld [vmem:[%s0 + $0x138] sm:$0xff]
    %v102 = vld [vmem:[%s0 + $0x140] sm:$0xff]
    %v103 = vld [vmem:[%s0 + $0x148] sm:$0xff]
    %v104 = vld [vmem:[%s0 + $0x150] sm:$0xff]
    %v105 = vld [vmem:[%s0 + $0x158] sm:$0xff]
    %v106 = vld [vmem:[%s0 + $0x160] sm:$0xff]
    %v107 = vld [vmem:[%s0 + $0x168] sm:$0xff]
    %v108 = vld [vmem:[%s0 + $0x170] sm:$0xff]
    %v109 = vld [vmem:[%s0 + $0x178] sm:$0xff]
    %v110 = vld [vmem:[%s0 + $0x180] sm:$0xff]
    %v111 = vld [vmem:[%s0 + $0x188] sm:$0xff]
    %v112 = vld [vmem:[%s0 + $0x190] sm:$0xff]
    %v113 = vld [vmem:[%s0 + $0x198] sm:$0xff]
    %v114 = vld [vmem:[%s0 + $0x1a0] sm:$0xff]
    %v115 = vld [vmem:[%s0 + $0x1a8] sm:$0xff]
    %v116 = vld [vmem:[%s0 + $0x1b0] sm:$0xff]
    %v117 = vld [vmem:[%s0 + $0x1b8] sm:$0xff]
    %v118 = vld [vmem:[%s0 + $0x1c0] sm:$0xff]
    %v119 = vld [vmem:[%s0 + $0x1c8] sm:$0xff]
    %v120 = vld [vmem:[%s0 + $0x1d0] sm:$0xff]
    %v121 = vld [vmem:[%s0 + $0x1d8] sm:$0xff]
    %v122 = vld [vmem:[%s0 + $0x1e0] sm:$0xff]
    %v123 = vld [vmem:[%s0 + $0x1e8] sm:$0xff]
    %v124 = vld [vmem:[%s0 + $0x1f0] sm:$0xff]
    %v125 = vld [vmem:[%s0 + $0x1f8] sm:$0xff]
    %v126 = vld [vmem:[%s1] sm:$0xff]
    %v127 = vld [vmem:[%s2] sm:$0x1]
    %v129 = vlaneseq
    %v130 = vshrl.u32 %v129, 7
    %v131 = vsub.s32 0, %v130
    %v132 = vrot.slane %v127, %v131
    %vm134 = vcmask 64512
    %v136 = vsel %vm134, %v62, 0
    %v139 = vsel %vm134, %v63, 0
    %v142 = vsel %vm134, %v64, 0
    %v145 = vsel %vm134, %v65, 0
    %v148 = vsel %vm134, %v66, 0
    %v151 = vsel %vm134, %v67, 0
    %v154 = vsel %vm134, %v68, 0
    %v157 = vsel %vm134, %v69, 0
    %v160 = vsel %vm134, %v70, 0
    %v163 = vsel %vm134, %v71, 0
    %v166 = vsel %vm134, %v72, 0
    %v169 = vsel %vm134, %v73, 0
    %v172 = vsel %vm134, %v74, 0
    %v175 = vsel %vm134, %v75, 0
    %v178 = vsel %vm134, %v76, 0
    %v181 = vsel %vm134, %v77, 0
    %v184 = vsel %vm134, %v78, 0
    %v187 = vsel %vm134, %v79, 0
    %v190 = vsel %vm134, %v80, 0
    %v193 = vsel %vm134, %v81, 0
    %v196 = vsel %vm134, %v82, 0
    %v199 = vsel %vm134, %v83, 0
    %v202 = vsel %vm134, %v84, 0
    %v205 = vsel %vm134, %v85, 0
    %v208 = vsel %vm134, %v86, 0
    %v211 = vsel %vm134, %v87, 0
    %v214 = vsel %vm134, %v88, 0
    %v217 = vsel %vm134, %v89, 0
    %v220 = vsel %vm134, %v90, 0
    %v223 = vsel %vm134, %v91, 0
    %v226 = vsel %vm134, %v92, 0
    %v229 = vsel %vm134, %v93, 0
    %v232 = vsel %vm134, %v94, 0
    %v235 = vsel %vm134, %v95, 0
    %v238 = vsel %vm134, %v96, 0
    %v241 = vsel %vm134, %v97, 0
    %v244 = vsel %vm134, %v98, 0
    %v247 = vsel %vm134, %v99, 0
    %v250 = vsel %vm134, %v100, 0
    %v253 = vsel %vm134, %v101, 0
    %v256 = vsel %vm134, %v102, 0
    %v259 = vsel %vm134, %v103, 0
    %v262 = vsel %vm134, %v104, 0
    %v265 = vsel %vm134, %v105, 0
    %v268 = vsel %vm134, %v106, 0
    %v271 = vsel %vm134, %v107, 0
    %v274 = vsel %vm134, %v108, 0
    %v277 = vsel %vm134, %v109, 0
    %v280 = vsel %vm134, %v110, 0
    %v283 = vsel %vm134, %v111, 0
    %v286 = vsel %vm134, %v112, 0
    %v289 = vsel %vm134, %v113, 0
    %v292 = vsel %vm134, %v114, 0
    %v295 = vsel %vm134, %v115, 0
    %v298 = vsel %vm134, %v116, 0
    %v301 = vsel %vm134, %v117, 0
    %v304 = vsel %vm134, %v118, 0
    %v307 = vsel %vm134, %v119, 0
    %v310 = vsel %vm134, %v120, 0
    %v313 = vsel %vm134, %v121, 0
    %v316 = vsel %vm134, %v122, 0
    %v319 = vsel %vm134, %v123, 0
    %v322 = vsel %vm134, %v124, 0
    %v325 = vsel %vm134, %v125, 0
    %327 = vmatprep.subr.mxu0 0.0
    %328 = vmatpush1.msra.mxu0 %v126
    %329 = vmatprep.subr.mxu0 0.0
    %330 = vmatpush1.msra.mxu0 0.0
    %331 = vmatprep.subr.mxu0 0.0
    %332 = vmatpush1.msra.mxu0 0.0
    %333 = vmatprep.subr.mxu0 0.0
    %334 = vmatpush1.msra.mxu0 0.0
    %335 = vmatprep.subr.mxu0 0.0
    %336 = vmatpush1.msra.mxu0 0.0
    %337 = vmatprep.subr.mxu0 0.0
    %338 = vmatpush1.msra.mxu0 0.0
    %339 = vmatprep.subr.mxu0 0.0
    %340 = vmatpush1.msra.mxu0 0.0
    %341 = vmatprep.subr.mxu0 0.0
    %342 = vmatpush1.msra.mxu0 0.0
    %343 = vmatprep.subr.mxu0 0.0
    %344 = vmatpush1.msra.mxu0 0.0
    %345 = vmatprep.subr.mxu0 0.0
    %346 = vmatpush1.msra.mxu0 0.0
    %347 = vmatprep.subr.mxu0 0.0
    %348 = vmatpush1.msra.mxu0 0.0
    %349 = vmatprep.subr.mxu0 0.0
    %350 = vmatpush1.msra.mxu0 0.0
    %351 = vmatprep.subr.mxu0 0.0
    %352 = vmatpush1.msra.mxu0 0.0
    %353 = vmatprep.subr.mxu0 0.0
    %354 = vmatpush1.msra.mxu0 0.0
    %355 = vmatprep.subr.mxu0 0.0
    %356 = vmatpush1.msra.mxu0 0.0
    %357 = vmatprep.subr.mxu0 0.0
    %358 = vmatpush1.msra.mxu0 0.0
    %359 = vmatprep.subr.mxu0 0.0
    %360 = vmatpush1.msra.mxu0 0.0
    %361 = vmatprep.subr.mxu0 0.0
    %362 = vmatpush1.msra.mxu0 0.0
    %363 = vmatprep.subr.mxu0 0.0
    %364 = vmatpush1.msra.mxu0 0.0
    %365 = vmatprep.subr.mxu0 0.0
    %366 = vmatpush1.msra.mxu0 0.0
    %367 = vmatprep.subr.mxu0 0.0
    %368 = vmatpush1.msra.mxu0 0.0
    %369 = vmatprep.subr.mxu0 0.0
    %370 = vmatpush1.msra.mxu0 0.0
    %371 = vmatprep.subr.mxu0 0.0
    %372 = vmatpush1.msra.mxu0 0.0
    %373 = vmatprep.subr.mxu0 0.0
    %374 = vmatpush1.msra.mxu0 0.0
    %375 = vmatprep.subr.mxu0 0.0
    %376 = vmatpush1.msra.mxu0 0.0
    %377 = vmatprep.subr.mxu0 0.0
    %378 = vmatpush1.msra.mxu0 0.0
    %379 = vmatprep.subr.mxu0 0.0
    %380 = vmatpush1.msra.mxu0 0.0
    %381 = vmatprep.subr.mxu0 0.0
    %382 = vmatpush1.msra.mxu0 0.0
    %383 = vmatprep.subr.mxu0 0.0
    %384 = vmatpush1.msra.mxu0 0.0
    %385 = vmatprep.subr.mxu0 0.0
    %386 = vmatpush1.msra.mxu0 0.0
    %387 = vmatprep.subr.mxu0 0.0
    %388 = vmatpush1.msra.mxu0 0.0
    %389 = vmatprep.subr.mxu0 0.0
    %390 = vmatpush1.msra.mxu0 0.0
    %391 = vmatprep.mubr.f32.mxu0 0.0
    %392 = vmatmul.mubr.f32.gmra.mrb[0].mxu0 %v136
    %v393 = vpop.f32.mrb[0].mxu0
    %v394 = vadd.f32 %v132, %v393
    %v395 = vpop.f32.mrb[0].mxu0
    %396 = vmatprep.mubr.f32.mxu0 0.0
    %397 = vmatmul.mubr.f32.gmra.mrb[0].mxu0 %v139
    %v398 = vpop.f32.mrb[0].mxu0
    %v399 = vadd.f32 %v132, %v398
    %v400 = vpop.f32.mrb[0].mxu0
    %401 = vmatprep.mubr.f32.mxu0 0.0
    %402 = vmatmul.mubr.f32.gmra.mrb[0].mxu0 %v142
    %v403 = vpop.f32.mrb[0].mxu0
    %v404 = vadd.f32 %v132, %v403
    %v405 = vpop.f32.mrb[0].mxu0
    %406 = vmatprep.mubr.f32.mxu0 0.0
    %407 = vmatmul.mubr.f32.gmra.mrb[0].mxu0 %v145
    %v408 = vpop.f32.mrb[0].mxu0
    %v409 = vadd.f32 %v132, %v408
    %v410 = vpop.f32.mrb[0].mxu0
    %411 = vmatprep.mubr.f32.mxu0 0.0
    %412 = vmatmul.mubr.f32.gmra.mrb[0].mxu0 %v148
    %v413 = vpop.f32.mrb[0].mxu0
    %v414 = vadd.f32 %v132, %v413
    %v415 = vpop.f32.mrb[0].mxu0
    %416 = vmatprep.mubr.f32.mxu0 0.0
    %417 = vmatmul.mubr.f32.gmra.mrb[0].mxu0 %v151
    %v418 = vpop.f32.mrb[0].mxu0
    %v419 = vadd.f32 %v132, %v418
    %v420 = vpop.f32.mrb[0].mxu0
    %421 = vmatprep.mubr.f32.mxu0 0.0
    %422 = vmatmul.mubr.f32.gmra.mrb[0].mxu0 %v154
    %v423 = vpop.f32.mrb[0].mxu0
    %v424 = vadd.f32 %v132, %v423
    %v425 = vpop.f32.mrb[0].mxu0
    %426 = vmatprep.mubr.f32.mxu0 0.0
    %427 = vmatmul.mubr.f32.gmra.mrb[0].mxu0 %v157
    %v428 = vpop.f32.mrb[0].mxu0
    %v429 = vadd.f32 %v132, %v428
    %v430 = vpop.f32.mrb[0].mxu0
    %431 = vmatprep.mubr.f32.mxu0 0.0
    %432 = vmatmul.mubr.f32.gmra.mrb[0].mxu0 %v160
    %v433 = vpop.f32.mrb[0].mxu0
    %v434 = vadd.f32 %v132, %v433
    %v435 = vpop.f32.mrb[0].mxu0
    %436 = vmatprep.mubr.f32.mxu0 0.0
    %437 = vmatmul.mubr.f32.gmra.mrb[0].mxu0 %v163
    %v438 = vpop.f32.mrb[0].mxu0
    %v439 = vadd.f32 %v132, %v438
    %v440 = vpop.f32.mrb[0].mxu0
    %441 = vmatprep.mubr.f32.mxu0 0.0
    %442 = vmatmul.mubr.f32.gmra.mrb[0].mxu0 %v166
    %v443 = vpop.f32.mrb[0].mxu0
    %v444 = vadd.f32 %v132, %v443
    %v445 = vpop.f32.mrb[0].mxu0
    %446 = vmatprep.mubr.f32.mxu0 0.0
    %447 = vmatmul.mubr.f32.gmra.mrb[0].mxu0 %v169
    %v448 = vpop.f32.mrb[0].mxu0
    %v449 = vadd.f32 %v132, %v448
    %v450 = vpop.f32.mrb[0].mxu0
    %451 = vmatprep.mubr.f32.mxu0 0.0
    %452 = vmatmul.mubr.f32.gmra.mrb[0].mxu0 %v172
    %v453 = vpop.f32.mrb[0].mxu0
    %v454 = vadd.f32 %v132, %v453
    %v455 = vpop.f32.mrb[0].mxu0
    %456 = vmatprep.mubr.f32.mxu0 0.0
    %457 = vmatmul.mubr.f32.gmra.mrb[0].mxu0 %v175
    %v458 = vpop.f32.mrb[0].mxu0
    %v459 = vadd.f32 %v132, %v458
    %v460 = vpop.f32.mrb[0].mxu0
    %461 = vmatprep.mubr.f32.mxu0 0.0
    %462 = vmatmul.mubr.f32.gmra.mrb[0].mxu0 %v178
    %v463 = vpop.f32.mrb[0].mxu0
    %v464 = vadd.f32 %v132, %v463
    %v465 = vpop.f32.mrb[0].mxu0
    %466 = vmatprep.mubr.f32.mxu0 0.0
    %467 = vmatmul.mubr.f32.gmra.mrb[0].mxu0 %v181
    %v468 = vpop.f32.mrb[0].mxu0
    %v469 = vadd.f32 %v132, %v468
    %v470 = vpop.f32.mrb[0].mxu0
    %471 = vmatprep.mubr.f32.mxu0 0.0
    %472 = vmatmul.mubr.f32.gmra.mrb[0].mxu0 %v184
    %v473 = vpop.f32.mrb[0].mxu0
    %v474 = vadd.f32 %v132, %v473
    %v475 = vpop.f32.mrb[0].mxu0
    %476 = vmatprep.mubr.f32.mxu0 0.0
    %477 = vmatmul.mubr.f32.gmra.mrb[0].mxu0 %v187
    %v478 = vpop.f32.mrb[0].mxu0
    %v479 = vadd.f32 %v132, %v478
    %v480 = vpop.f32.mrb[0].mxu0
    %481 = vmatprep.mubr.f32.mxu0 0.0
    %482 = vmatmul.mubr.f32.gmra.mrb[0].mxu0 %v190
    %v483 = vpop.f32.mrb[0].mxu0
    %v484 = vadd.f32 %v132, %v483
    %v485 = vpop.f32.mrb[0].mxu0
    %486 = vmatprep.mubr.f32.mxu0 0.0
    %487 = vmatmul.mubr.f32.gmra.mrb[0].mxu0 %v193
    %v488 = vpop.f32.mrb[0].mxu0
    %v489 = vadd.f32 %v132, %v488
    %v490 = vpop.f32.mrb[0].mxu0
    %491 = vmatprep.mubr.f32.mxu0 0.0
    %492 = vmatmul.mubr.f32.gmra.mrb[0].mxu0 %v196
    %v493 = vpop.f32.mrb[0].mxu0
    %v494 = vadd.f32 %v132, %v493
    %v495 = vpop.f32.mrb[0].mxu0
    %496 = vmatprep.mubr.f32.mxu0 0.0
    %497 = vmatmul.mubr.f32.gmra.mrb[0].mxu0 %v199
    %v498 = vpop.f32.mrb[0].mxu0
    %v499 = vadd.f32 %v132, %v498
    %v500 = vpop.f32.mrb[0].mxu0
    %501 = vmatprep.mubr.f32.mxu0 0.0
    %502 = vmatmul.mubr.f32.gmra.mrb[0].mxu0 %v202
    %v503 = vpop.f32.mrb[0].mxu0
    %v504 = vadd.f32 %v132, %v503
    %v505 = vpop.f32.mrb[0].mxu0
    %506 = vmatprep.mubr.f32.mxu0 0.0
    %507 = vmatmul.mubr.f32.gmra.mrb[0].mxu0 %v205
    %v508 = vpop.f32.mrb[0].mxu0
    %v509 = vadd.f32 %v132, %v508
    %v510 = vpop.f32.mrb[0].mxu0
    %511 = vmatprep.mubr.f32.mxu0 0.0
    %512 = vmatmul.mubr.f32.gmra.mrb[0].mxu0 %v208
    %v513 = vpop.f32.mrb[0].mxu0
    %v514 = vadd.f32 %v132, %v513
    %v515 = vpop.f32.mrb[0].mxu0
    %516 = vmatprep.mubr.f32.mxu0 0.0
    %517 = vmatmul.mubr.f32.gmra.mrb[0].mxu0 %v211
    %v518 = vpop.f32.mrb[0].mxu0
    %v519 = vadd.f32 %v132, %v518
    %v520 = vpop.f32.mrb[0].mxu0
    %521 = vmatprep.mubr.f32.mxu0 0.0
    %522 = vmatmul.mubr.f32.gmra.mrb[0].mxu0 %v214
    %v523 = vpop.f32.mrb[0].mxu0
    %v524 = vadd.f32 %v132, %v523
    %v525 = vpop.f32.mrb[0].mxu0
    %526 = vmatprep.mubr.f32.mxu0 0.0
    %527 = vmatmul.mubr.f32.gmra.mrb[0].mxu0 %v217
    %v528 = vpop.f32.mrb[0].mxu0
    %v529 = vadd.f32 %v132, %v528
    %v530 = vpop.f32.mrb[0].mxu0
    %531 = vmatprep.mubr.f32.mxu0 0.0
    %532 = vmatmul.mubr.f32.gmra.mrb[0].mxu0 %v220
    %v533 = vpop.f32.mrb[0].mxu0
    %v534 = vadd.f32 %v132, %v533
    %v535 = vpop.f32.mrb[0].mxu0
    %536 = vmatprep.mubr.f32.mxu0 0.0
    %537 = vmatmul.mubr.f32.gmra.mrb[0].mxu0 %v223
    %v538 = vpop.f32.mrb[0].mxu0
    %v539 = vadd.f32 %v132, %v538
    %v540 = vpop.f32.mrb[0].mxu0
    %541 = vmatprep.mubr.f32.mxu0 0.0
    %542 = vmatmul.mubr.f32.gmra.mrb[0].mxu0 %v226
    %v543 = vpop.f32.mrb[0].mxu0
    %v544 = vadd.f32 %v132, %v543
    %v545 = vpop.f32.mrb[0].mxu0
    %546 = vmatprep.mubr.f32.mxu0 0.0
    %547 = vmatmul.mubr.f32.gmra.mrb[0].mxu0 %v229
    %v548 = vpop.f32.mrb[0].mxu0
    %v549 = vadd.f32 %v132, %v548
    %v550 = vpop.f32.mrb[0].mxu0
    %551 = vmatprep.mubr.f32.mxu0 0.0
    %552 = vmatmul.mubr.f32.gmra.mrb[0].mxu0 %v232
    %v553 = vpop.f32.mrb[0].mxu0
    %v554 = vadd.f32 %v132, %v553
    %v555 = vpop.f32.mrb[0].mxu0
    %556 = vmatprep.mubr.f32.mxu0 0.0
    %557 = vmatmul.mubr.f32.gmra.mrb[0].mxu0 %v235
    %v558 = vpop.f32.mrb[0].mxu0
    %v559 = vadd.f32 %v132, %v558
    %v560 = vpop.f32.mrb[0].mxu0
    %561 = vmatprep.mubr.f32.mxu0 0.0
    %562 = vmatmul.mubr.f32.gmra.mrb[0].mxu0 %v238
    %v563 = vpop.f32.mrb[0].mxu0
    %v564 = vadd.f32 %v132, %v563
    %v565 = vpop.f32.mrb[0].mxu0
    %566 = vmatprep.mubr.f32.mxu0 0.0
    %567 = vmatmul.mubr.f32.gmra.mrb[0].mxu0 %v241
    %v568 = vpop.f32.mrb[0].mxu0
    %v569 = vadd.f32 %v132, %v568
    %v570 = vpop.f32.mrb[0].mxu0
    %571 = vmatprep.mubr.f32.mxu0 0.0
    %572 = vmatmul.mubr.f32.gmra.mrb[0].mxu0 %v244
    %v573 = vpop.f32.mrb[0].mxu0
    %v574 = vadd.f32 %v132, %v573
    %v575 = vpop.f32.mrb[0].mxu0
    %576 = vmatprep.mubr.f32.mxu0 0.0
    %577 = vmatmul.mubr.f32.gmra.mrb[0].mxu0 %v247
    %v578 = vpop.f32.mrb[0].mxu0
    %v579 = vadd.f32 %v132, %v578
    %v580 = vpop.f32.mrb[0].mxu0
    %581 = vmatprep.mubr.f32.mxu0 0.0
    %582 = vmatmul.mubr.f32.gmra.mrb[0].mxu0 %v250
    %v583 = vpop.f32.mrb[0].mxu0
    %v584 = vadd.f32 %v132, %v583
    %v585 = vpop.f32.mrb[0].mxu0
    %586 = vmatprep.mubr.f32.mxu0 0.0
    %587 = vmatmul.mubr.f32.gmra.mrb[0].mxu0 %v253
    %v588 = vpop.f32.mrb[0].mxu0
    %v589 = vadd.f32 %v132, %v588
    %v590 = vpop.f32.mrb[0].mxu0
    %591 = vmatprep.mubr.f32.mxu0 0.0
    %592 = vmatmul.mubr.f32.gmra.mrb[0].mxu0 %v256
    %v593 = vpop.f32.mrb[0].mxu0
    %v594 = vadd.f32 %v132, %v593
    %v595 = vpop.f32.mrb[0].mxu0
    %596 = vmatprep.mubr.f32.mxu0 0.0
    %597 = vmatmul.mubr.f32.gmra.mrb[0].mxu0 %v259
    %v598 = vpop.f32.mrb[0].mxu0
    %v599 = vadd.f32 %v132, %v598
    %v600 = vpop.f32.mrb[0].mxu0
    %601 = vmatprep.mubr.f32.mxu0 0.0
    %602 = vmatmul.mubr.f32.gmra.mrb[0].mxu0 %v262
    %v603 = vpop.f32.mrb[0].mxu0
    %v604 = vadd.f32 %v132, %v603
    %v605 = vpop.f32.mrb[0].mxu0
    %606 = vmatprep.mubr.f32.mxu0 0.0
    %607 = vmatmul.mubr.f32.gmra.mrb[0].mxu0 %v265
    %v608 = vpop.f32.mrb[0].mxu0
    %v609 = vadd.f32 %v132, %v608
    %v610 = vpop.f32.mrb[0].mxu0
    %611 = vmatprep.mubr.f32.mxu0 0.0
    %612 = vmatmul.mubr.f32.gmra.mrb[0].mxu0 %v268
    %v613 = vpop.f32.mrb[0].mxu0
    %v614 = vadd.f32 %v132, %v613
    %v615 = vpop.f32.mrb[0].mxu0
    %616 = vmatprep.mubr.f32.mxu0 0.0
    %617 = vmatmul.mubr.f32.gmra.mrb[0].mxu0 %v271
    %v618 = vpop.f32.mrb[0].mxu0
    %v619 = vadd.f32 %v132, %v618
    %v620 = vpop.f32.mrb[0].mxu0
    %621 = vmatprep.mubr.f32.mxu0 0.0
    %622 = vmatmul.mubr.f32.gmra.mrb[0].mxu0 %v274
    %v623 = vpop.f32.mrb[0].mxu0
    %v624 = vadd.f32 %v132, %v623
    %v625 = vpop.f32.mrb[0].mxu0
    %626 = vmatprep.mubr.f32.mxu0 0.0
    %627 = vmatmul.mubr.f32.gmra.mrb[0].mxu0 %v277
    %v628 = vpop.f32.mrb[0].mxu0
    %v629 = vadd.f32 %v132, %v628
    %v630 = vpop.f32.mrb[0].mxu0
    %631 = vmatprep.mubr.f32.mxu0 0.0
    %632 = vmatmul.mubr.f32.gmra.mrb[0].mxu0 %v280
    %v633 = vpop.f32.mrb[0].mxu0
    %v634 = vadd.f32 %v132, %v633
    %v635 = vpop.f32.mrb[0].mxu0
    %636 = vmatprep.mubr.f32.mxu0 0.0
    %637 = vmatmul.mubr.f32.gmra.mrb[0].mxu0 %v283
    %v638 = vpop.f32.mrb[0].mxu0
    %v639 = vadd.f32 %v132, %v638
    %v640 = vpop.f32.mrb[0].mxu0
    %641 = vmatprep.mubr.f32.mxu0 0.0
    %642 = vmatmul.mubr.f32.gmra.mrb[0].mxu0 %v286
    %v643 = vpop.f32.mrb[0].mxu0
    %v644 = vadd.f32 %v132, %v643
    %v645 = vpop.f32.mrb[0].mxu0
    %646 = vmatprep.mubr.f32.mxu0 0.0
    %647 = vmatmul.mubr.f32.gmra.mrb[0].mxu0 %v289
    %v648 = vpop.f32.mrb[0].mxu0
    %v649 = vadd.f32 %v132, %v648
    %v650 = vpop.f32.mrb[0].mxu0
    %651 = vmatprep.mubr.f32.mxu0 0.0
    %652 = vmatmul.mubr.f32.gmra.mrb[0].mxu0 %v292
    %v653 = vpop.f32.mrb[0].mxu0
    %v654 = vadd.f32 %v132, %v653
    %v655 = vpop.f32.mrb[0].mxu0
    %656 = vmatprep.mubr.f32.mxu0 0.0
    %657 = vmatmul.mubr.f32.gmra.mrb[0].mxu0 %v295
    %v658 = vpop.f32.mrb[0].mxu0
    %v659 = vadd.f32 %v132, %v658
    %v660 = vpop.f32.mrb[0].mxu0
    %661 = vmatprep.mubr.f32.mxu0 0.0
    %662 = vmatmul.mubr.f32.gmra.mrb[0].mxu0 %v298
    %v663 = vpop.f32.mrb[0].mxu0
    %v664 = vadd.f32 %v132, %v663
    %v665 = vpop.f32.mrb[0].mxu0
    %666 = vmatprep.mubr.f32.mxu0 0.0
    %667 = vmatmul.mubr.f32.gmra.mrb[0].mxu0 %v301
    %v668 = vpop.f32.mrb[0].mxu0
    %v669 = vadd.f32 %v132, %v668
    %v670 = vpop.f32.mrb[0].mxu0
    %671 = vmatprep.mubr.f32.mxu0 0.0
    %672 = vmatmul.mubr.f32.gmra.mrb[0].mxu0 %v304
    %v673 = vpop.f32.mrb[0].mxu0
    %v674 = vadd.f32 %v132, %v673
    %v675 = vpop.f32.mrb[0].mxu0
    %676 = vmatprep.mubr.f32.mxu0 0.0
    %677 = vmatmul.mubr.f32.gmra.mrb[0].mxu0 %v307
    %v678 = vpop.f32.mrb[0].mxu0
    %v679 = vadd.f32 %v132, %v678
    %v680 = vpop.f32.mrb[0].mxu0
    %681 = vmatprep.mubr.f32.mxu0 0.0
    %682 = vmatmul.mubr.f32.gmra.mrb[0].mxu0 %v310
    %v683 = vpop.f32.mrb[0].mxu0
    %v684 = vadd.f32 %v132, %v683
    %v685 = vpop.f32.mrb[0].mxu0
    %686 = vmatprep.mubr.f32.mxu0 0.0
    %687 = vmatmul.mubr.f32.gmra.mrb[0].mxu0 %v313
    %v688 = vpop.f32.mrb[0].mxu0
    %v689 = vadd.f32 %v132, %v688
    %v690 = vpop.f32.mrb[0].mxu0
    %691 = vmatprep.mubr.f32.mxu0 0.0
    %692 = vmatmul.mubr.f32.gmra.mrb[0].mxu0 %v316
    %v693 = vpop.f32.mrb[0].mxu0
    %v694 = vadd.f32 %v132, %v693
    %v695 = vpop.f32.mrb[0].mxu0
    %696 = vmatprep.mubr.f32.mxu0 0.0
    %697 = vmatmul.mubr.f32.gmra.mrb[0].mxu0 %v319
    %v698 = vpop.f32.mrb[0].mxu0
    %v699 = vadd.f32 %v132, %v698
    %v700 = vpop.f32.mrb[0].mxu0
    %701 = vmatprep.mubr.f32.mxu0 0.0
    %702 = vmatmul.mubr.f32.gmra.mrb[0].mxu0 %v322
    %v703 = vpop.f32.mrb[0].mxu0
    %v704 = vadd.f32 %v132, %v703
    %v705 = vpop.f32.mrb[0].mxu0
    %706 = vmatprep.mubr.f32.mxu0 0.0
    %707 = vmatmul.mubr.f32.gmra.mrb[0].mxu0 %v325
    %v708 = vpop.f32.mrb[0].mxu0
    %v709 = vadd.f32 %v132, %v708
    %v710 = vpop.f32.mrb[0].mxu0
    %711 = vdwg.mxu0
    %v712 = vmax.f32 %v394, 0.0
    %v713 = vmax.f32 %v399, 0.0
    %v714 = vmax.f32 %v404, 0.0
    %v715 = vmax.f32 %v409, 0.0
    %v716 = vmax.f32 %v414, 0.0
    %v717 = vmax.f32 %v419, 0.0
    %v718 = vmax.f32 %v424, 0.0
    %v719 = vmax.f32 %v429, 0.0
    %v720 = vmax.f32 %v434, 0.0
    %v721 = vmax.f32 %v439, 0.0
    %v722 = vmax.f32 %v444, 0.0
    %v723 = vmax.f32 %v449, 0.0
    %v724 = vmax.f32 %v454, 0.0
    %v725 = vmax.f32 %v459, 0.0
    %v726 = vmax.f32 %v464, 0.0
    %v727 = vmax.f32 %v469, 0.0
    %v728 = vmax.f32 %v474, 0.0
    %v729 = vmax.f32 %v479, 0.0
    %v730 = vmax.f32 %v484, 0.0
    %v731 = vmax.f32 %v489, 0.0
    %v732 = vmax.f32 %v494, 0.0
    %v733 = vmax.f32 %v499, 0.0
    %v734 = vmax.f32 %v504, 0.0
    %v735 = vmax.f32 %v509, 0.0
    %v736 = vmax.f32 %v514, 0.0
    %v737 = vmax.f32 %v519, 0.0
    %v738 = vmax.f32 %v524, 0.0
    %v739 = vmax.f32 %v529, 0.0
    %v740 = vmax.f32 %v534, 0.0
    %v741 = vmax.f32 %v539, 0.0
    %v742 = vmax.f32 %v544, 0.0
    %v743 = vmax.f32 %v549, 0.0
    %v744 = vmax.f32 %v554, 0.0
    %v745 = vmax.f32 %v559, 0.0
    %v746 = vmax.f32 %v564, 0.0
    %v747 = vmax.f32 %v569, 0.0
    %v748 = vmax.f32 %v574, 0.0
    %v749 = vmax.f32 %v579, 0.0
    %v750 = vmax.f32 %v584, 0.0
    %v751 = vmax.f32 %v589, 0.0
    %v752 = vmax.f32 %v594, 0.0
    %v753 = vmax.f32 %v599, 0.0
    %v754 = vmax.f32 %v604, 0.0
    %v755 = vmax.f32 %v609, 0.0
    %v756 = vmax.f32 %v614, 0.0
    %v757 = vmax.f32 %v619, 0.0
    %v758 = vmax.f32 %v624, 0.0
    %v759 = vmax.f32 %v629, 0.0
    %v760 = vmax.f32 %v634, 0.0
    %v761 = vmax.f32 %v639, 0.0
    %v762 = vmax.f32 %v644, 0.0
    %v763 = vmax.f32 %v649, 0.0
    %v764 = vmax.f32 %v654, 0.0
    %v765 = vmax.f32 %v659, 0.0
    %v766 = vmax.f32 %v664, 0.0
    %v767 = vmax.f32 %v669, 0.0
    %v768 = vmax.f32 %v674, 0.0
    %v769 = vmax.f32 %v679, 0.0
    %v770 = vmax.f32 %v684, 0.0
    %v771 = vmax.f32 %v689, 0.0
    %v772 = vmax.f32 %v694, 0.0
    %v773 = vmax.f32 %v699, 0.0
    %v774 = vmax.f32 %v704, 0.0
    %v775 = vmax.f32 %v709, 0.0
    %v776 = vpack.c.bf16 %v713, %v712
    %v777 = vpack.c.bf16 %v715, %v714
    %v778 = vpack.c.bf16 %v717, %v716
    %v779 = vpack.c.bf16 %v719, %v718
    %v780 = vpack.c.bf16 %v721, %v720
    %v781 = vpack.c.bf16 %v723, %v722
    %v782 = vpack.c.bf16 %v725, %v724
    %v783 = vpack.c.bf16 %v727, %v726
    %v784 = vpack.c.bf16 %v729, %v728
    %v785 = vpack.c.bf16 %v731, %v730
    %v786 = vpack.c.bf16 %v733, %v732
    %v787 = vpack.c.bf16 %v735, %v734
    %v788 = vpack.c.bf16 %v737, %v736
    %v789 = vpack.c.bf16 %v739, %v738
    %v790 = vpack.c.bf16 %v741, %v740
    %v791 = vpack.c.bf16 %v743, %v742
    %v792 = vpack.c.bf16 %v745, %v744
    %v793 = vpack.c.bf16 %v747, %v746
    %v794 = vpack.c.bf16 %v749, %v748
    %v795 = vpack.c.bf16 %v751, %v750
    %v796 = vpack.c.bf16 %v753, %v752
    %v797 = vpack.c.bf16 %v755, %v754
    %v798 = vpack.c.bf16 %v757, %v756
    %v799 = vpack.c.bf16 %v759, %v758
    %v800 = vpack.c.bf16 %v761, %v760
    %v801 = vpack.c.bf16 %v763, %v762
    %v802 = vpack.c.bf16 %v765, %v764
    %v803 = vpack.c.bf16 %v767, %v766
    %v804 = vpack.c.bf16 %v769, %v768
    %v805 = vpack.c.bf16 %v771, %v770
    %v806 = vpack.c.bf16 %v773, %v772
    %v807 = vpack.c.bf16 %v775, %v774
    %v808 = vld [vmem:[#allocation2] sm:$0xf]
    %v809 = vld [vmem:[#allocation2 + $0x4] sm:$0xf]
    %v810 = vld [vmem:[#allocation2 + $0x8] sm:$0xf]
    %v811 = vld [vmem:[#allocation2 + $0xc] sm:$0xf]
    %v812 = vld [vmem:[#allocation2 + $0x10] sm:$0xf]
    %v813 = vld [vmem:[#allocation2 + $0x14] sm:$0xf]
    %v814 = vld [vmem:[#allocation2 + $0x18] sm:$0xf]
    %v815 = vld [vmem:[#allocation2 + $0x1c] sm:$0xf]
    %v816 = vld [vmem:[#allocation2 + $0x20] sm:$0xf]
    %v817 = vld [vmem:[#allocation2 + $0x24] sm:$0xf]
    %v818 = vld [vmem:[#allocation2 + $0x28] sm:$0xf]
    %v819 = vld [vmem:[#allocation2 + $0x2c] sm:$0xf]
    %v820 = vld [vmem:[#allocation2 + $0x30] sm:$0xf]
    %v821 = vld [vmem:[#allocation2 + $0x34] sm:$0xf]
    %v822 = vld [vmem:[#allocation2 + $0x38] sm:$0xf]
    %v823 = vld [vmem:[#allocation2 + $0x3c] sm:$0xf]
    %v824 = vld [vmem:[%s4] sm:$0x1]
    %v826 = vlaneseq
    %v827 = vshrl.u32 %v826, 7
    %v828 = vsub.s32 0, %v827
    %v829 = vrot.slane %v824, %v828
    %v847 = vunpack.c.l.b16 %v808
    %v848 = vunpack.c.l.b16 %v809
    %v849 = vunpack.c.l.b16 %v810
    %v850 = vunpack.c.l.b16 %v811
    %v851 = vunpack.c.l.b16 %v812
    %v852 = vunpack.c.l.b16 %v813
    %v853 = vunpack.c.l.b16 %v814
    %v854 = vunpack.c.l.b16 %v815
    %v855 = vunpack.c.l.b16 %v816
    %v856 = vunpack.c.l.b16 %v817
    %v857 = vunpack.c.l.b16 %v818
    %v858 = vunpack.c.l.b16 %v819
    %v859 = vunpack.c.l.b16 %v820
    %v860 = vunpack.c.l.b16 %v821
    %v861 = vunpack.c.l.b16 %v822
    %v862 = vunpack.c.l.b16 %v823
    %v863 = vpack.c.b16 %v848, %v847
    %v864 = vpack.c.b16 %v850, %v849
    %v865 = vpack.c.b16 %v852, %v851
    %v866 = vpack.c.b16 %v854, %v853
    %v867 = vpack.c.b16 %v856, %v855
    %v868 = vpack.c.b16 %v858, %v857
    %v869 = vpack.c.b16 %v860, %v859
    %v870 = vpack.c.b16 %v862, %v861
    %879 = vmatprep.subr.bf16.mxu0 0
    %880 = vmatpush1.bf16.msra.mxu0 %v863
    %881 = vmatprep.subr.bf16.mxu0 0
    %882 = vmatpush1.bf16.msra.mxu0 %v864
    %883 = vmatprep.subr.bf16.mxu0 0
    %884 = vmatpush1.bf16.msra.mxu0 %v865
    %885 = vmatprep.subr.bf16.mxu0 0
    %886 = vmatpush1.bf16.msra.mxu0 %v866
    %887 = vmatprep.subr.bf16.mxu0 0
    %888 = vmatpush1.bf16.msra.mxu0 %v867
    %889 = vmatprep.subr.bf16.mxu0 0
    %890 = vmatpush1.bf16.msra.mxu0 %v868
    %891 = vmatprep.subr.bf16.mxu0 0
    %892 = vmatpush1.bf16.msra.mxu0 %v869
    %893 = vmatprep.subr.bf16.mxu0 0
    %894 = vmatpush1.bf16.msra.mxu0 %v870
    %895 = vmatprep.subr.bf16.mxu0 0
    %896 = vmatpush1.bf16.msra.mxu0 0
    %897 = vmatprep.subr.bf16.mxu0 0
    %898 = vmatpush1.bf16.msra.mxu0 0
    %899 = vmatprep.subr.bf16.mxu0 0
    %900 = vmatpush1.bf16.msra.mxu0 0
    %901 = vmatprep.subr.bf16.mxu0 0
    %902 = vmatpush1.bf16.msra.mxu0 0
    %903 = vmatprep.subr.bf16.mxu0 0
    %904 = vmatpush1.bf16.msra.mxu0 0
    %905 = vmatprep.subr.bf16.mxu0 0
    %906 = vmatpush1.bf16.msra.mxu0 0
    %907 = vmatprep.subr.bf16.mxu0 0
    %908 = vmatpush1.bf16.msra.mxu0 0
    %909 = vmatprep.subr.bf16.mxu0 0
    %910 = vmatpush1.bf16.msra.mxu0 0
    %911 = vmatprep.mubr.bf16.mxu0 0
    %912 = vmatmul.mubr.bf16.gmra.mrb[0].mxu0 %v776
    %v913 = vpop.f32.mrb[0].mxu0
    %v914 = vadd.f32 %v829, %v913
    %v915 = vpop.f32.mrb[0].mxu0
    %v916 = vpop.f32.mrb[0].mxu0
    %v917 = vadd.f32 %v829, %v916
    %v918 = vpop.f32.mrb[0].mxu0
    %919 = vmatprep.mubr.bf16.mxu0 0
    %920 = vmatmul.mubr.bf16.gmra.mrb[0].mxu0 %v777
    %v921 = vpop.f32.mrb[0].mxu0
    %v922 = vadd.f32 %v829, %v921
    %v923 = vpop.f32.mrb[0].mxu0
    %v924 = vpop.f32.mrb[0].mxu0
    %v925 = vadd.f32 %v829, %v924
    %v926 = vpop.f32.mrb[0].mxu0
    %927 = vmatprep.mubr.bf16.mxu0 0
    %928 = vmatmul.mubr.bf16.gmra.mrb[0].mxu0 %v778
    %v929 = vpop.f32.mrb[0].mxu0
    %v930 = vadd.f32 %v829, %v929
    %v931 = vpop.f32.mrb[0].mxu0
    %v932 = vpop.f32.mrb[0].mxu0
    %v933 = vadd.f32 %v829, %v932
    %v934 = vpop.f32.mrb[0].mxu0
    %935 = vmatprep.mubr.bf16.mxu0 0
    %936 = vmatmul.mubr.bf16.gmra.mrb[0].mxu0 %v779
    %v937 = vpop.f32.mrb[0].mxu0
    %v938 = vadd.f32 %v829, %v937
    %v939 = vpop.f32.mrb[0].mxu0
    %v940 = vpop.f32.mrb[0].mxu0
    %v941 = vadd.f32 %v829, %v940
    %v942 = vpop.f32.mrb[0].mxu0
    %943 = vmatprep.mubr.bf16.mxu0 0
    %944 = vmatmul.mubr.bf16.gmra.mrb[0].mxu0 %v780
    %v945 = vpop.f32.mrb[0].mxu0
    %v946 = vadd.f32 %v829, %v945
    %v947 = vpop.f32.mrb[0].mxu0
    %v948 = vpop.f32.mrb[0].mxu0
    %v949 = vadd.f32 %v829, %v948
    %v950 = vpop.f32.mrb[0].mxu0
    %951 = vmatprep.mubr.bf16.mxu0 0
    %952 = vmatmul.mubr.bf16.gmra.mrb[0].mxu0 %v781
    %v953 = vpop.f32.mrb[0].mxu0
    %v954 = vadd.f32 %v829, %v953
    %v955 = vpop.f32.mrb[0].mxu0
    %v956 = vpop.f32.mrb[0].mxu0
    %v957 = vadd.f32 %v829, %v956
    %v958 = vpop.f32.mrb[0].mxu0
    %959 = vmatprep.mubr.bf16.mxu0 0
    %960 = vmatmul.mubr.bf16.gmra.mrb[0].mxu0 %v782
    %v961 = vpop.f32.mrb[0].mxu0
    %v962 = vadd.f32 %v829, %v961
    %v963 = vpop.f32.mrb[0].mxu0
    %v964 = vpop.f32.mrb[0].mxu0
    %v965 = vadd.f32 %v829, %v964
    %v966 = vpop.f32.mrb[0].mxu0
    %967 = vmatprep.mubr.bf16.mxu0 0
    %968 = vmatmul.mubr.bf16.gmra.mrb[0].mxu0 %v783
    %v969 = vpop.f32.mrb[0].mxu0
    %v970 = vadd.f32 %v829, %v969
    %v971 = vpop.f32.mrb[0].mxu0
    %v972 = vpop.f32.mrb[0].mxu0
    %v973 = vadd.f32 %v829, %v972
    %v974 = vpop.f32.mrb[0].mxu0
    %975 = vmatprep.mubr.bf16.mxu0 0
    %976 = vmatmul.mubr.bf16.gmra.mrb[0].mxu0 %v784
    %v977 = vpop.f32.mrb[0].mxu0
    %v978 = vadd.f32 %v829, %v977
    %v979 = vpop.f32.mrb[0].mxu0
    %v980 = vpop.f32.mrb[0].mxu0
    %v981 = vadd.f32 %v829, %v980
    %v982 = vpop.f32.mrb[0].mxu0
    %983 = vmatprep.mubr.bf16.mxu0 0
    %984 = vmatmul.mubr.bf16.gmra.mrb[0].mxu0 %v785
    %v985 = vpop.f32.mrb[0].mxu0
    %v986 = vadd.f32 %v829, %v985
    %v987 = vpop.f32.mrb[0].mxu0
    %v988 = vpop.f32.mrb[0].mxu0
    %v989 = vadd.f32 %v829, %v988
    %v990 = vpop.f32.mrb[0].mxu0
    %991 = vmatprep.mubr.bf16.mxu0 0
    %992 = vmatmul.mubr.bf16.gmra.mrb[0].mxu0 %v786
    %v993 = vpop.f32.mrb[0].mxu0
    %v994 = vadd.f32 %v829, %v993
    %v995 = vpop.f32.mrb[0].mxu0
    %v996 = vpop.f32.mrb[0].mxu0
    %v997 = vadd.f32 %v829, %v996
    %v998 = vpop.f32.mrb[0].mxu0
    %999 = vmatprep.mubr.bf16.mxu0 0
    %1000 = vmatmul.mubr.bf16.gmra.mrb[0].mxu0 %v787
    %v1001 = vpop.f32.mrb[0].mxu0
    %v1002 = vadd.f32 %v829, %v1001
    %v1003 = vpop.f32.mrb[0].mxu0
    %v1004 = vpop.f32.mrb[0].mxu0
    %v1005 = vadd.f32 %v829, %v1004
    %v1006 = vpop.f32.mrb[0].mxu0
    %1007 = vmatprep.mubr.bf16.mxu0 0
    %1008 = vmatmul.mubr.bf16.gmra.mrb[0].mxu0 %v788
    %v1009 = vpop.f32.mrb[0].mxu0
    %v1010 = vadd.f32 %v829, %v1009
    %v1011 = vpop.f32.mrb[0].mxu0
    %v1012 = vpop.f32.mrb[0].mxu0
    %v1013 = vadd.f32 %v829, %v1012
    %v1014 = vpop.f32.mrb[0].mxu0
    %1015 = vmatprep.mubr.bf16.mxu0 0
    %1016 = vmatmul.mubr.bf16.gmra.mrb[0].mxu0 %v789
    %v1017 = vpop.f32.mrb[0].mxu0
    %v1018 = vadd.f32 %v829, %v1017
    %v1019 = vpop.f32.mrb[0].mxu0
    %v1020 = vpop.f32.mrb[0].mxu0
    %v1021 = vadd.f32 %v829, %v1020
    %v1022 = vpop.f32.mrb[0].mxu0
    %1023 = vmatprep.mubr.bf16.mxu0 0
    %1024 = vmatmul.mubr.bf16.gmra.mrb[0].mxu0 %v790
    %v1025 = vpop.f32.mrb[0].mxu0
    %v1026 = vadd.f32 %v829, %v1025
    %v1027 = vpop.f32.mrb[0].mxu0
    %v1028 = vpop.f32.mrb[0].mxu0
    %v1029 = vadd.f32 %v829, %v1028
    %v1030 = vpop.f32.mrb[0].mxu0
    %1031 = vmatprep.mubr.bf16.mxu0 0
    %1032 = vmatmul.mubr.bf16.gmra.mrb[0].mxu0 %v791
    %v1033 = vpop.f32.mrb[0].mxu0
    %v1034 = vadd.f32 %v829, %v1033
    %v1035 = vpop.f32.mrb[0].mxu0
    %v1036 = vpop.f32.mrb[0].mxu0
    %v1037 = vadd.f32 %v829, %v1036
    %v1038 = vpop.f32.mrb[0].mxu0
    %1039 = vmatprep.mubr.bf16.mxu0 0
    %1040 = vmatmul.mubr.bf16.gmra.mrb[0].mxu0 %v792
    %v1041 = vpop.f32.mrb[0].mxu0
    %v1042 = vadd.f32 %v829, %v1041
    %v1043 = vpop.f32.mrb[0].mxu0
    %v1044 = vpop.f32.mrb[0].mxu0
    %v1045 = vadd.f32 %v829, %v1044
    %v1046 = vpop.f32.mrb[0].mxu0
    %1047 = vmatprep.mubr.bf16.mxu0 0
    %1048 = vmatmul.mubr.bf16.gmra.mrb[0].mxu0 %v793
    %v1049 = vpop.f32.mrb[0].mxu0
    %v1050 = vadd.f32 %v829, %v1049
    %v1051 = vpop.f32.mrb[0].mxu0
    %v1052 = vpop.f32.mrb[0].mxu0
    %v1053 = vadd.f32 %v829, %v1052
    %v1054 = vpop.f32.mrb[0].mxu0
    %1055 = vmatprep.mubr.bf16.mxu0 0
    %1056 = vmatmul.mubr.bf16.gmra.mrb[0].mxu0 %v794
    %v1057 = vpop.f32.mrb[0].mxu0
    %v1058 = vadd.f32 %v829, %v1057
    %v1059 = vpop.f32.mrb[0].mxu0
    %v1060 = vpop.f32.mrb[0].mxu0
    %v1061 = vadd.f32 %v829, %v1060
    %v1062 = vpop.f32.mrb[0].mxu0
    %1063 = vmatprep.mubr.bf16.mxu0 0
    %1064 = vmatmul.mubr.bf16.gmra.mrb[0].mxu0 %v795
    %v1065 = vpop.f32.mrb[0].mxu0
    %v1066 = vadd.f32 %v829, %v1065
    %v1067 = vpop.f32.mrb[0].mxu0
    %v1068 = vpop.f32.mrb[0].mxu0
    %v1069 = vadd.f32 %v829, %v1068
    %v1070 = vpop.f32.mrb[0].mxu0
    %1071 = vmatprep.mubr.bf16.mxu0 0
    %1072 = vmatmul.mubr.bf16.gmra.mrb[0].mxu0 %v796
    %v1073 = vpop.f32.mrb[0].mxu0
    %v1074 = vadd.f32 %v829, %v1073
    %v1075 = vpop.f32.mrb[0].mxu0
    %v1076 = vpop.f32.mrb[0].mxu0
    %v1077 = vadd.f32 %v829, %v1076
    %v1078 = vpop.f32.mrb[0].mxu0
    %1079 = vmatprep.mubr.bf16.mxu0 0
    %1080 = vmatmul.mubr.bf16.gmra.mrb[0].mxu0 %v797
    %v1081 = vpop.f32.mrb[0].mxu0
    %v1082 = vadd.f32 %v829, %v1081
    %v1083 = vpop.f32.mrb[0].mxu0
    %v1084 = vpop.f32.mrb[0].mxu0
    %v1085 = vadd.f32 %v829, %v1084
    %v1086 = vpop.f32.mrb[0].mxu0
    %1087 = vmatprep.mubr.bf16.mxu0 0
    %1088 = vmatmul.mubr.bf16.gmra.mrb[0].mxu0 %v798
    %v1089 = vpop.f32.mrb[0].mxu0
    %v1090 = vadd.f32 %v829, %v1089
    %v1091 = vpop.f32.mrb[0].mxu0
    %v1092 = vpop.f32.mrb[0].mxu0
    %v1093 = vadd.f32 %v829, %v1092
    %v1094 = vpop.f32.mrb[0].mxu0
    %1095 = vmatprep.mubr.bf16.mxu0 0
    %1096 = vmatmul.mubr.bf16.gmra.mrb[0].mxu0 %v799
    %v1097 = vpop.f32.mrb[0].mxu0
    %v1098 = vadd.f32 %v829, %v1097
    %v1099 = vpop.f32.mrb[0].mxu0
    %v1100 = vpop.f32.mrb[0].mxu0
    %v1101 = vadd.f32 %v829, %v1100
    %v1102 = vpop.f32.mrb[0].mxu0
    %1103 = vmatprep.mubr.bf16.mxu0 0
    %1104 = vmatmul.mubr.bf16.gmra.mrb[0].mxu0 %v800
    %v1105 = vpop.f32.mrb[0].mxu0
    %v1106 = vadd.f32 %v829, %v1105
    %v1107 = vpop.f32.mrb[0].mxu0
    %v1108 = vpop.f32.mrb[0].mxu0
    %v1109 = vadd.f32 %v829, %v1108
    %v1110 = vpop.f32.mrb[0].mxu0
    %1111 = vmatprep.mubr.bf16.mxu0 0
    %1112 = vmatmul.mubr.bf16.gmra.mrb[0].mxu0 %v801
    %v1113 = vpop.f32.mrb[0].mxu0
    %v1114 = vadd.f32 %v829, %v1113
    %v1115 = vpop.f32.mrb[0].mxu0
    %v1116 = vpop.f32.mrb[0].mxu0
    %v1117 = vadd.f32 %v829, %v1116
    %v1118 = vpop.f32.mrb[0].mxu0
    %1119 = vmatprep.mubr.bf16.mxu0 0
    %1120 = vmatmul.mubr.bf16.gmra.mrb[0].mxu0 %v802
    %v1121 = vpop.f32.mrb[0].mxu0
    %v1122 = vadd.f32 %v829, %v1121
    %v1123 = vpop.f32.mrb[0].mxu0
    %v1124 = vpop.f32.mrb[0].mxu0
    %v1125 = vadd.f32 %v829, %v1124
    %v1126 = vpop.f32.mrb[0].mxu0
    %1127 = vmatprep.mubr.bf16.mxu0 0
    %1128 = vmatmul.mubr.bf16.gmra.mrb[0].mxu0 %v803
    %v1129 = vpop.f32.mrb[0].mxu0
    %v1130 = vadd.f32 %v829, %v1129
    %v1131 = vpop.f32.mrb[0].mxu0
    %v1132 = vpop.f32.mrb[0].mxu0
    %v1133 = vadd.f32 %v829, %v1132
    %v1134 = vpop.f32.mrb[0].mxu0
    %1135 = vmatprep.mubr.bf16.mxu0 0
    %1136 = vmatmul.mubr.bf16.gmra.mrb[0].mxu0 %v804
    %v1137 = vpop.f32.mrb[0].mxu0
    %v1138 = vadd.f32 %v829, %v1137
    %v1139 = vpop.f32.mrb[0].mxu0
    %v1140 = vpop.f32.mrb[0].mxu0
    %v1141 = vadd.f32 %v829, %v1140
    %v1142 = vpop.f32.mrb[0].mxu0
    %1143 = vmatprep.mubr.bf16.mxu0 0
    %1144 = vmatmul.mubr.bf16.gmra.mrb[0].mxu0 %v805
    %v1145 = vpop.f32.mrb[0].mxu0
    %v1146 = vadd.f32 %v829, %v1145
    %v1147 = vpop.f32.mrb[0].mxu0
    %v1148 = vpop.f32.mrb[0].mxu0
    %v1149 = vadd.f32 %v829, %v1148
    %v1150 = vpop.f32.mrb[0].mxu0
    %1151 = vmatprep.mubr.bf16.mxu0 0
    %1152 = vmatmul.mubr.bf16.gmra.mrb[0].mxu0 %v806
    %v1153 = vpop.f32.mrb[0].mxu0
    %v1154 = vadd.f32 %v829, %v1153
    %v1155 = vpop.f32.mrb[0].mxu0
    %v1156 = vpop.f32.mrb[0].mxu0
    %v1157 = vadd.f32 %v829, %v1156
    %v1158 = vpop.f32.mrb[0].mxu0
    %1159 = vmatprep.mubr.bf16.mxu0 0
    %1160 = vmatmul.mubr.bf16.gmra.mrb[0].mxu0 %v807
    %v1161 = vpop.f32.mrb[0].mxu0
    %v1162 = vadd.f32 %v829, %v1161
    %v1163 = vpop.f32.mrb[0].mxu0
    %v1164 = vpop.f32.mrb[0].mxu0
    %v1165 = vadd.f32 %v829, %v1164
    %v1166 = vpop.f32.mrb[0].mxu0
    %1167 = vdwg.mxu0
    %v1168 = vmax.f32 %v914, 0.0
    %v1169 = vmax.f32 %v917, 0.0
    %v1170 = vmax.f32 %v922, 0.0
    %v1171 = vmax.f32 %v925, 0.0
    %v1172 = vmax.f32 %v930, 0.0
    %v1173 = vmax.f32 %v933, 0.0
    %v1174 = vmax.f32 %v938, 0.0
    %v1175 = vmax.f32 %v941, 0.0
    %v1176 = vmax.f32 %v946, 0.0
    %v1177 = vmax.f32 %v949, 0.0
    %v1178 = vmax.f32 %v954, 0.0
    %v1179 = vmax.f32 %v957, 0.0
    %v1180 = vmax.f32 %v962, 0.0
    %v1181 = vmax.f32 %v965, 0.0
    %v1182 = vmax.f32 %v970, 0.0
    %v1183 = vmax.f32 %v973, 0.0
    %v1184 = vmax.f32 %v978, 0.0
    %v1185 = vmax.f32 %v981, 0.0
    %v1186 = vmax.f32 %v986, 0.0
    %v1187 = vmax.f32 %v989, 0.0
    %v1188 = vmax.f32 %v994, 0.0
    %v1189 = vmax.f32 %v997, 0.0
    %v1190 = vmax.f32 %v1002, 0.0
    %v1191 = vmax.f32 %v1005, 0.0
    %v1192 = vmax.f32 %v1010, 0.0
    %v1193 = vmax.f32 %v1013, 0.0
    %v1194 = vmax.f32 %v1018, 0.0
    %v1195 = vmax.f32 %v1021, 0.0
    %v1196 = vmax.f32 %v1026, 0.0
    %v1197 = vmax.f32 %v1029, 0.0
    %v1198 = vmax.f32 %v1034, 0.0
    %v1199 = vmax.f32 %v1037, 0.0
    %v1200 = vmax.f32 %v1042, 0.0
    %v1201 = vmax.f32 %v1045, 0.0
    %v1202 = vmax.f32 %v1050, 0.0
    %v1203 = vmax.f32 %v1053, 0.0
    %v1204 = vmax.f32 %v1058, 0.0
    %v1205 = vmax.f32 %v1061, 0.0
    %v1206 = vmax.f32 %v1066, 0.0
    %v1207 = vmax.f32 %v1069, 0.0
    %v1208 = vmax.f32 %v1074, 0.0
    %v1209 = vmax.f32 %v1077, 0.0
    %v1210 = vmax.f32 %v1082, 0.0
    %v1211 = vmax.f32 %v1085, 0.0
    %v1212 = vmax.f32 %v1090, 0.0
    %v1213 = vmax.f32 %v1093, 0.0
    %v1214 = vmax.f32 %v1098, 0.0
    %v1215 = vmax.f32 %v1101, 0.0
    %v1216 = vmax.f32 %v1106, 0.0
    %v1217 = vmax.f32 %v1109, 0.0
    %v1218 = vmax.f32 %v1114, 0.0
    %v1219 = vmax.f32 %v1117, 0.0
    %v1220 = vmax.f32 %v1122, 0.0
    %v1221 = vmax.f32 %v1125, 0.0
    %v1222 = vmax.f32 %v1130, 0.0
    %v1223 = vmax.f32 %v1133, 0.0
    %v1224 = vmax.f32 %v1138, 0.0
    %v1225 = vmax.f32 %v1141, 0.0
    %v1226 = vmax.f32 %v1146, 0.0
    %v1227 = vmax.f32 %v1149, 0.0
    %v1228 = vmax.f32 %v1154, 0.0
    %v1229 = vmax.f32 %v1157, 0.0
    %v1230 = vmax.f32 %v1162, 0.0
    %v1231 = vmax.f32 %v1165, 0.0
    %v1232 = vpack.c.bf16 %v1169, %v1168
    %v1233 = vpack.c.bf16 %v1171, %v1170
    %v1234 = vpack.c.bf16 %v1173, %v1172
    %v1235 = vpack.c.bf16 %v1175, %v1174
    %v1236 = vpack.c.bf16 %v1177, %v1176
    %v1237 = vpack.c.bf16 %v1179, %v1178
    %v1238 = vpack.c.bf16 %v1181, %v1180
    %v1239 = vpack.c.bf16 %v1183, %v1182
    %v1240 = vpack.c.bf16 %v1185, %v1184
    %v1241 = vpack.c.bf16 %v1187, %v1186
    %v1242 = vpack.c.bf16 %v1189, %v1188
    %v1243 = vpack.c.bf16 %v1191, %v1190
    %v1244 = vpack.c.bf16 %v1193, %v1192
    %v1245 = vpack.c.bf16 %v1195, %v1194
    %v1246 = vpack.c.bf16 %v1197, %v1196
    %v1247 = vpack.c.bf16 %v1199, %v1198
    %v1248 = vpack.c.bf16 %v1201, %v1200
    %v1249 = vpack.c.bf16 %v1203, %v1202
    %v1250 = vpack.c.bf16 %v1205, %v1204
    %v1251 = vpack.c.bf16 %v1207, %v1206
    %v1252 = vpack.c.bf16 %v1209, %v1208
    %v1253 = vpack.c.bf16 %v1211, %v1210
    %v1254 = vpack.c.bf16 %v1213, %v1212
    %v1255 = vpack.c.bf16 %v1215, %v1214
    %v1256 = vpack.c.bf16 %v1217, %v1216
    %v1257 = vpack.c.bf16 %v1219, %v1218
    %v1258 = vpack.c.bf16 %v1221, %v1220
    %v1259 = vpack.c.bf16 %v1223, %v1222
    %v1260 = vpack.c.bf16 %v1225, %v1224
    %v1261 = vpack.c.bf16 %v1227, %v1226
    %v1262 = vpack.c.bf16 %v1229, %v1228
    %v1263 = vpack.c.bf16 %v1231, %v1230
    %v1264 = vld [vmem:[#allocation5] sm:$0xff]
    %v1265 = vld [vmem:[#allocation5 + $0x8] sm:$0xff]
    %v1266 = vld [vmem:[#allocation5 + $0x10] sm:$0xff]
    %v1267 = vld [vmem:[#allocation5 + $0x18] sm:$0xff]
    %v1268 = vld [vmem:[#allocation5 + $0x20] sm:$0xff]
    %v1269 = vld [vmem:[#allocation5 + $0x28] sm:$0xff]
    %v1270 = vld [vmem:[#allocation5 + $0x30] sm:$0xff]
    %v1271 = vld [vmem:[#allocation5 + $0x38] sm:$0xff]
    %v1272 = vld [vmem:[#allocation5 + $0x40] sm:$0xff]
    %v1273 = vld [vmem:[#allocation5 + $0x48] sm:$0xff]
    %v1274 = vld [vmem:[#allocation5 + $0x50] sm:$0xff]
    %v1275 = vld [vmem:[#allocation5 + $0x58] sm:$0xff]
    %v1276 = vld [vmem:[#allocation5 + $0x60] sm:$0xff]
    %v1277 = vld [vmem:[#allocation5 + $0x68] sm:$0xff]
    %v1278 = vld [vmem:[#allocation5 + $0x70] sm:$0xff]
    %v1279 = vld [vmem:[#allocation5 + $0x78] sm:$0xff]
    %v1280 = vld [vmem:[%s6] sm:$0x3]
    %v1282 = vlaneseq
    %v1283 = vshrl.u32 %v1282, 7
    %v1284 = vsub.s32 0, %v1283
    %v1285 = vrot.slane %v1280, %v1284
    %v1286 = vlaneseq
    %v1287 = vshrl.u32 %v1286, 7
    %v1288 = vsub.s32 1, %v1287
    %v1289 = vrot.slane %v1280, %v1288
    %v1308 = vunpack.c.l.b16 %v1264
    %v1309 = vunpack.c.h.b16 %v1264
    %v1310 = vunpack.c.l.b16 %v1265
    %v1311 = vunpack.c.h.b16 %v1265
    %v1312 = vunpack.c.l.b16 %v1266
    %v1313 = vunpack.c.h.b16 %v1266
    %v1314 = vunpack.c.l.b16 %v1267
    %v1315 = vunpack.c.h.b16 %v1267
    %v1316 = vunpack.c.l.b16 %v1268
    %v1317 = vunpack.c.h.b16 %v1268
    %v1318 = vunpack.c.l.b16 %v1269
    %v1319 = vunpack.c.h.b16 %v1269
    %v1320 = vunpack.c.l.b16 %v1270
    %v1321 = vunpack.c.h.b16 %v1270
    %v1322 = vunpack.c.l.b16 %v1271
    %v1323 = vunpack.c.h.b16 %v1271
    %v1324 = vunpack.c.l.b16 %v1272
    %v1325 = vunpack.c.h.b16 %v1272
    %v1326 = vunpack.c.l.b16 %v1273
    %v1327 = vunpack.c.h.b16 %v1273
    %v1328 = vunpack.c.l.b16 %v1274
    %v1329 = vunpack.c.h.b16 %v1274
    %v1330 = vunpack.c.l.b16 %v1275
    %v1331 = vunpack.c.h.b16 %v1275
    %v1332 = vunpack.c.l.b16 %v1276
    %v1333 = vunpack.c.h.b16 %v1276
    %v1334 = vunpack.c.l.b16 %v1277
    %v1335 = vunpack.c.h.b16 %v1277
    %v1336 = vunpack.c.l.b16 %v1278
    %v1337 = vunpack.c.h.b16 %v1278
    %v1338 = vunpack.c.l.b16 %v1279
    %v1339 = vunpack.c.h.b16 %v1279
    %v1340 = vpack.c.b16 %v1310, %v1308
    %v1341 = vpack.c.b16 %v1311, %v1309
    %v1342 = vpack.c.b16 %v1314, %v1312
    %v1343 = vpack.c.b16 %v1315, %v1313
    %v1344 = vpack.c.b16 %v1318, %v1316
    %v1345 = vpack.c.b16 %v1319, %v1317
    %v1346 = vpack.c.b16 %v1322, %v1320
    %v1347 = vpack.c.b16 %v1323, %v1321
    %v1348 = vpack.c.b16 %v1326, %v1324
    %v1349 = vpack.c.b16 %v1327, %v1325
    %v1350 = vpack.c.b16 %v1330, %v1328
    %v1351 = vpack.c.b16 %v1331, %v1329
    %v1352 = vpack.c.b16 %v1334, %v1332
    %v1353 = vpack.c.b16 %v1335, %v1333
    %v1354 = vpack.c.b16 %v1338, %v1336
    %v1355 = vpack.c.b16 %v1339, %v1337
    %1372 = vmatprep.subr.bf16.mxu0 %v1341
    %1373 = vmatpush1.bf16.msra.mxu0 %v1340
    %1374 = vmatprep.subr.bf16.mxu0 %v1343
    %1375 = vmatpush1.bf16.msra.mxu0 %v1342
    %1376 = vmatprep.subr.bf16.mxu0 %v1345
    %1377 = vmatpush1.bf16.msra.mxu0 %v1344
    %1378 = vmatprep.subr.bf16.mxu0 %v1347
    %1379 = vmatpush1.bf16.msra.mxu0 %v1346
    %1380 = vmatprep.subr.bf16.mxu0 %v1349
    %1381 = vmatpush1.bf16.msra.mxu0 %v1348
    %1382 = vmatprep.subr.bf16.mxu0 %v1351
    %1383 = vmatpush1.bf16.msra.mxu0 %v1350
    %1384 = vmatprep.subr.bf16.mxu0 %v1353
    %1385 = vmatpush1.bf16.msra.mxu0 %v1352
    %1386 = vmatprep.subr.bf16.mxu0 %v1355
    %1387 = vmatpush1.bf16.msra.mxu0 %v1354
    %1388 = vmatprep.subr.bf16.mxu0 0
    %1389 = vmatpush1.bf16.msra.mxu0 0
    %1390 = vmatprep.subr.bf16.mxu0 0
    %1391 = vmatpush1.bf16.msra.mxu0 0
    %1392 = vmatprep.subr.bf16.mxu0 0
    %1393 = vmatpush1.bf16.msra.mxu0 0
    %1394 = vmatprep.subr.bf16.mxu0 0
    %1395 = vmatpush1.bf16.msra.mxu0 0
    %1396 = vmatprep.subr.bf16.mxu0 0
    %1397 = vmatpush1.bf16.msra.mxu0 0
    %1398 = vmatprep.subr.bf16.mxu0 0
    %1399 = vmatpush1.bf16.msra.mxu0 0
    %1400 = vmatprep.subr.bf16.mxu0 0
    %1401 = vmatpush1.bf16.msra.mxu0 0
    %1402 = vmatprep.subr.bf16.mxu0 0
    %1403 = vmatpush1.bf16.msra.mxu0 0
    %1404 = vmatprep.mubr.bf16.mxu0 0
    %1405 = vmatmul.mubr.bf16.gmra.mrb[0].mxu0 %v1232
    %v1406 = vpop.f32.mrb[0].mxu0
    %v1407 = vadd.f32 %v1285, %v1406
    %v1408 = vpop.f32.mrb[0].mxu0
    %v1409 = vadd.f32 %v1289, %v1408
    %v1410 = vpop.f32.mrb[0].mxu0
    %v1411 = vadd.f32 %v1285, %v1410
    %v1412 = vpop.f32.mrb[0].mxu0
    %v1413 = vadd.f32 %v1289, %v1412
    %1414 = vmatprep.mubr.bf16.mxu0 0
    %1415 = vmatmul.mubr.bf16.gmra.mrb[0].mxu0 %v1233
    %v1416 = vpop.f32.mrb[0].mxu0
    %v1417 = vadd.f32 %v1285, %v1416
    %v1418 = vpop.f32.mrb[0].mxu0
    %v1419 = vadd.f32 %v1289, %v1418
    %v1420 = vpop.f32.mrb[0].mxu0
    %v1421 = vadd.f32 %v1285, %v1420
    %v1422 = vpop.f32.mrb[0].mxu0
    %v1423 = vadd.f32 %v1289, %v1422
    %1424 = vmatprep.mubr.bf16.mxu0 0
    %1425 = vmatmul.mubr.bf16.gmra.mrb[0].mxu0 %v1234
    %v1426 = vpop.f32.mrb[0].mxu0
    %v1427 = vadd.f32 %v1285, %v1426
    %v1428 = vpop.f32.mrb[0].mxu0
    %v1429 = vadd.f32 %v1289, %v1428
    %v1430 = vpop.f32.mrb[0].mxu0
    %v1431 = vadd.f32 %v1285, %v1430
    %v1432 = vpop.f32.mrb[0].mxu0
    %v1433 = vadd.f32 %v1289, %v1432
    %1434 = vmatprep.mubr.bf16.mxu0 0
    %1435 = vmatmul.mubr.bf16.gmra.mrb[0].mxu0 %v1235
    %v1436 = vpop.f32.mrb[0].mxu0
    %v1437 = vadd.f32 %v1285, %v1436
    %v1438 = vpop.f32.mrb[0].mxu0
    %v1439 = vadd.f32 %v1289, %v1438
    %v1440 = vpop.f32.mrb[0].mxu0
    %v1441 = vadd.f32 %v1285, %v1440
    %v1442 = vpop.f32.mrb[0].mxu0
    %v1443 = vadd.f32 %v1289, %v1442
    %1444 = vmatprep.mubr.bf16.mxu0 0
    %1445 = vmatmul.mubr.bf16.gmra.mrb[0].mxu0 %v1236
    %v1446 = vpop.f32.mrb[0].mxu0
    %v1447 = vadd.f32 %v1285, %v1446
    %v1448 = vpop.f32.mrb[0].mxu0
    %v1449 = vadd.f32 %v1289, %v1448
    %v1450 = vpop.f32.mrb[0].mxu0
    %v1451 = vadd.f32 %v1285, %v1450
    %v1452 = vpop.f32.mrb[0].mxu0
    %v1453 = vadd.f32 %v1289, %v1452
    %1454 = vmatprep.mubr.bf16.mxu0 0
    %1455 = vmatmul.mubr.bf16.gmra.mrb[0].mxu0 %v1237
    %v1456 = vpop.f32.mrb[0].mxu0
    %v1457 = vadd.f32 %v1285, %v1456
    %v1458 = vpop.f32.mrb[0].mxu0
    %v1459 = vadd.f32 %v1289, %v1458
    %v1460 = vpop.f32.mrb[0].mxu0
    %v1461 = vadd.f32 %v1285, %v1460
    %v1462 = vpop.f32.mrb[0].mxu0
    %v1463 = vadd.f32 %v1289, %v1462
    %1464 = vmatprep.mubr.bf16.mxu0 0
    %1465 = vmatmul.mubr.bf16.gmra.mrb[0].mxu0 %v1238
    %v1466 = vpop.f32.mrb[0].mxu0
    %v1467 = vadd.f32 %v1285, %v1466
    %v1468 = vpop.f32.mrb[0].mxu0
    %v1469 = vadd.f32 %v1289, %v1468
    %v1470 = vpop.f32.mrb[0].mxu0
    %v1471 = vadd.f32 %v1285, %v1470
    %v1472 = vpop.f32.mrb[0].mxu0
    %v1473 = vadd.f32 %v1289, %v1472
    %1474 = vmatprep.mubr.bf16.mxu0 0
    %1475 = vmatmul.mubr.bf16.gmra.mrb[0].mxu0 %v1239
    %v1476 = vpop.f32.mrb[0].mxu0
    %v1477 = vadd.f32 %v1285, %v1476
    %v1478 = vpop.f32.mrb[0].mxu0
    %v1479 = vadd.f32 %v1289, %v1478
    %v1480 = vpop.f32.mrb[0].mxu0
    %v1481 = vadd.f32 %v1285, %v1480
    %v1482 = vpop.f32.mrb[0].mxu0
    %v1483 = vadd.f32 %v1289, %v1482
    %1484 = vmatprep.mubr.bf16.mxu0 0
    %1485 = vmatmul.mubr.bf16.gmra.mrb[0].mxu0 %v1240
    %v1486 = vpop.f32.mrb[0].mxu0
    %v1487 = vadd.f32 %v1285, %v1486
    %v1488 = vpop.f32.mrb[0].mxu0
    %v1489 = vadd.f32 %v1289, %v1488
    %v1490 = vpop.f32.mrb[0].mxu0
    %v1491 = vadd.f32 %v1285, %v1490
    %v1492 = vpop.f32.mrb[0].mxu0
    %v1493 = vadd.f32 %v1289, %v1492
    %1494 = vmatprep.mubr.bf16.mxu0 0
    %1495 = vmatmul.mubr.bf16.gmra.mrb[0].mxu0 %v1241
    %v1496 = vpop.f32.mrb[0].mxu0
    %v1497 = vadd.f32 %v1285, %v1496
    %v1498 = vpop.f32.mrb[0].mxu0
    %v1499 = vadd.f32 %v1289, %v1498
    %v1500 = vpop.f32.mrb[0].mxu0
    %v1501 = vadd.f32 %v1285, %v1500
    %v1502 = vpop.f32.mrb[0].mxu0
    %v1503 = vadd.f32 %v1289, %v1502
    %1504 = vmatprep.mubr.bf16.mxu0 0
    %1505 = vmatmul.mubr.bf16.gmra.mrb[0].mxu0 %v1242
    %v1506 = vpop.f32.mrb[0].mxu0
    %v1507 = vadd.f32 %v1285, %v1506
    %v1508 = vpop.f32.mrb[0].mxu0
    %v1509 = vadd.f32 %v1289, %v1508
    %v1510 = vpop.f32.mrb[0].mxu0
    %v1511 = vadd.f32 %v1285, %v1510
    %v1512 = vpop.f32.mrb[0].mxu0
    %v1513 = vadd.f32 %v1289, %v1512
    %1514 = vmatprep.mubr.bf16.mxu0 0
    %1515 = vmatmul.mubr.bf16.gmra.mrb[0].mxu0 %v1243
    %v1516 = vpop.f32.mrb[0].mxu0
    %v1517 = vadd.f32 %v1285, %v1516
    %v1518 = vpop.f32.mrb[0].mxu0
    %v1519 = vadd.f32 %v1289, %v1518
    %v1520 = vpop.f32.mrb[0].mxu0
    %v1521 = vadd.f32 %v1285, %v1520
    %v1522 = vpop.f32.mrb[0].mxu0
    %v1523 = vadd.f32 %v1289, %v1522
    %1524 = vmatprep.mubr.bf16.mxu0 0
    %1525 = vmatmul.mubr.bf16.gmra.mrb[0].mxu0 %v1244
    %v1526 = vpop.f32.mrb[0].mxu0
    %v1527 = vadd.f32 %v1285, %v1526
    %v1528 = vpop.f32.mrb[0].mxu0
    %v1529 = vadd.f32 %v1289, %v1528
    %v1530 = vpop.f32.mrb[0].mxu0
    %v1531 = vadd.f32 %v1285, %v1530
    %v1532 = vpop.f32.mrb[0].mxu0
    %v1533 = vadd.f32 %v1289, %v1532
    %1534 = vmatprep.mubr.bf16.mxu0 0
    %1535 = vmatmul.mubr.bf16.gmra.mrb[0].mxu0 %v1245
    %v1536 = vpop.f32.mrb[0].mxu0
    %v1537 = vadd.f32 %v1285, %v1536
    %v1538 = vpop.f32.mrb[0].mxu0
    %v1539 = vadd.f32 %v1289, %v1538
    %v1540 = vpop.f32.mrb[0].mxu0
    %v1541 = vadd.f32 %v1285, %v1540
    %v1542 = vpop.f32.mrb[0].mxu0
    %v1543 = vadd.f32 %v1289, %v1542
    %1544 = vmatprep.mubr.bf16.mxu0 0
    %1545 = vmatmul.mubr.bf16.gmra.mrb[0].mxu0 %v1246
    %v1546 = vpop.f32.mrb[0].mxu0
    %v1547 = vadd.f32 %v1285, %v1546
    %v1548 = vpop.f32.mrb[0].mxu0
    %v1549 = vadd.f32 %v1289, %v1548
    %v1550 = vpop.f32.mrb[0].mxu0
    %v1551 = vadd.f32 %v1285, %v1550
    %v1552 = vpop.f32.mrb[0].mxu0
    %v1553 = vadd.f32 %v1289, %v1552
    %1554 = vmatprep.mubr.bf16.mxu0 0
    %1555 = vmatmul.mubr.bf16.gmra.mrb[0].mxu0 %v1247
    %v1556 = vpop.f32.mrb[0].mxu0
    %v1557 = vadd.f32 %v1285, %v1556
    %v1558 = vpop.f32.mrb[0].mxu0
    %v1559 = vadd.f32 %v1289, %v1558
    %v1560 = vpop.f32.mrb[0].mxu0
    %v1561 = vadd.f32 %v1285, %v1560
    %v1562 = vpop.f32.mrb[0].mxu0
    %v1563 = vadd.f32 %v1289, %v1562
    %1564 = vmatprep.mubr.bf16.mxu0 0
    %1565 = vmatmul.mubr.bf16.gmra.mrb[0].mxu0 %v1248
    %v1566 = vpop.f32.mrb[0].mxu0
    %v1567 = vadd.f32 %v1285, %v1566
    %v1568 = vpop.f32.mrb[0].mxu0
    %v1569 = vadd.f32 %v1289, %v1568
    %v1570 = vpop.f32.mrb[0].mxu0
    %v1571 = vadd.f32 %v1285, %v1570
    %v1572 = vpop.f32.mrb[0].mxu0
    %v1573 = vadd.f32 %v1289, %v1572
    %1574 = vmatprep.mubr.bf16.mxu0 0
    %1575 = vmatmul.mubr.bf16.gmra.mrb[0].mxu0 %v1249
    %v1576 = vpop.f32.mrb[0].mxu0
    %v1577 = vadd.f32 %v1285, %v1576
    %v1578 = vpop.f32.mrb[0].mxu0
    %v1579 = vadd.f32 %v1289, %v1578
    %v1580 = vpop.f32.mrb[0].mxu0
    %v1581 = vadd.f32 %v1285, %v1580
    %v1582 = vpop.f32.mrb[0].mxu0
    %v1583 = vadd.f32 %v1289, %v1582
    %1584 = vmatprep.mubr.bf16.mxu0 0
    %1585 = vmatmul.mubr.bf16.gmra.mrb[0].mxu0 %v1250
    %v1586 = vpop.f32.mrb[0].mxu0
    %v1587 = vadd.f32 %v1285, %v1586
    %v1588 = vpop.f32.mrb[0].mxu0
    %v1589 = vadd.f32 %v1289, %v1588
    %v1590 = vpop.f32.mrb[0].mxu0
    %v1591 = vadd.f32 %v1285, %v1590
    %v1592 = vpop.f32.mrb[0].mxu0
    %v1593 = vadd.f32 %v1289, %v1592
    %1594 = vmatprep.mubr.bf16.mxu0 0
    %1595 = vmatmul.mubr.bf16.gmra.mrb[0].mxu0 %v1251
    %v1596 = vpop.f32.mrb[0].mxu0
    %v1597 = vadd.f32 %v1285, %v1596
    %v1598 = vpop.f32.mrb[0].mxu0
    %v1599 = vadd.f32 %v1289, %v1598
    %v1600 = vpop.f32.mrb[0].mxu0
    %v1601 = vadd.f32 %v1285, %v1600
    %v1602 = vpop.f32.mrb[0].mxu0
    %v1603 = vadd.f32 %v1289, %v1602
    %1604 = vmatprep.mubr.bf16.mxu0 0
    %1605 = vmatmul.mubr.bf16.gmra.mrb[0].mxu0 %v1252
    %v1606 = vpop.f32.mrb[0].mxu0
    %v1607 = vadd.f32 %v1285, %v1606
    %v1608 = vpop.f32.mrb[0].mxu0
    %v1609 = vadd.f32 %v1289, %v1608
    %v1610 = vpop.f32.mrb[0].mxu0
    %v1611 = vadd.f32 %v1285, %v1610
    %v1612 = vpop.f32.mrb[0].mxu0
    %v1613 = vadd.f32 %v1289, %v1612
    %1614 = vmatprep.mubr.bf16.mxu0 0
    %1615 = vmatmul.mubr.bf16.gmra.mrb[0].mxu0 %v1253
    %v1616 = vpop.f32.mrb[0].mxu0
    %v1617 = vadd.f32 %v1285, %v1616
    %v1618 = vpop.f32.mrb[0].mxu0
    %v1619 = vadd.f32 %v1289, %v1618
    %v1620 = vpop.f32.mrb[0].mxu0
    %v1621 = vadd.f32 %v1285, %v1620
    %v1622 = vpop.f32.mrb[0].mxu0
    %v1623 = vadd.f32 %v1289, %v1622
    %1624 = vmatprep.mubr.bf16.mxu0 0
    %1625 = vmatmul.mubr.bf16.gmra.mrb[0].mxu0 %v1254
    %v1626 = vpop.f32.mrb[0].mxu0
    %v1627 = vadd.f32 %v1285, %v1626
    %v1628 = vpop.f32.mrb[0].mxu0
    %v1629 = vadd.f32 %v1289, %v1628
    %v1630 = vpop.f32.mrb[0].mxu0
    %v1631 = vadd.f32 %v1285, %v1630
    %v1632 = vpop.f32.mrb[0].mxu0
    %v1633 = vadd.f32 %v1289, %v1632
    %1634 = vmatprep.mubr.bf16.mxu0 0
    %1635 = vmatmul.mubr.bf16.gmra.mrb[0].mxu0 %v1255
    %v1636 = vpop.f32.mrb[0].mxu0
    %v1637 = vadd.f32 %v1285, %v1636
    %v1638 = vpop.f32.mrb[0].mxu0
    %v1639 = vadd.f32 %v1289, %v1638
    %v1640 = vpop.f32.mrb[0].mxu0
    %v1641 = vadd.f32 %v1285, %v1640
    %v1642 = vpop.f32.mrb[0].mxu0
    %v1643 = vadd.f32 %v1289, %v1642
    %1644 = vmatprep.mubr.bf16.mxu0 0
    %1645 = vmatmul.mubr.bf16.gmra.mrb[0].mxu0 %v1256
    %v1646 = vpop.f32.mrb[0].mxu0
    %v1647 = vadd.f32 %v1285, %v1646
    %v1648 = vpop.f32.mrb[0].mxu0
    %v1649 = vadd.f32 %v1289, %v1648
    %v1650 = vpop.f32.mrb[0].mxu0
    %v1651 = vadd.f32 %v1285, %v1650
    %v1652 = vpop.f32.mrb[0].mxu0
    %v1653 = vadd.f32 %v1289, %v1652
    %1654 = vmatprep.mubr.bf16.mxu0 0
    %1655 = vmatmul.mubr.bf16.gmra.mrb[0].mxu0 %v1257
    %v1656 = vpop.f32.mrb[0].mxu0
    %v1657 = vadd.f32 %v1285, %v1656
    %v1658 = vpop.f32.mrb[0].mxu0
    %v1659 = vadd.f32 %v1289, %v1658
    %v1660 = vpop.f32.mrb[0].mxu0
    %v1661 = vadd.f32 %v1285, %v1660
    %v1662 = vpop.f32.mrb[0].mxu0
    %v1663 = vadd.f32 %v1289, %v1662
    %1664 = vmatprep.mubr.bf16.mxu0 0
    %1665 = vmatmul.mubr.bf16.gmra.mrb[0].mxu0 %v1258
    %v1666 = vpop.f32.mrb[0].mxu0
    %v1667 = vadd.f32 %v1285, %v1666
    %v1668 = vpop.f32.mrb[0].mxu0
    %v1669 = vadd.f32 %v1289, %v1668
    %v1670 = vpop.f32.mrb[0].mxu0
    %v1671 = vadd.f32 %v1285, %v1670
    %v1672 = vpop.f32.mrb[0].mxu0
    %v1673 = vadd.f32 %v1289, %v1672
    %1674 = vmatprep.mubr.bf16.mxu0 0
    %1675 = vmatmul.mubr.bf16.gmra.mrb[0].mxu0 %v1259
    %v1676 = vpop.f32.mrb[0].mxu0
    %v1677 = vadd.f32 %v1285, %v1676
    %v1678 = vpop.f32.mrb[0].mxu0
    %v1679 = vadd.f32 %v1289, %v1678
    %v1680 = vpop.f32.mrb[0].mxu0
    %v1681 = vadd.f32 %v1285, %v1680
    %v1682 = vpop.f32.mrb[0].mxu0
    %v1683 = vadd.f32 %v1289, %v1682
    %1684 = vmatprep.mubr.bf16.mxu0 0
    %1685 = vmatmul.mubr.bf16.gmra.mrb[0].mxu0 %v1260
    %v1686 = vpop.f32.mrb[0].mxu0
    %v1687 = vadd.f32 %v1285, %v1686
    %v1688 = vpop.f32.mrb[0].mxu0
    %v1689 = vadd.f32 %v1289, %v1688
    %v1690 = vpop.f32.mrb[0].mxu0
    %v1691 = vadd.f32 %v1285, %v1690
    %v1692 = vpop.f32.mrb[0].mxu0
    %v1693 = vadd.f32 %v1289, %v1692
    %1694 = vmatprep.mubr.bf16.mxu0 0
    %1695 = vmatmul.mubr.bf16.gmra.mrb[0].mxu0 %v1261
    %v1696 = vpop.f32.mrb[0].mxu0
    %v1697 = vadd.f32 %v1285, %v1696
    %v1698 = vpop.f32.mrb[0].mxu0
    %v1699 = vadd.f32 %v1289, %v1698
    %v1700 = vpop.f32.mrb[0].mxu0
    %v1701 = vadd.f32 %v1285, %v1700
    %v1702 = vpop.f32.mrb[0].mxu0
    %v1703 = vadd.f32 %v1289, %v1702
    %1704 = vmatprep.mubr.bf16.mxu0 0
    %1705 = vmatmul.mubr.bf16.gmra.mrb[0].mxu0 %v1262
    %v1706 = vpop.f32.mrb[0].mxu0
    %v1707 = vadd.f32 %v1285, %v1706
    %v1708 = vpop.f32.mrb[0].mxu0
    %v1709 = vadd.f32 %v1289, %v1708
    %v1710 = vpop.f32.mrb[0].mxu0
    %v1711 = vadd.f32 %v1285, %v1710
    %v1712 = vpop.f32.mrb[0].mxu0
    %v1713 = vadd.f32 %v1289, %v1712
    %1714 = vmatprep.mubr.bf16.mxu0 0
    %1715 = vmatmul.mubr.bf16.gmra.mrb[0].mxu0 %v1263
    %v1716 = vpop.f32.mrb[0].mxu0
    %v1717 = vadd.f32 %v1285, %v1716
    %v1718 = vpop.f32.mrb[0].mxu0
    %v1719 = vadd.f32 %v1289, %v1718
    %v1720 = vpop.f32.mrb[0].mxu0
    %v1721 = vadd.f32 %v1285, %v1720
    %v1722 = vpop.f32.mrb[0].mxu0
    %v1723 = vadd.f32 %v1289, %v1722
    %1724 = vdwg.mxu0
    %v1725 = vmax.f32 %v1407, 0.0
    %v1726 = vmax.f32 %v1409, 0.0
    %v1727 = vmax.f32 %v1411, 0.0
    %v1728 = vmax.f32 %v1413, 0.0
    %v1729 = vmax.f32 %v1417, 0.0
    %v1730 = vmax.f32 %v1419, 0.0
    %v1731 = vmax.f32 %v1421, 0.0
    %v1732 = vmax.f32 %v1423, 0.0
    %v1733 = vmax.f32 %v1427, 0.0
    %v1734 = vmax.f32 %v1429, 0.0
    %v1735 = vmax.f32 %v1431, 0.0
    %v1736 = vmax.f32 %v1433, 0.0
    %v1737 = vmax.f32 %v1437, 0.0
    %v1738 = vmax.f32 %v1439, 0.0
    %v1739 = vmax.f32 %v1441, 0.0
    %v1740 = vmax.f32 %v1443, 0.0
    %v1741 = vmax.f32 %v1447, 0.0
    %v1742 = vmax.f32 %v1449, 0.0
    %v1743 = vmax.f32 %v1451, 0.0
    %v1744 = vmax.f32 %v1453, 0.0
    %v1745 = vmax.f32 %v1457, 0.0
    %v1746 = vmax.f32 %v1459, 0.0
    %v1747 = vmax.f32 %v1461, 0.0
    %v1748 = vmax.f32 %v1463, 0.0
    %v1749 = vmax.f32 %v1467, 0.0
    %v1750 = vmax.f32 %v1469, 0.0
    %v1751 = vmax.f32 %v1471, 0.0
    %v1752 = vmax.f32 %v1473, 0.0
    %v1753 = vmax.f32 %v1477, 0.0
    %v1754 = vmax.f32 %v1479, 0.0
    %v1755 = vmax.f32 %v1481, 0.0
    %v1756 = vmax.f32 %v1483, 0.0
    %v1757 = vmax.f32 %v1487, 0.0
    %v1758 = vmax.f32 %v1489, 0.0
    %v1759 = vmax.f32 %v1491, 0.0
    %v1760 = vmax.f32 %v1493, 0.0
    %v1761 = vmax.f32 %v1497, 0.0
    %v1762 = vmax.f32 %v1499, 0.0
    %v1763 = vmax.f32 %v1501, 0.0
    %v1764 = vmax.f32 %v1503, 0.0
    %v1765 = vmax.f32 %v1507, 0.0
    %v1766 = vmax.f32 %v1509, 0.0
    %v1767 = vmax.f32 %v1511, 0.0
    %v1768 = vmax.f32 %v1513, 0.0
    %v1769 = vmax.f32 %v1517, 0.0
    %v1770 = vmax.f32 %v1519, 0.0
    %v1771 = vmax.f32 %v1521, 0.0
    %v1772 = vmax.f32 %v1523, 0.0
    %v1773 = vmax.f32 %v1527, 0.0
    %v1774 = vmax.f32 %v1529, 0.0
    %v1775 = vmax.f32 %v1531, 0.0
    %v1776 = vmax.f32 %v1533, 0.0
    %v1777 = vmax.f32 %v1537, 0.0
    %v1778 = vmax.f32 %v1539, 0.0
    %v1779 = vmax.f32 %v1541, 0.0
    %v1780 = vmax.f32 %v1543, 0.0
    %v1781 = vmax.f32 %v1547, 0.0
    %v1782 = vmax.f32 %v1549, 0.0
    %v1783 = vmax.f32 %v1551, 0.0
    %v1784 = vmax.f32 %v1553, 0.0
    %v1785 = vmax.f32 %v1557, 0.0
    %v1786 = vmax.f32 %v1559, 0.0
    %v1787 = vmax.f32 %v1561, 0.0
    %v1788 = vmax.f32 %v1563, 0.0
    %v1789 = vmax.f32 %v1567, 0.0
    %v1790 = vmax.f32 %v1569, 0.0
    %v1791 = vmax.f32 %v1571, 0.0
    %v1792 = vmax.f32 %v1573, 0.0
    %v1793 = vmax.f32 %v1577, 0.0
    %v1794 = vmax.f32 %v1579, 0.0
    %v1795 = vmax.f32 %v1581, 0.0
    %v1796 = vmax.f32 %v1583, 0.0
    %v1797 = vmax.f32 %v1587, 0.0
    %v1798 = vmax.f32 %v1589, 0.0
    %v1799 = vmax.f32 %v1591, 0.0
    %v1800 = vmax.f32 %v1593, 0.0
    %v1801 = vmax.f32 %v1597, 0.0
    %v1802 = vmax.f32 %v1599, 0.0
    %v1803 = vmax.f32 %v1601, 0.0
    %v1804 = vmax.f32 %v1603, 0.0
    %v1805 = vmax.f32 %v1607, 0.0
    %v1806 = vmax.f32 %v1609, 0.0
    %v1807 = vmax.f32 %v1611, 0.0
    %v1808 = vmax.f32 %v1613, 0.0
    %v1809 = vmax.f32 %v1617, 0.0
    %v1810 = vmax.f32 %v1619, 0.0
    %v1811 = vmax.f32 %v1621, 0.0
    %v1812 = vmax.f32 %v1623, 0.0
    %v1813 = vmax.f32 %v1627, 0.0
    %v1814 = vmax.f32 %v1629, 0.0
    %v1815 = vmax.f32 %v1631, 0.0
    %v1816 = vmax.f32 %v1633, 0.0
    %v1817 = vmax.f32 %v1637, 0.0
    %v1818 = vmax.f32 %v1639, 0.0
    %v1819 = vmax.f32 %v1641, 0.0
    %v1820 = vmax.f32 %v1643, 0.0
    %v1821 = vmax.f32 %v1647, 0.0
    %v1822 = vmax.f32 %v1649, 0.0
    %v1823 = vmax.f32 %v1651, 0.0
    %v1824 = vmax.f32 %v1653, 0.0
    %v1825 = vmax.f32 %v1657, 0.0
    %v1826 = vmax.f32 %v1659, 0.0
    %v1827 = vmax.f32 %v1661, 0.0
    %v1828 = vmax.f32 %v1663, 0.0
    %v1829 = vmax.f32 %v1667, 0.0
    %v1830 = vmax.f32 %v1669, 0.0
    %v1831 = vmax.f32 %v1671, 0.0
    %v1832 = vmax.f32 %v1673, 0.0
    %v1833 = vmax.f32 %v1677, 0.0
    %v1834 = vmax.f32 %v1679, 0.0
    %v1835 = vmax.f32 %v1681, 0.0
    %v1836 = vmax.f32 %v1683, 0.0
    %v1837 = vmax.f32 %v1687, 0.0
    %v1838 = vmax.f32 %v1689, 0.0
    %v1839 = vmax.f32 %v1691, 0.0
    %v1840 = vmax.f32 %v1693, 0.0
    %v1841 = vmax.f32 %v1697, 0.0
    %v1842 = vmax.f32 %v1699, 0.0
    %v1843 = vmax.f32 %v1701, 0.0
    %v1844 = vmax.f32 %v1703, 0.0
    %v1845 = vmax.f32 %v1707, 0.0
    %v1846 = vmax.f32 %v1709, 0.0
    %v1847 = vmax.f32 %v1711, 0.0
    %v1848 = vmax.f32 %v1713, 0.0
    %v1849 = vmax.f32 %v1717, 0.0
    %v1850 = vmax.f32 %v1719, 0.0
    %v1851 = vmax.f32 %v1721, 0.0
    %v1852 = vmax.f32 %v1723, 0.0
    %v1853 = vpack.c.bf16 %v1727, %v1725
    %v1854 = vpack.c.bf16 %v1728, %v1726
    %v1855 = vpack.c.bf16 %v1731, %v1729
    %v1856 = vpack.c.bf16 %v1732, %v1730
    %v1857 = vpack.c.bf16 %v1735, %v1733
    %v1858 = vpack.c.bf16 %v1736, %v1734
    %v1859 = vpack.c.bf16 %v1739, %v1737
    %v1860 = vpack.c.bf16 %v1740, %v1738
    %v1861 = vpack.c.bf16 %v1743, %v1741
    %v1862 = vpack.c.bf16 %v1744, %v1742
    %v1863 = vpack.c.bf16 %v1747, %v1745
    %v1864 = vpack.c.bf16 %v1748, %v1746
    %v1865 = vpack.c.bf16 %v1751, %v1749
    %v1866 = vpack.c.bf16 %v1752, %v1750
    %v1867 = vpack.c.bf16 %v1755, %v1753
    %v1868 = vpack.c.bf16 %v1756, %v1754
    %v1869 = vpack.c.bf16 %v1759, %v1757
    %v1870 = vpack.c.bf16 %v1760, %v1758
    %v1871 = vpack.c.bf16 %v1763, %v1761
    %v1872 = vpack.c.bf16 %v1764, %v1762
    %v1873 = vpack.c.bf16 %v1767, %v1765
    %v1874 = vpack.c.bf16 %v1768, %v1766
    %v1875 = vpack.c.bf16 %v1771, %v1769
    %v1876 = vpack.c.bf16 %v1772, %v1770
    %v1877 = vpack.c.bf16 %v1775, %v1773
    %v1878 = vpack.c.bf16 %v1776, %v1774
    %v1879 = vpack.c.bf16 %v1779, %v1777
    %v1880 = vpack.c.bf16 %v1780, %v1778
    %v1881 = vpack.c.bf16 %v1783, %v1781
    %v1882 = vpack.c.bf16 %v1784, %v1782
    %v1883 = vpack.c.bf16 %v1787, %v1785
    %v1884 = vpack.c.bf16 %v1788, %v1786
    %v1885 = vpack.c.bf16 %v1791, %v1789
    %v1886 = vpack.c.bf16 %v1792, %v1790
    %v1887 = vpack.c.bf16 %v1795, %v1793
    %v1888 = vpack.c.bf16 %v1796, %v1794
    %v1889 = vpack.c.bf16 %v1799, %v1797
    %v1890 = vpack.c.bf16 %v1800, %v1798
    %v1891 = vpack.c.bf16 %v1803, %v1801
    %v1892 = vpack.c.bf16 %v1804, %v1802
    %v1893 = vpack.c.bf16 %v1807, %v1805
    %v1894 = vpack.c.bf16 %v1808, %v1806
    %v1895 = vpack.c.bf16 %v1811, %v1809
    %v1896 = vpack.c.bf16 %v1812, %v1810
    %v1897 = vpack.c.bf16 %v1815, %v1813
    %v1898 = vpack.c.bf16 %v1816, %v1814
    %v1899 = vpack.c.bf16 %v1819, %v1817
    %v1900 = vpack.c.bf16 %v1820, %v1818
    %v1901 = vpack.c.bf16 %v1823, %v1821
    %v1902 = vpack.c.bf16 %v1824, %v1822
    %v1903 = vpack.c.bf16 %v1827, %v1825
    %v1904 = vpack.c.bf16 %v1828, %v1826
    %v1905 = vpack.c.bf16 %v1831, %v1829
    %v1906 = vpack.c.bf16 %v1832, %v1830
    %v1907 = vpack.c.bf16 %v1835, %v1833
    %v1908 = vpack.c.bf16 %v1836, %v1834
    %v1909 = vpack.c.bf16 %v1839, %v1837
    %v1910 = vpack.c.bf16 %v1840, %v1838
    %v1911 = vpack.c.bf16 %v1843, %v1841
    %v1912 = vpack.c.bf16 %v1844, %v1842
    %v1913 = vpack.c.bf16 %v1847, %v1845
    %v1914 = vpack.c.bf16 %v1848, %v1846
    %v1915 = vpack.c.bf16 %v1851, %v1849
    %v1916 = vpack.c.bf16 %v1852, %v1850
    %v1917 = vld [vmem:[%s7] sm:$0xff]
    %v1918 = vld [vmem:[%s7 + $0x8] sm:$0xff]
    %v1919 = vld [vmem:[%s7 + $0x10] sm:$0xff]
    %v1920 = vld [vmem:[%s7 + $0x18] sm:$0xff]
    %v1921 = vld [vmem:[%s7 + $0x20] sm:$0xff]
    %v1922 = vld [vmem:[%s7 + $0x28] sm:$0xff]
    %v1923 = vld [vmem:[%s7 + $0x30] sm:$0xff]
    %v1924 = vld [vmem:[%s7 + $0x38] sm:$0xff]
    %v1925 = vld [vmem:[%s7 + $0x40] sm:$0xff]
    %v1926 = vld [vmem:[%s7 + $0x48] sm:$0xff]
    %v1927 = vld [vmem:[%s7 + $0x50] sm:$0xff]
    %v1928 = vld [vmem:[%s7 + $0x58] sm:$0xff]
    %v1929 = vld [vmem:[%s7 + $0x60] sm:$0xff]
    %v1930 = vld [vmem:[%s7 + $0x68] sm:$0xff]
    %v1931 = vld [vmem:[%s7 + $0x70] sm:$0xff]
    %v1932 = vld [vmem:[%s7 + $0x78] sm:$0xff]
    %v1933 = vld [vmem:[%s7 + $0x80] sm:$0xff]
    %v1934 = vld [vmem:[%s7 + $0x88] sm:$0xff]
    %v1935 = vld [vmem:[%s7 + $0x90] sm:$0xff]
    %v1936 = vld [vmem:[%s7 + $0x98] sm:$0xff]
    %v1937 = vld [vmem:[%s7 + $0xa0] sm:$0xff]
    %v1938 = vld [vmem:[%s7 + $0xa8] sm:$0xff]
    %v1939 = vld [vmem:[%s7 + $0xb0] sm:$0xff]
    %v1940 = vld [vmem:[%s7 + $0xb8] sm:$0xff]
    %v1941 = vld [vmem:[%s7 + $0xc0] sm:$0xff]
    %v1942 = vld [vmem:[%s7 + $0xc8] sm:$0xff]
    %v1943 = vld [vmem:[%s7 + $0xd0] sm:$0xff]
    %v1944 = vld [vmem:[%s7 + $0xd8] sm:$0xff]
    %v1945 = vld [vmem:[%s7 + $0xe0] sm:$0xff]
    %v1946 = vld [vmem:[%s7 + $0xe8] sm:$0xff]
    %v1947 = vld [vmem:[%s7 + $0xf0] sm:$0xff]
    %v1948 = vld [vmem:[%s7 + $0xf8] sm:$0xff]
    %v1949 = vld [vmem:[%s7 + $0x100] sm:$0xff]
    %v1950 = vld [vmem:[%s7 + $0x108] sm:$0xff]
    %v1951 = vld [vmem:[%s7 + $0x110] sm:$0xff]
    %v1952 = vld [vmem:[%s7 + $0x118] sm:$0xff]
    %v1953 = vld [vmem:[%s7 + $0x120] sm:$0xff]
    %v1954 = vld [vmem:[%s7 + $0x128] sm:$0xff]
    %v1955 = vld [vmem:[%s7 + $0x130] sm:$0xff]
    %v1956 = vld [vmem:[%s7 + $0x138] sm:$0xff]
    %v1957 = vld [vmem:[%s7 + $0x140] sm:$0xff]
    %v1958 = vld [vmem:[%s7 + $0x148] sm:$0xff]
    %v1959 = vld [vmem:[%s7 + $0x150] sm:$0xff]
    %v1960 = vld [vmem:[%s7 + $0x158] sm:$0xff]
    %v1961 = vld [vmem:[%s7 + $0x160] sm:$0xff]
    %v1962 = vld [vmem:[%s7 + $0x168] sm:$0xff]
    %v1963 = vld [vmem:[%s7 + $0x170] sm:$0xff]
    %v1964 = vld [vmem:[%s7 + $0x178] sm:$0xff]
    %v1965 = vld [vmem:[%s7 + $0x180] sm:$0xff]
    %v1966 = vld [vmem:[%s7 + $0x188] sm:$0xff]
    %v1967 = vld [vmem:[%s7 + $0x190] sm:$0xff]
    %v1968 = vld [vmem:[%s7 + $0x198] sm:$0xff]
    %v1969 = vld [vmem:[%s7 + $0x1a0] sm:$0xff]
    %v1970 = vld [vmem:[%s7 + $0x1a8] sm:$0xff]
    %v1971 = vld [vmem:[%s7 + $0x1b0] sm:$0xff]
    %v1972 = vld [vmem:[%s7 + $0x1b8] sm:$0xff]
    %v1973 = vld [vmem:[%s7 + $0x1c0] sm:$0xff]
    %v1974 = vld [vmem:[%s7 + $0x1c8] sm:$0xff]
    %v1975 = vld [vmem:[%s7 + $0x1d0] sm:$0xff]
    %v1976 = vld [vmem:[%s7 + $0x1d8] sm:$0xff]
    %v1977 = vld [vmem:[%s7 + $0x1e0] sm:$0xff]
    %v1978 = vld [vmem:[%s7 + $0x1e8] sm:$0xff]
    %v1979 = vld [vmem:[%s7 + $0x1f0] sm:$0xff]
    %v1980 = vld [vmem:[%s7 + $0x1f8] sm:$0xff]
    %v1981 = vld [vmem:[%s8] sm:$0xf]
    %v1983 = vlaneseq
    %v1984 = vshrl.u32 %v1983, 7
    %v1985 = vsub.s32 0, %v1984
    %v1986 = vrot.slane %v1981, %v1985
    %v1987 = vlaneseq
    %v1988 = vshrl.u32 %v1987, 7
    %v1989 = vsub.s32 1, %v1988
    %v1990 = vrot.slane %v1981, %v1989
    %v1991 = vlaneseq
    %v1992 = vshrl.u32 %v1991, 7
    %v1993 = vsub.s32 2, %v1992
    %v1994 = vrot.slane %v1981, %v1993
    %v1995 = vlaneseq
    %v1996 = vshrl.u32 %v1995, 7
    %v1997 = vsub.s32 3, %v1996
    %v1998 = vrot.slane %v1981, %v1997
    %v2067 = vunpack.c.l.b16 %v1917
    %v2068 = vunpack.c.h.b16 %v1917
    %v2069 = vunpack.c.l.b16 %v1918
    %v2070 = vunpack.c.h.b16 %v1918
    %v2071 = vunpack.c.l.b16 %v1919
    %v2072 = vunpack.c.h.b16 %v1919
    %v2073 = vunpack.c.l.b16 %v1920
    %v2074 = vunpack.c.h.b16 %v1920
    %v2075 = vunpack.c.l.b16 %v1921
    %v2076 = vunpack.c.h.b16 %v1921
    %v2077 = vunpack.c.l.b16 %v1922
    %v2078 = vunpack.c.h.b16 %v1922
    %v2079 = vunpack.c.l.b16 %v1923
    %v2080 = vunpack.c.h.b16 %v1923
    %v2081 = vunpack.c.l.b16 %v1924
    %v2082 = vunpack.c.h.b16 %v1924
    %v2083 = vunpack.c.l.b16 %v1925
    %v2084 = vunpack.c.h.b16 %v1925
    %v2085 = vunpack.c.l.b16 %v1926
    %v2086 = vunpack.c.h.b16 %v1926
    %v2087 = vunpack.c.l.b16 %v1927
    %v2088 = vunpack.c.h.b16 %v1927
    %v2089 = vunpack.c.l.b16 %v1928
    %v2090 = vunpack.c.h.b16 %v1928
    %v2091 = vunpack.c.l.b16 %v1929
    %v2092 = vunpack.c.h.b16 %v1929
    %v2093 = vunpack.c.l.b16 %v1930
    %v2094 = vunpack.c.h.b16 %v1930
    %v2095 = vunpack.c.l.b16 %v1931
    %v2096 = vunpack.c.h.b16 %v1931
    %v2097 = vunpack.c.l.b16 %v1932
    %v2098 = vunpack.c.h.b16 %v1932
    %v2099 = vunpack.c.l.b16 %v1933
    %v2100 = vunpack.c.h.b16 %v1933
    %v2101 = vunpack.c.l.b16 %v1934
    %v2102 = vunpack.c.h.b16 %v1934
    %v2103 = vunpack.c.l.b16 %v1935
    %v2104 = vunpack.c.h.b16 %v1935
    %v2105 = vunpack.c.l.b16 %v1936
    %v2106 = vunpack.c.h.b16 %v1936
    %v2107 = vunpack.c.l.b16 %v1937
    %v2108 = vunpack.c.h.b16 %v1937
    %v2109 = vunpack.c.l.b16 %v1938
    %v2110 = vunpack.c.h.b16 %v1938
    %v2111 = vunpack.c.l.b16 %v1939
    %v2112 = vunpack.c.h.b16 %v1939
    %v2113 = vunpack.c.l.b16 %v1940
    %v2114 = vunpack.c.h.b16 %v1940
    %v2115 = vunpack.c.l.b16 %v1941
    %v2116 = vunpack.c.h.b16 %v1941
    %v2117 = vunpack.c.l.b16 %v1942
    %v2118 = vunpack.c.h.b16 %v1942
    %v2119 = vunpack.c.l.b16 %v1943
    %v2120 = vunpack.c.h.b16 %v1943
    %v2121 = vunpack.c.l.b16 %v1944
    %v2122 = vunpack.c.h.b16 %v1944
    %v2123 = vunpack.c.l.b16 %v1945
    %v2124 = vunpack.c.h.b16 %v1945
    %v2125 = vunpack.c.l.b16 %v1946
    %v2126 = vunpack.c.h.b16 %v1946
    %v2127 = vunpack.c.l.b16 %v1947
    %v2128 = vunpack.c.h.b16 %v1947
    %v2129 = vunpack.c.l.b16 %v1948
    %v2130 = vunpack.c.h.b16 %v1948
    %v2131 = vunpack.c.l.b16 %v1949
    %v2132 = vunpack.c.h.b16 %v1949
    %v2133 = vunpack.c.l.b16 %v1950
    %v2134 = vunpack.c.h.b16 %v1950
    %v2135 = vunpack.c.l.b16 %v1951
    %v2136 = vunpack.c.h.b16 %v1951
    %v2137 = vunpack.c.l.b16 %v1952
    %v2138 = vunpack.c.h.b16 %v1952
    %v2139 = vunpack.c.l.b16 %v1953
    %v2140 = vunpack.c.h.b16 %v1953
    %v2141 = vunpack.c.l.b16 %v1954
    %v2142 = vunpack.c.h.b16 %v1954
    %v2143 = vunpack.c.l.b16 %v1955
    %v2144 = vunpack.c.h.b16 %v1955
    %v2145 = vunpack.c.l.b16 %v1956
    %v2146 = vunpack.c.h.b16 %v1956
    %v2147 = vunpack.c.l.b16 %v1957
    %v2148 = vunpack.c.h.b16 %v1957
    %v2149 = vunpack.c.l.b16 %v1958
    %v2150 = vunpack.c.h.b16 %v1958
    %v2151 = vunpack.c.l.b16 %v1959
    %v2152 = vunpack.c.h.b16 %v1959
    %v2153 = vunpack.c.l.b16 %v1960
    %v2154 = vunpack.c.h.b16 %v1960
    %v2155 = vunpack.c.l.b16 %v1961
    %v2156 = vunpack.c.h.b16 %v1961
    %v2157 = vunpack.c.l.b16 %v1962
    %v2158 = vunpack.c.h.b16 %v1962
    %v2159 = vunpack.c.l.b16 %v1963
    %v2160 = vunpack.c.h.b16 %v1963
    %v2161 = vunpack.c.l.b16 %v1964
    %v2162 = vunpack.c.h.b16 %v1964
    %v2163 = vunpack.c.l.b16 %v1965
    %v2164 = vunpack.c.h.b16 %v1965
    %v2165 = vunpack.c.l.b16 %v1966
    %v2166 = vunpack.c.h.b16 %v1966
    %v2167 = vunpack.c.l.b16 %v1967
    %v2168 = vunpack.c.h.b16 %v1967
    %v2169 = vunpack.c.l.b16 %v1968
    %v2170 = vunpack.c.h.b16 %v1968
    %v2171 = vunpack.c.l.b16 %v1969
    %v2172 = vunpack.c.h.b16 %v1969
    %v2173 = vunpack.c.l.b16 %v1970
    %v2174 = vunpack.c.h.b16 %v1970
    %v2175 = vunpack.c.l.b16 %v1971
    %v2176 = vunpack.c.h.b16 %v1971
    %v2177 = vunpack.c.l.b16 %v1972
    %v2178 = vunpack.c.h.b16 %v1972
    %v2179 = vunpack.c.l.b16 %v1973
    %v2180 = vunpack.c.h.b16 %v1973
    %v2181 = vunpack.c.l.b16 %v1974
    %v2182 = vunpack.c.h.b16 %v1974
    %v2183 = vunpack.c.l.b16 %v1975
    %v2184 = vunpack.c.h.b16 %v1975
    %v2185 = vunpack.c.l.b16 %v1976
    %v2186 = vunpack.c.h.b16 %v1976
    %v2187 = vunpack.c.l.b16 %v1977
    %v2188 = vunpack.c.h.b16 %v1977
    %v2189 = vunpack.c.l.b16 %v1978
    %v2190 = vunpack.c.h.b16 %v1978
    %v2191 = vunpack.c.l.b16 %v1979
    %v2192 = vunpack.c.h.b16 %v1979
    %v2193 = vunpack.c.l.b16 %v1980
    %v2194 = vunpack.c.h.b16 %v1980
    %v2195 = vpack.c.b16 %v2071, %v2067
    %v2196 = vpack.c.b16 %v2072, %v2068
    %v2197 = vpack.c.b16 %v2073, %v2069
    %v2198 = vpack.c.b16 %v2074, %v2070
    %v2199 = vpack.c.b16 %v2079, %v2075
    %v2200 = vpack.c.b16 %v2080, %v2076
    %v2201 = vpack.c.b16 %v2081, %v2077
    %v2202 = vpack.c.b16 %v2082, %v2078
    %v2203 = vpack.c.b16 %v2087, %v2083
    %v2204 = vpack.c.b16 %v2088, %v2084
    %v2205 = vpack.c.b16 %v2089, %v2085
    %v2206 = vpack.c.b16 %v2090, %v2086
    %v2207 = vpack.c.b16 %v2095, %v2091
    %v2208 = vpack.c.b16 %v2096, %v2092
    %v2209 = vpack.c.b16 %v2097, %v2093
    %v2210 = vpack.c.b16 %v2098, %v2094
    %v2211 = vpack.c.b16 %v2103, %v2099
    %v2212 = vpack.c.b16 %v2104, %v2100
    %v2213 = vpack.c.b16 %v2105, %v2101
    %v2214 = vpack.c.b16 %v2106, %v2102
    %v2215 = vpack.c.b16 %v2111, %v2107
    %v2216 = vpack.c.b16 %v2112, %v2108
    %v2217 = vpack.c.b16 %v2113, %v2109
    %v2218 = vpack.c.b16 %v2114, %v2110
    %v2219 = vpack.c.b16 %v2119, %v2115
    %v2220 = vpack.c.b16 %v2120, %v2116
    %v2221 = vpack.c.b16 %v2121, %v2117
    %v2222 = vpack.c.b16 %v2122, %v2118
    %v2223 = vpack.c.b16 %v2127, %v2123
    %v2224 = vpack.c.b16 %v2128, %v2124
    %v2225 = vpack.c.b16 %v2129, %v2125
    %v2226 = vpack.c.b16 %v2130, %v2126
    %v2227 = vpack.c.b16 %v2135, %v2131
    %v2228 = vpack.c.b16 %v2136, %v2132
    %v2229 = vpack.c.b16 %v2137, %v2133
    %v2230 = vpack.c.b16 %v2138, %v2134
    %v2231 = vpack.c.b16 %v2143, %v2139
    %v2232 = vpack.c.b16 %v2144, %v2140
    %v2233 = vpack.c.b16 %v2145, %v2141
    %v2234 = vpack.c.b16 %v2146, %v2142
    %v2235 = vpack.c.b16 %v2151, %v2147
    %v2236 = vpack.c.b16 %v2152, %v2148
    %v2237 = vpack.c.b16 %v2153, %v2149
    %v2238 = vpack.c.b16 %v2154, %v2150
    %v2239 = vpack.c.b16 %v2159, %v2155
    %v2240 = vpack.c.b16 %v2160, %v2156
    %v2241 = vpack.c.b16 %v2161, %v2157
    %v2242 = vpack.c.b16 %v2162, %v2158
    %v2243 = vpack.c.b16 %v2167, %v2163
    %v2244 = vpack.c.b16 %v2168, %v2164
    %v2245 = vpack.c.b16 %v2169, %v2165
    %v2246 = vpack.c.b16 %v2170, %v2166
    %v2247 = vpack.c.b16 %v2175, %v2171
    %v2248 = vpack.c.b16 %v2176, %v2172
    %v2249 = vpack.c.b16 %v2177, %v2173
    %v2250 = vpack.c.b16 %v2178, %v2174
    %v2251 = vpack.c.b16 %v2183, %v2179
    %v2252 = vpack.c.b16 %v2184, %v2180
    %v2253 = vpack.c.b16 %v2185, %v2181
    %v2254 = vpack.c.b16 %v2186, %v2182
    %v2255 = vpack.c.b16 %v2191, %v2187
    %v2256 = vpack.c.b16 %v2192, %v2188
    %v2257 = vpack.c.b16 %v2193, %v2189
    %v2258 = vpack.c.b16 %v2194, %v2190
    %2323 = vmatprep.subr.bf16.mxu0 %v2196
    %2324 = vmatpush1.bf16.msra.mxu0 %v2195
    %2325 = vmatprep.subr.bf16.mxu0 %v2200
    %2326 = vmatpush1.bf16.msra.mxu0 %v2199
    %2327 = vmatprep.subr.bf16.mxu0 %v2204
    %2328 = vmatpush1.bf16.msra.mxu0 %v2203
    %2329 = vmatprep.subr.bf16.mxu0 %v2208
    %2330 = vmatpush1.bf16.msra.mxu0 %v2207
    %2331 = vmatprep.subr.bf16.mxu0 %v2212
    %2332 = vmatpush1.bf16.msra.mxu0 %v2211
    %2333 = vmatprep.subr.bf16.mxu0 %v2216
    %2334 = vmatpush1.bf16.msra.mxu0 %v2215
    %2335 = vmatprep.subr.bf16.mxu0 %v2220
    %2336 = vmatpush1.bf16.msra.mxu0 %v2219
    %2337 = vmatprep.subr.bf16.mxu0 %v2224
    %2338 = vmatpush1.bf16.msra.mxu0 %v2223
    %2339 = vmatprep.subr.bf16.mxu0 %v2228
    %2340 = vmatpush1.bf16.msra.mxu0 %v2227
    %2341 = vmatprep.subr.bf16.mxu0 %v2232
    %2342 = vmatpush1.bf16.msra.mxu0 %v2231
    %2343 = vmatprep.subr.bf16.mxu0 %v2236
    %2344 = vmatpush1.bf16.msra.mxu0 %v2235
    %2345 = vmatprep.subr.bf16.mxu0 %v2240
    %2346 = vmatpush1.bf16.msra.mxu0 %v2239
    %2347 = vmatprep.subr.bf16.mxu0 %v2244
    %2348 = vmatpush1.bf16.msra.mxu0 %v2243
    %2349 = vmatprep.subr.bf16.mxu0 %v2248
    %2350 = vmatpush1.bf16.msra.mxu0 %v2247
    %2351 = vmatprep.subr.bf16.mxu0 %v2252
    %2352 = vmatpush1.bf16.msra.mxu0 %v2251
    %2353 = vmatprep.subr.bf16.mxu0 %v2256
    %2354 = vmatpush1.bf16.msra.mxu0 %v2255
    %2355 = vmatprep.mubr.bf16.mxu0 %v1854
    %2356 = vmatmul.mubr.bf16.gmra.mrb[0].mxu0 %v1853
    %v2357 = vpop.f32.mrb[0].mxu0
    %v2358 = vadd.f32 %v1986, %v2357
    %v2359 = vpop.f32.mrb[0].mxu0
    %v2360 = vadd.f32 %v1990, %v2359
    %v2361 = vpop.f32.mrb[0].mxu0
    %v2362 = vadd.f32 %v1986, %v2361
    %v2363 = vpop.f32.mrb[0].mxu0
    %v2364 = vadd.f32 %v1990, %v2363
    %2365 = vmatprep.mubr.bf16.mxu0 %v1856
    %2366 = vmatmul.mubr.bf16.gmra.mrb[0].mxu0 %v1855
    %v2367 = vpop.f32.mrb[0].mxu0
    %v2368 = vadd.f32 %v1986, %v2367
    %v2369 = vpop.f32.mrb[0].mxu0
    %v2370 = vadd.f32 %v1990, %v2369
    %v2371 = vpop.f32.mrb[0].mxu0
    %v2372 = vadd.f32 %v1986, %v2371
    %v2373 = vpop.f32.mrb[0].mxu0
    %v2374 = vadd.f32 %v1990, %v2373
    %2375 = vmatprep.mubr.bf16.mxu0 %v1858
    %2376 = vmatmul.mubr.bf16.gmra.mrb[0].mxu0 %v1857
    %v2377 = vpop.f32.mrb[0].mxu0
    %v2378 = vadd.f32 %v1986, %v2377
    %v2379 = vpop.f32.mrb[0].mxu0
    %v2380 = vadd.f32 %v1990, %v2379
    %v2381 = vpop.f32.mrb[0].mxu0
    %v2382 = vadd.f32 %v1986, %v2381
    %v2383 = vpop.f32.mrb[0].mxu0
    %v2384 = vadd.f32 %v1990, %v2383
    %2385 = vmatprep.mubr.bf16.mxu0 %v1860
    %2386 = vmatmul.mubr.bf16.gmra.mrb[0].mxu0 %v1859
    %v2387 = vpop.f32.mrb[0].mxu0
    %v2388 = vadd.f32 %v1986, %v2387
    %v2389 = vpop.f32.mrb[0].mxu0
    %v2390 = vadd.f32 %v1990, %v2389
    %v2391 = vpop.f32.mrb[0].mxu0
    %v2392 = vadd.f32 %v1986, %v2391
    %v2393 = vpop.f32.mrb[0].mxu0
    %v2394 = vadd.f32 %v1990, %v2393
    %2395 = vmatprep.mubr.bf16.mxu0 %v1862
    %2396 = vmatmul.mubr.bf16.gmra.mrb[0].mxu0 %v1861
    %v2397 = vpop.f32.mrb[0].mxu0
    %v2398 = vadd.f32 %v1986, %v2397
    %v2399 = vpop.f32.mrb[0].mxu0
    %v2400 = vadd.f32 %v1990, %v2399
    %v2401 = vpop.f32.mrb[0].mxu0
    %v2402 = vadd.f32 %v1986, %v2401
    %v2403 = vpop.f32.mrb[0].mxu0
    %v2404 = vadd.f32 %v1990, %v2403
    %2405 = vmatprep.mubr.bf16.mxu0 %v1864
    %2406 = vmatmul.mubr.bf16.gmra.mrb[0].mxu0 %v1863
    %v2407 = vpop.f32.mrb[0].mxu0
    %v2408 = vadd.f32 %v1986, %v2407
    %v2409 = vpop.f32.mrb[0].mxu0
    %v2410 = vadd.f32 %v1990, %v2409
    %v2411 = vpop.f32.mrb[0].mxu0
    %v2412 = vadd.f32 %v1986, %v2411
    %v2413 = vpop.f32.mrb[0].mxu0
    %v2414 = vadd.f32 %v1990, %v2413
    %2415 = vmatprep.mubr.bf16.mxu0 %v1866
    %2416 = vmatmul.mubr.bf16.gmra.mrb[0].mxu0 %v1865
    %v2417 = vpop.f32.mrb[0].mxu0
    %v2418 = vadd.f32 %v1986, %v2417
    %v2419 = vpop.f32.mrb[0].mxu0
    %v2420 = vadd.f32 %v1990, %v2419
    %v2421 = vpop.f32.mrb[0].mxu0
    %v2422 = vadd.f32 %v1986, %v2421
    %v2423 = vpop.f32.mrb[0].mxu0
    %v2424 = vadd.f32 %v1990, %v2423
    %2425 = vmatprep.mubr.bf16.mxu0 %v1868
    %2426 = vmatmul.mubr.bf16.gmra.mrb[0].mxu0 %v1867
    %v2427 = vpop.f32.mrb[0].mxu0
    %v2428 = vadd.f32 %v1986, %v2427
    %v2429 = vpop.f32.mrb[0].mxu0
    %v2430 = vadd.f32 %v1990, %v2429
    %v2431 = vpop.f32.mrb[0].mxu0
    %v2432 = vadd.f32 %v1986, %v2431
    %v2433 = vpop.f32.mrb[0].mxu0
    %v2434 = vadd.f32 %v1990, %v2433
    %2435 = vmatprep.mubr.bf16.mxu0 %v1870
    %2436 = vmatmul.mubr.bf16.gmra.mrb[0].mxu0 %v1869
    %v2437 = vpop.f32.mrb[0].mxu0
    %v2438 = vadd.f32 %v1986, %v2437
    %v2439 = vpop.f32.mrb[0].mxu0
    %v2440 = vadd.f32 %v1990, %v2439
    %v2441 = vpop.f32.mrb[0].mxu0
    %v2442 = vadd.f32 %v1986, %v2441
    %v2443 = vpop.f32.mrb[0].mxu0
    %v2444 = vadd.f32 %v1990, %v2443
    %2445 = vmatprep.mubr.bf16.mxu0 %v1872
    %2446 = vmatmul.mubr.bf16.gmra.mrb[0].mxu0 %v1871
    %v2447 = vpop.f32.mrb[0].mxu0
    %v2448 = vadd.f32 %v1986, %v2447
    %v2449 = vpop.f32.mrb[0].mxu0
    %v2450 = vadd.f32 %v1990, %v2449
    %v2451 = vpop.f32.mrb[0].mxu0
    %v2452 = vadd.f32 %v1986, %v2451
    %v2453 = vpop.f32.mrb[0].mxu0
    %v2454 = vadd.f32 %v1990, %v2453
    %2455 = vmatprep.mubr.bf16.mxu0 %v1874
    %2456 = vmatmul.mubr.bf16.gmra.mrb[0].mxu0 %v1873
    %v2457 = vpop.f32.mrb[0].mxu0
    %v2458 = vadd.f32 %v1986, %v2457
    %v2459 = vpop.f32.mrb[0].mxu0
    %v2460 = vadd.f32 %v1990, %v2459
    %v2461 = vpop.f32.mrb[0].mxu0
    %v2462 = vadd.f32 %v1986, %v2461
    %v2463 = vpop.f32.mrb[0].mxu0
    %v2464 = vadd.f32 %v1990, %v2463
    %2465 = vmatprep.mubr.bf16.mxu0 %v1876
    %2466 = vmatmul.mubr.bf16.gmra.mrb[0].mxu0 %v1875
    %v2467 = vpop.f32.mrb[0].mxu0
    %v2468 = vadd.f32 %v1986, %v2467
    %v2469 = vpop.f32.mrb[0].mxu0
    %v2470 = vadd.f32 %v1990, %v2469
    %v2471 = vpop.f32.mrb[0].mxu0
    %v2472 = vadd.f32 %v1986, %v2471
    %v2473 = vpop.f32.mrb[0].mxu0
    %v2474 = vadd.f32 %v1990, %v2473
    %2475 = vmatprep.mubr.bf16.mxu0 %v1878
    %2476 = vmatmul.mubr.bf16.gmra.mrb[0].mxu0 %v1877
    %v2477 = vpop.f32.mrb[0].mxu0
    %v2478 = vadd.f32 %v1986, %v2477
    %v2479 = vpop.f32.mrb[0].mxu0
    %v2480 = vadd.f32 %v1990, %v2479
    %v2481 = vpop.f32.mrb[0].mxu0
    %v2482 = vadd.f32 %v1986, %v2481
    %v2483 = vpop.f32.mrb[0].mxu0
    %v2484 = vadd.f32 %v1990, %v2483
    %2485 = vmatprep.mubr.bf16.mxu0 %v1880
    %2486 = vmatmul.mubr.bf16.gmra.mrb[0].mxu0 %v1879
    %v2487 = vpop.f32.mrb[0].mxu0
    %v2488 = vadd.f32 %v1986, %v2487
    %v2489 = vpop.f32.mrb[0].mxu0
    %v2490 = vadd.f32 %v1990, %v2489
    %v2491 = vpop.f32.mrb[0].mxu0
    %v2492 = vadd.f32 %v1986, %v2491
    %v2493 = vpop.f32.mrb[0].mxu0
    %v2494 = vadd.f32 %v1990, %v2493
    %2495 = vmatprep.mubr.bf16.mxu0 %v1882
    %2496 = vmatmul.mubr.bf16.gmra.mrb[0].mxu0 %v1881
    %v2497 = vpop.f32.mrb[0].mxu0
    %v2498 = vadd.f32 %v1986, %v2497
    %v2499 = vpop.f32.mrb[0].mxu0
    %v2500 = vadd.f32 %v1990, %v2499
    %v2501 = vpop.f32.mrb[0].mxu0
    %v2502 = vadd.f32 %v1986, %v2501
    %v2503 = vpop.f32.mrb[0].mxu0
    %v2504 = vadd.f32 %v1990, %v2503
    %2505 = vmatprep.mubr.bf16.mxu0 %v1884
    %2506 = vmatmul.mubr.bf16.gmra.mrb[0].mxu0 %v1883
    %v2507 = vpop.f32.mrb[0].mxu0
    %v2508 = vadd.f32 %v1986, %v2507
    %v2509 = vpop.f32.mrb[0].mxu0
    %v2510 = vadd.f32 %v1990, %v2509
    %v2511 = vpop.f32.mrb[0].mxu0
    %v2512 = vadd.f32 %v1986, %v2511
    %v2513 = vpop.f32.mrb[0].mxu0
    %v2514 = vadd.f32 %v1990, %v2513
    %2515 = vmatprep.mubr.bf16.mxu0 %v1886
    %2516 = vmatmul.mubr.bf16.gmra.mrb[0].mxu0 %v1885
    %v2517 = vpop.f32.mrb[0].mxu0
    %v2518 = vadd.f32 %v1986, %v2517
    %v2519 = vpop.f32.mrb[0].mxu0
    %v2520 = vadd.f32 %v1990, %v2519
    %v2521 = vpop.f32.mrb[0].mxu0
    %v2522 = vadd.f32 %v1986, %v2521
    %v2523 = vpop.f32.mrb[0].mxu0
    %v2524 = vadd.f32 %v1990, %v2523
    %2525 = vmatprep.mubr.bf16.mxu0 %v1888
    %2526 = vmatmul.mubr.bf16.gmra.mrb[0].mxu0 %v1887
    %v2527 = vpop.f32.mrb[0].mxu0
    %v2528 = vadd.f32 %v1986, %v2527
    %v2529 = vpop.f32.mrb[0].mxu0
    %v2530 = vadd.f32 %v1990, %v2529
    %v2531 = vpop.f32.mrb[0].mxu0
    %v2532 = vadd.f32 %v1986, %v2531
    %v2533 = vpop.f32.mrb[0].mxu0
    %v2534 = vadd.f32 %v1990, %v2533
    %2535 = vmatprep.mubr.bf16.mxu0 %v1890
    %2536 = vmatmul.mubr.bf16.gmra.mrb[0].mxu0 %v1889
    %v2537 = vpop.f32.mrb[0].mxu0
    %v2538 = vadd.f32 %v1986, %v2537
    %v2539 = vpop.f32.mrb[0].mxu0
    %v2540 = vadd.f32 %v1990, %v2539
    %v2541 = vpop.f32.mrb[0].mxu0
    %v2542 = vadd.f32 %v1986, %v2541
    %v2543 = vpop.f32.mrb[0].mxu0
    %v2544 = vadd.f32 %v1990, %v2543
    %2545 = vmatprep.mubr.bf16.mxu0 %v1892
    %2546 = vmatmul.mubr.bf16.gmra.mrb[0].mxu0 %v1891
    %v2547 = vpop.f32.mrb[0].mxu0
    %v2548 = vadd.f32 %v1986, %v2547
    %v2549 = vpop.f32.mrb[0].mxu0
    %v2550 = vadd.f32 %v1990, %v2549
    %v2551 = vpop.f32.mrb[0].mxu0
    %v2552 = vadd.f32 %v1986, %v2551
    %v2553 = vpop.f32.mrb[0].mxu0
    %v2554 = vadd.f32 %v1990, %v2553
    %2555 = vmatprep.mubr.bf16.mxu0 %v1894
    %2556 = vmatmul.mubr.bf16.gmra.mrb[0].mxu0 %v1893
    %v2557 = vpop.f32.mrb[0].mxu0
    %v2558 = vadd.f32 %v1986, %v2557
    %v2559 = vpop.f32.mrb[0].mxu0
    %v2560 = vadd.f32 %v1990, %v2559
    %v2561 = vpop.f32.mrb[0].mxu0
    %v2562 = vadd.f32 %v1986, %v2561
    %v2563 = vpop.f32.mrb[0].mxu0
    %v2564 = vadd.f32 %v1990, %v2563
    %2565 = vmatprep.mubr.bf16.mxu0 %v1896
    %2566 = vmatmul.mubr.bf16.gmra.mrb[0].mxu0 %v1895
    %v2567 = vpop.f32.mrb[0].mxu0
    %v2568 = vadd.f32 %v1986, %v2567
    %v2569 = vpop.f32.mrb[0].mxu0
    %v2570 = vadd.f32 %v1990, %v2569
    %v2571 = vpop.f32.mrb[0].mxu0
    %v2572 = vadd.f32 %v1986, %v2571
    %v2573 = vpop.f32.mrb[0].mxu0
    %v2574 = vadd.f32 %v1990, %v2573
    %2575 = vmatprep.mubr.bf16.mxu0 %v1898
    %2576 = vmatmul.mubr.bf16.gmra.mrb[0].mxu0 %v1897
    %v2577 = vpop.f32.mrb[0].mxu0
    %v2578 = vadd.f32 %v1986, %v2577
    %v2579 = vpop.f32.mrb[0].mxu0
    %v2580 = vadd.f32 %v1990, %v2579
    %v2581 = vpop.f32.mrb[0].mxu0
    %v2582 = vadd.f32 %v1986, %v2581
    %v2583 = vpop.f32.mrb[0].mxu0
    %v2584 = vadd.f32 %v1990, %v2583
    %2585 = vmatprep.mubr.bf16.mxu0 %v1900
    %2586 = vmatmul.mubr.bf16.gmra.mrb[0].mxu0 %v1899
    %v2587 = vpop.f32.mrb[0].mxu0
    %v2588 = vadd.f32 %v1986, %v2587
    %v2589 = vpop.f32.mrb[0].mxu0
    %v2590 = vadd.f32 %v1990, %v2589
    %v2591 = vpop.f32.mrb[0].mxu0
    %v2592 = vadd.f32 %v1986, %v2591
    %v2593 = vpop.f32.mrb[0].mxu0
    %v2594 = vadd.f32 %v1990, %v2593
    %2595 = vmatprep.mubr.bf16.mxu0 %v1902
    %2596 = vmatmul.mubr.bf16.gmra.mrb[0].mxu0 %v1901
    %v2597 = vpop.f32.mrb[0].mxu0
    %v2598 = vadd.f32 %v1986, %v2597
    %v2599 = vpop.f32.mrb[0].mxu0
    %v2600 = vadd.f32 %v1990, %v2599
    %v2601 = vpop.f32.mrb[0].mxu0
    %v2602 = vadd.f32 %v1986, %v2601
    %v2603 = vpop.f32.mrb[0].mxu0
    %v2604 = vadd.f32 %v1990, %v2603
    %2605 = vmatprep.mubr.bf16.mxu0 %v1904
    %2606 = vmatmul.mubr.bf16.gmra.mrb[0].mxu0 %v1903
    %v2607 = vpop.f32.mrb[0].mxu0
    %v2608 = vadd.f32 %v1986, %v2607
    %v2609 = vpop.f32.mrb[0].mxu0
    %v2610 = vadd.f32 %v1990, %v2609
    %v2611 = vpop.f32.mrb[0].mxu0
    %v2612 = vadd.f32 %v1986, %v2611
    %v2613 = vpop.f32.mrb[0].mxu0
    %v2614 = vadd.f32 %v1990, %v2613
    %2615 = vmatprep.mubr.bf16.mxu0 %v1906
    %2616 = vmatmul.mubr.bf16.gmra.mrb[0].mxu0 %v1905
    %v2617 = vpop.f32.mrb[0].mxu0
    %v2618 = vadd.f32 %v1986, %v2617
    %v2619 = vpop.f32.mrb[0].mxu0
    %v2620 = vadd.f32 %v1990, %v2619
    %v2621 = vpop.f32.mrb[0].mxu0
    %v2622 = vadd.f32 %v1986, %v2621
    %v2623 = vpop.f32.mrb[0].mxu0
    %v2624 = vadd.f32 %v1990, %v2623
    %2625 = vmatprep.mubr.bf16.mxu0 %v1908
    %2626 = vmatmul.mubr.bf16.gmra.mrb[0].mxu0 %v1907
    %v2627 = vpop.f32.mrb[0].mxu0
    %v2628 = vadd.f32 %v1986, %v2627
    %v2629 = vpop.f32.mrb[0].mxu0
    %v2630 = vadd.f32 %v1990, %v2629
    %v2631 = vpop.f32.mrb[0].mxu0
    %v2632 = vadd.f32 %v1986, %v2631
    %v2633 = vpop.f32.mrb[0].mxu0
    %v2634 = vadd.f32 %v1990, %v2633
    %2635 = vmatprep.mubr.bf16.mxu0 %v1910
    %2636 = vmatmul.mubr.bf16.gmra.mrb[0].mxu0 %v1909
    %v2637 = vpop.f32.mrb[0].mxu0
    %v2638 = vadd.f32 %v1986, %v2637
    %v2639 = vpop.f32.mrb[0].mxu0
    %v2640 = vadd.f32 %v1990, %v2639
    %v2641 = vpop.f32.mrb[0].mxu0
    %v2642 = vadd.f32 %v1986, %v2641
    %v2643 = vpop.f32.mrb[0].mxu0
    %v2644 = vadd.f32 %v1990, %v2643
    %2645 = vmatprep.mubr.bf16.mxu0 %v1912
    %2646 = vmatmul.mubr.bf16.gmra.mrb[0].mxu0 %v1911
    %v2647 = vpop.f32.mrb[0].mxu0
    %v2648 = vadd.f32 %v1986, %v2647
    %v2649 = vpop.f32.mrb[0].mxu0
    %v2650 = vadd.f32 %v1990, %v2649
    %v2651 = vpop.f32.mrb[0].mxu0
    %v2652 = vadd.f32 %v1986, %v2651
    %v2653 = vpop.f32.mrb[0].mxu0
    %v2654 = vadd.f32 %v1990, %v2653
    %2655 = vmatprep.mubr.bf16.mxu0 %v1914
    %2656 = vmatmul.mubr.bf16.gmra.mrb[0].mxu0 %v1913
    %v2657 = vpop.f32.mrb[0].mxu0
    %v2658 = vadd.f32 %v1986, %v2657
    %v2659 = vpop.f32.mrb[0].mxu0
    %v2660 = vadd.f32 %v1990, %v2659
    %v2661 = vpop.f32.mrb[0].mxu0
    %v2662 = vadd.f32 %v1986, %v2661
    %v2663 = vpop.f32.mrb[0].mxu0
    %v2664 = vadd.f32 %v1990, %v2663
    %2665 = vmatprep.mubr.bf16.mxu0 %v1916
    %2666 = vmatmul.mubr.bf16.gmra.mrb[0].mxu0 %v1915
    %v2667 = vpop.f32.mrb[0].mxu0
    %v2668 = vadd.f32 %v1986, %v2667
    %v2669 = vpop.f32.mrb[0].mxu0
    %v2670 = vadd.f32 %v1990, %v2669
    %v2671 = vpop.f32.mrb[0].mxu0
    %v2672 = vadd.f32 %v1986, %v2671
    %v2673 = vpop.f32.mrb[0].mxu0
    %v2674 = vadd.f32 %v1990, %v2673
    %2675 = vdwg.mxu0
    %2676 = vmatprep.subr.bf16.mxu0 %v2198
    %2677 = vmatpush1.bf16.msra.mxu0 %v2197
    %2678 = vmatprep.subr.bf16.mxu0 %v2202
    %2679 = vmatpush1.bf16.msra.mxu0 %v2201
    %2680 = vmatprep.subr.bf16.mxu0 %v2206
    %2681 = vmatpush1.bf16.msra.mxu0 %v2205
    %2682 = vmatprep.subr.bf16.mxu0 %v2210
    %2683 = vmatpush1.bf16.msra.mxu0 %v2209
    %2684 = vmatprep.subr.bf16.mxu0 %v2214
    %2685 = vmatpush1.bf16.msra.mxu0 %v2213
    %2686 = vmatprep.subr.bf16.mxu0 %v2218
    %2687 = vmatpush1.bf16.msra.mxu0 %v2217
    %2688 = vmatprep.subr.bf16.mxu0 %v2222
    %2689 = vmatpush1.bf16.msra.mxu0 %v2221
    %2690 = vmatprep.subr.bf16.mxu0 %v2226
    %2691 = vmatpush1.bf16.msra.mxu0 %v2225
    %2692 = vmatprep.subr.bf16.mxu0 %v2230
    %2693 = vmatpush1.bf16.msra.mxu0 %v2229
    %2694 = vmatprep.subr.bf16.mxu0 %v2234
    %2695 = vmatpush1.bf16.msra.mxu0 %v2233
    %2696 = vmatprep.subr.bf16.mxu0 %v2238
    %2697 = vmatpush1.bf16.msra.mxu0 %v2237
    %2698 = vmatprep.subr.bf16.mxu0 %v2242
    %2699 = vmatpush1.bf16.msra.mxu0 %v2241
    %2700 = vmatprep.subr.bf16.mxu0 %v2246
    %2701 = vmatpush1.bf16.msra.mxu0 %v2245
    %2702 = vmatprep.subr.bf16.mxu0 %v2250
    %2703 = vmatpush1.bf16.msra.mxu0 %v2249
    %2704 = vmatprep.subr.bf16.mxu0 %v2254
    %2705 = vmatpush1.bf16.msra.mxu0 %v2253
    %2706 = vmatprep.subr.bf16.mxu0 %v2258
    %2707 = vmatpush1.bf16.msra.mxu0 %v2257
    %2708 = vmatprep.mubr.bf16.mxu0 %v1854
    %2709 = vmatmul.mubr.bf16.gmra.mrb[0].mxu0 %v1853
    %v2710 = vpop.f32.mrb[0].mxu0
    %v2711 = vadd.f32 %v1994, %v2710
    %v2712 = vpop.f32.mrb[0].mxu0
    %v2713 = vadd.f32 %v1998, %v2712
    %v2714 = vpop.f32.mrb[0].mxu0
    %v2715 = vadd.f32 %v1994, %v2714
    %v2716 = vpop.f32.mrb[0].mxu0
    %v2717 = vadd.f32 %v1998, %v2716
    %2718 = vmatprep.mubr.bf16.mxu0 %v1856
    %2719 = vmatmul.mubr.bf16.gmra.mrb[0].mxu0 %v1855
    %v2720 = vpop.f32.mrb[0].mxu0
    %v2721 = vadd.f32 %v1994, %v2720
    %v2722 = vpop.f32.mrb[0].mxu0
    %v2723 = vadd.f32 %v1998, %v2722
    %v2724 = vpop.f32.mrb[0].mxu0
    %v2725 = vadd.f32 %v1994, %v2724
    %v2726 = vpop.f32.mrb[0].mxu0
    %v2727 = vadd.f32 %v1998, %v2726
    %2728 = vmatprep.mubr.bf16.mxu0 %v1858
    %2729 = vmatmul.mubr.bf16.gmra.mrb[0].mxu0 %v1857
    %v2730 = vpop.f32.mrb[0].mxu0
    %v2731 = vadd.f32 %v1994, %v2730
    %v2732 = vpop.f32.mrb[0].mxu0
    %v2733 = vadd.f32 %v1998, %v2732
    %v2734 = vpop.f32.mrb[0].mxu0
    %v2735 = vadd.f32 %v1994, %v2734
    %v2736 = vpop.f32.mrb[0].mxu0
    %v2737 = vadd.f32 %v1998, %v2736
    %2738 = vmatprep.mubr.bf16.mxu0 %v1860
    %2739 = vmatmul.mubr.bf16.gmra.mrb[0].mxu0 %v1859
    %v2740 = vpop.f32.mrb[0].mxu0
    %v2741 = vadd.f32 %v1994, %v2740
    %v2742 = vpop.f32.mrb[0].mxu0
    %v2743 = vadd.f32 %v1998, %v2742
    %v2744 = vpop.f32.mrb[0].mxu0
    %v2745 = vadd.f32 %v1994, %v2744
    %v2746 = vpop.f32.mrb[0].mxu0
    %v2747 = vadd.f32 %v1998, %v2746
    %2748 = vmatprep.mubr.bf16.mxu0 %v1862
    %2749 = vmatmul.mubr.bf16.gmra.mrb[0].mxu0 %v1861
    %v2750 = vpop.f32.mrb[0].mxu0
    %v2751 = vadd.f32 %v1994, %v2750
    %v2752 = vpop.f32.mrb[0].mxu0
    %v2753 = vadd.f32 %v1998, %v2752
    %v2754 = vpop.f32.mrb[0].mxu0
    %v2755 = vadd.f32 %v1994, %v2754
    %v2756 = vpop.f32.mrb[0].mxu0
    %v2757 = vadd.f32 %v1998, %v2756
    %2758 = vmatprep.mubr.bf16.mxu0 %v1864
    %2759 = vmatmul.mubr.bf16.gmra.mrb[0].mxu0 %v1863
    %v2760 = vpop.f32.mrb[0].mxu0
    %v2761 = vadd.f32 %v1994, %v2760
    %v2762 = vpop.f32.mrb[0].mxu0
    %v2763 = vadd.f32 %v1998, %v2762
    %v2764 = vpop.f32.mrb[0].mxu0
    %v2765 = vadd.f32 %v1994, %v2764
    %v2766 = vpop.f32.mrb[0].mxu0
    %v2767 = vadd.f32 %v1998, %v2766
    %2768 = vmatprep.mubr.bf16.mxu0 %v1866
    %2769 = vmatmul.mubr.bf16.gmra.mrb[0].mxu0 %v1865
    %v2770 = vpop.f32.mrb[0].mxu0
    %v2771 = vadd.f32 %v1994, %v2770
    %v2772 = vpop.f32.mrb[0].mxu0
    %v2773 = vadd.f32 %v1998, %v2772
    %v2774 = vpop.f32.mrb[0].mxu0
    %v2775 = vadd.f32 %v1994, %v2774
    %v2776 = vpop.f32.mrb[0].mxu0
    %v2777 = vadd.f32 %v1998, %v2776
    %2778 = vmatprep.mubr.bf16.mxu0 %v1868
    %2779 = vmatmul.mubr.bf16.gmra.mrb[0].mxu0 %v1867
    %v2780 = vpop.f32.mrb[0].mxu0
    %v2781 = vadd.f32 %v1994, %v2780
    %v2782 = vpop.f32.mrb[0].mxu0
    %v2783 = vadd.f32 %v1998, %v2782
    %v2784 = vpop.f32.mrb[0].mxu0
    %v2785 = vadd.f32 %v1994, %v2784
    %v2786 = vpop.f32.mrb[0].mxu0
    %v2787 = vadd.f32 %v1998, %v2786
    %2788 = vmatprep.mubr.bf16.mxu0 %v1870
    %2789 = vmatmul.mubr.bf16.gmra.mrb[0].mxu0 %v1869
    %v2790 = vpop.f32.mrb[0].mxu0
    %v2791 = vadd.f32 %v1994, %v2790
    %v2792 = vpop.f32.mrb[0].mxu0
    %v2793 = vadd.f32 %v1998, %v2792
    %v2794 = vpop.f32.mrb[0].mxu0
    %v2795 = vadd.f32 %v1994, %v2794
    %v2796 = vpop.f32.mrb[0].mxu0
    %v2797 = vadd.f32 %v1998, %v2796
    %2798 = vmatprep.mubr.bf16.mxu0 %v1872
    %2799 = vmatmul.mubr.bf16.gmra.mrb[0].mxu0 %v1871
    %v2800 = vpop.f32.mrb[0].mxu0
    %v2801 = vadd.f32 %v1994, %v2800
    %v2802 = vpop.f32.mrb[0].mxu0
    %v2803 = vadd.f32 %v1998, %v2802
    %v2804 = vpop.f32.mrb[0].mxu0
    %v2805 = vadd.f32 %v1994, %v2804
    %v2806 = vpop.f32.mrb[0].mxu0
    %v2807 = vadd.f32 %v1998, %v2806
    %2808 = vmatprep.mubr.bf16.mxu0 %v1874
    %2809 = vmatmul.mubr.bf16.gmra.mrb[0].mxu0 %v1873
    %v2810 = vpop.f32.mrb[0].mxu0
    %v2811 = vadd.f32 %v1994, %v2810
    %v2812 = vpop.f32.mrb[0].mxu0
    %v2813 = vadd.f32 %v1998, %v2812
    %v2814 = vpop.f32.mrb[0].mxu0
    %v2815 = vadd.f32 %v1994, %v2814
    %v2816 = vpop.f32.mrb[0].mxu0
    %v2817 = vadd.f32 %v1998, %v2816
    %2818 = vmatprep.mubr.bf16.mxu0 %v1876
    %2819 = vmatmul.mubr.bf16.gmra.mrb[0].mxu0 %v1875
    %v2820 = vpop.f32.mrb[0].mxu0
    %v2821 = vadd.f32 %v1994, %v2820
    %v2822 = vpop.f32.mrb[0].mxu0
    %v2823 = vadd.f32 %v1998, %v2822
    %v2824 = vpop.f32.mrb[0].mxu0
    %v2825 = vadd.f32 %v1994, %v2824
    %v2826 = vpop.f32.mrb[0].mxu0
    %v2827 = vadd.f32 %v1998, %v2826
    %2828 = vmatprep.mubr.bf16.mxu0 %v1878
    %2829 = vmatmul.mubr.bf16.gmra.mrb[0].mxu0 %v1877
    %v2830 = vpop.f32.mrb[0].mxu0
    %v2831 = vadd.f32 %v1994, %v2830
    %v2832 = vpop.f32.mrb[0].mxu0
    %v2833 = vadd.f32 %v1998, %v2832
    %v2834 = vpop.f32.mrb[0].mxu0
    %v2835 = vadd.f32 %v1994, %v2834
    %v2836 = vpop.f32.mrb[0].mxu0
    %v2837 = vadd.f32 %v1998, %v2836
    %2838 = vmatprep.mubr.bf16.mxu0 %v1880
    %2839 = vmatmul.mubr.bf16.gmra.mrb[0].mxu0 %v1879
    %v2840 = vpop.f32.mrb[0].mxu0
    %v2841 = vadd.f32 %v1994, %v2840
    %v2842 = vpop.f32.mrb[0].mxu0
    %v2843 = vadd.f32 %v1998, %v2842
    %v2844 = vpop.f32.mrb[0].mxu0
    %v2845 = vadd.f32 %v1994, %v2844
    %v2846 = vpop.f32.mrb[0].mxu0
    %v2847 = vadd.f32 %v1998, %v2846
    %2848 = vmatprep.mubr.bf16.mxu0 %v1882
    %2849 = vmatmul.mubr.bf16.gmra.mrb[0].mxu0 %v1881
    %v2850 = vpop.f32.mrb[0].mxu0
    %v2851 = vadd.f32 %v1994, %v2850
    %v2852 = vpop.f32.mrb[0].mxu0
    %v2853 = vadd.f32 %v1998, %v2852
    %v2854 = vpop.f32.mrb[0].mxu0
    %v2855 = vadd.f32 %v1994, %v2854
    %v2856 = vpop.f32.mrb[0].mxu0
    %v2857 = vadd.f32 %v1998, %v2856
    %2858 = vmatprep.mubr.bf16.mxu0 %v1884
    %2859 = vmatmul.mubr.bf16.gmra.mrb[0].mxu0 %v1883
    %v2860 = vpop.f32.mrb[0].mxu0
    %v2861 = vadd.f32 %v1994, %v2860
    %v2862 = vpop.f32.mrb[0].mxu0
    %v2863 = vadd.f32 %v1998, %v2862
    %v2864 = vpop.f32.mrb[0].mxu0
    %v2865 = vadd.f32 %v1994, %v2864
    %v2866 = vpop.f32.mrb[0].mxu0
    %v2867 = vadd.f32 %v1998, %v2866
    %2868 = vmatprep.mubr.bf16.mxu0 %v1886
    %2869 = vmatmul.mubr.bf16.gmra.mrb[0].mxu0 %v1885
    %v2870 = vpop.f32.mrb[0].mxu0
    %v2871 = vadd.f32 %v1994, %v2870
    %v2872 = vpop.f32.mrb[0].mxu0
    %v2873 = vadd.f32 %v1998, %v2872
    %v2874 = vpop.f32.mrb[0].mxu0
    %v2875 = vadd.f32 %v1994, %v2874
    %v2876 = vpop.f32.mrb[0].mxu0
    %v2877 = vadd.f32 %v1998, %v2876
    %2878 = vmatprep.mubr.bf16.mxu0 %v1888
    %2879 = vmatmul.mubr.bf16.gmra.mrb[0].mxu0 %v1887
    %v2880 = vpop.f32.mrb[0].mxu0
    %v2881 = vadd.f32 %v1994, %v2880
    %v2882 = vpop.f32.mrb[0].mxu0
    %v2883 = vadd.f32 %v1998, %v2882
    %v2884 = vpop.f32.mrb[0].mxu0
    %v2885 = vadd.f32 %v1994, %v2884
    %v2886 = vpop.f32.mrb[0].mxu0
    %v2887 = vadd.f32 %v1998, %v2886
    %2888 = vmatprep.mubr.bf16.mxu0 %v1890
    %2889 = vmatmul.mubr.bf16.gmra.mrb[0].mxu0 %v1889
    %v2890 = vpop.f32.mrb[0].mxu0
    %v2891 = vadd.f32 %v1994, %v2890
    %v2892 = vpop.f32.mrb[0].mxu0
    %v2893 = vadd.f32 %v1998, %v2892
    %v2894 = vpop.f32.mrb[0].mxu0
    %v2895 = vadd.f32 %v1994, %v2894
    %v2896 = vpop.f32.mrb[0].mxu0
    %v2897 = vadd.f32 %v1998, %v2896
    %2898 = vmatprep.mubr.bf16.mxu0 %v1892
    %2899 = vmatmul.mubr.bf16.gmra.mrb[0].mxu0 %v1891
    %v2900 = vpop.f32.mrb[0].mxu0
    %v2901 = vadd.f32 %v1994, %v2900
    %v2902 = vpop.f32.mrb[0].mxu0
    %v2903 = vadd.f32 %v1998, %v2902
    %v2904 = vpop.f32.mrb[0].mxu0
    %v2905 = vadd.f32 %v1994, %v2904
    %v2906 = vpop.f32.mrb[0].mxu0
    %v2907 = vadd.f32 %v1998, %v2906
    %2908 = vmatprep.mubr.bf16.mxu0 %v1894
    %2909 = vmatmul.mubr.bf16.gmra.mrb[0].mxu0 %v1893
    %v2910 = vpop.f32.mrb[0].mxu0
    %v2911 = vadd.f32 %v1994, %v2910
    %v2912 = vpop.f32.mrb[0].mxu0
    %v2913 = vadd.f32 %v1998, %v2912
    %v2914 = vpop.f32.mrb[0].mxu0
    %v2915 = vadd.f32 %v1994, %v2914
    %v2916 = vpop.f32.mrb[0].mxu0
    %v2917 = vadd.f32 %v1998, %v2916
    %2918 = vmatprep.mubr.bf16.mxu0 %v1896
    %2919 = vmatmul.mubr.bf16.gmra.mrb[0].mxu0 %v1895
    %v2920 = vpop.f32.mrb[0].mxu0
    %v2921 = vadd.f32 %v1994, %v2920
    %v2922 = vpop.f32.mrb[0].mxu0
    %v2923 = vadd.f32 %v1998, %v2922
    %v2924 = vpop.f32.mrb[0].mxu0
    %v2925 = vadd.f32 %v1994, %v2924
    %v2926 = vpop.f32.mrb[0].mxu0
    %v2927 = vadd.f32 %v1998, %v2926
    %2928 = vmatprep.mubr.bf16.mxu0 %v1898
    %2929 = vmatmul.mubr.bf16.gmra.mrb[0].mxu0 %v1897
    %v2930 = vpop.f32.mrb[0].mxu0
    %v2931 = vadd.f32 %v1994, %v2930
    %v2932 = vpop.f32.mrb[0].mxu0
    %v2933 = vadd.f32 %v1998, %v2932
    %v2934 = vpop.f32.mrb[0].mxu0
    %v2935 = vadd.f32 %v1994, %v2934
    %v2936 = vpop.f32.mrb[0].mxu0
    %v2937 = vadd.f32 %v1998, %v2936
    %2938 = vmatprep.mubr.bf16.mxu0 %v1900
    %2939 = vmatmul.mubr.bf16.gmra.mrb[0].mxu0 %v1899
    %v2940 = vpop.f32.mrb[0].mxu0
    %v2941 = vadd.f32 %v1994, %v2940
    %v2942 = vpop.f32.mrb[0].mxu0
    %v2943 = vadd.f32 %v1998, %v2942
    %v2944 = vpop.f32.mrb[0].mxu0
    %v2945 = vadd.f32 %v1994, %v2944
    %v2946 = vpop.f32.mrb[0].mxu0
    %v2947 = vadd.f32 %v1998, %v2946
    %2948 = vmatprep.mubr.bf16.mxu0 %v1902
    %2949 = vmatmul.mubr.bf16.gmra.mrb[0].mxu0 %v1901
    %v2950 = vpop.f32.mrb[0].mxu0
    %v2951 = vadd.f32 %v1994, %v2950
    %v2952 = vpop.f32.mrb[0].mxu0
    %v2953 = vadd.f32 %v1998, %v2952
    %v2954 = vpop.f32.mrb[0].mxu0
    %v2955 = vadd.f32 %v1994, %v2954
    %v2956 = vpop.f32.mrb[0].mxu0
    %v2957 = vadd.f32 %v1998, %v2956
    %2958 = vmatprep.mubr.bf16.mxu0 %v1904
    %2959 = vmatmul.mubr.bf16.gmra.mrb[0].mxu0 %v1903
    %v2960 = vpop.f32.mrb[0].mxu0
    %v2961 = vadd.f32 %v1994, %v2960
    %v2962 = vpop.f32.mrb[0].mxu0
    %v2963 = vadd.f32 %v1998, %v2962
    %v2964 = vpop.f32.mrb[0].mxu0
    %v2965 = vadd.f32 %v1994, %v2964
    %v2966 = vpop.f32.mrb[0].mxu0
    %v2967 = vadd.f32 %v1998, %v2966
    %2968 = vmatprep.mubr.bf16.mxu0 %v1906
    %2969 = vmatmul.mubr.bf16.gmra.mrb[0].mxu0 %v1905
    %v2970 = vpop.f32.mrb[0].mxu0
    %v2971 = vadd.f32 %v1994, %v2970
    %v2972 = vpop.f32.mrb[0].mxu0
    %v2973 = vadd.f32 %v1998, %v2972
    %v2974 = vpop.f32.mrb[0].mxu0
    %v2975 = vadd.f32 %v1994, %v2974
    %v2976 = vpop.f32.mrb[0].mxu0
    %v2977 = vadd.f32 %v1998, %v2976
    %2978 = vmatprep.mubr.bf16.mxu0 %v1908
    %2979 = vmatmul.mubr.bf16.gmra.mrb[0].mxu0 %v1907
    %v2980 = vpop.f32.mrb[0].mxu0
    %v2981 = vadd.f32 %v1994, %v2980
    %v2982 = vpop.f32.mrb[0].mxu0
    %v2983 = vadd.f32 %v1998, %v2982
    %v2984 = vpop.f32.mrb[0].mxu0
    %v2985 = vadd.f32 %v1994, %v2984
    %v2986 = vpop.f32.mrb[0].mxu0
    %v2987 = vadd.f32 %v1998, %v2986
    %2988 = vmatprep.mubr.bf16.mxu0 %v1910
    %2989 = vmatmul.mubr.bf16.gmra.mrb[0].mxu0 %v1909
    %v2990 = vpop.f32.mrb[0].mxu0
    %v2991 = vadd.f32 %v1994, %v2990
    %v2992 = vpop.f32.mrb[0].mxu0
    %v2993 = vadd.f32 %v1998, %v2992
    %v2994 = vpop.f32.mrb[0].mxu0
    %v2995 = vadd.f32 %v1994, %v2994
    %v2996 = vpop.f32.mrb[0].mxu0
    %v2997 = vadd.f32 %v1998, %v2996
    %2998 = vmatprep.mubr.bf16.mxu0 %v1912
    %2999 = vmatmul.mubr.bf16.gmra.mrb[0].mxu0 %v1911
    %v3000 = vpop.f32.mrb[0].mxu0
    %v3001 = vadd.f32 %v1994, %v3000
    %v3002 = vpop.f32.mrb[0].mxu0
    %v3003 = vadd.f32 %v1998, %v3002
    %v3004 = vpop.f32.mrb[0].mxu0
    %v3005 = vadd.f32 %v1994, %v3004
    %v3006 = vpop.f32.mrb[0].mxu0
    %v3007 = vadd.f32 %v1998, %v3006
    %3008 = vmatprep.mubr.bf16.mxu0 %v1914
    %3009 = vmatmul.mubr.bf16.gmra.mrb[0].mxu0 %v1913
    %v3010 = vpop.f32.mrb[0].mxu0
    %v3011 = vadd.f32 %v1994, %v3010
    %v3012 = vpop.f32.mrb[0].mxu0
    %v3013 = vadd.f32 %v1998, %v3012
    %v3014 = vpop.f32.mrb[0].mxu0
    %v3015 = vadd.f32 %v1994, %v3014
    %v3016 = vpop.f32.mrb[0].mxu0
    %v3017 = vadd.f32 %v1998, %v3016
    %3018 = vmatprep.mubr.bf16.mxu0 %v1916
    %3019 = vmatmul.mubr.bf16.gmra.mrb[0].mxu0 %v1915
    %v3020 = vpop.f32.mrb[0].mxu0
    %v3021 = vadd.f32 %v1994, %v3020
    %v3022 = vpop.f32.mrb[0].mxu0
    %v3023 = vadd.f32 %v1998, %v3022
    %v3024 = vpop.f32.mrb[0].mxu0
    %v3025 = vadd.f32 %v1994, %v3024
    %v3026 = vpop.f32.mrb[0].mxu0
    %v3027 = vadd.f32 %v1998, %v3026
    %3028 = vdwg.mxu0
    %v3029 = vmax.f32 %v2358, 0.0
    %v3030 = vmax.f32 %v2360, 0.0
    %v3031 = vmax.f32 %v2711, 0.0
    %v3032 = vmax.f32 %v2713, 0.0
    %v3033 = vmax.f32 %v2362, 0.0
    %v3034 = vmax.f32 %v2364, 0.0
    %v3035 = vmax.f32 %v2715, 0.0
    %v3036 = vmax.f32 %v2717, 0.0
    %v3037 = vmax.f32 %v2368, 0.0
    %v3038 = vmax.f32 %v2370, 0.0
    %v3039 = vmax.f32 %v2721, 0.0
    %v3040 = vmax.f32 %v2723, 0.0
    %v3041 = vmax.f32 %v2372, 0.0
    %v3042 = vmax.f32 %v2374, 0.0
    %v3043 = vmax.f32 %v2725, 0.0
    %v3044 = vmax.f32 %v2727, 0.0
    %v3045 = vmax.f32 %v2378, 0.0
    %v3046 = vmax.f32 %v2380, 0.0
    %v3047 = vmax.f32 %v2731, 0.0
    %v3048 = vmax.f32 %v2733, 0.0
    %v3049 = vmax.f32 %v2382, 0.0
    %v3050 = vmax.f32 %v2384, 0.0
    %v3051 = vmax.f32 %v2735, 0.0
    %v3052 = vmax.f32 %v2737, 0.0
    %v3053 = vmax.f32 %v2388, 0.0
    %v3054 = vmax.f32 %v2390, 0.0
    %v3055 = vmax.f32 %v2741, 0.0
    %v3056 = vmax.f32 %v2743, 0.0
    %v3057 = vmax.f32 %v2392, 0.0
    %v3058 = vmax.f32 %v2394, 0.0
    %v3059 = vmax.f32 %v2745, 0.0
    %v3060 = vmax.f32 %v2747, 0.0
    %v3061 = vmax.f32 %v2398, 0.0
    %v3062 = vmax.f32 %v2400, 0.0
    %v3063 = vmax.f32 %v2751, 0.0
    %v3064 = vmax.f32 %v2753, 0.0
    %v3065 = vmax.f32 %v2402, 0.0
    %v3066 = vmax.f32 %v2404, 0.0
    %v3067 = vmax.f32 %v2755, 0.0
    %v3068 = vmax.f32 %v2757, 0.0
    %v3069 = vmax.f32 %v2408, 0.0
    %v3070 = vmax.f32 %v2410, 0.0
    %v3071 = vmax.f32 %v2761, 0.0
    %v3072 = vmax.f32 %v2763, 0.0
    %v3073 = vmax.f32 %v2412, 0.0
    %v3074 = vmax.f32 %v2414, 0.0
    %v3075 = vmax.f32 %v2765, 0.0
    %v3076 = vmax.f32 %v2767, 0.0
    %v3077 = vmax.f32 %v2418, 0.0
    %v3078 = vmax.f32 %v2420, 0.0
    %v3079 = vmax.f32 %v2771, 0.0
    %v3080 = vmax.f32 %v2773, 0.0
    %v3081 = vmax.f32 %v2422, 0.0
    %v3082 = vmax.f32 %v2424, 0.0
    %v3083 = vmax.f32 %v2775, 0.0
    %v3084 = vmax.f32 %v2777, 0.0
    %v3085 = vmax.f32 %v2428, 0.0
    %v3086 = vmax.f32 %v2430, 0.0
    %v3087 = vmax.f32 %v2781, 0.0
    %v3088 = vmax.f32 %v2783, 0.0
    %v3089 = vmax.f32 %v2432, 0.0
    %v3090 = vmax.f32 %v2434, 0.0
    %v3091 = vmax.f32 %v2785, 0.0
    %v3092 = vmax.f32 %v2787, 0.0
    %v3093 = vmax.f32 %v2438, 0.0
    %v3094 = vmax.f32 %v2440, 0.0
    %v3095 = vmax.f32 %v2791, 0.0
    %v3096 = vmax.f32 %v2793, 0.0
    %v3097 = vmax.f32 %v2442, 0.0
    %v3098 = vmax.f32 %v2444, 0.0
    %v3099 = vmax.f32 %v2795, 0.0
    %v3100 = vmax.f32 %v2797, 0.0
    %v3101 = vmax.f32 %v2448, 0.0
    %v3102 = vmax.f32 %v2450, 0.0
    %v3103 = vmax.f32 %v2801, 0.0
    %v3104 = vmax.f32 %v2803, 0.0
    %v3105 = vmax.f32 %v2452, 0.0
    %v3106 = vmax.f32 %v2454, 0.0
    %v3107 = vmax.f32 %v2805, 0.0
    %v3108 = vmax.f32 %v2807, 0.0
    %v3109 = vmax.f32 %v2458, 0.0
    %v3110 = vmax.f32 %v2460, 0.0
    %v3111 = vmax.f32 %v2811, 0.0
    %v3112 = vmax.f32 %v2813, 0.0
    %v3113 = vmax.f32 %v2462, 0.0
    %v3114 = vmax.f32 %v2464, 0.0
    %v3115 = vmax.f32 %v2815, 0.0
    %v3116 = vmax.f32 %v2817, 0.0
    %v3117 = vmax.f32 %v2468, 0.0
    %v3118 = vmax.f32 %v2470, 0.0
    %v3119 = vmax.f32 %v2821, 0.0
    %v3120 = vmax.f32 %v2823, 0.0
    %v3121 = vmax.f32 %v2472, 0.0
    %v3122 = vmax.f32 %v2474, 0.0
    %v3123 = vmax.f32 %v2825, 0.0
    %v3124 = vmax.f32 %v2827, 0.0
    %v3125 = vmax.f32 %v2478, 0.0
    %v3126 = vmax.f32 %v2480, 0.0
    %v3127 = vmax.f32 %v2831, 0.0
    %v3128 = vmax.f32 %v2833, 0.0
    %v3129 = vmax.f32 %v2482, 0.0
    %v3130 = vmax.f32 %v2484, 0.0
    %v3131 = vmax.f32 %v2835, 0.0
    %v3132 = vmax.f32 %v2837, 0.0
    %v3133 = vmax.f32 %v2488, 0.0
    %v3134 = vmax.f32 %v2490, 0.0
    %v3135 = vmax.f32 %v2841, 0.0
    %v3136 = vmax.f32 %v2843, 0.0
    %v3137 = vmax.f32 %v2492, 0.0
    %v3138 = vmax.f32 %v2494, 0.0
    %v3139 = vmax.f32 %v2845, 0.0
    %v3140 = vmax.f32 %v2847, 0.0
    %v3141 = vmax.f32 %v2498, 0.0
    %v3142 = vmax.f32 %v2500, 0.0
    %v3143 = vmax.f32 %v2851, 0.0
    %v3144 = vmax.f32 %v2853, 0.0
    %v3145 = vmax.f32 %v2502, 0.0
    %v3146 = vmax.f32 %v2504, 0.0
    %v3147 = vmax.f32 %v2855, 0.0
    %v3148 = vmax.f32 %v2857, 0.0
    %v3149 = vmax.f32 %v2508, 0.0
    %v3150 = vmax.f32 %v2510, 0.0
    %v3151 = vmax.f32 %v2861, 0.0
    %v3152 = vmax.f32 %v2863, 0.0
    %v3153 = vmax.f32 %v2512, 0.0
    %v3154 = vmax.f32 %v2514, 0.0
    %v3155 = vmax.f32 %v2865, 0.0
    %v3156 = vmax.f32 %v2867, 0.0
    %v3157 = vmax.f32 %v2518, 0.0
    %v3158 = vmax.f32 %v2520, 0.0
    %v3159 = vmax.f32 %v2871, 0.0
    %v3160 = vmax.f32 %v2873, 0.0
    %v3161 = vmax.f32 %v2522, 0.0
    %v3162 = vmax.f32 %v2524, 0.0
    %v3163 = vmax.f32 %v2875, 0.0
    %v3164 = vmax.f32 %v2877, 0.0
    %v3165 = vmax.f32 %v2528, 0.0
    %v3166 = vmax.f32 %v2530, 0.0
    %v3167 = vmax.f32 %v2881, 0.0
    %v3168 = vmax.f32 %v2883, 0.0
    %v3169 = vmax.f32 %v2532, 0.0
    %v3170 = vmax.f32 %v2534, 0.0
    %v3171 = vmax.f32 %v2885, 0.0
    %v3172 = vmax.f32 %v2887, 0.0
    %v3173 = vmax.f32 %v2538, 0.0
    %v3174 = vmax.f32 %v2540, 0.0
    %v3175 = vmax.f32 %v2891, 0.0
    %v3176 = vmax.f32 %v2893, 0.0
    %v3177 = vmax.f32 %v2542, 0.0
    %v3178 = vmax.f32 %v2544, 0.0
    %v3179 = vmax.f32 %v2895, 0.0
    %v3180 = vmax.f32 %v2897, 0.0
    %v3181 = vmax.f32 %v2548, 0.0
    %v3182 = vmax.f32 %v2550, 0.0
    %v3183 = vmax.f32 %v2901, 0.0
    %v3184 = vmax.f32 %v2903, 0.0
    %v3185 = vmax.f32 %v2552, 0.0
    %v3186 = vmax.f32 %v2554, 0.0
    %v3187 = vmax.f32 %v2905, 0.0
    %v3188 = vmax.f32 %v2907, 0.0
    %v3189 = vmax.f32 %v2558, 0.0
    %v3190 = vmax.f32 %v2560, 0.0
    %v3191 = vmax.f32 %v2911, 0.0
    %v3192 = vmax.f32 %v2913, 0.0
    %v3193 = vmax.f32 %v2562, 0.0
    %v3194 = vmax.f32 %v2564, 0.0
    %v3195 = vmax.f32 %v2915, 0.0
    %v3196 = vmax.f32 %v2917, 0.0
    %v3197 = vmax.f32 %v2568, 0.0
    %v3198 = vmax.f32 %v2570, 0.0
    %v3199 = vmax.f32 %v2921, 0.0
    %v3200 = vmax.f32 %v2923, 0.0
    %v3201 = vmax.f32 %v2572, 0.0
    %v3202 = vmax.f32 %v2574, 0.0
    %v3203 = vmax.f32 %v2925, 0.0
    %v3204 = vmax.f32 %v2927, 0.0
    %v3205 = vmax.f32 %v2578, 0.0
    %v3206 = vmax.f32 %v2580, 0.0
    %v3207 = vmax.f32 %v2931, 0.0
    %v3208 = vmax.f32 %v2933, 0.0
    %v3209 = vmax.f32 %v2582, 0.0
    %v3210 = vmax.f32 %v2584, 0.0
    %v3211 = vmax.f32 %v2935, 0.0
    %v3212 = vmax.f32 %v2937, 0.0
    %v3213 = vmax.f32 %v2588, 0.0
    %v3214 = vmax.f32 %v2590, 0.0
    %v3215 = vmax.f32 %v2941, 0.0
    %v3216 = vmax.f32 %v2943, 0.0
    %v3217 = vmax.f32 %v2592, 0.0
    %v3218 = vmax.f32 %v2594, 0.0
    %v3219 = vmax.f32 %v2945, 0.0
    %v3220 = vmax.f32 %v2947, 0.0
    %v3221 = vmax.f32 %v2598, 0.0
    %v3222 = vmax.f32 %v2600, 0.0
    %v3223 = vmax.f32 %v2951, 0.0
    %v3224 = vmax.f32 %v2953, 0.0
    %v3225 = vmax.f32 %v2602, 0.0
    %v3226 = vmax.f32 %v2604, 0.0
    %v3227 = vmax.f32 %v2955, 0.0
    %v3228 = vmax.f32 %v2957, 0.0
    %v3229 = vmax.f32 %v2608, 0.0
    %v3230 = vmax.f32 %v2610, 0.0
    %v3231 = vmax.f32 %v2961, 0.0
    %v3232 = vmax.f32 %v2963, 0.0
    %v3233 = vmax.f32 %v2612, 0.0
    %v3234 = vmax.f32 %v2614, 0.0
    %v3235 = vmax.f32 %v2965, 0.0
    %v3236 = vmax.f32 %v2967, 0.0
    %v3237 = vmax.f32 %v2618, 0.0
    %v3238 = vmax.f32 %v2620, 0.0
    %v3239 = vmax.f32 %v2971, 0.0
    %v3240 = vmax.f32 %v2973, 0.0
    %v3241 = vmax.f32 %v2622, 0.0
    %v3242 = vmax.f32 %v2624, 0.0
    %v3243 = vmax.f32 %v2975, 0.0
    %v3244 = vmax.f32 %v2977, 0.0
    %v3245 = vmax.f32 %v2628, 0.0
    %v3246 = vmax.f32 %v2630, 0.0
    %v3247 = vmax.f32 %v2981, 0.0
    %v3248 = vmax.f32 %v2983, 0.0
    %v3249 = vmax.f32 %v2632, 0.0
    %v3250 = vmax.f32 %v2634, 0.0
    %v3251 = vmax.f32 %v2985, 0.0
    %v3252 = vmax.f32 %v2987, 0.0
    %v3253 = vmax.f32 %v2638, 0.0
    %v3254 = vmax.f32 %v2640, 0.0
    %v3255 = vmax.f32 %v2991, 0.0
    %v3256 = vmax.f32 %v2993, 0.0
    %v3257 = vmax.f32 %v2642, 0.0
    %v3258 = vmax.f32 %v2644, 0.0
    %v3259 = vmax.f32 %v2995, 0.0
    %v3260 = vmax.f32 %v2997, 0.0
    %v3261 = vmax.f32 %v2648, 0.0
    %v3262 = vmax.f32 %v2650, 0.0
    %v3263 = vmax.f32 %v3001, 0.0
    %v3264 = vmax.f32 %v3003, 0.0
    %v3265 = vmax.f32 %v2652, 0.0
    %v3266 = vmax.f32 %v2654, 0.0
    %v3267 = vmax.f32 %v3005, 0.0
    %v3268 = vmax.f32 %v3007, 0.0
    %v3269 = vmax.f32 %v2658, 0.0
    %v3270 = vmax.f32 %v2660, 0.0
    %v3271 = vmax.f32 %v3011, 0.0
    %v3272 = vmax.f32 %v3013, 0.0
    %v3273 = vmax.f32 %v2662, 0.0
    %v3274 = vmax.f32 %v2664, 0.0
    %v3275 = vmax.f32 %v3015, 0.0
    %v3276 = vmax.f32 %v3017, 0.0
    %v3277 = vmax.f32 %v2668, 0.0
    %v3278 = vmax.f32 %v2670, 0.0
    %v3279 = vmax.f32 %v3021, 0.0
    %v3280 = vmax.f32 %v3023, 0.0
    %v3281 = vmax.f32 %v2672, 0.0
    %v3282 = vmax.f32 %v2674, 0.0
    %v3283 = vmax.f32 %v3025, 0.0
    %v3284 = vmax.f32 %v3027, 0.0
    %v3285 = vmax.f32 %v3029, %v3033
    %v3286 = vmax.f32 %v3285, %v3037
    %v3287 = vmax.f32 %v3286, %v3041
    %v3288 = vmax.f32 %v3287, %v3045
    %v3289 = vmax.f32 %v3288, %v3049
    %v3290 = vmax.f32 %v3289, %v3053
    %v3291 = vmax.f32 %v3290, %v3057
    %v3292 = vmax.f32 %v3291, %v3061
    %v3293 = vmax.f32 %v3292, %v3065
    %v3294 = vmax.f32 %v3293, %v3069
    %v3295 = vmax.f32 %v3294, %v3073
    %v3296 = vmax.f32 %v3295, %v3077
    %v3297 = vmax.f32 %v3296, %v3081
    %v3298 = vmax.f32 %v3297, %v3085
    %v3299 = vmax.f32 %v3298, %v3089
    %v3300 = vrot.slane %v3299, 4
    %v3301 = vmax.f32 %v3299, %v3300
    %v3302 = vrot.slane %v3301, 2
    %v3303 = vmax.f32 %v3301, %v3302
    %v3304 = vrot.slane %v3303, 1
    %v3305 = vmax.f32 %v3303, %v3304
    %v3306 = vmax.f32 %v3030, %v3034
    %v3307 = vmax.f32 %v3306, %v3038
    %v3308 = vmax.f32 %v3307, %v3042
    %v3309 = vmax.f32 %v3308, %v3046
    %v3310 = vmax.f32 %v3309, %v3050
    %v3311 = vmax.f32 %v3310, %v3054
    %v3312 = vmax.f32 %v3311, %v3058
    %v3313 = vmax.f32 %v3312, %v3062
    %v3314 = vmax.f32 %v3313, %v3066
    %v3315 = vmax.f32 %v3314, %v3070
    %v3316 = vmax.f32 %v3315, %v3074
    %v3317 = vmax.f32 %v3316, %v3078
    %v3318 = vmax.f32 %v3317, %v3082
    %v3319 = vmax.f32 %v3318, %v3086
    %v3320 = vmax.f32 %v3319, %v3090
    %v3321 = vrot.slane %v3320, 4
    %v3322 = vmax.f32 %v3320, %v3321
    %v3323 = vrot.slane %v3322, 2
    %v3324 = vmax.f32 %v3322, %v3323
    %v3325 = vrot.slane %v3324, 1
    %v3326 = vmax.f32 %v3324, %v3325
    %v3327 = vmax.f32 %v3031, %v3035
    %v3328 = vmax.f32 %v3327, %v3039
    %v3329 = vmax.f32 %v3328, %v3043
    %v3330 = vmax.f32 %v3329, %v3047
    %v3331 = vmax.f32 %v3330, %v3051
    %v3332 = vmax.f32 %v3331, %v3055
    %v3333 = vmax.f32 %v3332, %v3059
    %v3334 = vmax.f32 %v3333, %v3063
    %v3335 = vmax.f32 %v3334, %v3067
    %v3336 = vmax.f32 %v3335, %v3071
    %v3337 = vmax.f32 %v3336, %v3075
    %v3338 = vmax.f32 %v3337, %v3079
    %v3339 = vmax.f32 %v3338, %v3083
    %v3340 = vmax.f32 %v3339, %v3087
    %v3341 = vmax.f32 %v3340, %v3091
    %v3342 = vrot.slane %v3341, 4
    %v3343 = vmax.f32 %v3341, %v3342
    %v3344 = vrot.slane %v3343, 2
    %v3345 = vmax.f32 %v3343, %v3344
    %v3346 = vrot.slane %v3345, 1
    %v3347 = vmax.f32 %v3345, %v3346
    %v3348 = vmax.f32 %v3032, %v3036
    %v3349 = vmax.f32 %v3348, %v3040
    %v3350 = vmax.f32 %v3349, %v3044
    %v3351 = vmax.f32 %v3350, %v3048
    %v3352 = vmax.f32 %v3351, %v3052
    %v3353 = vmax.f32 %v3352, %v3056
    %v3354 = vmax.f32 %v3353, %v3060
    %v3355 = vmax.f32 %v3354, %v3064
    %v3356 = vmax.f32 %v3355, %v3068
    %v3357 = vmax.f32 %v3356, %v3072
    %v3358 = vmax.f32 %v3357, %v3076
    %v3359 = vmax.f32 %v3358, %v3080
    %v3360 = vmax.f32 %v3359, %v3084
    %v3361 = vmax.f32 %v3360, %v3088
    %v3362 = vmax.f32 %v3361, %v3092
    %v3363 = vrot.slane %v3362, 4
    %v3364 = vmax.f32 %v3362, %v3363
    %v3365 = vrot.slane %v3364, 2
    %v3366 = vmax.f32 %v3364, %v3365
    %v3367 = vrot.slane %v3366, 1
    %v3368 = vmax.f32 %v3366, %v3367
    %v3369 = vmax.f32 %v3093, %v3097
    %v3370 = vmax.f32 %v3369, %v3101
    %v3371 = vmax.f32 %v3370, %v3105
    %v3372 = vmax.f32 %v3371, %v3109
    %v3373 = vmax.f32 %v3372, %v3113
    %v3374 = vmax.f32 %v3373, %v3117
    %v3375 = vmax.f32 %v3374, %v3121
    %v3376 = vmax.f32 %v3375, %v3125
    %v3377 = vmax.f32 %v3376, %v3129
    %v3378 = vmax.f32 %v3377, %v3133
    %v3379 = vmax.f32 %v3378, %v3137
    %v3380 = vmax.f32 %v3379, %v3141
    %v3381 = vmax.f32 %v3380, %v3145
    %v3382 = vmax.f32 %v3381, %v3149
    %v3383 = vmax.f32 %v3382, %v3153
    %v3384 = vrot.slane %v3383, 4
    %v3385 = vmax.f32 %v3383, %v3384
    %v3386 = vrot.slane %v3385, 2
    %v3387 = vmax.f32 %v3385, %v3386
    %v3388 = vrot.slane %v3387, 1
    %v3389 = vmax.f32 %v3387, %v3388
    %v3390 = vmax.f32 %v3094, %v3098
    %v3391 = vmax.f32 %v3390, %v3102
    %v3392 = vmax.f32 %v3391, %v3106
    %v3393 = vmax.f32 %v3392, %v3110
    %v3394 = vmax.f32 %v3393, %v3114
    %v3395 = vmax.f32 %v3394, %v3118
    %v3396 = vmax.f32 %v3395, %v3122
    %v3397 = vmax.f32 %v3396, %v3126
    %v3398 = vmax.f32 %v3397, %v3130
    %v3399 = vmax.f32 %v3398, %v3134
    %v3400 = vmax.f32 %v3399, %v3138
    %v3401 = vmax.f32 %v3400, %v3142
    %v3402 = vmax.f32 %v3401, %v3146
    %v3403 = vmax.f32 %v3402, %v3150
    %v3404 = vmax.f32 %v3403, %v3154
    %v3405 = vrot.slane %v3404, 4
    %v3406 = vmax.f32 %v3404, %v3405
    %v3407 = vrot.slane %v3406, 2
    %v3408 = vmax.f32 %v3406, %v3407
    %v3409 = vrot.slane %v3408, 1
    %v3410 = vmax.f32 %v3408, %v3409
    %v3411 = vmax.f32 %v3095, %v3099
    %v3412 = vmax.f32 %v3411, %v3103
    %v3413 = vmax.f32 %v3412, %v3107
    %v3414 = vmax.f32 %v3413, %v3111
    %v3415 = vmax.f32 %v3414, %v3115
    %v3416 = vmax.f32 %v3415, %v3119
    %v3417 = vmax.f32 %v3416, %v3123
    %v3418 = vmax.f32 %v3417, %v3127
    %v3419 = vmax.f32 %v3418, %v3131
    %v3420 = vmax.f32 %v3419, %v3135
    %v3421 = vmax.f32 %v3420, %v3139
    %v3422 = vmax.f32 %v3421, %v3143
    %v3423 = vmax.f32 %v3422, %v3147
    %v3424 = vmax.f32 %v3423, %v3151
    %v3425 = vmax.f32 %v3424, %v3155
    %v3426 = vrot.slane %v3425, 4
    %v3427 = vmax.f32 %v3425, %v3426
    %v3428 = vrot.slane %v3427, 2
    %v3429 = vmax.f32 %v3427, %v3428
    %v3430 = vrot.slane %v3429, 1
    %v3431 = vmax.f32 %v3429, %v3430
    %v3432 = vmax.f32 %v3096, %v3100
    %v3433 = vmax.f32 %v3432, %v3104
    %v3434 = vmax.f32 %v3433, %v3108
    %v3435 = vmax.f32 %v3434, %v3112
    %v3436 = vmax.f32 %v3435, %v3116
    %v3437 = vmax.f32 %v3436, %v3120
    %v3438 = vmax.f32 %v3437, %v3124
    %v3439 = vmax.f32 %v3438, %v3128
    %v3440 = vmax.f32 %v3439, %v3132
    %v3441 = vmax.f32 %v3440, %v3136
    %v3442 = vmax.f32 %v3441, %v3140
    %v3443 = vmax.f32 %v3442, %v3144
    %v3444 = vmax.f32 %v3443, %v3148
    %v3445 = vmax.f32 %v3444, %v3152
    %v3446 = vmax.f32 %v3445, %v3156
    %v3447 = vrot.slane %v3446, 4
    %v3448 = vmax.f32 %v3446, %v3447
    %v3449 = vrot.slane %v3448, 2
    %v3450 = vmax.f32 %v3448, %v3449
    %v3451 = vrot.slane %v3450, 1
    %v3452 = vmax.f32 %v3450, %v3451
    %v3453 = vmax.f32 %v3157, %v3161
    %v3454 = vmax.f32 %v3453, %v3165
    %v3455 = vmax.f32 %v3454, %v3169
    %v3456 = vmax.f32 %v3455, %v3173
    %v3457 = vmax.f32 %v3456, %v3177
    %v3458 = vmax.f32 %v3457, %v3181
    %v3459 = vmax.f32 %v3458, %v3185
    %v3460 = vmax.f32 %v3459, %v3189
    %v3461 = vmax.f32 %v3460, %v3193
    %v3462 = vmax.f32 %v3461, %v3197
    %v3463 = vmax.f32 %v3462, %v3201
    %v3464 = vmax.f32 %v3463, %v3205
    %v3465 = vmax.f32 %v3464, %v3209
    %v3466 = vmax.f32 %v3465, %v3213
    %v3467 = vmax.f32 %v3466, %v3217
    %v3468 = vrot.slane %v3467, 4
    %v3469 = vmax.f32 %v3467, %v3468
    %v3470 = vrot.slane %v3469, 2
    %v3471 = vmax.f32 %v3469, %v3470
    %v3472 = vrot.slane %v3471, 1
    %v3473 = vmax.f32 %v3471, %v3472
    %v3474 = vmax.f32 %v3158, %v3162
    %v3475 = vmax.f32 %v3474, %v3166
    %v3476 = vmax.f32 %v3475, %v3170
    %v3477 = vmax.f32 %v3476, %v3174
    %v3478 = vmax.f32 %v3477, %v3178
    %v3479 = vmax.f32 %v3478, %v3182
    %v3480 = vmax.f32 %v3479, %v3186
    %v3481 = vmax.f32 %v3480, %v3190
    %v3482 = vmax.f32 %v3481, %v3194
    %v3483 = vmax.f32 %v3482, %v3198
    %v3484 = vmax.f32 %v3483, %v3202
    %v3485 = vmax.f32 %v3484, %v3206
    %v3486 = vmax.f32 %v3485, %v3210
    %v3487 = vmax.f32 %v3486, %v3214
    %v3488 = vmax.f32 %v3487, %v3218
    %v3489 = vrot.slane %v3488, 4
    %v3490 = vmax.f32 %v3488, %v3489
    %v3491 = vrot.slane %v3490, 2
    %v3492 = vmax.f32 %v3490, %v3491
    %v3493 = vrot.slane %v3492, 1
    %v3494 = vmax.f32 %v3492, %v3493
    %v3495 = vmax.f32 %v3159, %v3163
    %v3496 = vmax.f32 %v3495, %v3167
    %v3497 = vmax.f32 %v3496, %v3171
    %v3498 = vmax.f32 %v3497, %v3175
    %v3499 = vmax.f32 %v3498, %v3179
    %v3500 = vmax.f32 %v3499, %v3183
    %v3501 = vmax.f32 %v3500, %v3187
    %v3502 = vmax.f32 %v3501, %v3191
    %v3503 = vmax.f32 %v3502, %v3195
    %v3504 = vmax.f32 %v3503, %v3199
    %v3505 = vmax.f32 %v3504, %v3203
    %v3506 = vmax.f32 %v3505, %v3207
    %v3507 = vmax.f32 %v3506, %v3211
    %v3508 = vmax.f32 %v3507, %v3215
    %v3509 = vmax.f32 %v3508, %v3219
    %v3510 = vrot.slane %v3509, 4
    %v3511 = vmax.f32 %v3509, %v3510
    %v3512 = vrot.slane %v3511, 2
    %v3513 = vmax.f32 %v3511, %v3512
    %v3514 = vrot.slane %v3513, 1
    %v3515 = vmax.f32 %v3513, %v3514
    %v3516 = vmax.f32 %v3160, %v3164
    %v3517 = vmax.f32 %v3516, %v3168
    %v3518 = vmax.f32 %v3517, %v3172
    %v3519 = vmax.f32 %v3518, %v3176
    %v3520 = vmax.f32 %v3519, %v3180
    %v3521 = vmax.f32 %v3520, %v3184
    %v3522 = vmax.f32 %v3521, %v3188
    %v3523 = vmax.f32 %v3522, %v3192
    %v3524 = vmax.f32 %v3523, %v3196
    %v3525 = vmax.f32 %v3524, %v3200
    %v3526 = vmax.f32 %v3525, %v3204
    %v3527 = vmax.f32 %v3526, %v3208
    %v3528 = vmax.f32 %v3527, %v3212
    %v3529 = vmax.f32 %v3528, %v3216
    %v3530 = vmax.f32 %v3529, %v3220
    %v3531 = vrot.slane %v3530, 4
    %v3532 = vmax.f32 %v3530, %v3531
    %v3533 = vrot.slane %v3532, 2
    %v3534 = vmax.f32 %v3532, %v3533
    %v3535 = vrot.slane %v3534, 1
    %v3536 = vmax.f32 %v3534, %v3535
    %v3537 = vmax.f32 %v3221, %v3225
    %v3538 = vmax.f32 %v3537, %v3229
    %v3539 = vmax.f32 %v3538, %v3233
    %v3540 = vmax.f32 %v3539, %v3237
    %v3541 = vmax.f32 %v3540, %v3241
    %v3542 = vmax.f32 %v3541, %v3245
    %v3543 = vmax.f32 %v3542, %v3249
    %v3544 = vmax.f32 %v3543, %v3253
    %v3545 = vmax.f32 %v3544, %v3257
    %v3546 = vmax.f32 %v3545, %v3261
    %v3547 = vmax.f32 %v3546, %v3265
    %v3548 = vmax.f32 %v3547, %v3269
    %v3549 = vmax.f32 %v3548, %v3273
    %v3550 = vmax.f32 %v3549, %v3277
    %v3551 = vmax.f32 %v3550, %v3281
    %v3552 = vrot.slane %v3551, 4
    %v3553 = vmax.f32 %v3551, %v3552
    %v3554 = vrot.slane %v3553, 2
    %v3555 = vmax.f32 %v3553, %v3554
    %v3556 = vrot.slane %v3555, 1
    %v3557 = vmax.f32 %v3555, %v3556
    %v3558 = vmax.f32 %v3222, %v3226
    %v3559 = vmax.f32 %v3558, %v3230
    %v3560 = vmax.f32 %v3559, %v3234
    %v3561 = vmax.f32 %v3560, %v3238
    %v3562 = vmax.f32 %v3561, %v3242
    %v3563 = vmax.f32 %v3562, %v3246
    %v3564 = vmax.f32 %v3563, %v3250
    %v3565 = vmax.f32 %v3564, %v3254
    %v3566 = vmax.f32 %v3565, %v3258
    %v3567 = vmax.f32 %v3566, %v3262
    %v3568 = vmax.f32 %v3567, %v3266
    %v3569 = vmax.f32 %v3568, %v3270
    %v3570 = vmax.f32 %v3569, %v3274
    %v3571 = vmax.f32 %v3570, %v3278
    %v3572 = vmax.f32 %v3571, %v3282
    %v3573 = vrot.slane %v3572, 4
    %v3574 = vmax.f32 %v3572, %v3573
    %v3575 = vrot.slane %v3574, 2
    %v3576 = vmax.f32 %v3574, %v3575
    %v3577 = vrot.slane %v3576, 1
    %v3578 = vmax.f32 %v3576, %v3577
    %v3579 = vmax.f32 %v3223, %v3227
    %v3580 = vmax.f32 %v3579, %v3231
    %v3581 = vmax.f32 %v3580, %v3235
    %v3582 = vmax.f32 %v3581, %v3239
    %v3583 = vmax.f32 %v3582, %v3243
    %v3584 = vmax.f32 %v3583, %v3247
    %v3585 = vmax.f32 %v3584, %v3251
    %v3586 = vmax.f32 %v3585, %v3255
    %v3587 = vmax.f32 %v3586, %v3259
    %v3588 = vmax.f32 %v3587, %v3263
    %v3589 = vmax.f32 %v3588, %v3267
    %v3590 = vmax.f32 %v3589, %v3271
    %v3591 = vmax.f32 %v3590, %v3275
    %v3592 = vmax.f32 %v3591, %v3279
    %v3593 = vmax.f32 %v3592, %v3283
    %v3594 = vrot.slane %v3593, 4
    %v3595 = vmax.f32 %v3593, %v3594
    %v3596 = vrot.slane %v3595, 2
    %v3597 = vmax.f32 %v3595, %v3596
    %v3598 = vrot.slane %v3597, 1
    %v3599 = vmax.f32 %v3597, %v3598
    %v3600 = vmax.f32 %v3224, %v3228
    %v3601 = vmax.f32 %v3600, %v3232
    %v3602 = vmax.f32 %v3601, %v3236
    %v3603 = vmax.f32 %v3602, %v3240
    %v3604 = vmax.f32 %v3603, %v3244
    %v3605 = vmax.f32 %v3604, %v3248
    %v3606 = vmax.f32 %v3605, %v3252
    %v3607 = vmax.f32 %v3606, %v3256
    %v3608 = vmax.f32 %v3607, %v3260
    %v3609 = vmax.f32 %v3608, %v3264
    %v3610 = vmax.f32 %v3609, %v3268
    %v3611 = vmax.f32 %v3610, %v3272
    %v3612 = vmax.f32 %v3611, %v3276
    %v3613 = vmax.f32 %v3612, %v3280
    %v3614 = vmax.f32 %v3613, %v3284
    %v3615 = vrot.slane %v3614, 4
    %v3616 = vmax.f32 %v3614, %v3615
    %v3617 = vrot.slane %v3616, 2
    %v3618 = vmax.f32 %v3616, %v3617
    %v3619 = vrot.slane %v3618, 1
    %v3620 = vmax.f32 %v3618, %v3619
    %v3621 = vpack.c.bf16 %v3305, %v3305
    %v3622 = vpack.c.bf16 %v3326, %v3326
    %v3623 = vpack.c.bf16 %v3347, %v3347
    %v3624 = vpack.c.bf16 %v3368, %v3368
    %v3625 = vpack.c.bf16 %v3389, %v3389
    %v3626 = vpack.c.bf16 %v3410, %v3410
    %v3627 = vpack.c.bf16 %v3431, %v3431
    %v3628 = vpack.c.bf16 %v3452, %v3452
    %v3629 = vpack.c.bf16 %v3473, %v3473
    %v3630 = vpack.c.bf16 %v3494, %v3494
    %v3631 = vpack.c.bf16 %v3515, %v3515
    %v3632 = vpack.c.bf16 %v3536, %v3536
    %v3633 = vpack.c.bf16 %v3557, %v3557
    %v3634 = vpack.c.bf16 %v3578, %v3578
    %v3635 = vpack.c.bf16 %v3599, %v3599
    %v3636 = vpack.c.bf16 %v3620, %v3620
    %p3637 = scmp.eq.s32.totalorder 0, 0
    // Predicated region
    $region46: #{tpu_custom_call.1} parent=1 // pred_check
      %p3638 = pneg %p3637
    $region47: #{tpu_custom_call.1} parent=1 // pred_check_branch
      %3640 = sbr.rel (%p3638) target = $region49
    $region48: #{tpu_custom_call.1} parent=1 // pred_region
      %v3657 = vcombine.low %v3621, %v3622
      %v3658 = vcombine.low %v3623, %v3624
      %v3660 = vunpack.c.l.s4 1983009808
      %v3661 = vunpack.c.0.s8 %v3660
      %v3662 = vlaneseq
      %v3663 = vshrl.u32 %v3662, 7
      %v3664 = vsub.s32 %v3661, %v3663
      %v3665 = vrot.slane %v3657, %v3664
      %v3667 = vunpack.c.l.s4 1983009808
      %v3668 = vunpack.c.0.s8 %v3667
      %v3669 = vlaneseq
      %v3670 = vshrl.u32 %v3669, 7
      %v3671 = vsub.s32 %v3668, %v3670
      %v3672 = vrot.slane %v3658, %v3671
      %v3673 = vcombine.low %v3665, %v3672
      %v3674 = vcombine.low %v3625, %v3626
      %v3675 = vcombine.low %v3627, %v3628
      %v3677 = vunpack.c.l.s4 1983009808
      %v3678 = vunpack.c.0.s8 %v3677
      %v3679 = vlaneseq
      %v3680 = vshrl.u32 %v3679, 7
      %v3681 = vsub.s32 %v3678, %v3680
      %v3682 = vrot.slane %v3674, %v3681
      %v3684 = vunpack.c.l.s4 1983009808
      %v3685 = vunpack.c.0.s8 %v3684
      %v3686 = vlaneseq
      %v3687 = vshrl.u32 %v3686, 7
      %v3688 = vsub.s32 %v3685, %v3687
      %v3689 = vrot.slane %v3675, %v3688
      %v3690 = vcombine.low %v3682, %v3689
      %v3691 = vcombine.low %v3629, %v3630
      %v3692 = vcombine.low %v3631, %v3632
      %v3694 = vunpack.c.l.s4 1983009808
      %v3695 = vunpack.c.0.s8 %v3694
      %v3696 = vlaneseq
      %v3697 = vshrl.u32 %v3696, 7
      %v3698 = vsub.s32 %v3695, %v3697
      %v3699 = vrot.slane %v3691, %v3698
      %v3701 = vunpack.c.l.s4 1983009808
      %v3702 = vunpack.c.0.s8 %v3701
      %v3703 = vlaneseq
      %v3704 = vshrl.u32 %v3703, 7
      %v3705 = vsub.s32 %v3702, %v3704
      %v3706 = vrot.slane %v3692, %v3705
      %v3707 = vcombine.low %v3699, %v3706
      %v3708 = vcombine.low %v3633, %v3634
      %v3709 = vcombine.low %v3635, %v3636
      %v3711 = vunpack.c.l.s4 1983009808
      %v3712 = vunpack.c.0.s8 %v3711
      %v3713 = vlaneseq
      %v3714 = vshrl.u32 %v3713, 7
      %v3715 = vsub.s32 %v3712, %v3714
      %v3716 = vrot.slane %v3708, %v3715
      %v3718 = vunpack.c.l.s4 1983009808
      %v3719 = vunpack.c.0.s8 %v3718
      %v3720 = vlaneseq
      %v3721 = vshrl.u32 %v3720, 7
      %v3722 = vsub.s32 %v3719, %v3721
      %v3723 = vrot.slane %v3709, %v3722
      %v3724 = vcombine.low %v3716, %v3723
      %v3725 = vcombine.high %v3673, %v3673
      %v3727 = vunpack.c.l.s4 1983009808
      %v3728 = vunpack.c.0.s8 %v3727
      %v3729 = vlaneseq
      %v3730 = vshrl.u32 %v3729, 7
      %v3731 = vsub.s32 %v3728, %v3730
      %v3732 = vrot.slane %v3673, %v3731
      %v3734 = vunpack.c.l.s4 1983009808
      %v3735 = vunpack.c.0.s8 %v3734
      %v3736 = vlaneseq
      %v3737 = vshrl.u32 %v3736, 7
      %v3738 = vsub.s32 %v3735, %v3737
      %v3739 = vrot.slane %v3725, %v3738
      %v3740 = vcombine.high %v3690, %v3690
      %v3742 = vunpack.c.l.s4 1983009808
      %v3743 = vunpack.c.0.s8 %v3742
      %v3744 = vlaneseq
      %v3745 = vshrl.u32 %v3744, 7
      %v3746 = vsub.s32 %v3743, %v3745
      %v3747 = vrot.slane %v3690, %v3746
      %v3749 = vunpack.c.l.s4 1983009808
      %v3750 = vunpack.c.0.s8 %v3749
      %v3751 = vlaneseq
      %v3752 = vshrl.u32 %v3751, 7
      %v3753 = vsub.s32 %v3750, %v3752
      %v3754 = vrot.slane %v3740, %v3753
      %v3755 = vcombine.high %v3707, %v3707
      %v3757 = vunpack.c.l.s4 1983009808
      %v3758 = vunpack.c.0.s8 %v3757
      %v3759 = vlaneseq
      %v3760 = vshrl.u32 %v3759, 7
      %v3761 = vsub.s32 %v3758, %v3760
      %v3762 = vrot.slane %v3707, %v3761
      %v3764 = vunpack.c.l.s4 1983009808
      %v3765 = vunpack.c.0.s8 %v3764
      %v3766 = vlaneseq
      %v3767 = vshrl.u32 %v3766, 7
      %v3768 = vsub.s32 %v3765, %v3767
      %v3769 = vrot.slane %v3755, %v3768
      %v3770 = vcombine.high %v3724, %v3724
      %v3772 = vunpack.c.l.s4 1983009808
      %v3773 = vunpack.c.0.s8 %v3772
      %v3774 = vlaneseq
      %v3775 = vshrl.u32 %v3774, 7
      %v3776 = vsub.s32 %v3773, %v3775
      %v3777 = vrot.slane %v3724, %v3776
      %v3779 = vunpack.c.l.s4 1983009808
      %v3780 = vunpack.c.0.s8 %v3779
      %v3781 = vlaneseq
      %v3782 = vshrl.u32 %v3781, 7
      %v3783 = vsub.s32 %v3780, %v3782
      %v3784 = vrot.slane %v3770, %v3783
      %v3785 = vunpack.c.l.b16 %v3732
      %v3786 = vunpack.c.h.b16 %v3732
      %v3787 = vunpack.c.l.b16 %v3739
      %v3788 = vunpack.c.h.b16 %v3739
      %v3789 = vunpack.c.l.b16 %v3747
      %v3790 = vunpack.c.h.b16 %v3747
      %v3791 = vunpack.c.l.b16 %v3754
      %v3792 = vunpack.c.h.b16 %v3754
      %v3793 = vunpack.c.l.b16 %v3762
      %v3794 = vunpack.c.h.b16 %v3762
      %v3795 = vunpack.c.l.b16 %v3769
      %v3796 = vunpack.c.h.b16 %v3769
      %v3797 = vunpack.c.l.b16 %v3777
      %v3798 = vunpack.c.h.b16 %v3777
      %v3799 = vunpack.c.l.b16 %v3784
      %v3800 = vunpack.c.h.b16 %v3784
      %v3801 = vrot.slane %v3789, 7
      %vm3802 = vcmask 1041409
      %v3803 = vsel %vm3802, %v3801, %v3785
      %v3804 = vrot.slane %v3793, 6
      %vm3805 = vcmask 1042434
      %v3806 = vsel %vm3805, %v3804, %v3803
      %v3807 = vrot.slane %v3797, 5
      %vm3808 = vcmask 1043459
      %v3809 = vsel %vm3808, %v3807, %v3806
      %v3810 = vrot.slane %v3790, 7
      %v3811 = vsel %vm3802, %v3810, %v3786
      %v3812 = vrot.slane %v3794, 6
      %v3813 = vsel %vm3805, %v3812, %v3811
      %v3814 = vrot.slane %v3798, 5
      %v3815 = vsel %vm3808, %v3814, %v3813
      %v3816 = vrot.slane %v3791, 7
      %v3817 = vsel %vm3802, %v3816, %v3787
      %v3818 = vrot.slane %v3795, 6
      %v3819 = vsel %vm3805, %v3818, %v3817
      %v3820 = vrot.slane %v3799, 5
      %v3821 = vsel %vm3808, %v3820, %v3819
      %v3822 = vrot.slane %v3792, 7
      %v3823 = vsel %vm3802, %v3822, %v3788
      %v3824 = vrot.slane %v3796, 6
      %v3825 = vsel %vm3805, %v3824, %v3823
      %v3826 = vrot.slane %v3800, 5
      %v3827 = vsel %vm3808, %v3826, %v3825
      %v3828 = vpack.c.b16 %v3815, %v3809
      %v3829 = vpack.c.b16 %v3827, %v3821
      %v3831 = vunpack.c.l.s4 1983009808
      %v3832 = vunpack.c.0.s8 %v3831
      %v3833 = vlaneseq
      %v3834 = vshrl.u32 %v3833, 7
      %v3835 = vsub.s32 %v3832, %v3834
      %v3836 = vrot.slane %v3828, %v3835
      %v3838 = vunpack.c.l.s4 1983009808
      %v3839 = vunpack.c.0.s8 %v3838
      %v3840 = vlaneseq
      %v3841 = vshrl.u32 %v3840, 7
      %v3842 = vsub.s32 %v3839, %v3841
      %v3843 = vrot.slane %v3829, %v3842
      %v3844 = vcombine.low %v3836, %v3843
      %3846 = vst [vmem:[#allocation7] sm:$0xff] %v3844
    $region49: #{tpu_custom_call.1} parent=1 // pred_fallthru
      _
    %p3847 = scmp.gt.s32.totalorder 0, 0
    // Predicated region
    $region50: #{tpu_custom_call.1} parent=1 // pred_check
      %p3848 = pneg %p3847
    $region51: #{tpu_custom_call.1} parent=1 // pred_check_branch
      %3850 = sbr.rel (%p3848) target = $region53
    $region52: #{tpu_custom_call.1} parent=1 // pred_region
      %v3851 = vld [vmem:[#allocation7] sm:$0xff]
      %v3868 = vcombine.low %v3621, %v3622
      %v3869 = vcombine.low %v3623, %v3624
      %v3871 = vunpack.c.l.s4 1983009808
      %v3872 = vunpack.c.0.s8 %v3871
      %v3873 = vlaneseq
      %v3874 = vshrl.u32 %v3873, 7
      %v3875 = vsub.s32 %v3872, %v3874
      %v3876 = vrot.slane %v3868, %v3875
      %v3878 = vunpack.c.l.s4 1983009808
      %v3879 = vunpack.c.0.s8 %v3878
      %v3880 = vlaneseq
      %v3881 = vshrl.u32 %v3880, 7
      %v3882 = vsub.s32 %v3879, %v3881
      %v3883 = vrot.slane %v3869, %v3882
      %v3884 = vcombine.low %v3876, %v3883
      %v3885 = vcombine.low %v3625, %v3626
      %v3886 = vcombine.low %v3627, %v3628
      %v3888 = vunpack.c.l.s4 1983009808
      %v3889 = vunpack.c.0.s8 %v3888
      %v3890 = vlaneseq
      %v3891 = vshrl.u32 %v3890, 7
      %v3892 = vsub.s32 %v3889, %v3891
      %v3893 = vrot.slane %v3885, %v3892
      %v3895 = vunpack.c.l.s4 1983009808
      %v3896 = vunpack.c.0.s8 %v3895
      %v3897 = vlaneseq
      %v3898 = vshrl.u32 %v3897, 7
      %v3899 = vsub.s32 %v3896, %v3898
      %v3900 = vrot.slane %v3886, %v3899
      %v3901 = vcombine.low %v3893, %v3900
      %v3902 = vcombine.low %v3629, %v3630
      %v3903 = vcombine.low %v3631, %v3632
      %v3905 = vunpack.c.l.s4 1983009808
      %v3906 = vunpack.c.0.s8 %v3905
      %v3907 = vlaneseq
      %v3908 = vshrl.u32 %v3907, 7
      %v3909 = vsub.s32 %v3906, %v3908
      %v3910 = vrot.slane %v3902, %v3909
      %v3912 = vunpack.c.l.s4 1983009808
      %v3913 = vunpack.c.0.s8 %v3912
      %v3914 = vlaneseq
      %v3915 = vshrl.u32 %v3914, 7
      %v3916 = vsub.s32 %v3913, %v3915
      %v3917 = vrot.slane %v3903, %v3916
      %v3918 = vcombine.low %v3910, %v3917
      %v3919 = vcombine.low %v3633, %v3634
      %v3920 = vcombine.low %v3635, %v3636
      %v3922 = vunpack.c.l.s4 1983009808
      %v3923 = vunpack.c.0.s8 %v3922
      %v3924 = vlaneseq
      %v3925 = vshrl.u32 %v3924, 7
      %v3926 = vsub.s32 %v3923, %v3925
      %v3927 = vrot.slane %v3919, %v3926
      %v3929 = vunpack.c.l.s4 1983009808
      %v3930 = vunpack.c.0.s8 %v3929
      %v3931 = vlaneseq
      %v3932 = vshrl.u32 %v3931, 7
      %v3933 = vsub.s32 %v3930, %v3932
      %v3934 = vrot.slane %v3920, %v3933
      %v3935 = vcombine.low %v3927, %v3934
      %v3936 = vcombine.high %v3884, %v3884
      %v3938 = vunpack.c.l.s4 1983009808
      %v3939 = vunpack.c.0.s8 %v3938
      %v3940 = vlaneseq
      %v3941 = vshrl.u32 %v3940, 7
      %v3942 = vsub.s32 %v3939, %v3941
      %v3943 = vrot.slane %v3884, %v3942
      %v3945 = vunpack.c.l.s4 1983009808
      %v3946 = vunpack.c.0.s8 %v3945
      %v3947 = vlaneseq
      %v3948 = vshrl.u32 %v3947, 7
      %v3949 = vsub.s32 %v3946, %v3948
      %v3950 = vrot.slane %v3936, %v3949
      %v3951 = vcombine.high %v3901, %v3901
      %v3953 = vunpack.c.l.s4 1983009808
      %v3954 = vunpack.c.0.s8 %v3953
      %v3955 = vlaneseq
      %v3956 = vshrl.u32 %v3955, 7
      %v3957 = vsub.s32 %v3954, %v3956
      %v3958 = vrot.slane %v3901, %v3957
      %v3960 = vunpack.c.l.s4 1983009808
      %v3961 = vunpack.c.0.s8 %v3960
      %v3962 = vlaneseq
      %v3963 = vshrl.u32 %v3962, 7
      %v3964 = vsub.s32 %v3961, %v3963
      %v3965 = vrot.slane %v3951, %v3964
      %v3966 = vcombine.high %v3918, %v3918
      %v3968 = vunpack.c.l.s4 1983009808
      %v3969 = vunpack.c.0.s8 %v3968
      %v3970 = vlaneseq
      %v3971 = vshrl.u32 %v3970, 7
      %v3972 = vsub.s32 %v3969, %v3971
      %v3973 = vrot.slane %v3918, %v3972
      %v3975 = vunpack.c.l.s4 1983009808
      %v3976 = vunpack.c.0.s8 %v3975
      %v3977 = vlaneseq
      %v3978 = vshrl.u32 %v3977, 7
      %v3979 = vsub.s32 %v3976, %v3978
      %v3980 = vrot.slane %v3966, %v3979
      %v3981 = vcombine.high %v3935, %v3935
      %v3983 = vunpack.c.l.s4 1983009808
      %v3984 = vunpack.c.0.s8 %v3983
      %v3985 = vlaneseq
      %v3986 = vshrl.u32 %v3985, 7
      %v3987 = vsub.s32 %v3984, %v3986
      %v3988 = vrot.slane %v3935, %v3987
      %v3990 = vunpack.c.l.s4 1983009808
      %v3991 = vunpack.c.0.s8 %v3990
      %v3992 = vlaneseq
      %v3993 = vshrl.u32 %v3992, 7
      %v3994 = vsub.s32 %v3991, %v3993
      %v3995 = vrot.slane %v3981, %v3994
      %v3996 = vunpack.c.l.b16 %v3943
      %v3997 = vunpack.c.h.b16 %v3943
      %v3998 = vunpack.c.l.b16 %v3950
      %v3999 = vunpack.c.h.b16 %v3950
      %v4000 = vunpack.c.l.b16 %v3958
      %v4001 = vunpack.c.h.b16 %v3958
      %v4002 = vunpack.c.l.b16 %v3965
      %v4003 = vunpack.c.h.b16 %v3965
      %v4004 = vunpack.c.l.b16 %v3973
      %v4005 = vunpack.c.h.b16 %v3973
      %v4006 = vunpack.c.l.b16 %v3980
      %v4007 = vunpack.c.h.b16 %v3980
      %v4008 = vunpack.c.l.b16 %v3988
      %v4009 = vunpack.c.h.b16 %v3988
      %v4010 = vunpack.c.l.b16 %v3995
      %v4011 = vunpack.c.h.b16 %v3995
      %v4012 = vrot.slane %v4000, 7
      %vm4013 = vcmask 1041409
      %v4014 = vsel %vm4013, %v4012, %v3996
      %v4015 = vrot.slane %v4004, 6
      %vm4016 = vcmask 1042434
      %v4017 = vsel %vm4016, %v4015, %v4014
      %v4018 = vrot.slane %v4008, 5
      %vm4019 = vcmask 1043459
      %v4020 = vsel %vm4019, %v4018, %v4017
      %v4021 = vrot.slane %v4001, 7
      %v4022 = vsel %vm4013, %v4021, %v3997
      %v4023 = vrot.slane %v4005, 6
      %v4024 = vsel %vm4016, %v4023, %v4022
      %v4025 = vrot.slane %v4009, 5
      %v4026 = vsel %vm4019, %v4025, %v4024
      %v4027 = vrot.slane %v4002, 7
      %v4028 = vsel %vm4013, %v4027, %v3998
      %v4029 = vrot.slane %v4006, 6
      %v4030 = vsel %vm4016, %v4029, %v4028
      %v4031 = vrot.slane %v4010, 5
      %v4032 = vsel %vm4019, %v4031, %v4030
      %v4033 = vrot.slane %v4003, 7
      %v4034 = vsel %vm4013, %v4033, %v3999
      %v4035 = vrot.slane %v4007, 6
      %v4036 = vsel %vm4016, %v4035, %v4034
      %v4037 = vrot.slane %v4011, 5
      %v4038 = vsel %vm4019, %v4037, %v4036
      %v4039 = vpack.c.b16 %v4026, %v4020
      %v4040 = vpack.c.b16 %v4038, %v4032
      %v4042 = vunpack.c.l.s4 1983009808
      %v4043 = vunpack.c.0.s8 %v4042
      %v4044 = vlaneseq
      %v4045 = vshrl.u32 %v4044, 7
      %v4046 = vsub.s32 %v4043, %v4045
      %v4047 = vrot.slane %v4039, %v4046
      %v4049 = vunpack.c.l.s4 1983009808
      %v4050 = vunpack.c.0.s8 %v4049
      %v4051 = vlaneseq
      %v4052 = vshrl.u32 %v4051, 7
      %v4053 = vsub.s32 %v4050, %v4052
      %v4054 = vrot.slane %v4040, %v4053
      %v4055 = vcombine.low %v4047, %v4054
      %v4057 = vmax.bf16 %v3851, %v4055
      %4058 = vst [vmem:[#allocation7] sm:$0xff] %v4057
    $region53: #{tpu_custom_call.1} parent=1 // pred_fallthru
      _
    // Predicated region
    $region54: #{tpu_custom_call.1} parent=1 // pred_check
      _
    $region55: #{tpu_custom_call.1} parent=1 // pred_check_branch
      %4060 = sbr.rel (0) target = $region57
    $region56: #{tpu_custom_call.1} parent=1 // pred_region
      %s4062 = ssub.s32 128, 128
      %4063 = vsyncadd [#allocation4], %s4062
      %s4065 = sshll.u32 [#allocation7], 4
      %s4066 = int_to_ptr.vmem [resolvable:$true] %s4065
      %4068 = dma.vmem_to_hbm [thread:$0]  %s4066, 128, %s9, [#allocation4]
    $region57: #{tpu_custom_call.1} parent=1 // pred_fallthru
      _
    // Predicated region
    $region58: #{tpu_custom_call.1} parent=1 // pred_check
      _
    $region59: #{tpu_custom_call.1} parent=1 // pred_check_branch
      %4070 = sbr.rel (0) target = $region61
    $region60: #{tpu_custom_call.1} parent=1 // pred_region
      %4071 = dma.done [#allocation4], 128
    $region61: #{tpu_custom_call.1} parent=1 // pred_fallthru
      _
    %4072 = vsyncpa [#allocation3], 1
    %4073 = vsyncpa [#allocation6], 1
    %4074 = vsyncpa [#allocation4], 1

</llo_original>
